<compile_context>
chip_gen: v5e
topology: v5e:2x2
jax: 0.10.0
libtpu: 0.0.40
codegen_flags: <defaults>
</compile_context>

<pallas_src>
import functools

import jax
import jax.numpy as jnp
from jax.experimental import pallas as pl
from jax.experimental.pallas import tpu as pltpu


# ----------------------------- in-kernel helpers -----------------------------

def _layernorm(x, g, b, eps=1e-5):
    mu = jnp.mean(x, axis=-1, keepdims=True)
    xc = x - mu
    var = jnp.mean(xc * xc, axis=-1, keepdims=True)
    return xc * jax.lax.rsqrt(var + eps) * g + b


def _gelu_tanh(x):
    # tanh-approx GELU (single EUP tanh); well within the 5e-2 tolerance.
    c = 0.7978845608028654  # sqrt(2/pi)
    return 0.5 * x * (1.0 + jnp.tanh(c * (x + 0.044715 * x * x * x)))


def _dwconv3x3_flat(f1, w9, b, H, W):
    """Depthwise 3x3 conv (stride 1, pad 1, groups=C) evaluated directly on the
    batch-folded flat layout (Bt*H*W, C) using XLU sublane rolls + hoisted
    per-image row/col masks (masks also prevent cross-image bleeding)."""
    rows, _ = f1.shape
    n_img = H * W
    r = jax.lax.broadcasted_iota(jnp.int32, (rows, 1), 0) % n_img   # row in image
    col = r % W                                                     # w coordinate
    onef = jnp.ones((rows, 1), jnp.float32)
    hmask = {-1: (r >= W).astype(jnp.float32), 0: onef,
             1: (r < n_img - W).astype(jnp.float32)}
    wmask = {-1: (col >= 1).astype(jnp.float32), 0: onef,
             1: (col < W - 1).astype(jnp.float32)}
    acc = jnp.zeros_like(f1)
    for kh in range(3):
        for kw in range(3):
            dh, dw = kh - 1, kw - 1
            d = dh * W + dw
            tap = f1 if d == 0 else pltpu.roll(f1, shift=(-d) % rows, axis=0)
            mask = hmask[dh] * wmask[dw]
            acc = acc + (tap * mask) * w9[kh * 3 + kw: kh * 3 + kw + 1, :]
    return acc + b


# ------------------------------ fused block kernel ----------------------------

def _block_kernel(x_ref, cos_ref, sin_ref, wqkv_ref, wproj_ref, w1_ref, w2_ref,
                  pp_ref, o_ref, *, head, H, W, bt):
    f32, bf16 = jnp.float32, jnp.bfloat16
    x = x_ref[...]                                   # (bt*N, C) f32
    rows, C = x.shape
    n_img = H * W
    dh = C // head
    c2 = w1_ref.shape[1]

    # Packed small params: static row/lane slices of one (24, c2) f32 array.
    pp = pp_ref[...]
    n1g, n1b = pp[0:1, 0:C], pp[1:2, 0:C]
    n2g, n2b = pp[2:3, 0:C], pp[3:4, 0:C]
    bqkv = pp[4:5, 0:4 * C]
    bproj = pp[5:6, 0:C]
    b1 = pp[6:7, 0:c2]
    dwb = pp[7:8, 0:c2]
    dww = pp[8:17, 0:c2]
    l1g, l1b = pp[17:18, 0:c2], pp[18:19, 0:c2]
    l2g, l2b = pp[19:20, 0:c2], pp[20:21, 0:c2]
    l3g, l3b = pp[21:22, 0:c2], pp[22:23, 0:c2]
    b2 = pp[23:24, 0:C]

    # --------- RSA: norm1 -> fused [q | q_pair_swapped | k | v] GEMM ----------
    n1 = _layernorm(x, n1g, n1b)
    qkv = jnp.dot(n1.astype(bf16), wqkv_ref[...],
                  preferred_element_type=f32) + bqkv                # (rows, 4C)
    # RoPE (interleaved complex multiply); attention scale folded into q columns.
    q = qkv[:, 0:C] * cos_ref[...] + qkv[:, C:2 * C] * sin_ref[...]
    k = qkv[:, 2 * C:3 * C]
    v = qkv[:, 3 * C:4 * C]

    # --------- attention: per-(image, head) loop, proj folded into PV ---------
    wproj = wproj_ref[...]                                          # (C, C) f32
    per_image = []
    for b in range(bt):
        r0 = b * n_img
        q_b = q[r0:r0 + n_img, :]
        k_b = k[r0:r0 + n_img, :]
        v_b = v[r0:r0 + n_img, :]
        out_b = jnp.zeros((n_img, C), f32)
        for h in range(head):
            c0 = h * dh
            q_h = q_b[:, c0:c0 + dh].astype(bf16)
            k_h = k_b[:, c0:c0 + dh].astype(bf16)
            # scores without materializing k.T (rhs-transposed contraction)
            s = jax.lax.dot_general(q_h, k_h, (((1,), (1,)), ((), ())),
                                    preferred_element_type=f32)     # (N, N)
            m = jnp.max(s, axis=-1, keepdims=True)
            e = jnp.exp(s - m)
            p = e * pl.reciprocal(jnp.sum(e, axis=-1, keepdims=True), approx=True)
            # fold output projection:  concat_h(p_h @ v_h) @ Wproj
            #                        == sum_h  p_h @ (v_h @ Wproj[h*dh:(h+1)*dh])
            vproj = jnp.dot(v_b[:, c0:c0 + dh].astype(bf16),
                            wproj[c0:c0 + dh, :].astype(bf16),
                            preferred_element_type=f32)             # (N, C)
            out_b = out_b + jnp.dot(p.astype(bf16), vproj.astype(bf16),
                                    preferred_element_type=f32)
        per_image.append(out_b)
    attn_out = per_image[0] if bt == 1 else jnp.concatenate(per_image, axis=0)
    tx = x + attn_out + bproj

    # --------- FRN: norm2 -> fc1 -> dwconv -> 3x LN -> GELU -> fc2 -------------
    n2 = _layernorm(tx, n2g, n2b)
    f1 = jnp.dot(n2.astype(bf16), w1_ref[...],
                 preferred_element_type=f32) + b1                   # (rows, c2)
    dw = _dwconv3x3_flat(f1, dww, dwb, H, W)
    s1 = _layernorm(dw + f1, l1g, l1b)
    s2 = _layernorm(s1 + f1, l2g, l2b)
    s3 = _layernorm(s2 + f1, l3g, l3b)
    ax = _gelu_tanh(s3)
    frn = jnp.dot(ax.astype(bf16), w2_ref[...],
                  preferred_element_type=f32) + b2
    o_ref[...] = tx + frn


# ------------------------------- wrapper ---------------------------------------

def transformer_block_forward(x, params, H, W, head, batch_tile=None):
    B, N, C = x.shape
    assert N == H * W
    dh = C // head
    c2 = 4 * C
    scale = dh ** (-0.5)
    a, m = params["attn"], params["mlp"]

    if batch_tile is None:
        # Keep the grid exactly 2-wide when possible (v7x: one step per TC);
        # fold the remaining batch elements into the GEMM row dimension.
        batch_tile = B // 2 if (B >= 2 and B % 2 == 0) else 1
    assert B % batch_tile == 0
    grid_b = B // batch_tile
    rows = batch_tile * N

    # Fold attention scale into q; fuse [q | q(pair-swapped) | k | v] into one
    # lane-dense (C, 4C) weight so RoPE becomes two elementwise FMAs.
    swap = jnp.arange(C) ^ 1
    wq_s, bq_s = a["wq"] * scale, a["bq"] * scale
    wqkv = jnp.concatenate([wq_s, wq_s[:, swap], a["wkv"]], axis=1)   # (C, 4C)
    bqkv = jnp.concatenate([bq_s, bq_s[swap], a["bkv"]])              # (4C,)

    # Pack all tiny per-channel vectors into ONE (24, c2) f32 array.
    def row(v):
        v = jnp.asarray(v, jnp.float32).reshape(1, -1)
        return jnp.pad(v, ((0, 0), (0, c2 - v.shape[1])))

    packed = jnp.concatenate(
        [row(params["norm1_g"]), row(params["norm1_b"]),
         row(params["norm2_g"]), row(params["norm2_b"]),
         row(bqkv), row(a["bproj"]), row(m["b1"]), row(m["dw_b"]),
         m["dw_w"].astype(jnp.float32),                               # (9, c2)
         row(m["ln1_g"]), row(m["ln1_b"]), row(m["ln2_g"]), row(m["ln2_b"]),
         row(m["ln3_g"]), row(m["ln3_b"]), row(m["b2"])], axis=0)     # (24, c2)

    bf = jnp.bfloat16
    operands = [
        x.reshape(B * N, C),                                          # f32 rows
        jnp.tile(params["rope_cos_full"], (batch_tile, 1)),           # (rows, C)
        jnp.tile(params["rope_sin_full"], (batch_tile, 1)),
        wqkv.astype(bf),                                              # MXU weights
        a["wproj"].astype(jnp.float32),
        m["w1"].astype(bf),
        m["w2"].astype(bf),
        packed,
    ]

    x_spec = pl.BlockSpec((rows, C), lambda i: (i, 0))
    in_specs = [x_spec] + [
        pl.BlockSpec(op.shape, lambda i: (0, 0)) for op in operands[1:]
    ]

    out = pl.pallas_call(
        functools.partial(_block_kernel, head=head, H=H, W=W, bt=batch_tile),
        out_shape=jax.ShapeDtypeStruct((B * N, C), jnp.float32),
        grid=(grid_b,),
        in_specs=in_specs,
        out_specs=x_spec,
        compiler_params=pltpu.CompilerParams(
            dimension_semantics=("parallel",),       # v7x: 2 TCs split the grid
            vmem_limit_bytes=32 * 1024 * 1024,
        ),
    )(*operands)
    return out.reshape(B, N, C)


# --------------------------- RoPE tables & params ------------------------------

def make_rope_dense_tables(H, W, C, base=10000.0):
    # RoPE(shape=(H, W, C)): k_max = C // (2*2); angles: (H, W, C // 2).
    k_max = C // 4
    theta = 1.0 / base ** (jnp.arange(k_max, dtype=jnp.float32) / k_max)
    hh = jnp.arange(H, dtype=jnp.float32)[:, None, None]
    ww = jnp.arange(W, dtype=jnp.float32)[None, :, None]
    ang_h = jnp.broadcast_to(hh * theta, (H, W, k_max))
    ang_w = jnp.broadcast_to(ww * theta, (H, W, k_max))
    ang = jnp.concatenate([ang_h, ang_w], axis=-1).reshape(H * W, C // 2)
    cos, sin = jnp.cos(ang), jnp.sin(ang)
    # Dense per-feature tables for the interleaved complex multiply:
    #   out[2i]   = cos_i*x[2i] - sin_i*x[2i+1]
    #   out[2i+1] = sin_i*x[2i] + cos_i*x[2i+1]
    cos_full = jnp.repeat(cos, 2, axis=-1)                           # (N, C)
    sin_full = jnp.stack([-sin, sin], axis=-1).reshape(H * W, C)     # (N, C)
    return cos_full, sin_full


def init_params(key, dim, head, H, W):
    c2 = dim * 4
    cnt = [0]

    def nxt():
        cnt[0] += 1
        return jax.random.fold_in(key, cnt[0])

    def nrm(shape, s=0.02):
        return (s * jax.random.normal(nxt(), shape)).astype(jnp.float32)

    def ln_pair(c):
        g = (1.0 + 0.1 * jax.random.normal(nxt(), (c,))).astype(jnp.float32)
        b = (0.1 * jax.random.normal(nxt(), (c,))).astype(jnp.float32)
        return g, b

    n1g, n1b = ln_pair(dim)
    n2g, n2b = ln_pair(dim)
    attn = dict(wq=nrm((dim, dim)), bq=nrm((dim,)),
                wkv=nrm((dim, 2 * dim)), bkv=nrm((2 * dim,)),
                wproj=nrm((dim, dim)), bproj=nrm((dim,)))
    l1g, l1b = ln_pair(c2)
    l2g, l2b = ln_pair(c2)
    l3g, l3b = ln_pair(c2)
    mlp = dict(w1=nrm((dim, c2)), b1=nrm((c2,)),
               dw_w=nrm((9, c2)), dw_b=nrm((c2,)),
               w2=nrm((c2, dim)), b2=nrm((dim,)),
               ln1_g=l1g, ln1_b=l1b, ln2_g=l2g, ln2_b=l2b,
               ln3_g=l3g, ln3_b=l3b)
    cos_full, sin_full = make_rope_dense_tables(H, W, dim)
    return dict(norm1_g=n1g, norm1_b=n1b, norm2_g=n2g, norm2_b=n2b,
                attn=attn, mlp=mlp,
                rope_cos_full=cos_full, rope_sin_full=sin_full)


# --------------------------- pure-JAX reference (for sanity) -------------------

def reference_block_forward(x, params, H, W, head):
    B, N, C = x.shape
    dh = C // head
    scale = dh ** (-0.5)
    a, m = params["attn"], params["mlp"]

    def ln(v, g, b):
        mu = jnp.mean(v, -1, keepdims=True)
        var = jnp.mean((v - mu) ** 2, -1, keepdims=True)
        return (v - mu) * jax.lax.rsqrt(var + 1e-5) * g + b

    n1 = ln(x, params["norm1_g"], params["norm1_b"])
    q = n1 @ a["wq"] + a["bq"]
    q_swp = q.reshape(B, N, C // 2, 2)[..., ::-1].reshape(B, N, C)
    q = q * params["rope_cos_full"] + q_swp * params["rope_sin_full"]
    q = q.reshape(B, N, head, dh).transpose(0, 2, 1, 3)
    kv = (n1 @ a["wkv"] + a["bkv"]).reshape(B, N, 2, head, dh).transpose(2, 0, 3, 1, 4)
    k, v = kv[0], kv[1]
    s = jnp.einsum("bhqd,bhkd->bhqk", q, k) * scale
    p = jax.nn.softmax(s, axis=-1)
    att = jnp.einsum("bhqk,bhkd->bhqd", p, v).transpose(0, 2, 1, 3).reshape(B, N, C)
    tx = x + att @ a["wproj"] + a["bproj"]

    n2 = ln(tx, params["norm2_g"], params["norm2_b"])
    f1 = n2 @ m["w1"] + m["b1"]
    c2 = f1.shape[-1]
    f1s = f1.reshape(B, H, W, c2)
    fp = jnp.pad(f1s, ((0, 0), (1, 1), (1, 1), (0, 0)))
    dwc = jnp.zeros_like(f1s)
    for kh in range(3):
        for kw in range(3):
            dwc = dwc + fp[:, kh:kh + H, kw:kw + W, :] * m["dw_w"][kh * 3 + kw]
    dwf = (dwc + m["dw_b"]).reshape(B, N, c2)
    s1 = ln(dwf + f1, m["ln1_g"], m["ln1_b"])
    s2 = ln(s1 + f1, m["ln2_g"], m["ln2_b"])
    s3 = ln(s2 + f1, m["ln3_g"], m["ln3_b"])
    ax = jax.nn.gelu(s3, approximate=False)
    return tx + ax @ m["w2"] + m["b2"]


# --------------------------------- main -----------------------------------------

if __name__ == "__main__":
    dim, head = 32, 4          # TransformerBlock(dim=32, head=4,
    H = W = 8                  #                  reduction_ratio=1, input_resolution=(8, 8))
    B = 4                      # grid=(2,), batch_tile=2 -> 128-row GEMMs per step
    N = H * W

    key = jax.random.PRNGKey(0)
    params = init_params(key, dim, head, H, W)
    x = jax.random.normal(jax.random.fold_in(key, 9999), (B, N, dim),
                          dtype=jnp.float32)

    fwd = jax.jit(functools.partial(transformer_block_forward, H=H, W=W, head=head))
    out = fwd(x, params)
    jax.block_until_ready(out)

    assert out.shape == (B, N, dim) and out.dtype == jnp.float32
    ref = reference_block_forward(x, params, H, W, head)
    max_diff = float(jnp.max(jnp.abs(out - ref)))
    assert max_diff < 5e-2, f"mismatch vs reference: {max_diff}"
    print("KERNEL_OK")
</pallas_src>

<mosaic_0001>
module attributes {stable_mosaic.version = 11 : i64} {
  func.func @_block_kernel(%arg0: i32, %arg1: memref<128x32xf32, #tpu.memory_space<vmem>>, %arg2: memref<128x32xf32, #tpu.memory_space<vmem>>, %arg3: memref<128x32xf32, #tpu.memory_space<vmem>>, %arg4: memref<32x128xbf16, #tpu.memory_space<vmem>>, %arg5: memref<32x32xf32, #tpu.memory_space<vmem>>, %arg6: memref<32x128xbf16, #tpu.memory_space<vmem>>, %arg7: memref<128x32xbf16, #tpu.memory_space<vmem>>, %arg8: memref<24x128xf32, #tpu.memory_space<vmem>>, %arg9: memref<128x32xf32, #tpu.memory_space<vmem>>) attributes {dimension_semantics = [#tpu.dimension_semantics<parallel>], iteration_bounds = array<i64: 2>, scalar_prefetch = 0 : i64, scratch_operands = 0 : i64, tpu.core_type = #tpu.core_type<tc>, window_params = [{transform_indices = @transform_0, window_bounds = array<i64: 128, 32>}, {pipeline_mode = #tpu.pipeline_mode<synchronous>, transform_indices = @transform_1, window_bounds = array<i64: 128, 32>}, {pipeline_mode = #tpu.pipeline_mode<synchronous>, transform_indices = @transform_2, window_bounds = array<i64: 128, 32>}, {pipeline_mode = #tpu.pipeline_mode<synchronous>, transform_indices = @transform_3, window_bounds = array<i64: 32, 128>}, {pipeline_mode = #tpu.pipeline_mode<synchronous>, transform_indices = @transform_4, window_bounds = array<i64: 32, 32>}, {pipeline_mode = #tpu.pipeline_mode<synchronous>, transform_indices = @transform_5, window_bounds = array<i64: 32, 128>}, {pipeline_mode = #tpu.pipeline_mode<synchronous>, transform_indices = @transform_6, window_bounds = array<i64: 128, 32>}, {pipeline_mode = #tpu.pipeline_mode<synchronous>, transform_indices = @transform_7, window_bounds = array<i64: 24, 128>}, {transform_indices = @transform_8, window_bounds = array<i64: 128, 32>}]} {
    %c0 = arith.constant 0 : index
    %c0_0 = arith.constant 0 : index
    %0 = vector.load %arg1[%c0, %c0_0] : memref<128x32xf32, #tpu.memory_space<vmem>>, vector<128x32xf32>
    %c0_1 = arith.constant 0 : index
    %c0_2 = arith.constant 0 : index
    %1 = vector.load %arg8[%c0_1, %c0_2] : memref<24x128xf32, #tpu.memory_space<vmem>>, vector<24x128xf32>
    %2 = vector.extract_strided_slice %1 {offsets = [0, 0], sizes = [1, 32], strides = [1, 1]} : vector<24x128xf32> to vector<1x32xf32>
    %3 = vector.extract_strided_slice %1 {offsets = [1, 0], sizes = [1, 32], strides = [1, 1]} : vector<24x128xf32> to vector<1x32xf32>
    %4 = vector.extract_strided_slice %1 {offsets = [2, 0], sizes = [1, 32], strides = [1, 1]} : vector<24x128xf32> to vector<1x32xf32>
    %5 = vector.extract_strided_slice %1 {offsets = [3, 0], sizes = [1, 32], strides = [1, 1]} : vector<24x128xf32> to vector<1x32xf32>
    %6 = vector.extract_strided_slice %1 {offsets = [4, 0], sizes = [1, 128], strides = [1, 1]} : vector<24x128xf32> to vector<1x128xf32>
    %7 = vector.extract_strided_slice %1 {offsets = [5, 0], sizes = [1, 32], strides = [1, 1]} : vector<24x128xf32> to vector<1x32xf32>
    %8 = vector.extract_strided_slice %1 {offsets = [6, 0], sizes = [1, 128], strides = [1, 1]} : vector<24x128xf32> to vector<1x128xf32>
    %9 = vector.extract_strided_slice %1 {offsets = [7, 0], sizes = [1, 128], strides = [1, 1]} : vector<24x128xf32> to vector<1x128xf32>
    %10 = vector.extract_strided_slice %1 {offsets = [8, 0], sizes = [9, 128], strides = [1, 1]} : vector<24x128xf32> to vector<9x128xf32>
    %11 = vector.extract_strided_slice %1 {offsets = [17, 0], sizes = [1, 128], strides = [1, 1]} : vector<24x128xf32> to vector<1x128xf32>
    %12 = vector.extract_strided_slice %1 {offsets = [18, 0], sizes = [1, 128], strides = [1, 1]} : vector<24x128xf32> to vector<1x128xf32>
    %13 = vector.extract_strided_slice %1 {offsets = [19, 0], sizes = [1, 128], strides = [1, 1]} : vector<24x128xf32> to vector<1x128xf32>
    %14 = vector.extract_strided_slice %1 {offsets = [20, 0], sizes = [1, 128], strides = [1, 1]} : vector<24x128xf32> to vector<1x128xf32>
    %15 = vector.extract_strided_slice %1 {offsets = [21, 0], sizes = [1, 128], strides = [1, 1]} : vector<24x128xf32> to vector<1x128xf32>
    %16 = vector.extract_strided_slice %1 {offsets = [22, 0], sizes = [1, 128], strides = [1, 1]} : vector<24x128xf32> to vector<1x128xf32>
    %17 = vector.extract_strided_slice %1 {offsets = [23, 0], sizes = [1, 32], strides = [1, 1]} : vector<24x128xf32> to vector<1x32xf32>
    %cst = arith.constant dense<0.000000e+00> : vector<128xf32>
    %18 = vector.multi_reduction <add>, %0, %cst [1] : vector<128x32xf32> to vector<128xf32>
    %19 = vector.shape_cast %18 : vector<128xf32> to vector<128x1xf32>
    %cst_3 = arith.constant 3.200000e+01 : f32
    %20 = vector.broadcast %cst_3 : f32 to vector<128x1xf32>
    %21 = arith.divf %19, %20 : vector<128x1xf32>
    %22 = vector.broadcast %21 : vector<128x1xf32> to vector<128x32xf32>
    %23 = arith.subf %0, %22 : vector<128x32xf32>
    %24 = arith.mulf %23, %23 : vector<128x32xf32>
    %cst_4 = arith.constant dense<0.000000e+00> : vector<128xf32>
    %25 = vector.multi_reduction <add>, %24, %cst_4 [1] : vector<128x32xf32> to vector<128xf32>
    %26 = vector.shape_cast %25 : vector<128xf32> to vector<128x1xf32>
    %cst_5 = arith.constant 3.200000e+01 : f32
    %27 = vector.broadcast %cst_5 : f32 to vector<128x1xf32>
    %28 = arith.divf %26, %27 : vector<128x1xf32>
    %cst_6 = arith.constant 9.99999974E-6 : f32
    %29 = vector.broadcast %cst_6 : f32 to vector<128x1xf32>
    %30 = arith.addf %28, %29 : vector<128x1xf32>
    %31 = math.rsqrt %30 : vector<128x1xf32>
    %32 = vector.broadcast %31 : vector<128x1xf32> to vector<128x32xf32>
    %33 = arith.mulf %23, %32 : vector<128x32xf32>
    %34 = vector.broadcast %2 : vector<1x32xf32> to vector<128x32xf32>
    %35 = arith.mulf %33, %34 : vector<128x32xf32>
    %36 = vector.broadcast %3 : vector<1x32xf32> to vector<128x32xf32>
    %37 = arith.addf %35, %36 : vector<128x32xf32>
    %38 = arith.truncf %37 : vector<128x32xf32> to vector<128x32xbf16>
    %c0_7 = arith.constant 0 : index
    %c0_8 = arith.constant 0 : index
    %39 = vector.load %arg4[%c0_7, %c0_8] : memref<32x128xbf16, #tpu.memory_space<vmem>>, vector<32x128xbf16>
    %cst_9 = arith.constant dense<0.000000e+00> : vector<128x128xf32>
    %40 = tpu.matmul %38, %39, %cst_9 {dimension_numbers = #tpu.dot_dimension_numbers<[1], [0], [0], [1], [0, 0, 1, 1], [], []>} : vector<128x32xbf16>, vector<32x128xbf16>, vector<128x128xf32> -> vector<128x128xf32>
    %41 = vector.broadcast %6 : vector<1x128xf32> to vector<128x128xf32>
    %42 = arith.addf %40, %41 : vector<128x128xf32>
    %43 = vector.extract_strided_slice %42 {offsets = [0, 0], sizes = [128, 32], strides = [1, 1]} : vector<128x128xf32> to vector<128x32xf32>
    %c0_10 = arith.constant 0 : index
    %c0_11 = arith.constant 0 : index
    %44 = vector.load %arg2[%c0_10, %c0_11] : memref<128x32xf32, #tpu.memory_space<vmem>>, vector<128x32xf32>
    %45 = arith.mulf %43, %44 : vector<128x32xf32>
    %46 = vector.extract_strided_slice %42 {offsets = [0, 32], sizes = [128, 32], strides = [1, 1]} : vector<128x128xf32> to vector<128x32xf32>
    %c0_12 = arith.constant 0 : index
    %c0_13 = arith.constant 0 : index
    %47 = vector.load %arg3[%c0_12, %c0_13] : memref<128x32xf32, #tpu.memory_space<vmem>>, vector<128x32xf32>
    %48 = arith.mulf %46, %47 : vector<128x32xf32>
    %49 = arith.addf %45, %48 : vector<128x32xf32>
    %50 = vector.extract_strided_slice %42 {offsets = [0, 64], sizes = [128, 32], strides = [1, 1]} : vector<128x128xf32> to vector<128x32xf32>
    %51 = vector.extract_strided_slice %42 {offsets = [0, 96], sizes = [128, 32], strides = [1, 1]} : vector<128x128xf32> to vector<128x32xf32>
    %c0_14 = arith.constant 0 : index
    %c0_15 = arith.constant 0 : index
    %52 = vector.load %arg5[%c0_14, %c0_15] : memref<32x32xf32, #tpu.memory_space<vmem>>, vector<32x32xf32>
    %53 = vector.extract_strided_slice %49 {offsets = [0, 0], sizes = [64, 32], strides = [1, 1]} : vector<128x32xf32> to vector<64x32xf32>
    %54 = vector.extract_strided_slice %50 {offsets = [0, 0], sizes = [64, 32], strides = [1, 1]} : vector<128x32xf32> to vector<64x32xf32>
    %55 = vector.extract_strided_slice %51 {offsets = [0, 0], sizes = [64, 32], strides = [1, 1]} : vector<128x32xf32> to vector<64x32xf32>
    %cst_16 = arith.constant 0.000000e+00 : f32
    %56 = vector.broadcast %cst_16 : f32 to vector<64x32xf32>
    %57 = vector.extract_strided_slice %53 {offsets = [0, 0], sizes = [64, 8], strides = [1, 1]} : vector<64x32xf32> to vector<64x8xf32>
    %58 = arith.truncf %57 : vector<64x8xf32> to vector<64x8xbf16>
    %59 = vector.extract_strided_slice %54 {offsets = [0, 0], sizes = [64, 8], strides = [1, 1]} : vector<64x32xf32> to vector<64x8xf32>
    %60 = arith.truncf %59 : vector<64x8xf32> to vector<64x8xbf16>
    %cst_17 = arith.constant dense<0.000000e+00> : vector<64x64xf32>
    %61 = tpu.matmul %58, %60, %cst_17 {dimension_numbers = #tpu.dot_dimension_numbers<[1], [1], [0], [0], [0, 0, 1, 0], [], []>} : vector<64x8xbf16>, vector<64x8xbf16>, vector<64x64xf32> -> vector<64x64xf32>
    %cst_18 = arith.constant dense<0xFF800000> : vector<64xf32>
    %62 = vector.multi_reduction <maximumf>, %61, %cst_18 [1] : vector<64x64xf32> to vector<64xf32>
    %63 = vector.shape_cast %62 : vector<64xf32> to vector<64x1xf32>
    %64 = vector.broadcast %63 : vector<64x1xf32> to vector<64x64xf32>
    %65 = arith.subf %61, %64 : vector<64x64xf32>
    %66 = math.exp %65 : vector<64x64xf32>
    %cst_19 = arith.constant dense<0.000000e+00> : vector<64xf32>
    %67 = vector.multi_reduction <add>, %66, %cst_19 [1] : vector<64x64xf32> to vector<64xf32>
    %68 = vector.shape_cast %67 : vector<64xf32> to vector<64x1xf32>
    %69 = tpu.reciprocal %68 {approx = true} : vector<64x1xf32> -> vector<64x1xf32>
    %70 = vector.broadcast %69 : vector<64x1xf32> to vector<64x64xf32>
    %71 = arith.mulf %66, %70 : vector<64x64xf32>
    %72 = vector.extract_strided_slice %55 {offsets = [0, 0], sizes = [64, 8], strides = [1, 1]} : vector<64x32xf32> to vector<64x8xf32>
    %73 = arith.truncf %72 : vector<64x8xf32> to vector<64x8xbf16>
    %74 = vector.extract_strided_slice %52 {offsets = [0, 0], sizes = [8, 32], strides = [1, 1]} : vector<32x32xf32> to vector<8x32xf32>
    %75 = arith.truncf %74 : vector<8x32xf32> to vector<8x32xbf16>
    %cst_20 = arith.constant dense<0.000000e+00> : vector<64x32xf32>
    %76 = tpu.matmul %73, %75, %cst_20 {dimension_numbers = #tpu.dot_dimension_numbers<[1], [0], [0], [1], [0, 0, 1, 1], [], []>} : vector<64x8xbf16>, vector<8x32xbf16>, vector<64x32xf32> -> vector<64x32xf32>
    %77 = arith.truncf %71 : vector<64x64xf32> to vector<64x64xbf16>
    %78 = arith.truncf %76 : vector<64x32xf32> to vector<64x32xbf16>
    %cst_21 = arith.constant dense<0.000000e+00> : vector<64x32xf32>
    %79 = tpu.matmul %77, %78, %cst_21 {dimension_numbers = #tpu.dot_dimension_numbers<[1], [0], [0], [1], [0, 0, 1, 1], [], []>} : vector<64x64xbf16>, vector<64x32xbf16>, vector<64x32xf32> -> vector<64x32xf32>
    %80 = arith.addf %56, %79 : vector<64x32xf32>
    %81 = vector.extract_strided_slice %53 {offsets = [0, 8], sizes = [64, 8], strides = [1, 1]} : vector<64x32xf32> to vector<64x8xf32>
    %82 = arith.truncf %81 : vector<64x8xf32> to vector<64x8xbf16>
    %83 = vector.extract_strided_slice %54 {offsets = [0, 8], sizes = [64, 8], strides = [1, 1]} : vector<64x32xf32> to vector<64x8xf32>
    %84 = arith.truncf %83 : vector<64x8xf32> to vector<64x8xbf16>
    %cst_22 = arith.constant dense<0.000000e+00> : vector<64x64xf32>
    %85 = tpu.matmul %82, %84, %cst_22 {dimension_numbers = #tpu.dot_dimension_numbers<[1], [1], [0], [0], [0, 0, 1, 0], [], []>} : vector<64x8xbf16>, vector<64x8xbf16>, vector<64x64xf32> -> vector<64x64xf32>
    %cst_23 = arith.constant dense<0xFF800000> : vector<64xf32>
    %86 = vector.multi_reduction <maximumf>, %85, %cst_23 [1] : vector<64x64xf32> to vector<64xf32>
    %87 = vector.shape_cast %86 : vector<64xf32> to vector<64x1xf32>
    %88 = vector.broadcast %87 : vector<64x1xf32> to vector<64x64xf32>
    %89 = arith.subf %85, %88 : vector<64x64xf32>
    %90 = math.exp %89 : vector<64x64xf32>
    %cst_24 = arith.constant dense<0.000000e+00> : vector<64xf32>
    %91 = vector.multi_reduction <add>, %90, %cst_24 [1] : vector<64x64xf32> to vector<64xf32>
    %92 = vector.shape_cast %91 : vector<64xf32> to vector<64x1xf32>
    %93 = tpu.reciprocal %92 {approx = true} : vector<64x1xf32> -> vector<64x1xf32>
    %94 = vector.broadcast %93 : vector<64x1xf32> to vector<64x64xf32>
    %95 = arith.mulf %90, %94 : vector<64x64xf32>
    %96 = vector.extract_strided_slice %55 {offsets = [0, 8], sizes = [64, 8], strides = [1, 1]} : vector<64x32xf32> to vector<64x8xf32>
    %97 = arith.truncf %96 : vector<64x8xf32> to vector<64x8xbf16>
    %98 = vector.extract_strided_slice %52 {offsets = [8, 0], sizes = [8, 32], strides = [1, 1]} : vector<32x32xf32> to vector<8x32xf32>
    %99 = arith.truncf %98 : vector<8x32xf32> to vector<8x32xbf16>
    %cst_25 = arith.constant dense<0.000000e+00> : vector<64x32xf32>
    %100 = tpu.matmul %97, %99, %cst_25 {dimension_numbers = #tpu.dot_dimension_numbers<[1], [0], [0], [1], [0, 0, 1, 1], [], []>} : vector<64x8xbf16>, vector<8x32xbf16>, vector<64x32xf32> -> vector<64x32xf32>
    %101 = arith.truncf %95 : vector<64x64xf32> to vector<64x64xbf16>
    %102 = arith.truncf %100 : vector<64x32xf32> to vector<64x32xbf16>
    %cst_26 = arith.constant dense<0.000000e+00> : vector<64x32xf32>
    %103 = tpu.matmul %101, %102, %cst_26 {dimension_numbers = #tpu.dot_dimension_numbers<[1], [0], [0], [1], [0, 0, 1, 1], [], []>} : vector<64x64xbf16>, vector<64x32xbf16>, vector<64x32xf32> -> vector<64x32xf32>
    %104 = arith.addf %80, %103 : vector<64x32xf32>
    %105 = vector.extract_strided_slice %53 {offsets = [0, 16], sizes = [64, 8], strides = [1, 1]} : vector<64x32xf32> to vector<64x8xf32>
    %106 = arith.truncf %105 : vector<64x8xf32> to vector<64x8xbf16>
    %107 = vector.extract_strided_slice %54 {offsets = [0, 16], sizes = [64, 8], strides = [1, 1]} : vector<64x32xf32> to vector<64x8xf32>
    %108 = arith.truncf %107 : vector<64x8xf32> to vector<64x8xbf16>
    %cst_27 = arith.constant dense<0.000000e+00> : vector<64x64xf32>
    %109 = tpu.matmul %106, %108, %cst_27 {dimension_numbers = #tpu.dot_dimension_numbers<[1], [1], [0], [0], [0, 0, 1, 0], [], []>} : vector<64x8xbf16>, vector<64x8xbf16>, vector<64x64xf32> -> vector<64x64xf32>
    %cst_28 = arith.constant dense<0xFF800000> : vector<64xf32>
    %110 = vector.multi_reduction <maximumf>, %109, %cst_28 [1] : vector<64x64xf32> to vector<64xf32>
    %111 = vector.shape_cast %110 : vector<64xf32> to vector<64x1xf32>
    %112 = vector.broadcast %111 : vector<64x1xf32> to vector<64x64xf32>
    %113 = arith.subf %109, %112 : vector<64x64xf32>
    %114 = math.exp %113 : vector<64x64xf32>
    %cst_29 = arith.constant dense<0.000000e+00> : vector<64xf32>
    %115 = vector.multi_reduction <add>, %114, %cst_29 [1] : vector<64x64xf32> to vector<64xf32>
    %116 = vector.shape_cast %115 : vector<64xf32> to vector<64x1xf32>
    %117 = tpu.reciprocal %116 {approx = true} : vector<64x1xf32> -> vector<64x1xf32>
    %118 = vector.broadcast %117 : vector<64x1xf32> to vector<64x64xf32>
    %119 = arith.mulf %114, %118 : vector<64x64xf32>
    %120 = vector.extract_strided_slice %55 {offsets = [0, 16], sizes = [64, 8], strides = [1, 1]} : vector<64x32xf32> to vector<64x8xf32>
    %121 = arith.truncf %120 : vector<64x8xf32> to vector<64x8xbf16>
    %122 = vector.extract_strided_slice %52 {offsets = [16, 0], sizes = [8, 32], strides = [1, 1]} : vector<32x32xf32> to vector<8x32xf32>
    %123 = arith.truncf %122 : vector<8x32xf32> to vector<8x32xbf16>
    %cst_30 = arith.constant dense<0.000000e+00> : vector<64x32xf32>
    %124 = tpu.matmul %121, %123, %cst_30 {dimension_numbers = #tpu.dot_dimension_numbers<[1], [0], [0], [1], [0, 0, 1, 1], [], []>} : vector<64x8xbf16>, vector<8x32xbf16>, vector<64x32xf32> -> vector<64x32xf32>
    %125 = arith.truncf %119 : vector<64x64xf32> to vector<64x64xbf16>
    %126 = arith.truncf %124 : vector<64x32xf32> to vector<64x32xbf16>
    %cst_31 = arith.constant dense<0.000000e+00> : vector<64x32xf32>
    %127 = tpu.matmul %125, %126, %cst_31 {dimension_numbers = #tpu.dot_dimension_numbers<[1], [0], [0], [1], [0, 0, 1, 1], [], []>} : vector<64x64xbf16>, vector<64x32xbf16>, vector<64x32xf32> -> vector<64x32xf32>
    %128 = arith.addf %104, %127 : vector<64x32xf32>
    %129 = vector.extract_strided_slice %53 {offsets = [0, 24], sizes = [64, 8], strides = [1, 1]} : vector<64x32xf32> to vector<64x8xf32>
    %130 = arith.truncf %129 : vector<64x8xf32> to vector<64x8xbf16>
    %131 = vector.extract_strided_slice %54 {offsets = [0, 24], sizes = [64, 8], strides = [1, 1]} : vector<64x32xf32> to vector<64x8xf32>
    %132 = arith.truncf %131 : vector<64x8xf32> to vector<64x8xbf16>
    %cst_32 = arith.constant dense<0.000000e+00> : vector<64x64xf32>
    %133 = tpu.matmul %130, %132, %cst_32 {dimension_numbers = #tpu.dot_dimension_numbers<[1], [1], [0], [0], [0, 0, 1, 0], [], []>} : vector<64x8xbf16>, vector<64x8xbf16>, vector<64x64xf32> -> vector<64x64xf32>
    %cst_33 = arith.constant dense<0xFF800000> : vector<64xf32>
    %134 = vector.multi_reduction <maximumf>, %133, %cst_33 [1] : vector<64x64xf32> to vector<64xf32>
    %135 = vector.shape_cast %134 : vector<64xf32> to vector<64x1xf32>
    %136 = vector.broadcast %135 : vector<64x1xf32> to vector<64x64xf32>
    %137 = arith.subf %133, %136 : vector<64x64xf32>
    %138 = math.exp %137 : vector<64x64xf32>
    %cst_34 = arith.constant dense<0.000000e+00> : vector<64xf32>
    %139 = vector.multi_reduction <add>, %138, %cst_34 [1] : vector<64x64xf32> to vector<64xf32>
    %140 = vector.shape_cast %139 : vector<64xf32> to vector<64x1xf32>
    %141 = tpu.reciprocal %140 {approx = true} : vector<64x1xf32> -> vector<64x1xf32>
    %142 = vector.broadcast %141 : vector<64x1xf32> to vector<64x64xf32>
    %143 = arith.mulf %138, %142 : vector<64x64xf32>
    %144 = vector.extract_strided_slice %55 {offsets = [0, 24], sizes = [64, 8], strides = [1, 1]} : vector<64x32xf32> to vector<64x8xf32>
    %145 = arith.truncf %144 : vector<64x8xf32> to vector<64x8xbf16>
    %146 = vector.extract_strided_slice %52 {offsets = [24, 0], sizes = [8, 32], strides = [1, 1]} : vector<32x32xf32> to vector<8x32xf32>
    %147 = arith.truncf %146 : vector<8x32xf32> to vector<8x32xbf16>
    %cst_35 = arith.constant dense<0.000000e+00> : vector<64x32xf32>
    %148 = tpu.matmul %145, %147, %cst_35 {dimension_numbers = #tpu.dot_dimension_numbers<[1], [0], [0], [1], [0, 0, 1, 1], [], []>} : vector<64x8xbf16>, vector<8x32xbf16>, vector<64x32xf32> -> vector<64x32xf32>
    %149 = arith.truncf %143 : vector<64x64xf32> to vector<64x64xbf16>
    %150 = arith.truncf %148 : vector<64x32xf32> to vector<64x32xbf16>
    %cst_36 = arith.constant dense<0.000000e+00> : vector<64x32xf32>
    %151 = tpu.matmul %149, %150, %cst_36 {dimension_numbers = #tpu.dot_dimension_numbers<[1], [0], [0], [1], [0, 0, 1, 1], [], []>} : vector<64x64xbf16>, vector<64x32xbf16>, vector<64x32xf32> -> vector<64x32xf32>
    %152 = arith.addf %128, %151 : vector<64x32xf32>
    %153 = vector.extract_strided_slice %49 {offsets = [64, 0], sizes = [64, 32], strides = [1, 1]} : vector<128x32xf32> to vector<64x32xf32>
    %154 = vector.extract_strided_slice %50 {offsets = [64, 0], sizes = [64, 32], strides = [1, 1]} : vector<128x32xf32> to vector<64x32xf32>
    %155 = vector.extract_strided_slice %51 {offsets = [64, 0], sizes = [64, 32], strides = [1, 1]} : vector<128x32xf32> to vector<64x32xf32>
    %cst_37 = arith.constant 0.000000e+00 : f32
    %156 = vector.broadcast %cst_37 : f32 to vector<64x32xf32>
    %157 = vector.extract_strided_slice %153 {offsets = [0, 0], sizes = [64, 8], strides = [1, 1]} : vector<64x32xf32> to vector<64x8xf32>
    %158 = arith.truncf %157 : vector<64x8xf32> to vector<64x8xbf16>
    %159 = vector.extract_strided_slice %154 {offsets = [0, 0], sizes = [64, 8], strides = [1, 1]} : vector<64x32xf32> to vector<64x8xf32>
    %160 = arith.truncf %159 : vector<64x8xf32> to vector<64x8xbf16>
    %cst_38 = arith.constant dense<0.000000e+00> : vector<64x64xf32>
    %161 = tpu.matmul %158, %160, %cst_38 {dimension_numbers = #tpu.dot_dimension_numbers<[1], [1], [0], [0], [0, 0, 1, 0], [], []>} : vector<64x8xbf16>, vector<64x8xbf16>, vector<64x64xf32> -> vector<64x64xf32>
    %cst_39 = arith.constant dense<0xFF800000> : vector<64xf32>
    %162 = vector.multi_reduction <maximumf>, %161, %cst_39 [1] : vector<64x64xf32> to vector<64xf32>
    %163 = vector.shape_cast %162 : vector<64xf32> to vector<64x1xf32>
    %164 = vector.broadcast %163 : vector<64x1xf32> to vector<64x64xf32>
    %165 = arith.subf %161, %164 : vector<64x64xf32>
    %166 = math.exp %165 : vector<64x64xf32>
    %cst_40 = arith.constant dense<0.000000e+00> : vector<64xf32>
    %167 = vector.multi_reduction <add>, %166, %cst_40 [1] : vector<64x64xf32> to vector<64xf32>
    %168 = vector.shape_cast %167 : vector<64xf32> to vector<64x1xf32>
    %169 = tpu.reciprocal %168 {approx = true} : vector<64x1xf32> -> vector<64x1xf32>
    %170 = vector.broadcast %169 : vector<64x1xf32> to vector<64x64xf32>
    %171 = arith.mulf %166, %170 : vector<64x64xf32>
    %172 = vector.extract_strided_slice %155 {offsets = [0, 0], sizes = [64, 8], strides = [1, 1]} : vector<64x32xf32> to vector<64x8xf32>
    %173 = arith.truncf %172 : vector<64x8xf32> to vector<64x8xbf16>
    %174 = vector.extract_strided_slice %52 {offsets = [0, 0], sizes = [8, 32], strides = [1, 1]} : vector<32x32xf32> to vector<8x32xf32>
    %175 = arith.truncf %174 : vector<8x32xf32> to vector<8x32xbf16>
    %cst_41 = arith.constant dense<0.000000e+00> : vector<64x32xf32>
    %176 = tpu.matmul %173, %175, %cst_41 {dimension_numbers = #tpu.dot_dimension_numbers<[1], [0], [0], [1], [0, 0, 1, 1], [], []>} : vector<64x8xbf16>, vector<8x32xbf16>, vector<64x32xf32> -> vector<64x32xf32>
    %177 = arith.truncf %171 : vector<64x64xf32> to vector<64x64xbf16>
    %178 = arith.truncf %176 : vector<64x32xf32> to vector<64x32xbf16>
    %cst_42 = arith.constant dense<0.000000e+00> : vector<64x32xf32>
    %179 = tpu.matmul %177, %178, %cst_42 {dimension_numbers = #tpu.dot_dimension_numbers<[1], [0], [0], [1], [0, 0, 1, 1], [], []>} : vector<64x64xbf16>, vector<64x32xbf16>, vector<64x32xf32> -> vector<64x32xf32>
    %180 = arith.addf %156, %179 : vector<64x32xf32>
    %181 = vector.extract_strided_slice %153 {offsets = [0, 8], sizes = [64, 8], strides = [1, 1]} : vector<64x32xf32> to vector<64x8xf32>
    %182 = arith.truncf %181 : vector<64x8xf32> to vector<64x8xbf16>
    %183 = vector.extract_strided_slice %154 {offsets = [0, 8], sizes = [64, 8], strides = [1, 1]} : vector<64x32xf32> to vector<64x8xf32>
    %184 = arith.truncf %183 : vector<64x8xf32> to vector<64x8xbf16>
    %cst_43 = arith.constant dense<0.000000e+00> : vector<64x64xf32>
    %185 = tpu.matmul %182, %184, %cst_43 {dimension_numbers = #tpu.dot_dimension_numbers<[1], [1], [0], [0], [0, 0, 1, 0], [], []>} : vector<64x8xbf16>, vector<64x8xbf16>, vector<64x64xf32> -> vector<64x64xf32>
    %cst_44 = arith.constant dense<0xFF800000> : vector<64xf32>
    %186 = vector.multi_reduction <maximumf>, %185, %cst_44 [1] : vector<64x64xf32> to vector<64xf32>
    %187 = vector.shape_cast %186 : vector<64xf32> to vector<64x1xf32>
    %188 = vector.broadcast %187 : vector<64x1xf32> to vector<64x64xf32>
    %189 = arith.subf %185, %188 : vector<64x64xf32>
    %190 = math.exp %189 : vector<64x64xf32>
    %cst_45 = arith.constant dense<0.000000e+00> : vector<64xf32>
    %191 = vector.multi_reduction <add>, %190, %cst_45 [1] : vector<64x64xf32> to vector<64xf32>
    %192 = vector.shape_cast %191 : vector<64xf32> to vector<64x1xf32>
    %193 = tpu.reciprocal %192 {approx = true} : vector<64x1xf32> -> vector<64x1xf32>
    %194 = vector.broadcast %193 : vector<64x1xf32> to vector<64x64xf32>
    %195 = arith.mulf %190, %194 : vector<64x64xf32>
    %196 = vector.extract_strided_slice %155 {offsets = [0, 8], sizes = [64, 8], strides = [1, 1]} : vector<64x32xf32> to vector<64x8xf32>
    %197 = arith.truncf %196 : vector<64x8xf32> to vector<64x8xbf16>
    %198 = vector.extract_strided_slice %52 {offsets = [8, 0], sizes = [8, 32], strides = [1, 1]} : vector<32x32xf32> to vector<8x32xf32>
    %199 = arith.truncf %198 : vector<8x32xf32> to vector<8x32xbf16>
    %cst_46 = arith.constant dense<0.000000e+00> : vector<64x32xf32>
    %200 = tpu.matmul %197, %199, %cst_46 {dimension_numbers = #tpu.dot_dimension_numbers<[1], [0], [0], [1], [0, 0, 1, 1], [], []>} : vector<64x8xbf16>, vector<8x32xbf16>, vector<64x32xf32> -> vector<64x32xf32>
    %201 = arith.truncf %195 : vector<64x64xf32> to vector<64x64xbf16>
    %202 = arith.truncf %200 : vector<64x32xf32> to vector<64x32xbf16>
    %cst_47 = arith.constant dense<0.000000e+00> : vector<64x32xf32>
    %203 = tpu.matmul %201, %202, %cst_47 {dimension_numbers = #tpu.dot_dimension_numbers<[1], [0], [0], [1], [0, 0, 1, 1], [], []>} : vector<64x64xbf16>, vector<64x32xbf16>, vector<64x32xf32> -> vector<64x32xf32>
    %204 = arith.addf %180, %203 : vector<64x32xf32>
    %205 = vector.extract_strided_slice %153 {offsets = [0, 16], sizes = [64, 8], strides = [1, 1]} : vector<64x32xf32> to vector<64x8xf32>
    %206 = arith.truncf %205 : vector<64x8xf32> to vector<64x8xbf16>
    %207 = vector.extract_strided_slice %154 {offsets = [0, 16], sizes = [64, 8], strides = [1, 1]} : vector<64x32xf32> to vector<64x8xf32>
    %208 = arith.truncf %207 : vector<64x8xf32> to vector<64x8xbf16>
    %cst_48 = arith.constant dense<0.000000e+00> : vector<64x64xf32>
    %209 = tpu.matmul %206, %208, %cst_48 {dimension_numbers = #tpu.dot_dimension_numbers<[1], [1], [0], [0], [0, 0, 1, 0], [], []>} : vector<64x8xbf16>, vector<64x8xbf16>, vector<64x64xf32> -> vector<64x64xf32>
    %cst_49 = arith.constant dense<0xFF800000> : vector<64xf32>
    %210 = vector.multi_reduction <maximumf>, %209, %cst_49 [1] : vector<64x64xf32> to vector<64xf32>
    %211 = vector.shape_cast %210 : vector<64xf32> to vector<64x1xf32>
    %212 = vector.broadcast %211 : vector<64x1xf32> to vector<64x64xf32>
    %213 = arith.subf %209, %212 : vector<64x64xf32>
    %214 = math.exp %213 : vector<64x64xf32>
    %cst_50 = arith.constant dense<0.000000e+00> : vector<64xf32>
    %215 = vector.multi_reduction <add>, %214, %cst_50 [1] : vector<64x64xf32> to vector<64xf32>
    %216 = vector.shape_cast %215 : vector<64xf32> to vector<64x1xf32>
    %217 = tpu.reciprocal %216 {approx = true} : vector<64x1xf32> -> vector<64x1xf32>
    %218 = vector.broadcast %217 : vector<64x1xf32> to vector<64x64xf32>
    %219 = arith.mulf %214, %218 : vector<64x64xf32>
    %220 = vector.extract_strided_slice %155 {offsets = [0, 16], sizes = [64, 8], strides = [1, 1]} : vector<64x32xf32> to vector<64x8xf32>
    %221 = arith.truncf %220 : vector<64x8xf32> to vector<64x8xbf16>
    %222 = vector.extract_strided_slice %52 {offsets = [16, 0], sizes = [8, 32], strides = [1, 1]} : vector<32x32xf32> to vector<8x32xf32>
    %223 = arith.truncf %222 : vector<8x32xf32> to vector<8x32xbf16>
    %cst_51 = arith.constant dense<0.000000e+00> : vector<64x32xf32>
    %224 = tpu.matmul %221, %223, %cst_51 {dimension_numbers = #tpu.dot_dimension_numbers<[1], [0], [0], [1], [0, 0, 1, 1], [], []>} : vector<64x8xbf16>, vector<8x32xbf16>, vector<64x32xf32> -> vector<64x32xf32>
    %225 = arith.truncf %219 : vector<64x64xf32> to vector<64x64xbf16>
    %226 = arith.truncf %224 : vector<64x32xf32> to vector<64x32xbf16>
    %cst_52 = arith.constant dense<0.000000e+00> : vector<64x32xf32>
    %227 = tpu.matmul %225, %226, %cst_52 {dimension_numbers = #tpu.dot_dimension_numbers<[1], [0], [0], [1], [0, 0, 1, 1], [], []>} : vector<64x64xbf16>, vector<64x32xbf16>, vector<64x32xf32> -> vector<64x32xf32>
    %228 = arith.addf %204, %227 : vector<64x32xf32>
    %229 = vector.extract_strided_slice %153 {offsets = [0, 24], sizes = [64, 8], strides = [1, 1]} : vector<64x32xf32> to vector<64x8xf32>
    %230 = arith.truncf %229 : vector<64x8xf32> to vector<64x8xbf16>
    %231 = vector.extract_strided_slice %154 {offsets = [0, 24], sizes = [64, 8], strides = [1, 1]} : vector<64x32xf32> to vector<64x8xf32>
    %232 = arith.truncf %231 : vector<64x8xf32> to vector<64x8xbf16>
    %cst_53 = arith.constant dense<0.000000e+00> : vector<64x64xf32>
    %233 = tpu.matmul %230, %232, %cst_53 {dimension_numbers = #tpu.dot_dimension_numbers<[1], [1], [0], [0], [0, 0, 1, 0], [], []>} : vector<64x8xbf16>, vector<64x8xbf16>, vector<64x64xf32> -> vector<64x64xf32>
    %cst_54 = arith.constant dense<0xFF800000> : vector<64xf32>
    %234 = vector.multi_reduction <maximumf>, %233, %cst_54 [1] : vector<64x64xf32> to vector<64xf32>
    %235 = vector.shape_cast %234 : vector<64xf32> to vector<64x1xf32>
    %236 = vector.broadcast %235 : vector<64x1xf32> to vector<64x64xf32>
    %237 = arith.subf %233, %236 : vector<64x64xf32>
    %238 = math.exp %237 : vector<64x64xf32>
    %cst_55 = arith.constant dense<0.000000e+00> : vector<64xf32>
    %239 = vector.multi_reduction <add>, %238, %cst_55 [1] : vector<64x64xf32> to vector<64xf32>
    %240 = vector.shape_cast %239 : vector<64xf32> to vector<64x1xf32>
    %241 = tpu.reciprocal %240 {approx = true} : vector<64x1xf32> -> vector<64x1xf32>
    %242 = vector.broadcast %241 : vector<64x1xf32> to vector<64x64xf32>
    %243 = arith.mulf %238, %242 : vector<64x64xf32>
    %244 = vector.extract_strided_slice %155 {offsets = [0, 24], sizes = [64, 8], strides = [1, 1]} : vector<64x32xf32> to vector<64x8xf32>
    %245 = arith.truncf %244 : vector<64x8xf32> to vector<64x8xbf16>
    %246 = vector.extract_strided_slice %52 {offsets = [24, 0], sizes = [8, 32], strides = [1, 1]} : vector<32x32xf32> to vector<8x32xf32>
    %247 = arith.truncf %246 : vector<8x32xf32> to vector<8x32xbf16>
    %cst_56 = arith.constant dense<0.000000e+00> : vector<64x32xf32>
    %248 = tpu.matmul %245, %247, %cst_56 {dimension_numbers = #tpu.dot_dimension_numbers<[1], [0], [0], [1], [0, 0, 1, 1], [], []>} : vector<64x8xbf16>, vector<8x32xbf16>, vector<64x32xf32> -> vector<64x32xf32>
    %249 = arith.truncf %243 : vector<64x64xf32> to vector<64x64xbf16>
    %250 = arith.truncf %248 : vector<64x32xf32> to vector<64x32xbf16>
    %cst_57 = arith.constant dense<0.000000e+00> : vector<64x32xf32>
    %251 = tpu.matmul %249, %250, %cst_57 {dimension_numbers = #tpu.dot_dimension_numbers<[1], [0], [0], [1], [0, 0, 1, 1], [], []>} : vector<64x64xbf16>, vector<64x32xbf16>, vector<64x32xf32> -> vector<64x32xf32>
    %252 = arith.addf %228, %251 : vector<64x32xf32>
    %253 = tpu.concatenate %152, %252 in 0 : vector<64x32xf32>, vector<64x32xf32> -> vector<128x32xf32>
    %254 = arith.addf %0, %253 : vector<128x32xf32>
    %255 = vector.broadcast %7 : vector<1x32xf32> to vector<128x32xf32>
    %256 = arith.addf %254, %255 : vector<128x32xf32>
    %cst_58 = arith.constant dense<0.000000e+00> : vector<128xf32>
    %257 = vector.multi_reduction <add>, %256, %cst_58 [1] : vector<128x32xf32> to vector<128xf32>
    %258 = vector.shape_cast %257 : vector<128xf32> to vector<128x1xf32>
    %cst_59 = arith.constant 3.200000e+01 : f32
    %259 = vector.broadcast %cst_59 : f32 to vector<128x1xf32>
    %260 = arith.divf %258, %259 : vector<128x1xf32>
    %261 = vector.broadcast %260 : vector<128x1xf32> to vector<128x32xf32>
    %262 = arith.subf %256, %261 : vector<128x32xf32>
    %263 = arith.mulf %262, %262 : vector<128x32xf32>
    %cst_60 = arith.constant dense<0.000000e+00> : vector<128xf32>
    %264 = vector.multi_reduction <add>, %263, %cst_60 [1] : vector<128x32xf32> to vector<128xf32>
    %265 = vector.shape_cast %264 : vector<128xf32> to vector<128x1xf32>
    %cst_61 = arith.constant 3.200000e+01 : f32
    %266 = vector.broadcast %cst_61 : f32 to vector<128x1xf32>
    %267 = arith.divf %265, %266 : vector<128x1xf32>
    %cst_62 = arith.constant 9.99999974E-6 : f32
    %268 = vector.broadcast %cst_62 : f32 to vector<128x1xf32>
    %269 = arith.addf %267, %268 : vector<128x1xf32>
    %270 = math.rsqrt %269 : vector<128x1xf32>
    %271 = vector.broadcast %270 : vector<128x1xf32> to vector<128x32xf32>
    %272 = arith.mulf %262, %271 : vector<128x32xf32>
    %273 = vector.broadcast %4 : vector<1x32xf32> to vector<128x32xf32>
    %274 = arith.mulf %272, %273 : vector<128x32xf32>
    %275 = vector.broadcast %5 : vector<1x32xf32> to vector<128x32xf32>
    %276 = arith.addf %274, %275 : vector<128x32xf32>
    %277 = arith.truncf %276 : vector<128x32xf32> to vector<128x32xbf16>
    %c0_63 = arith.constant 0 : index
    %c0_64 = arith.constant 0 : index
    %278 = vector.load %arg6[%c0_63, %c0_64] : memref<32x128xbf16, #tpu.memory_space<vmem>>, vector<32x128xbf16>
    %cst_65 = arith.constant dense<0.000000e+00> : vector<128x128xf32>
    %279 = tpu.matmul %277, %278, %cst_65 {dimension_numbers = #tpu.dot_dimension_numbers<[1], [0], [0], [1], [0, 0, 1, 1], [], []>} : vector<128x32xbf16>, vector<32x128xbf16>, vector<128x128xf32> -> vector<128x128xf32>
    %280 = vector.broadcast %8 : vector<1x128xf32> to vector<128x128xf32>
    %281 = arith.addf %279, %280 : vector<128x128xf32>
    %282 = tpu.iota {dimensions = array<i32: 0>} : vector<128x1xi32>
    %c64_i32 = arith.constant 64 : i32
    %c0_i32 = arith.constant 0 : i32
    %283 = arith.cmpi eq, %c64_i32, %c0_i32 : i32
    %c1_i32 = arith.constant 1 : i32
    %284 = arith.select %283, %c1_i32, %c64_i32 : i32
    %285 = vector.broadcast %284 : i32 to vector<128x1xi32>
    %286 = arith.remsi %282, %285 : vector<128x1xi32>
    %c0_i32_66 = arith.constant 0 : i32
    %287 = vector.broadcast %c0_i32_66 : i32 to vector<128x1xi32>
    %288 = arith.cmpi ne, %286, %287 : vector<128x1xi32>
    %c0_i32_67 = arith.constant 0 : i32
    %289 = vector.broadcast %c0_i32_67 : i32 to vector<128x1xi32>
    %290 = arith.cmpi slt, %286, %289 : vector<128x1xi32>
    %c0_i32_68 = arith.constant 0 : i32
    %291 = arith.cmpi slt, %284, %c0_i32_68 : i32
    %292 = vector.broadcast %291 : i1 to vector<128x1xi1>
    %293 = vector.broadcast %292 : vector<128x1xi1> to vector<128x1xi1>
    %294 = arith.xori %290, %293 : vector<128x1xi1>
    %295 = arith.andi %294, %288 : vector<128x1xi1>
    %296 = vector.broadcast %284 : i32 to vector<128x1xi32>
    %297 = arith.addi %286, %296 : vector<128x1xi32>
    %298 = arith.select %295, %297, %286 : vector<128x1xi1>, vector<128x1xi32>
    %c8_i32 = arith.constant 8 : i32
    %c0_i32_69 = arith.constant 0 : i32
    %299 = arith.cmpi eq, %c8_i32, %c0_i32_69 : i32
    %c1_i32_70 = arith.constant 1 : i32
    %300 = arith.select %299, %c1_i32_70, %c8_i32 : i32
    %301 = vector.broadcast %300 : i32 to vector<128x1xi32>
    %302 = arith.remsi %298, %301 : vector<128x1xi32>
    %c0_i32_71 = arith.constant 0 : i32
    %303 = vector.broadcast %c0_i32_71 : i32 to vector<128x1xi32>
    %304 = arith.cmpi ne, %302, %303 : vector<128x1xi32>
    %c0_i32_72 = arith.constant 0 : i32
    %305 = vector.broadcast %c0_i32_72 : i32 to vector<128x1xi32>
    %306 = arith.cmpi slt, %302, %305 : vector<128x1xi32>
    %c0_i32_73 = arith.constant 0 : i32
    %307 = arith.cmpi slt, %300, %c0_i32_73 : i32
    %308 = vector.broadcast %307 : i1 to vector<128x1xi1>
    %309 = vector.broadcast %308 : vector<128x1xi1> to vector<128x1xi1>
    %310 = arith.xori %306, %309 : vector<128x1xi1>
    %311 = arith.andi %310, %304 : vector<128x1xi1>
    %312 = vector.broadcast %300 : i32 to vector<128x1xi32>
    %313 = arith.addi %302, %312 : vector<128x1xi32>
    %314 = arith.select %311, %313, %302 : vector<128x1xi1>, vector<128x1xi32>
    %cst_74 = arith.constant 1.000000e+00 : f32
    %315 = vector.broadcast %cst_74 : f32 to vector<128x1xf32>
    %c8_i32_75 = arith.constant 8 : i32
    %316 = vector.broadcast %c8_i32_75 : i32 to vector<128x1xi32>
    %317 = arith.cmpi sge, %298, %316 : vector<128x1xi32>
    %318 = arith.extui %317 : vector<128x1xi1> to vector<128x1xi32>
    %319 = arith.sitofp %318 : vector<128x1xi32> to vector<128x1xf32>
    %c56_i32 = arith.constant 56 : i32
    %320 = vector.broadcast %c56_i32 : i32 to vector<128x1xi32>
    %321 = arith.cmpi slt, %298, %320 : vector<128x1xi32>
    %322 = arith.extui %321 : vector<128x1xi1> to vector<128x1xi32>
    %323 = arith.sitofp %322 : vector<128x1xi32> to vector<128x1xf32>
    %c1_i32_76 = arith.constant 1 : i32
    %324 = vector.broadcast %c1_i32_76 : i32 to vector<128x1xi32>
    %325 = arith.cmpi sge, %314, %324 : vector<128x1xi32>
    %326 = arith.extui %325 : vector<128x1xi1> to vector<128x1xi32>
    %327 = arith.sitofp %326 : vector<128x1xi32> to vector<128x1xf32>
    %c7_i32 = arith.constant 7 : i32
    %328 = vector.broadcast %c7_i32 : i32 to vector<128x1xi32>
    %329 = arith.cmpi slt, %314, %328 : vector<128x1xi32>
    %330 = arith.extui %329 : vector<128x1xi1> to vector<128x1xi32>
    %331 = arith.sitofp %330 : vector<128x1xi32> to vector<128x1xf32>
    %cst_77 = arith.constant 0.000000e+00 : f32
    %332 = vector.broadcast %cst_77 : f32 to vector<128x128xf32>
    %c9_i32 = arith.constant 9 : i32
    %333 = tpu.dynamic_rotate %281 by %c9_i32 dim 0 : vector<128x128xf32>, i32 -> vector<128x128xf32>
    %334 = arith.mulf %319, %327 : vector<128x1xf32>
    %335 = vector.broadcast %334 : vector<128x1xf32> to vector<128x128xf32>
    %336 = arith.mulf %333, %335 : vector<128x128xf32>
    %337 = vector.extract_strided_slice %10 {offsets = [0, 0], sizes = [1, 128], strides = [1, 1]} : vector<9x128xf32> to vector<1x128xf32>
    %338 = vector.broadcast %337 : vector<1x128xf32> to vector<128x128xf32>
    %339 = arith.mulf %336, %338 : vector<128x128xf32>
    %340 = arith.addf %332, %339 : vector<128x128xf32>
    %c8_i32_78 = arith.constant 8 : i32
    %341 = tpu.dynamic_rotate %281 by %c8_i32_78 dim 0 : vector<128x128xf32>, i32 -> vector<128x128xf32>
    %342 = arith.mulf %319, %315 : vector<128x1xf32>
    %343 = vector.broadcast %342 : vector<128x1xf32> to vector<128x128xf32>
    %344 = arith.mulf %341, %343 : vector<128x128xf32>
    %345 = vector.extract_strided_slice %10 {offsets = [1, 0], sizes = [1, 128], strides = [1, 1]} : vector<9x128xf32> to vector<1x128xf32>
    %346 = vector.broadcast %345 : vector<1x128xf32> to vector<128x128xf32>
    %347 = arith.mulf %344, %346 : vector<128x128xf32>
    %348 = arith.addf %340, %347 : vector<128x128xf32>
    %c7_i32_79 = arith.constant 7 : i32
    %349 = tpu.dynamic_rotate %281 by %c7_i32_79 dim 0 : vector<128x128xf32>, i32 -> vector<128x128xf32>
    %350 = arith.mulf %319, %331 : vector<128x1xf32>
    %351 = vector.broadcast %350 : vector<128x1xf32> to vector<128x128xf32>
    %352 = arith.mulf %349, %351 : vector<128x128xf32>
    %353 = vector.extract_strided_slice %10 {offsets = [2, 0], sizes = [1, 128], strides = [1, 1]} : vector<9x128xf32> to vector<1x128xf32>
    %354 = vector.broadcast %353 : vector<1x128xf32> to vector<128x128xf32>
    %355 = arith.mulf %352, %354 : vector<128x128xf32>
    %356 = arith.addf %348, %355 : vector<128x128xf32>
    %c1_i32_80 = arith.constant 1 : i32
    %357 = tpu.dynamic_rotate %281 by %c1_i32_80 dim 0 : vector<128x128xf32>, i32 -> vector<128x128xf32>
    %358 = arith.mulf %315, %327 : vector<128x1xf32>
    %359 = vector.broadcast %358 : vector<128x1xf32> to vector<128x128xf32>
    %360 = arith.mulf %357, %359 : vector<128x128xf32>
    %361 = vector.extract_strided_slice %10 {offsets = [3, 0], sizes = [1, 128], strides = [1, 1]} : vector<9x128xf32> to vector<1x128xf32>
    %362 = vector.broadcast %361 : vector<1x128xf32> to vector<128x128xf32>
    %363 = arith.mulf %360, %362 : vector<128x128xf32>
    %364 = arith.addf %356, %363 : vector<128x128xf32>
    %365 = arith.mulf %315, %315 : vector<128x1xf32>
    %366 = vector.broadcast %365 : vector<128x1xf32> to vector<128x128xf32>
    %367 = arith.mulf %281, %366 : vector<128x128xf32>
    %368 = vector.extract_strided_slice %10 {offsets = [4, 0], sizes = [1, 128], strides = [1, 1]} : vector<9x128xf32> to vector<1x128xf32>
    %369 = vector.broadcast %368 : vector<1x128xf32> to vector<128x128xf32>
    %370 = arith.mulf %367, %369 : vector<128x128xf32>
    %371 = arith.addf %364, %370 : vector<128x128xf32>
    %c127_i32 = arith.constant 127 : i32
    %372 = tpu.dynamic_rotate %281 by %c127_i32 dim 0 : vector<128x128xf32>, i32 -> vector<128x128xf32>
    %373 = arith.mulf %315, %331 : vector<128x1xf32>
    %374 = vector.broadcast %373 : vector<128x1xf32> to vector<128x128xf32>
    %375 = arith.mulf %372, %374 : vector<128x128xf32>
    %376 = vector.extract_strided_slice %10 {offsets = [5, 0], sizes = [1, 128], strides = [1, 1]} : vector<9x128xf32> to vector<1x128xf32>
    %377 = vector.broadcast %376 : vector<1x128xf32> to vector<128x128xf32>
    %378 = arith.mulf %375, %377 : vector<128x128xf32>
    %379 = arith.addf %371, %378 : vector<128x128xf32>
    %c121_i32 = arith.constant 121 : i32
    %380 = tpu.dynamic_rotate %281 by %c121_i32 dim 0 : vector<128x128xf32>, i32 -> vector<128x128xf32>
    %381 = arith.mulf %323, %327 : vector<128x1xf32>
    %382 = vector.broadcast %381 : vector<128x1xf32> to vector<128x128xf32>
    %383 = arith.mulf %380, %382 : vector<128x128xf32>
    %384 = vector.extract_strided_slice %10 {offsets = [6, 0], sizes = [1, 128], strides = [1, 1]} : vector<9x128xf32> to vector<1x128xf32>
    %385 = vector.broadcast %384 : vector<1x128xf32> to vector<128x128xf32>
    %386 = arith.mulf %383, %385 : vector<128x128xf32>
    %387 = arith.addf %379, %386 : vector<128x128xf32>
    %c120_i32 = arith.constant 120 : i32
    %388 = tpu.dynamic_rotate %281 by %c120_i32 dim 0 : vector<128x128xf32>, i32 -> vector<128x128xf32>
    %389 = arith.mulf %323, %315 : vector<128x1xf32>
    %390 = vector.broadcast %389 : vector<128x1xf32> to vector<128x128xf32>
    %391 = arith.mulf %388, %390 : vector<128x128xf32>
    %392 = vector.extract_strided_slice %10 {offsets = [7, 0], sizes = [1, 128], strides = [1, 1]} : vector<9x128xf32> to vector<1x128xf32>
    %393 = vector.broadcast %392 : vector<1x128xf32> to vector<128x128xf32>
    %394 = arith.mulf %391, %393 : vector<128x128xf32>
    %395 = arith.addf %387, %394 : vector<128x128xf32>
    %c119_i32 = arith.constant 119 : i32
    %396 = tpu.dynamic_rotate %281 by %c119_i32 dim 0 : vector<128x128xf32>, i32 -> vector<128x128xf32>
    %397 = arith.mulf %323, %331 : vector<128x1xf32>
    %398 = vector.broadcast %397 : vector<128x1xf32> to vector<128x128xf32>
    %399 = arith.mulf %396, %398 : vector<128x128xf32>
    %400 = vector.extract_strided_slice %10 {offsets = [8, 0], sizes = [1, 128], strides = [1, 1]} : vector<9x128xf32> to vector<1x128xf32>
    %401 = vector.broadcast %400 : vector<1x128xf32> to vector<128x128xf32>
    %402 = arith.mulf %399, %401 : vector<128x128xf32>
    %403 = arith.addf %395, %402 : vector<128x128xf32>
    %404 = vector.broadcast %9 : vector<1x128xf32> to vector<128x128xf32>
    %405 = arith.addf %403, %404 : vector<128x128xf32>
    %406 = arith.addf %405, %281 : vector<128x128xf32>
    %cst_81 = arith.constant dense<0.000000e+00> : vector<128xf32>
    %407 = vector.multi_reduction <add>, %406, %cst_81 [1] : vector<128x128xf32> to vector<128xf32>
    %408 = vector.shape_cast %407 : vector<128xf32> to vector<128x1xf32>
    %cst_82 = arith.constant 1.280000e+02 : f32
    %409 = vector.broadcast %cst_82 : f32 to vector<128x1xf32>
    %410 = arith.divf %408, %409 : vector<128x1xf32>
    %411 = vector.broadcast %410 : vector<128x1xf32> to vector<128x128xf32>
    %412 = arith.subf %406, %411 : vector<128x128xf32>
    %413 = arith.mulf %412, %412 : vector<128x128xf32>
    %cst_83 = arith.constant dense<0.000000e+00> : vector<128xf32>
    %414 = vector.multi_reduction <add>, %413, %cst_83 [1] : vector<128x128xf32> to vector<128xf32>
    %415 = vector.shape_cast %414 : vector<128xf32> to vector<128x1xf32>
    %cst_84 = arith.constant 1.280000e+02 : f32
    %416 = vector.broadcast %cst_84 : f32 to vector<128x1xf32>
    %417 = arith.divf %415, %416 : vector<128x1xf32>
    %cst_85 = arith.constant 9.99999974E-6 : f32
    %418 = vector.broadcast %cst_85 : f32 to vector<128x1xf32>
    %419 = arith.addf %417, %418 : vector<128x1xf32>
    %420 = math.rsqrt %419 : vector<128x1xf32>
    %421 = vector.broadcast %420 : vector<128x1xf32> to vector<128x128xf32>
    %422 = arith.mulf %412, %421 : vector<128x128xf32>
    %423 = vector.broadcast %11 : vector<1x128xf32> to vector<128x128xf32>
    %424 = arith.mulf %422, %423 : vector<128x128xf32>
    %425 = vector.broadcast %12 : vector<1x128xf32> to vector<128x128xf32>
    %426 = arith.addf %424, %425 : vector<128x128xf32>
    %427 = arith.addf %426, %281 : vector<128x128xf32>
    %cst_86 = arith.constant dense<0.000000e+00> : vector<128xf32>
    %428 = vector.multi_reduction <add>, %427, %cst_86 [1] : vector<128x128xf32> to vector<128xf32>
    %429 = vector.shape_cast %428 : vector<128xf32> to vector<128x1xf32>
    %cst_87 = arith.constant 1.280000e+02 : f32
    %430 = vector.broadcast %cst_87 : f32 to vector<128x1xf32>
    %431 = arith.divf %429, %430 : vector<128x1xf32>
    %432 = vector.broadcast %431 : vector<128x1xf32> to vector<128x128xf32>
    %433 = arith.subf %427, %432 : vector<128x128xf32>
    %434 = arith.mulf %433, %433 : vector<128x128xf32>
    %cst_88 = arith.constant dense<0.000000e+00> : vector<128xf32>
    %435 = vector.multi_reduction <add>, %434, %cst_88 [1] : vector<128x128xf32> to vector<128xf32>
    %436 = vector.shape_cast %435 : vector<128xf32> to vector<128x1xf32>
    %cst_89 = arith.constant 1.280000e+02 : f32
    %437 = vector.broadcast %cst_89 : f32 to vector<128x1xf32>
    %438 = arith.divf %436, %437 : vector<128x1xf32>
    %cst_90 = arith.constant 9.99999974E-6 : f32
    %439 = vector.broadcast %cst_90 : f32 to vector<128x1xf32>
    %440 = arith.addf %438, %439 : vector<128x1xf32>
    %441 = math.rsqrt %440 : vector<128x1xf32>
    %442 = vector.broadcast %441 : vector<128x1xf32> to vector<128x128xf32>
    %443 = arith.mulf %433, %442 : vector<128x128xf32>
    %444 = vector.broadcast %13 : vector<1x128xf32> to vector<128x128xf32>
    %445 = arith.mulf %443, %444 : vector<128x128xf32>
    %446 = vector.broadcast %14 : vector<1x128xf32> to vector<128x128xf32>
    %447 = arith.addf %445, %446 : vector<128x128xf32>
    %448 = arith.addf %447, %281 : vector<128x128xf32>
    %cst_91 = arith.constant dense<0.000000e+00> : vector<128xf32>
    %449 = vector.multi_reduction <add>, %448, %cst_91 [1] : vector<128x128xf32> to vector<128xf32>
    %450 = vector.shape_cast %449 : vector<128xf32> to vector<128x1xf32>
    %cst_92 = arith.constant 1.280000e+02 : f32
    %451 = vector.broadcast %cst_92 : f32 to vector<128x1xf32>
    %452 = arith.divf %450, %451 : vector<128x1xf32>
    %453 = vector.broadcast %452 : vector<128x1xf32> to vector<128x128xf32>
    %454 = arith.subf %448, %453 : vector<128x128xf32>
    %455 = arith.mulf %454, %454 : vector<128x128xf32>
    %cst_93 = arith.constant dense<0.000000e+00> : vector<128xf32>
    %456 = vector.multi_reduction <add>, %455, %cst_93 [1] : vector<128x128xf32> to vector<128xf32>
    %457 = vector.shape_cast %456 : vector<128xf32> to vector<128x1xf32>
    %cst_94 = arith.constant 1.280000e+02 : f32
    %458 = vector.broadcast %cst_94 : f32 to vector<128x1xf32>
    %459 = arith.divf %457, %458 : vector<128x1xf32>
    %cst_95 = arith.constant 9.99999974E-6 : f32
    %460 = vector.broadcast %cst_95 : f32 to vector<128x1xf32>
    %461 = arith.addf %459, %460 : vector<128x1xf32>
    %462 = math.rsqrt %461 : vector<128x1xf32>
    %463 = vector.broadcast %462 : vector<128x1xf32> to vector<128x128xf32>
    %464 = arith.mulf %454, %463 : vector<128x128xf32>
    %465 = vector.broadcast %15 : vector<1x128xf32> to vector<128x128xf32>
    %466 = arith.mulf %464, %465 : vector<128x128xf32>
    %467 = vector.broadcast %16 : vector<1x128xf32> to vector<128x128xf32>
    %468 = arith.addf %466, %467 : vector<128x128xf32>
    %cst_96 = arith.constant 5.000000e-01 : f32
    %469 = vector.broadcast %cst_96 : f32 to vector<128x128xf32>
    %470 = arith.mulf %469, %468 : vector<128x128xf32>
    %cst_97 = arith.constant 4.471500e-02 : f32
    %471 = vector.broadcast %cst_97 : f32 to vector<128x128xf32>
    %472 = arith.mulf %471, %468 : vector<128x128xf32>
    %473 = arith.mulf %472, %468 : vector<128x128xf32>
    %474 = arith.mulf %473, %468 : vector<128x128xf32>
    %475 = arith.addf %468, %474 : vector<128x128xf32>
    %cst_98 = arith.constant 0.797884583 : f32
    %476 = vector.broadcast %cst_98 : f32 to vector<128x128xf32>
    %477 = arith.mulf %476, %475 : vector<128x128xf32>
    %478 = math.tanh %477 : vector<128x128xf32>
    %cst_99 = arith.constant 1.000000e+00 : f32
    %479 = vector.broadcast %cst_99 : f32 to vector<128x128xf32>
    %480 = arith.addf %479, %478 : vector<128x128xf32>
    %481 = arith.mulf %470, %480 : vector<128x128xf32>
    %482 = arith.truncf %481 : vector<128x128xf32> to vector<128x128xbf16>
    %c0_100 = arith.constant 0 : index
    %c0_101 = arith.constant 0 : index
    %483 = vector.load %arg7[%c0_100, %c0_101] : memref<128x32xbf16, #tpu.memory_space<vmem>>, vector<128x32xbf16>
    %cst_102 = arith.constant dense<0.000000e+00> : vector<128x32xf32>
    %484 = tpu.matmul %482, %483, %cst_102 {dimension_numbers = #tpu.dot_dimension_numbers<[1], [0], [0], [1], [0, 0, 1, 1], [], []>} : vector<128x128xbf16>, vector<128x32xbf16>, vector<128x32xf32> -> vector<128x32xf32>
    %485 = vector.broadcast %17 : vector<1x32xf32> to vector<128x32xf32>
    %486 = arith.addf %484, %485 : vector<128x32xf32>
    %487 = arith.addf %256, %486 : vector<128x32xf32>
    %c0_103 = arith.constant 0 : index
    %c0_104 = arith.constant 0 : index
    %488 = vector.load %arg9[%c0_103, %c0_104] : memref<128x32xf32, #tpu.memory_space<vmem>>, vector<128x32xf32>
    tpu.vector_store %arg9[%c0_103, %c0_104], %487 {strides = array<i32>} : memref<128x32xf32, #tpu.memory_space<vmem>>, vector<128x32xf32>,
    return
  }
  func.func @transform_0(%arg0: i32) -> (i32, i32) {
    %c0_i32 = arith.constant 0 : i32
    %c0_i32_0 = arith.constant 0 : i32
    return %arg0, %c0_i32 : i32, i32
  }
  func.func @transform_1(%arg0: i32) -> (i32, i32) {
    %c0_i32 = arith.constant 0 : i32
    %c0_i32_0 = arith.constant 0 : i32
    %c0_i32_1 = arith.constant 0 : i32
    return %c0_i32, %c0_i32_0 : i32, i32
  }
  func.func @transform_2(%arg0: i32) -> (i32, i32) {
    %c0_i32 = arith.constant 0 : i32
    %c0_i32_0 = arith.constant 0 : i32
    %c0_i32_1 = arith.constant 0 : i32
    return %c0_i32, %c0_i32_0 : i32, i32
  }
  func.func @transform_3(%arg0: i32) -> (i32, i32) {
    %c0_i32 = arith.constant 0 : i32
    %c0_i32_0 = arith.constant 0 : i32
    %c0_i32_1 = arith.constant 0 : i32
    return %c0_i32, %c0_i32_0 : i32, i32
  }
  func.func @transform_4(%arg0: i32) -> (i32, i32) {
    %c0_i32 = arith.constant 0 : i32
    %c0_i32_0 = arith.constant 0 : i32
    %c0_i32_1 = arith.constant 0 : i32
    return %c0_i32, %c0_i32_0 : i32, i32
  }
  func.func @transform_5(%arg0: i32) -> (i32, i32) {
    %c0_i32 = arith.constant 0 : i32
    %c0_i32_0 = arith.constant 0 : i32
    %c0_i32_1 = arith.constant 0 : i32
    return %c0_i32, %c0_i32_0 : i32, i32
  }
  func.func @transform_6(%arg0: i32) -> (i32, i32) {
    %c0_i32 = arith.constant 0 : i32
    %c0_i32_0 = arith.constant 0 : i32
    %c0_i32_1 = arith.constant 0 : i32
    return %c0_i32, %c0_i32_0 : i32, i32
  }
  func.func @transform_7(%arg0: i32) -> (i32, i32) {
    %c0_i32 = arith.constant 0 : i32
    %c0_i32_0 = arith.constant 0 : i32
    %c0_i32_1 = arith.constant 0 : i32
    return %c0_i32, %c0_i32_0 : i32, i32
  }
  func.func @transform_8(%arg0: i32) -> (i32, i32) {
    %c0_i32 = arith.constant 0 : i32
    %c0_i32_0 = arith.constant 0 : i32
    return %arg0, %c0_i32 : i32, i32
  }
}

</mosaic_0001>

<llo_original>
// kernel: transformer_block_forward.1
$region0: #{transformer_block_forward.1}
  #allocation0 [shape = 'u32[]', space=smem, size = 0x4, offset = 0x4, fixed_abs, tag = 'smem constant byte address 0x4 - core index']
  #allocation1 [shape = 'u32[72,128]{1,0:T(1,128)}', space=vmem, size = 0x9000, scoped, tag = 'internal scratch']
  %s0 = inlined_call_operand.vmem [shape: f32[256,32], index: 0, kind: input, shape index: {}]
  %s1 = inlined_call_operand.vmem [shape: f32[128,32], index: 1, kind: input, shape index: {}]
  %s2 = inlined_call_operand.vmem [shape: f32[128,32], index: 2, kind: input, shape index: {}]
  %s3 = inlined_call_operand.vmem [shape: bf16[32,128], index: 3, kind: input, shape index: {}]
  %s4 = inlined_call_operand.vmem [shape: f32[32,32], index: 4, kind: input, shape index: {}]
  %s5 = inlined_call_operand.vmem [shape: bf16[32,128], index: 5, kind: input, shape index: {}]
  %s6 = inlined_call_operand.vmem [shape: bf16[128,32], index: 6, kind: input, shape index: {}]
  %s7 = inlined_call_operand.vmem [shape: f32[24,128], index: 7, kind: input, shape index: {}]
  %s8 = inlined_call_operand.vmem [shape: f32[256,32], index: 8, kind: output, shape index: {}]
  %s9 = sld [smem:[#allocation0]]
  $region65: #{transformer_block_forward.1} parent=0
    _
  %s11 = ssub.s32 1, %s9
  %s12 = scalar_select 0, %s11, %s9
  loop: start=0, step=1, limit=4
  $region2: #{transformer_block_forward.1} parent=0 // loop_pre_header
    _
  $region3: #{transformer_block_forward.1} parent=0 // loop_header
    %s14 = sphi 0, %s18
    %p15 = scmp.ge.s32.totalorder %s14, 4
    %s24 = sphi 0, %s26
    %s27 = sphi 0, %s24
    %s28 = sphi 0, %s27
    %s44 = sphi 0, %s28
    %s48 = sphi 0, %s48
    %s50 = sphi 0, %s48
    %s51 = sphi 0, %s50
    %s65 = sphi 0, %s51
    %s69 = sphi 0, %s69
    %s71 = sphi 0, %s69
    %s72 = sphi 0, %s71
    %s86 = sphi 0, %s72
    %s90 = sphi 0, %s90
    %s92 = sphi 0, %s90
    %s93 = sphi 0, %s92
    %s107 = sphi 0, %s93
    %s111 = sphi 0, %s111
    %s113 = sphi 0, %s111
    %s114 = sphi 0, %s113
    %s128 = sphi 0, %s114
    %s132 = sphi 0, %s132
    %s134 = sphi 0, %s132
    %s135 = sphi 0, %s134
    %s149 = sphi 0, %s135
    %s153 = sphi 0, %s153
    %s155 = sphi 0, %s153
    %s156 = sphi 0, %s155
    %s170 = sphi 0, %s156
    %s174 = sphi 0, %s174
    %s176 = sphi 0, %s174
    %s177 = sphi 0, %s176
    %s191 = sphi 0, %s177
    %s197 = sphi 0, %s199
    %s200 = sphi 0, %s197
    %s201 = sphi 0, %s200
    %s217 = sphi 0, %s201
  $region4: #{transformer_block_forward.1} parent=0 // loop_header_branch
    %17 = sbr.rel (%p15) target = $region8
  $region5: #{transformer_block_forward.1} parent=0 // loop_body
    %s19 = ssub.s32 %s14, 1
    %s20 = ssub.s32 %s14, 2
    %s21 = sadd.s32 %s14, 1
    %s22 = ssub.s32 %s14, %s21
    %p23 = scmp.eq.s32.totalorder %s22, 0
    %s25 = sadd.s32 %s24, 1
    %s26 = scalar_select %p23, %s24, %s25
    %p29 = pneg %p23
    %p30 = scmp.eq.s32.totalorder %s14, 1
    %p31 = por %p29, %p30
    %p32 = scmp.ne.s32.totalorder %s24, %s27
    %p33 = scmp.eq.s32.totalorder %s14, 0
    %p34 = por %p32, %p33
    %p35 = scmp.ne.s32.totalorder %s24, %s27
    %p36 = scmp.eq.s32.totalorder %s19, 1
    %p37 = por %p35, %p36
    %p38 = scmp.ne.s32.totalorder %s27, %s28
    %p39 = scmp.eq.s32.totalorder %s19, 0
    %p40 = por %p38, %p39
    %p41 = scmp.ne.s32.totalorder %s27, %s28
    %p42 = scmp.eq.s32.totalorder %s20, 1
    %p43 = por %p41, %p42
    %p45 = scmp.ne.s32.totalorder %s28, %s44
    %p46 = scmp.eq.s32.totalorder %s20, 0
    %p47 = por %p45, %p46
    %s49 = sadd.s32 %s48, 1
    %p52 = scmp.eq.s32.totalorder %s14, 1
    %p53 = scmp.ne.s32.totalorder %s48, %s50
    %p54 = scmp.eq.s32.totalorder %s14, 0
    %p55 = por %p53, %p54
    %p56 = scmp.ne.s32.totalorder %s48, %s50
    %p57 = scmp.eq.s32.totalorder %s19, 1
    %p58 = por %p56, %p57
    %p59 = scmp.ne.s32.totalorder %s50, %s51
    %p60 = scmp.eq.s32.totalorder %s19, 0
    %p61 = por %p59, %p60
    %p62 = scmp.ne.s32.totalorder %s50, %s51
    %p63 = scmp.eq.s32.totalorder %s20, 1
    %p64 = por %p62, %p63
    %p66 = scmp.ne.s32.totalorder %s51, %s65
    %p67 = scmp.eq.s32.totalorder %s20, 0
    %p68 = por %p66, %p67
    %s70 = sadd.s32 %s69, 1
    %p73 = scmp.eq.s32.totalorder %s14, 1
    %p74 = scmp.ne.s32.totalorder %s69, %s71
    %p75 = scmp.eq.s32.totalorder %s14, 0
    %p76 = por %p74, %p75
    %p77 = scmp.ne.s32.totalorder %s69, %s71
    %p78 = scmp.eq.s32.totalorder %s19, 1
    %p79 = por %p77, %p78
    %p80 = scmp.ne.s32.totalorder %s71, %s72
    %p81 = scmp.eq.s32.totalorder %s19, 0
    %p82 = por %p80, %p81
    %p83 = scmp.ne.s32.totalorder %s71, %s72
    %p84 = scmp.eq.s32.totalorder %s20, 1
    %p85 = por %p83, %p84
    %p87 = scmp.ne.s32.totalorder %s72, %s86
    %p88 = scmp.eq.s32.totalorder %s20, 0
    %p89 = por %p87, %p88
    %s91 = sadd.s32 %s90, 1
    %p94 = scmp.eq.s32.totalorder %s14, 1
    %p95 = scmp.ne.s32.totalorder %s90, %s92
    %p96 = scmp.eq.s32.totalorder %s14, 0
    %p97 = por %p95, %p96
    %p98 = scmp.ne.s32.totalorder %s90, %s92
    %p99 = scmp.eq.s32.totalorder %s19, 1
    %p100 = por %p98, %p99
    %p101 = scmp.ne.s32.totalorder %s92, %s93
    %p102 = scmp.eq.s32.totalorder %s19, 0
    %p103 = por %p101, %p102
    %p104 = scmp.ne.s32.totalorder %s92, %s93
    %p105 = scmp.eq.s32.totalorder %s20, 1
    %p106 = por %p104, %p105
    %p108 = scmp.ne.s32.totalorder %s93, %s107
    %p109 = scmp.eq.s32.totalorder %s20, 0
    %p110 = por %p108, %p109
    %s112 = sadd.s32 %s111, 1
    %p115 = scmp.eq.s32.totalorder %s14, 1
    %p116 = scmp.ne.s32.totalorder %s111, %s113
    %p117 = scmp.eq.s32.totalorder %s14, 0
    %p118 = por %p116, %p117
    %p119 = scmp.ne.s32.totalorder %s111, %s113
    %p120 = scmp.eq.s32.totalorder %s19, 1
    %p121 = por %p119, %p120
    %p122 = scmp.ne.s32.totalorder %s113, %s114
    %p123 = scmp.eq.s32.totalorder %s19, 0
    %p124 = por %p122, %p123
    %p125 = scmp.ne.s32.totalorder %s113, %s114
    %p126 = scmp.eq.s32.totalorder %s20, 1
    %p127 = por %p125, %p126
    %p129 = scmp.ne.s32.totalorder %s114, %s128
    %p130 = scmp.eq.s32.totalorder %s20, 0
    %p131 = por %p129, %p130
    %s133 = sadd.s32 %s132, 1
    %p136 = scmp.eq.s32.totalorder %s14, 1
    %p137 = scmp.ne.s32.totalorder %s132, %s134
    %p138 = scmp.eq.s32.totalorder %s14, 0
    %p139 = por %p137, %p138
    %p140 = scmp.ne.s32.totalorder %s132, %s134
    %p141 = scmp.eq.s32.totalorder %s19, 1
    %p142 = por %p140, %p141
    %p143 = scmp.ne.s32.totalorder %s134, %s135
    %p144 = scmp.eq.s32.totalorder %s19, 0
    %p145 = por %p143, %p144
    %p146 = scmp.ne.s32.totalorder %s134, %s135
    %p147 = scmp.eq.s32.totalorder %s20, 1
    %p148 = por %p146, %p147
    %p150 = scmp.ne.s32.totalorder %s135, %s149
    %p151 = scmp.eq.s32.totalorder %s20, 0
    %p152 = por %p150, %p151
    %s154 = sadd.s32 %s153, 1
    %p157 = scmp.eq.s32.totalorder %s14, 1
    %p158 = scmp.ne.s32.totalorder %s153, %s155
    %p159 = scmp.eq.s32.totalorder %s14, 0
    %p160 = por %p158, %p159
    %p161 = scmp.ne.s32.totalorder %s153, %s155
    %p162 = scmp.eq.s32.totalorder %s19, 1
    %p163 = por %p161, %p162
    %p164 = scmp.ne.s32.totalorder %s155, %s156
    %p165 = scmp.eq.s32.totalorder %s19, 0
    %p166 = por %p164, %p165
    %p167 = scmp.ne.s32.totalorder %s155, %s156
    %p168 = scmp.eq.s32.totalorder %s20, 1
    %p169 = por %p167, %p168
    %p171 = scmp.ne.s32.totalorder %s156, %s170
    %p172 = scmp.eq.s32.totalorder %s20, 0
    %p173 = por %p171, %p172
    %s175 = sadd.s32 %s174, 1
    %p178 = scmp.eq.s32.totalorder %s14, 1
    %p179 = scmp.ne.s32.totalorder %s174, %s176
    %p180 = scmp.eq.s32.totalorder %s14, 0
    %p181 = por %p179, %p180
    %p182 = scmp.ne.s32.totalorder %s174, %s176
    %p183 = scmp.eq.s32.totalorder %s19, 1
    %p184 = por %p182, %p183
    %p185 = scmp.ne.s32.totalorder %s176, %s177
    %p186 = scmp.eq.s32.totalorder %s19, 0
    %p187 = por %p185, %p186
    %p188 = scmp.ne.s32.totalorder %s176, %s177
    %p189 = scmp.eq.s32.totalorder %s20, 1
    %p190 = por %p188, %p189
    %p192 = scmp.ne.s32.totalorder %s177, %s191
    %p193 = scmp.eq.s32.totalorder %s20, 0
    %p194 = por %p192, %p193
    %s195 = ssub.s32 %s14, %s21
    %p196 = scmp.eq.s32.totalorder %s195, 0
    %s198 = sadd.s32 %s197, 1
    %s199 = scalar_select %p196, %s197, %s198
    %p202 = pneg %p196
    %p203 = scmp.eq.s32.totalorder %s14, 1
    %p204 = por %p202, %p203
    %p205 = scmp.ne.s32.totalorder %s197, %s200
    %p206 = scmp.eq.s32.totalorder %s14, 0
    %p207 = por %p205, %p206
    %p208 = scmp.ne.s32.totalorder %s197, %s200
    %p209 = scmp.eq.s32.totalorder %s19, 1
    %p210 = por %p208, %p209
    %p211 = scmp.ne.s32.totalorder %s200, %s201
    %p212 = scmp.eq.s32.totalorder %s19, 0
    %p213 = por %p211, %p212
    %p214 = scmp.ne.s32.totalorder %s200, %s201
    %p215 = scmp.eq.s32.totalorder %s20, 1
    %p216 = por %p214, %p215
    %p218 = scmp.ne.s32.totalorder %s201, %s217
    %p219 = scmp.eq.s32.totalorder %s20, 0
    %p220 = por %p218, %p219
    %p221 = scmp.le.s32.totalorder 1, %s14
    %p222 = scmp.lt.s32.totalorder %s14, 3
    %p223 = pnand %p221, %p222
    %p224 = pneg %p223
    // Predicated region
    $region9: #{transformer_block_forward.1} parent=5 // pred_check
      _
    $region10: #{transformer_block_forward.1} parent=5 // pred_check_branch
      %226 = sbr.rel (%p223) target = $region12
    $region11: #{transformer_block_forward.1} parent=5 // pred_region
      %s227 = ssub.s32 %s14, 1
      // Predicated region
      $region13: #{transformer_block_forward.1} parent=11 // pred_check
        %p228 = pneg %p61
      $region14: #{transformer_block_forward.1} parent=11 // pred_check_branch
        %230 = sbr.rel (%p228) target = $region16
      $region15: #{transformer_block_forward.1} parent=11 // pred_region
        _
      $region16: #{transformer_block_forward.1} parent=11 // pred_fallthru
        _
      // Predicated region
      $region17: #{transformer_block_forward.1} parent=11 // pred_check
        %p231 = pneg %p82
      $region18: #{transformer_block_forward.1} parent=11 // pred_check_branch
        %233 = sbr.rel (%p231) target = $region20
      $region19: #{transformer_block_forward.1} parent=11 // pred_region
        _
      $region20: #{transformer_block_forward.1} parent=11 // pred_fallthru
        _
      // Predicated region
      $region21: #{transformer_block_forward.1} parent=11 // pred_check
        %p234 = pneg %p103
      $region22: #{transformer_block_forward.1} parent=11 // pred_check_branch
        %236 = sbr.rel (%p234) target = $region24
      $region23: #{transformer_block_forward.1} parent=11 // pred_region
        _
      $region24: #{transformer_block_forward.1} parent=11 // pred_fallthru
        _
      // Predicated region
      $region25: #{transformer_block_forward.1} parent=11 // pred_check
        %p237 = pneg %p124
      $region26: #{transformer_block_forward.1} parent=11 // pred_check_branch
        %239 = sbr.rel (%p237) target = $region28
      $region27: #{transformer_block_forward.1} parent=11 // pred_region
        _
      $region28: #{transformer_block_forward.1} parent=11 // pred_fallthru
        _
      // Predicated region
      $region29: #{transformer_block_forward.1} parent=11 // pred_check
        %p240 = pneg %p145
      $region30: #{transformer_block_forward.1} parent=11 // pred_check_branch
        %242 = sbr.rel (%p240) target = $region32
      $region31: #{transformer_block_forward.1} parent=11 // pred_region
        _
      $region32: #{transformer_block_forward.1} parent=11 // pred_fallthru
        _
      // Predicated region
      $region33: #{transformer_block_forward.1} parent=11 // pred_check
        %p243 = pneg %p166
      $region34: #{transformer_block_forward.1} parent=11 // pred_check_branch
        %245 = sbr.rel (%p243) target = $region36
      $region35: #{transformer_block_forward.1} parent=11 // pred_region
        _
      $region36: #{transformer_block_forward.1} parent=11 // pred_fallthru
        _
      // Predicated region
      $region37: #{transformer_block_forward.1} parent=11 // pred_check
        %p246 = pneg %p187
      $region38: #{transformer_block_forward.1} parent=11 // pred_check_branch
        %248 = sbr.rel (%p246) target = $region40
      $region39: #{transformer_block_forward.1} parent=11 // pred_region
        _
      $region40: #{transformer_block_forward.1} parent=11 // pred_fallthru
        _
    $region12: #{transformer_block_forward.1} parent=5 // pred_fallthru
      _
    %p249 = scmp.lt.s32.totalorder %s14, 2
    // Predicated region
    $region41: #{transformer_block_forward.1} parent=5 // pred_check
      %p250 = pneg %p249
    $region42: #{transformer_block_forward.1} parent=5 // pred_check_branch
      %252 = sbr.rel (%p250) target = $region44
    $region43: #{transformer_block_forward.1} parent=5 // pred_region
      // Predicated region
      $region45: #{transformer_block_forward.1} parent=43 // pred_check
        %p253 = pneg %p34
      $region46: #{transformer_block_forward.1} parent=43 // pred_check_branch
        %255 = sbr.rel (%p253) target = $region48
      $region47: #{transformer_block_forward.1} parent=43 // pred_region
        %s256 = smul.u32 16, %s14
        %p257 = scmp.lt.s32.totalorder %s256, 31
        %s258 = scalar_select %p257, %s256, 31
        %s259 = smul.addr %s258, 8
        %s260 = scalar_lea.vmem %s0, %s259
        %s261 = smul.u32 16, %s14
      $region48: #{transformer_block_forward.1} parent=43 // pred_fallthru
        _
    $region44: #{transformer_block_forward.1} parent=5 // pred_fallthru
      _
    %p262 = scmp.le.s32.totalorder 1, %s14
    %p263 = scmp.lt.s32.totalorder %s14, 3
    %p264 = pnand %p262, %p263
    %p265 = pneg %p264
    // Predicated region
    $region49: #{transformer_block_forward.1} parent=5 // pred_check
      _
    $region50: #{transformer_block_forward.1} parent=5 // pred_check_branch
      %267 = sbr.rel (%p264) target = $region52
    $region51: #{transformer_block_forward.1} parent=5 // pred_region
      %s268 = ssub.s32 %s14, 1
      %s269 = smul.u32 16, %s19
      %p270 = scmp.lt.s32.totalorder %s269, 31
      %s271 = scalar_select %p270, %s269, 31
      %s272 = smul.addr %s271, 8
      %s273 = scalar_lea.vmem %s0, %s272
      %p274 = pneg %p40
      %p275 = pneg %p37
      %p276 = pneg %p61
      %p277 = pneg %p58
      %p278 = pneg %p82
      %p279 = pneg %p79
      %p280 = pneg %p103
      %p281 = pneg %p100
      %p282 = pneg %p124
      %p283 = pneg %p121
      %p284 = pneg %p145
      %p285 = pneg %p142
      %p286 = pneg %p166
      %p287 = pneg %p163
      %p288 = pneg %p187
      %p289 = pneg %p184
      %p290 = pneg %p213
      %p291 = pneg %p210
      %s292 = smul.u32 16, %s19
      %p293 = scmp.lt.s32.totalorder %s292, 31
      %s294 = scalar_select %p293, %s292, 31
      %s295 = smul.addr %s294, 8
      %s296 = scalar_lea.vmem %s8, %s295
      %s297 = smul.u32 16, %s19
      %p298 = scmp.lt.s32.totalorder %s297, 31
      %s299 = scalar_select %p298, %s297, 31
      %s300 = smul.addr %s299, 8
      %s301 = scalar_lea.vmem %s0, %s300
      %s302 = smul.u32 16, %s19
      %s303 = smul.u32 16, %s19
      %p304 = scmp.lt.s32.totalorder %s303, 31
      %s305 = scalar_select %p304, %s303, 31
      %s306 = smul.addr %s305, 8
      %s307 = scalar_lea.vmem %s8, %s306
      %s308 = smul.u32 16, %s19
      %v310 = vld [vmem:[%s301] sm:$0xff]
      %v311 = vld [vmem:[%s301 + $0x8] sm:$0xff]
      %v312 = vld [vmem:[%s301 + $0x10] sm:$0xff]
      %v313 = vld [vmem:[%s301 + $0x18] sm:$0xff]
      %v314 = vld [vmem:[%s301 + $0x20] sm:$0xff]
      %v315 = vld [vmem:[%s301 + $0x28] sm:$0xff]
      %v316 = vld [vmem:[%s301 + $0x30] sm:$0xff]
      %v317 = vld [vmem:[%s301 + $0x38] sm:$0xff]
      %v318 = vld [vmem:[%s301 + $0x40] sm:$0xff]
      %v319 = vld [vmem:[%s301 + $0x48] sm:$0xff]
      %v320 = vld [vmem:[%s301 + $0x50] sm:$0xff]
      %v321 = vld [vmem:[%s301 + $0x58] sm:$0xff]
      %v322 = vld [vmem:[%s301 + $0x60] sm:$0xff]
      %v323 = vld [vmem:[%s301 + $0x68] sm:$0xff]
      %v324 = vld [vmem:[%s301 + $0x70] sm:$0xff]
      %v325 = vld [vmem:[%s301 + $0x78] sm:$0xff]
      %v326 = vld [vmem:[%s7] sm:$0xff]
      %v327 = vld [vmem:[%s7 + $0x8] sm:$0xff]
      %v328 = vld [vmem:[%s7 + $0x10] sm:$0xff]
      %vm329 = vcmask 261120
      %v330 = vsel %vm329, %v310, 0.0
      %331 = vadd.xlane.f32.xlu0 %v330
      %v332 = vpop.xlane.xlu0 %331
      %v333 = vsel %vm329, %v311, 0.0
      %334 = vadd.xlane.f32.xlu0 %v333
      %v335 = vpop.xlane.xlu0 %334
      %v336 = vsel %vm329, %v312, 0.0
      %337 = vadd.xlane.f32.xlu0 %v336
      %v338 = vpop.xlane.xlu0 %337
      %v339 = vsel %vm329, %v313, 0.0
      %340 = vadd.xlane.f32.xlu0 %v339
      %v341 = vpop.xlane.xlu0 %340
      %v342 = vsel %vm329, %v314, 0.0
      %343 = vadd.xlane.f32.xlu0 %v342
      %v344 = vpop.xlane.xlu0 %343
      %v345 = vsel %vm329, %v315, 0.0
      %346 = vadd.xlane.f32.xlu0 %v345
      %v347 = vpop.xlane.xlu0 %346
      %v348 = vsel %vm329, %v316, 0.0
      %349 = vadd.xlane.f32.xlu0 %v348
      %v350 = vpop.xlane.xlu0 %349
      %v351 = vsel %vm329, %v317, 0.0
      %352 = vadd.xlane.f32.xlu0 %v351
      %v353 = vpop.xlane.xlu0 %352
      %v354 = vsel %vm329, %v318, 0.0
      %355 = vadd.xlane.f32.xlu0 %v354
      %v356 = vpop.xlane.xlu0 %355
      %v357 = vsel %vm329, %v319, 0.0
      %358 = vadd.xlane.f32.xlu0 %v357
      %v359 = vpop.xlane.xlu0 %358
      %v360 = vsel %vm329, %v320, 0.0
      %361 = vadd.xlane.f32.xlu0 %v360
      %v362 = vpop.xlane.xlu0 %361
      %v363 = vsel %vm329, %v321, 0.0
      %364 = vadd.xlane.f32.xlu0 %v363
      %v365 = vpop.xlane.xlu0 %364
      %v366 = vsel %vm329, %v322, 0.0
      %367 = vadd.xlane.f32.xlu0 %v366
      %v368 = vpop.xlane.xlu0 %367
      %v369 = vsel %vm329, %v323, 0.0
      %370 = vadd.xlane.f32.xlu0 %v369
      %v371 = vpop.xlane.xlu0 %370
      %v372 = vsel %vm329, %v324, 0.0
      %373 = vadd.xlane.f32.xlu0 %v372
      %v374 = vpop.xlane.xlu0 %373
      %v375 = vsel %vm329, %v325, 0.0
      %376 = vadd.xlane.f32.xlu0 %v375
      %v377 = vpop.xlane.xlu0 %376
      %v378 = vrcp.pop 32.0
      %v379 = vmul.f32 32.0, %v378
      %v380 = vsub.f32 1.0, %v379
      %v381 = vmul.f32 %v378, %v380
      %v382 = vadd.f32 %v378, %v381
      %vm383 = vweird.f32 %v378
      %v384 = vsel %vm383, %v378, %v382
      %v385 = vmul.f32 %v332, %v384
      %v386 = vmul.f32 %v335, %v384
      %v387 = vmul.f32 %v338, %v384
      %v388 = vmul.f32 %v341, %v384
      %v389 = vmul.f32 %v344, %v384
      %v390 = vmul.f32 %v347, %v384
      %v391 = vmul.f32 %v350, %v384
      %v392 = vmul.f32 %v353, %v384
      %v393 = vmul.f32 %v356, %v384
      %v394 = vmul.f32 %v359, %v384
      %v395 = vmul.f32 %v362, %v384
      %v396 = vmul.f32 %v365, %v384
      %v397 = vmul.f32 %v368, %v384
      %v398 = vmul.f32 %v371, %v384
      %v399 = vmul.f32 %v374, %v384
      %v400 = vmul.f32 %v377, %v384
      %v401 = vsub.f32 %v310, %v385
      %v402 = vsub.f32 %v311, %v386
      %v403 = vsub.f32 %v312, %v387
      %v404 = vsub.f32 %v313, %v388
      %v405 = vsub.f32 %v314, %v389
      %v406 = vsub.f32 %v315, %v390
      %v407 = vsub.f32 %v316, %v391
      %v408 = vsub.f32 %v317, %v392
      %v409 = vsub.f32 %v318, %v393
      %v410 = vsub.f32 %v319, %v394
      %v411 = vsub.f32 %v320, %v395
      %v412 = vsub.f32 %v321, %v396
      %v413 = vsub.f32 %v322, %v397
      %v414 = vsub.f32 %v323, %v398
      %v415 = vsub.f32 %v324, %v399
      %v416 = vsub.f32 %v325, %v400
      %v417 = vmul.f32 %v401, %v401
      %v418 = vmul.f32 %v402, %v402
      %v419 = vmul.f32 %v403, %v403
      %v420 = vmul.f32 %v404, %v404
      %v421 = vmul.f32 %v405, %v405
      %v422 = vmul.f32 %v406, %v406
      %v423 = vmul.f32 %v407, %v407
      %v424 = vmul.f32 %v408, %v408
      %v425 = vmul.f32 %v409, %v409
      %v426 = vmul.f32 %v410, %v410
      %v427 = vmul.f32 %v411, %v411
      %v428 = vmul.f32 %v412, %v412
      %v429 = vmul.f32 %v413, %v413
      %v430 = vmul.f32 %v414, %v414
      %v431 = vmul.f32 %v415, %v415
      %v432 = vmul.f32 %v416, %v416
      %v433 = vsel %vm329, %v417, 0.0
      %434 = vadd.xlane.f32.xlu0 %v433
      %v435 = vpop.xlane.xlu0 %434
      %v436 = vsel %vm329, %v418, 0.0
      %437 = vadd.xlane.f32.xlu0 %v436
      %v438 = vpop.xlane.xlu0 %437
      %v439 = vsel %vm329, %v419, 0.0
      %440 = vadd.xlane.f32.xlu0 %v439
      %v441 = vpop.xlane.xlu0 %440
      %v442 = vsel %vm329, %v420, 0.0
      %443 = vadd.xlane.f32.xlu0 %v442
      %v444 = vpop.xlane.xlu0 %443
      %v445 = vsel %vm329, %v421, 0.0
      %446 = vadd.xlane.f32.xlu0 %v445
      %v447 = vpop.xlane.xlu0 %446
      %v448 = vsel %vm329, %v422, 0.0
      %449 = vadd.xlane.f32.xlu0 %v448
      %v450 = vpop.xlane.xlu0 %449
      %v451 = vsel %vm329, %v423, 0.0
      %452 = vadd.xlane.f32.xlu0 %v451
      %v453 = vpop.xlane.xlu0 %452
      %v454 = vsel %vm329, %v424, 0.0
      %455 = vadd.xlane.f32.xlu0 %v454
      %v456 = vpop.xlane.xlu0 %455
      %v457 = vsel %vm329, %v425, 0.0
      %458 = vadd.xlane.f32.xlu0 %v457
      %v459 = vpop.xlane.xlu0 %458
      %v460 = vsel %vm329, %v426, 0.0
      %461 = vadd.xlane.f32.xlu0 %v460
      %v462 = vpop.xlane.xlu0 %461
      %v463 = vsel %vm329, %v427, 0.0
      %464 = vadd.xlane.f32.xlu0 %v463
      %v465 = vpop.xlane.xlu0 %464
      %v466 = vsel %vm329, %v428, 0.0
      %467 = vadd.xlane.f32.xlu0 %v466
      %v468 = vpop.xlane.xlu0 %467
      %v469 = vsel %vm329, %v429, 0.0
      %470 = vadd.xlane.f32.xlu0 %v469
      %v471 = vpop.xlane.xlu0 %470
      %v472 = vsel %vm329, %v430, 0.0
      %473 = vadd.xlane.f32.xlu0 %v472
      %v474 = vpop.xlane.xlu0 %473
      %v475 = vsel %vm329, %v431, 0.0
      %476 = vadd.xlane.f32.xlu0 %v475
      %v477 = vpop.xlane.xlu0 %476
      %v478 = vsel %vm329, %v432, 0.0
      %479 = vadd.xlane.f32.xlu0 %v478
      %v480 = vpop.xlane.xlu0 %479
      %v481 = vmul.f32 %v435, %v384
      %v482 = vmul.f32 %v438, %v384
      %v483 = vmul.f32 %v441, %v384
      %v484 = vmul.f32 %v444, %v384
      %v485 = vmul.f32 %v447, %v384
      %v486 = vmul.f32 %v450, %v384
      %v487 = vmul.f32 %v453, %v384
      %v488 = vmul.f32 %v456, %v384
      %v489 = vmul.f32 %v459, %v384
      %v490 = vmul.f32 %v462, %v384
      %v491 = vmul.f32 %v465, %v384
      %v492 = vmul.f32 %v468, %v384
      %v493 = vmul.f32 %v471, %v384
      %v494 = vmul.f32 %v474, %v384
      %v495 = vmul.f32 %v477, %v384
      %v496 = vmul.f32 %v480, %v384
      %v497 = vadd.f32 %v481, 1e-05
      %v498 = vadd.f32 %v482, 1e-05
      %v499 = vadd.f32 %v483, 1e-05
      %v500 = vadd.f32 %v484, 1e-05
      %v501 = vadd.f32 %v485, 1e-05
      %v502 = vadd.f32 %v486, 1e-05
      %v503 = vadd.f32 %v487, 1e-05
      %v504 = vadd.f32 %v488, 1e-05
      %v505 = vadd.f32 %v489, 1e-05
      %v506 = vadd.f32 %v490, 1e-05
      %v507 = vadd.f32 %v491, 1e-05
      %v508 = vadd.f32 %v492, 1e-05
      %v509 = vadd.f32 %v493, 1e-05
      %v510 = vadd.f32 %v494, 1e-05
      %v511 = vadd.f32 %v495, 1e-05
      %v512 = vadd.f32 %v496, 1e-05
      %v513 = vrsqrt.pop %v497
      %v514 = vmul.f32 %v513, %v497
      %v515 = vmul.f32 %v514, %v513
      %v516 = vmul.f32 0.5, %v515
      %v517 = vsub.f32 1.5, %v516
      %v518 = vmul.f32 %v513, %v517
      %vm519 = vweird.f32 %v497
      %vm520 = vweird.f32 %v513
      %vm521 = vmor %vm519, %vm520
      %v522 = vsel %vm521, %v513, %v518
      %v523 = vrsqrt.pop %v498
      %v524 = vmul.f32 %v523, %v498
      %v525 = vmul.f32 %v524, %v523
      %v526 = vmul.f32 0.5, %v525
      %v527 = vsub.f32 1.5, %v526
      %v528 = vmul.f32 %v523, %v527
      %vm529 = vweird.f32 %v498
      %vm530 = vweird.f32 %v523
      %vm531 = vmor %vm529, %vm530
      %v532 = vsel %vm531, %v523, %v528
      %v533 = vrsqrt.pop %v499
      %v534 = vmul.f32 %v533, %v499
      %v535 = vmul.f32 %v534, %v533
      %v536 = vmul.f32 0.5, %v535
      %v537 = vsub.f32 1.5, %v536
      %v538 = vmul.f32 %v533, %v537
      %vm539 = vweird.f32 %v499
      %vm540 = vweird.f32 %v533
      %vm541 = vmor %vm539, %vm540
      %v542 = vsel %vm541, %v533, %v538
      %v543 = vrsqrt.pop %v500
      %v544 = vmul.f32 %v543, %v500
      %v545 = vmul.f32 %v544, %v543
      %v546 = vmul.f32 0.5, %v545
      %v547 = vsub.f32 1.5, %v546
      %v548 = vmul.f32 %v543, %v547
      %vm549 = vweird.f32 %v500
      %vm550 = vweird.f32 %v543
      %vm551 = vmor %vm549, %vm550
      %v552 = vsel %vm551, %v543, %v548
      %v553 = vrsqrt.pop %v501
      %v554 = vmul.f32 %v553, %v501
      %v555 = vmul.f32 %v554, %v553
      %v556 = vmul.f32 0.5, %v555
      %v557 = vsub.f32 1.5, %v556
      %v558 = vmul.f32 %v553, %v557
      %vm559 = vweird.f32 %v501
      %vm560 = vweird.f32 %v553
      %vm561 = vmor %vm559, %vm560
      %v562 = vsel %vm561, %v553, %v558
      %v563 = vrsqrt.pop %v502
      %v564 = vmul.f32 %v563, %v502
      %v565 = vmul.f32 %v564, %v563
      %v566 = vmul.f32 0.5, %v565
      %v567 = vsub.f32 1.5, %v566
      %v568 = vmul.f32 %v563, %v567
      %vm569 = vweird.f32 %v502
      %vm570 = vweird.f32 %v563
      %vm571 = vmor %vm569, %vm570
      %v572 = vsel %vm571, %v563, %v568
      %v573 = vrsqrt.pop %v503
      %v574 = vmul.f32 %v573, %v503
      %v575 = vmul.f32 %v574, %v573
      %v576 = vmul.f32 0.5, %v575
      %v577 = vsub.f32 1.5, %v576
      %v578 = vmul.f32 %v573, %v577
      %vm579 = vweird.f32 %v503
      %vm580 = vweird.f32 %v573
      %vm581 = vmor %vm579, %vm580
      %v582 = vsel %vm581, %v573, %v578
      %v583 = vrsqrt.pop %v504
      %v584 = vmul.f32 %v583, %v504
      %v585 = vmul.f32 %v584, %v583
      %v586 = vmul.f32 0.5, %v585
      %v587 = vsub.f32 1.5, %v586
      %v588 = vmul.f32 %v583, %v587
      %vm589 = vweird.f32 %v504
      %vm590 = vweird.f32 %v583
      %vm591 = vmor %vm589, %vm590
      %v592 = vsel %vm591, %v583, %v588
      %v593 = vrsqrt.pop %v505
      %v594 = vmul.f32 %v593, %v505
      %v595 = vmul.f32 %v594, %v593
      %v596 = vmul.f32 0.5, %v595
      %v597 = vsub.f32 1.5, %v596
      %v598 = vmul.f32 %v593, %v597
      %vm599 = vweird.f32 %v505
      %vm600 = vweird.f32 %v593
      %vm601 = vmor %vm599, %vm600
      %v602 = vsel %vm601, %v593, %v598
      %v603 = vrsqrt.pop %v506
      %v604 = vmul.f32 %v603, %v506
      %v605 = vmul.f32 %v604, %v603
      %v606 = vmul.f32 0.5, %v605
      %v607 = vsub.f32 1.5, %v606
      %v608 = vmul.f32 %v603, %v607
      %vm609 = vweird.f32 %v506
      %vm610 = vweird.f32 %v603
      %vm611 = vmor %vm609, %vm610
      %v612 = vsel %vm611, %v603, %v608
      %v613 = vrsqrt.pop %v507
      %v614 = vmul.f32 %v613, %v507
      %v615 = vmul.f32 %v614, %v613
      %v616 = vmul.f32 0.5, %v615
      %v617 = vsub.f32 1.5, %v616
      %v618 = vmul.f32 %v613, %v617
      %vm619 = vweird.f32 %v507
      %vm620 = vweird.f32 %v613
      %vm621 = vmor %vm619, %vm620
      %v622 = vsel %vm621, %v613, %v618
      %v623 = vrsqrt.pop %v508
      %v624 = vmul.f32 %v623, %v508
      %v625 = vmul.f32 %v624, %v623
      %v626 = vmul.f32 0.5, %v625
      %v627 = vsub.f32 1.5, %v626
      %v628 = vmul.f32 %v623, %v627
      %vm629 = vweird.f32 %v508
      %vm630 = vweird.f32 %v623
      %vm631 = vmor %vm629, %vm630
      %v632 = vsel %vm631, %v623, %v628
      %v633 = vrsqrt.pop %v509
      %v634 = vmul.f32 %v633, %v509
      %v635 = vmul.f32 %v634, %v633
      %v636 = vmul.f32 0.5, %v635
      %v637 = vsub.f32 1.5, %v636
      %v638 = vmul.f32 %v633, %v637
      %vm639 = vweird.f32 %v509
      %vm640 = vweird.f32 %v633
      %vm641 = vmor %vm639, %vm640
      %v642 = vsel %vm641, %v633, %v638
      %v643 = vrsqrt.pop %v510
      %v644 = vmul.f32 %v643, %v510
      %v645 = vmul.f32 %v644, %v643
      %v646 = vmul.f32 0.5, %v645
      %v647 = vsub.f32 1.5, %v646
      %v648 = vmul.f32 %v643, %v647
      %vm649 = vweird.f32 %v510
      %vm650 = vweird.f32 %v643
      %vm651 = vmor %vm649, %vm650
      %v652 = vsel %vm651, %v643, %v648
      %v653 = vrsqrt.pop %v511
      %v654 = vmul.f32 %v653, %v511
      %v655 = vmul.f32 %v654, %v653
      %v656 = vmul.f32 0.5, %v655
      %v657 = vsub.f32 1.5, %v656
      %v658 = vmul.f32 %v653, %v657
      %vm659 = vweird.f32 %v511
      %vm660 = vweird.f32 %v653
      %vm661 = vmor %vm659, %vm660
      %v662 = vsel %vm661, %v653, %v658
      %v663 = vrsqrt.pop %v512
      %v664 = vmul.f32 %v663, %v512
      %v665 = vmul.f32 %v664, %v663
      %v666 = vmul.f32 0.5, %v665
      %v667 = vsub.f32 1.5, %v666
      %v668 = vmul.f32 %v663, %v667
      %vm669 = vweird.f32 %v512
      %vm670 = vweird.f32 %v663
      %vm671 = vmor %vm669, %vm670
      %v672 = vsel %vm671, %v663, %v668
      %v673 = vmul.f32 %v401, %v522
      %v674 = vmul.f32 %v402, %v532
      %v675 = vmul.f32 %v403, %v542
      %v676 = vmul.f32 %v404, %v552
      %v677 = vmul.f32 %v405, %v562
      %v678 = vmul.f32 %v406, %v572
      %v679 = vmul.f32 %v407, %v582
      %v680 = vmul.f32 %v408, %v592
      %v681 = vmul.f32 %v409, %v602
      %v682 = vmul.f32 %v410, %v612
      %v683 = vmul.f32 %v411, %v622
      %v684 = vmul.f32 %v412, %v632
      %v685 = vmul.f32 %v413, %v642
      %v686 = vmul.f32 %v414, %v652
      %v687 = vmul.f32 %v415, %v662
      %v688 = vmul.f32 %v416, %v672
      %v689 = vperm.slane %v326, 0
      %v690 = vmul.f32 %v673, %v689
      %v691 = vmul.f32 %v674, %v689
      %v692 = vmul.f32 %v675, %v689
      %v693 = vmul.f32 %v676, %v689
      %v694 = vmul.f32 %v677, %v689
      %v695 = vmul.f32 %v678, %v689
      %v696 = vmul.f32 %v679, %v689
      %v697 = vmul.f32 %v680, %v689
      %v698 = vmul.f32 %v681, %v689
      %v699 = vmul.f32 %v682, %v689
      %v700 = vmul.f32 %v683, %v689
      %v701 = vmul.f32 %v684, %v689
      %v702 = vmul.f32 %v685, %v689
      %v703 = vmul.f32 %v686, %v689
      %v704 = vmul.f32 %v687, %v689
      %v705 = vmul.f32 %v688, %v689
      %v706 = vperm.slane %v326, 1
      %v707 = vadd.f32 %v690, %v706
      %v708 = vadd.f32 %v691, %v706
      %v709 = vadd.f32 %v692, %v706
      %v710 = vadd.f32 %v693, %v706
      %v711 = vadd.f32 %v694, %v706
      %v712 = vadd.f32 %v695, %v706
      %v713 = vadd.f32 %v696, %v706
      %v714 = vadd.f32 %v697, %v706
      %v715 = vadd.f32 %v698, %v706
      %v716 = vadd.f32 %v699, %v706
      %v717 = vadd.f32 %v700, %v706
      %v718 = vadd.f32 %v701, %v706
      %v719 = vadd.f32 %v702, %v706
      %v720 = vadd.f32 %v703, %v706
      %v721 = vadd.f32 %v704, %v706
      %v722 = vadd.f32 %v705, %v706
      %v723 = vpack.c.bf16 %v708, %v707
      %v724 = vpack.c.bf16 %v710, %v709
      %v725 = vpack.c.bf16 %v712, %v711
      %v726 = vpack.c.bf16 %v714, %v713
      %v727 = vpack.c.bf16 %v716, %v715
      %v728 = vpack.c.bf16 %v718, %v717
      %v729 = vpack.c.bf16 %v720, %v719
      %v730 = vpack.c.bf16 %v722, %v721
      %v731 = vld [vmem:[%s3] sm:$0xf]
      %v732 = vld [vmem:[%s3 + $0x4] sm:$0xf]
      %v733 = vld [vmem:[%s3 + $0x8] sm:$0xf]
      %v734 = vld [vmem:[%s3 + $0xc] sm:$0xf]
      %v735 = vperm.slane %v326, 4
      %v740 = vunpack.c.l.b16 %v731
      %v741 = vunpack.c.l.b16 %v732
      %v742 = vunpack.c.l.b16 %v733
      %v743 = vunpack.c.l.b16 %v734
      %v744 = vpack.c.b16 %v741, %v740
      %v745 = vpack.c.b16 %v743, %v742
      %v749 = vsel %vm329, %v723, 0
      %v752 = vsel %vm329, %v724, 0
      %v755 = vsel %vm329, %v725, 0
      %v758 = vsel %vm329, %v726, 0
      %v761 = vsel %vm329, %v727, 0
      %v764 = vsel %vm329, %v728, 0
      %v767 = vsel %vm329, %v729, 0
      %v770 = vsel %vm329, %v730, 0
      %772 = vmatpush.bf16.msra.mxu0 0
      %773 = vmatpush.bf16.msra.mxu0 0
      %774 = vmatpush.bf16.msra.mxu0 0
      %775 = vmatpush.bf16.msra.mxu0 0
      %776 = vmatpush.bf16.msra.mxu0 0
      %777 = vmatpush.bf16.msra.mxu0 0
      %778 = vmatpush.bf16.msra.mxu0 %v745
      %779 = vmatpush.bf16.msra.mxu0 %v744
      %780 = vmatmul.bf16.gmra.mxu0 %v749
      %v781 = vpop.f32.mrf.mxu0
      %v782 = vadd.f32 %v735, %v781
      %v783 = vpop.f32.mrf.mxu0
      %v784 = vadd.f32 %v735, %v783
      %785 = vmatmul.bf16.gmra.mxu0 %v752
      %v786 = vpop.f32.mrf.mxu0
      %v787 = vadd.f32 %v735, %v786
      %v788 = vpop.f32.mrf.mxu0
      %v789 = vadd.f32 %v735, %v788
      %790 = vmatmul.bf16.gmra.mxu0 %v755
      %v791 = vpop.f32.mrf.mxu0
      %v792 = vadd.f32 %v735, %v791
      %v793 = vpop.f32.mrf.mxu0
      %v794 = vadd.f32 %v735, %v793
      %795 = vmatmul.bf16.gmra.mxu0 %v758
      %v796 = vpop.f32.mrf.mxu0
      %v797 = vadd.f32 %v735, %v796
      %v798 = vpop.f32.mrf.mxu0
      %v799 = vadd.f32 %v735, %v798
      %800 = vmatmul.bf16.gmra.mxu0 %v761
      %v801 = vpop.f32.mrf.mxu0
      %v802 = vadd.f32 %v735, %v801
      %v803 = vpop.f32.mrf.mxu0
      %v804 = vadd.f32 %v735, %v803
      %805 = vmatmul.bf16.gmra.mxu0 %v764
      %v806 = vpop.f32.mrf.mxu0
      %v807 = vadd.f32 %v735, %v806
      %v808 = vpop.f32.mrf.mxu0
      %v809 = vadd.f32 %v735, %v808
      %810 = vmatmul.bf16.gmra.mxu0 %v767
      %v811 = vpop.f32.mrf.mxu0
      %v812 = vadd.f32 %v735, %v811
      %v813 = vpop.f32.mrf.mxu0
      %v814 = vadd.f32 %v735, %v813
      %815 = vmatmul.bf16.gmra.mxu0 %v770
      %v816 = vpop.f32.mrf.mxu0
      %v817 = vadd.f32 %v735, %v816
      %v818 = vpop.f32.mrf.mxu0
      %v819 = vadd.f32 %v735, %v818
      %820 = vdwg.mxu0
      %v821 = vld [vmem:[%s1] sm:$0xff]
      %v822 = vld [vmem:[%s1 + $0x8] sm:$0xff]
      %v823 = vld [vmem:[%s1 + $0x10] sm:$0xff]
      %v824 = vld [vmem:[%s1 + $0x18] sm:$0xff]
      %v825 = vld [vmem:[%s1 + $0x20] sm:$0xff]
      %v826 = vld [vmem:[%s1 + $0x28] sm:$0xff]
      %v827 = vld [vmem:[%s1 + $0x30] sm:$0xff]
      %v828 = vld [vmem:[%s1 + $0x38] sm:$0xff]
      %v829 = vld [vmem:[%s1 + $0x40] sm:$0xff]
      %v830 = vld [vmem:[%s1 + $0x48] sm:$0xff]
      %v831 = vld [vmem:[%s1 + $0x50] sm:$0xff]
      %v832 = vld [vmem:[%s1 + $0x58] sm:$0xff]
      %v833 = vld [vmem:[%s1 + $0x60] sm:$0xff]
      %v834 = vld [vmem:[%s1 + $0x68] sm:$0xff]
      %v835 = vld [vmem:[%s1 + $0x70] sm:$0xff]
      %v836 = vld [vmem:[%s1 + $0x78] sm:$0xff]
      %v837 = vmul.f32 %v782, %v821
      %v838 = vmul.f32 %v784, %v822
      %v839 = vmul.f32 %v787, %v823
      %v840 = vmul.f32 %v789, %v824
      %v841 = vmul.f32 %v792, %v825
      %v842 = vmul.f32 %v794, %v826
      %v843 = vmul.f32 %v797, %v827
      %v844 = vmul.f32 %v799, %v828
      %v845 = vmul.f32 %v802, %v829
      %v846 = vmul.f32 %v804, %v830
      %v847 = vmul.f32 %v807, %v831
      %v848 = vmul.f32 %v809, %v832
      %v849 = vmul.f32 %v812, %v833
      %v850 = vmul.f32 %v814, %v834
      %v851 = vmul.f32 %v817, %v835
      %v852 = vmul.f32 %v819, %v836
      %v853 = vld [vmem:[%s2] sm:$0xff]
      %v854 = vld [vmem:[%s2 + $0x8] sm:$0xff]
      %v855 = vld [vmem:[%s2 + $0x10] sm:$0xff]
      %v856 = vld [vmem:[%s2 + $0x18] sm:$0xff]
      %v857 = vld [vmem:[%s2 + $0x20] sm:$0xff]
      %v858 = vld [vmem:[%s2 + $0x28] sm:$0xff]
      %v859 = vld [vmem:[%s2 + $0x30] sm:$0xff]
      %v860 = vld [vmem:[%s2 + $0x38] sm:$0xff]
      %v861 = vld [vmem:[%s2 + $0x40] sm:$0xff]
      %v862 = vld [vmem:[%s2 + $0x48] sm:$0xff]
      %v863 = vld [vmem:[%s2 + $0x50] sm:$0xff]
      %v864 = vld [vmem:[%s2 + $0x58] sm:$0xff]
      %v865 = vld [vmem:[%s2 + $0x60] sm:$0xff]
      %v866 = vld [vmem:[%s2 + $0x68] sm:$0xff]
      %v867 = vld [vmem:[%s2 + $0x70] sm:$0xff]
      %v868 = vld [vmem:[%s2 + $0x78] sm:$0xff]
      %885 = vrot.lane.b32.xlu0 %v853, 32
      %v886 = vpop.permute.xlu0 %885
      %887 = vrot.lane.b32.xlu0 %v854, 32
      %v888 = vpop.permute.xlu0 %887
      %889 = vrot.lane.b32.xlu0 %v855, 32
      %v890 = vpop.permute.xlu0 %889
      %891 = vrot.lane.b32.xlu0 %v856, 32
      %v892 = vpop.permute.xlu0 %891
      %893 = vrot.lane.b32.xlu0 %v857, 32
      %v894 = vpop.permute.xlu0 %893
      %895 = vrot.lane.b32.xlu0 %v858, 32
      %v896 = vpop.permute.xlu0 %895
      %897 = vrot.lane.b32.xlu0 %v859, 32
      %v898 = vpop.permute.xlu0 %897
      %899 = vrot.lane.b32.xlu0 %v860, 32
      %v900 = vpop.permute.xlu0 %899
      %901 = vrot.lane.b32.xlu0 %v861, 32
      %v902 = vpop.permute.xlu0 %901
      %903 = vrot.lane.b32.xlu0 %v862, 32
      %v904 = vpop.permute.xlu0 %903
      %905 = vrot.lane.b32.xlu0 %v863, 32
      %v906 = vpop.permute.xlu0 %905
      %907 = vrot.lane.b32.xlu0 %v864, 32
      %v908 = vpop.permute.xlu0 %907
      %909 = vrot.lane.b32.xlu0 %v865, 32
      %v910 = vpop.permute.xlu0 %909
      %911 = vrot.lane.b32.xlu0 %v866, 32
      %v912 = vpop.permute.xlu0 %911
      %913 = vrot.lane.b32.xlu0 %v867, 32
      %v914 = vpop.permute.xlu0 %913
      %915 = vrot.lane.b32.xlu0 %v868, 32
      %v916 = vpop.permute.xlu0 %915
      %v933 = vmul.f32 %v782, %v886
      %v934 = vmul.f32 %v784, %v888
      %v935 = vmul.f32 %v787, %v890
      %v936 = vmul.f32 %v789, %v892
      %v937 = vmul.f32 %v792, %v894
      %v938 = vmul.f32 %v794, %v896
      %v939 = vmul.f32 %v797, %v898
      %v940 = vmul.f32 %v799, %v900
      %v941 = vmul.f32 %v802, %v902
      %v942 = vmul.f32 %v804, %v904
      %v943 = vmul.f32 %v807, %v906
      %v944 = vmul.f32 %v809, %v908
      %v945 = vmul.f32 %v812, %v910
      %v946 = vmul.f32 %v814, %v912
      %v947 = vmul.f32 %v817, %v914
      %v948 = vmul.f32 %v819, %v916
      %965 = vrot.lane.b32.xlu0 %v933, 96
      %v966 = vpop.permute.xlu0 %965
      %967 = vrot.lane.b32.xlu0 %v934, 96
      %v968 = vpop.permute.xlu0 %967
      %969 = vrot.lane.b32.xlu0 %v935, 96
      %v970 = vpop.permute.xlu0 %969
      %971 = vrot.lane.b32.xlu0 %v936, 96
      %v972 = vpop.permute.xlu0 %971
      %973 = vrot.lane.b32.xlu0 %v937, 96
      %v974 = vpop.permute.xlu0 %973
      %975 = vrot.lane.b32.xlu0 %v938, 96
      %v976 = vpop.permute.xlu0 %975
      %977 = vrot.lane.b32.xlu0 %v939, 96
      %v978 = vpop.permute.xlu0 %977
      %979 = vrot.lane.b32.xlu0 %v940, 96
      %v980 = vpop.permute.xlu0 %979
      %981 = vrot.lane.b32.xlu0 %v941, 96
      %v982 = vpop.permute.xlu0 %981
      %983 = vrot.lane.b32.xlu0 %v942, 96
      %v984 = vpop.permute.xlu0 %983
      %985 = vrot.lane.b32.xlu0 %v943, 96
      %v986 = vpop.permute.xlu0 %985
      %987 = vrot.lane.b32.xlu0 %v944, 96
      %v988 = vpop.permute.xlu0 %987
      %989 = vrot.lane.b32.xlu0 %v945, 96
      %v990 = vpop.permute.xlu0 %989
      %991 = vrot.lane.b32.xlu0 %v946, 96
      %v992 = vpop.permute.xlu0 %991
      %993 = vrot.lane.b32.xlu0 %v947, 96
      %v994 = vpop.permute.xlu0 %993
      %995 = vrot.lane.b32.xlu0 %v948, 96
      %v996 = vpop.permute.xlu0 %995
      %v1013 = vadd.f32 %v837, %v966
      %v1014 = vadd.f32 %v838, %v968
      %v1015 = vadd.f32 %v839, %v970
      %v1016 = vadd.f32 %v840, %v972
      %v1017 = vadd.f32 %v841, %v974
      %v1018 = vadd.f32 %v842, %v976
      %v1019 = vadd.f32 %v843, %v978
      %v1020 = vadd.f32 %v844, %v980
      %v1021 = vadd.f32 %v845, %v982
      %v1022 = vadd.f32 %v846, %v984
      %v1023 = vadd.f32 %v847, %v986
      %v1024 = vadd.f32 %v848, %v988
      %v1025 = vadd.f32 %v849, %v990
      %v1026 = vadd.f32 %v850, %v992
      %v1027 = vadd.f32 %v851, %v994
      %v1028 = vadd.f32 %v852, %v996
      %v1029 = vld [vmem:[%s4] sm:$0xff]
      %v1030 = vld [vmem:[%s4 + $0x8] sm:$0xff]
      %v1031 = vld [vmem:[%s4 + $0x10] sm:$0xff]
      %v1032 = vld [vmem:[%s4 + $0x18] sm:$0xff]
      %v1033 = vpack.c.bf16 %v1014, %v1013
      %v1034 = vpack.c.bf16 %v1016, %v1015
      %v1035 = vpack.c.bf16 %v1018, %v1017
      %v1036 = vpack.c.bf16 %v1020, %v1019
      %v1037 = vpack.c.bf16 %v784, %v782
      %v1038 = vpack.c.bf16 %v789, %v787
      %v1039 = vpack.c.bf16 %v794, %v792
      %v1040 = vpack.c.bf16 %v799, %v797
      %1045 = vrot.lane.b32.xlu0 %v1037, 64
      %v1046 = vpop.permute.xlu0 %1045
      %1047 = vrot.lane.b32.xlu0 %v1038, 64
      %v1048 = vpop.permute.xlu0 %1047
      %1049 = vrot.lane.b32.xlu0 %v1039, 64
      %v1050 = vpop.permute.xlu0 %1049
      %1051 = vrot.lane.b32.xlu0 %v1040, 64
      %v1052 = vpop.permute.xlu0 %1051
      %vm1053 = vcmask 64512
      %v1055 = vsel %vm1053, %v1033, 0
      %v1058 = vsel %vm1053, %v1034, 0
      %v1061 = vsel %vm1053, %v1035, 0
      %v1064 = vsel %vm1053, %v1036, 0
      %v1067 = vsel %vm1053, %v1046, 0
      %v1070 = vsel %vm1053, %v1048, 0
      %v1073 = vsel %vm1053, %v1050, 0
      %v1076 = vsel %vm1053, %v1052, 0
      %1078 = vmatpush.bf16.xpose.msra.mxu0 0
      %1079 = vmatpush.bf16.xpose.msra.mxu0 0
      %1080 = vmatpush.bf16.xpose.msra.mxu0 0
      %1081 = vmatpush.bf16.xpose.msra.mxu0 0
      %1082 = vmatpush.bf16.xpose.msra.mxu0 %v1076
      %1083 = vmatpush.bf16.xpose.msra.mxu0 %v1073
      %1084 = vmatpush.bf16.xpose.msra.mxu0 %v1070
      %1085 = vmatpush.bf16.xpose.msra.mxu0 %v1067
      %1086 = vmatmul.bf16.gmra.mxu0 %v1055
      %v1087 = vpop.f32.mrf.mxu0
      %v1088 = vadd.f32 0.0, %v1087
      %v1089 = vpop.f32.mrf.mxu0
      %v1090 = vadd.f32 0.0, %v1089
      %1091 = vmatmul.bf16.gmra.mxu0 %v1058
      %v1092 = vpop.f32.mrf.mxu0
      %v1093 = vadd.f32 0.0, %v1092
      %v1094 = vpop.f32.mrf.mxu0
      %v1095 = vadd.f32 0.0, %v1094
      %1096 = vmatmul.bf16.gmra.mxu0 %v1061
      %v1097 = vpop.f32.mrf.mxu0
      %v1098 = vadd.f32 0.0, %v1097
      %v1099 = vpop.f32.mrf.mxu0
      %v1100 = vadd.f32 0.0, %v1099
      %1101 = vmatmul.bf16.gmra.mxu0 %v1064
      %v1102 = vpop.f32.mrf.mxu0
      %v1103 = vadd.f32 0.0, %v1102
      %v1104 = vpop.f32.mrf.mxu0
      %v1105 = vadd.f32 0.0, %v1104
      %1106 = vdwg.mxu0
      %vm1107 = vcmask 523264
      %v1108 = vsel %vm1107, %v1088, -inf
      %1109 = vmax.xlane.f32.xlu0 %v1108
      %v1110 = vpop.xlane.xlu0 %1109
      %v1111 = vsel %vm1107, %v1090, -inf
      %1112 = vmax.xlane.f32.xlu0 %v1111
      %v1113 = vpop.xlane.xlu0 %1112
      %v1114 = vsel %vm1107, %v1093, -inf
      %1115 = vmax.xlane.f32.xlu0 %v1114
      %v1116 = vpop.xlane.xlu0 %1115
      %v1117 = vsel %vm1107, %v1095, -inf
      %1118 = vmax.xlane.f32.xlu0 %v1117
      %v1119 = vpop.xlane.xlu0 %1118
      %v1120 = vsel %vm1107, %v1098, -inf
      %1121 = vmax.xlane.f32.xlu0 %v1120
      %v1122 = vpop.xlane.xlu0 %1121
      %v1123 = vsel %vm1107, %v1100, -inf
      %1124 = vmax.xlane.f32.xlu0 %v1123
      %v1125 = vpop.xlane.xlu0 %1124
      %v1126 = vsel %vm1107, %v1103, -inf
      %1127 = vmax.xlane.f32.xlu0 %v1126
      %v1128 = vpop.xlane.xlu0 %1127
      %v1129 = vsel %vm1107, %v1105, -inf
      %1130 = vmax.xlane.f32.xlu0 %v1129
      %v1131 = vpop.xlane.xlu0 %1130
      %v1132 = vsub.f32 %v1088, %v1110
      %v1133 = vsub.f32 %v1090, %v1113
      %v1134 = vsub.f32 %v1093, %v1116
      %v1135 = vsub.f32 %v1095, %v1119
      %v1136 = vsub.f32 %v1098, %v1122
      %v1137 = vsub.f32 %v1100, %v1125
      %v1138 = vsub.f32 %v1103, %v1128
      %v1139 = vsub.f32 %v1105, %v1131
      %v1140 = vmul.f32 %v1132, 1.442695
      %v1141 = vpow.pop %v1140
      %v1142 = vmul.f32 %v1133, 1.442695
      %v1143 = vpow.pop %v1142
      %v1144 = vmul.f32 %v1134, 1.442695
      %v1145 = vpow.pop %v1144
      %v1146 = vmul.f32 %v1135, 1.442695
      %v1147 = vpow.pop %v1146
      %v1148 = vmul.f32 %v1136, 1.442695
      %v1149 = vpow.pop %v1148
      %v1150 = vmul.f32 %v1137, 1.442695
      %v1151 = vpow.pop %v1150
      %v1152 = vmul.f32 %v1138, 1.442695
      %v1153 = vpow.pop %v1152
      %v1154 = vmul.f32 %v1139, 1.442695
      %v1155 = vpow.pop %v1154
      %v1156 = vsel %vm1107, %v1141, 0.0
      %1157 = vadd.xlane.f32.xlu0 %v1156
      %v1158 = vpop.xlane.xlu0 %1157
      %v1159 = vsel %vm1107, %v1143, 0.0
      %1160 = vadd.xlane.f32.xlu0 %v1159
      %v1161 = vpop.xlane.xlu0 %1160
      %v1162 = vsel %vm1107, %v1145, 0.0
      %1163 = vadd.xlane.f32.xlu0 %v1162
      %v1164 = vpop.xlane.xlu0 %1163
      %v1165 = vsel %vm1107, %v1147, 0.0
      %1166 = vadd.xlane.f32.xlu0 %v1165
      %v1167 = vpop.xlane.xlu0 %1166
      %v1168 = vsel %vm1107, %v1149, 0.0
      %1169 = vadd.xlane.f32.xlu0 %v1168
      %v1170 = vpop.xlane.xlu0 %1169
      %v1171 = vsel %vm1107, %v1151, 0.0
      %1172 = vadd.xlane.f32.xlu0 %v1171
      %v1173 = vpop.xlane.xlu0 %1172
      %v1174 = vsel %vm1107, %v1153, 0.0
      %1175 = vadd.xlane.f32.xlu0 %v1174
      %v1176 = vpop.xlane.xlu0 %1175
      %v1177 = vsel %vm1107, %v1155, 0.0
      %1178 = vadd.xlane.f32.xlu0 %v1177
      %v1179 = vpop.xlane.xlu0 %1178
      %v1180 = vrcp.pop %v1158
      %v1181 = vrcp.pop %v1161
      %v1182 = vrcp.pop %v1164
      %v1183 = vrcp.pop %v1167
      %v1184 = vrcp.pop %v1170
      %v1185 = vrcp.pop %v1173
      %v1186 = vrcp.pop %v1176
      %v1187 = vrcp.pop %v1179
      %v1188 = vmul.f32 %v1141, %v1180
      %v1189 = vmul.f32 %v1143, %v1181
      %v1190 = vmul.f32 %v1145, %v1182
      %v1191 = vmul.f32 %v1147, %v1183
      %v1192 = vmul.f32 %v1149, %v1184
      %v1193 = vmul.f32 %v1151, %v1185
      %v1194 = vmul.f32 %v1153, %v1186
      %v1195 = vmul.f32 %v1155, %v1187
      %v1196 = vpack.c.bf16 %v1029, %v1029
      %1197 = vrot.lane.b32.xlu0 %v1037, 32
      %v1198 = vpop.permute.xlu0 %1197
      %1199 = vrot.lane.b32.xlu0 %v1038, 32
      %v1200 = vpop.permute.xlu0 %1199
      %1201 = vrot.lane.b32.xlu0 %v1039, 32
      %v1202 = vpop.permute.xlu0 %1201
      %1203 = vrot.lane.b32.xlu0 %v1040, 32
      %v1204 = vpop.permute.xlu0 %1203
      %v1206 = vsel %vm1053, %v1198, 0
      %v1209 = vsel %vm1053, %v1200, 0
      %v1212 = vsel %vm1053, %v1202, 0
      %v1215 = vsel %vm1053, %v1204, 0
      %vm1217 = vcmask 1043456
      %v1219 = vsel %vm1217, %v1196, 0
      %1221 = vmatpush.bf16.msra.mxu0 0
      %1222 = vmatpush.bf16.msra.mxu0 0
      %1223 = vmatpush.bf16.msra.mxu0 0
      %1224 = vmatpush.bf16.msra.mxu0 0
      %1225 = vmatpush.bf16.msra.mxu0 0
      %1226 = vmatpush.bf16.msra.mxu0 0
      %1227 = vmatpush.bf16.msra.mxu0 0
      %1228 = vmatpush.bf16.msra.mxu0 %v1219
      %1229 = vmatmul.bf16.gmra.mxu0 %v1206
      %v1230 = vpop.f32.mrf.mxu0
      %v1231 = vadd.f32 0.0, %v1230
      %v1232 = vpop.f32.mrf.mxu0
      %v1233 = vadd.f32 0.0, %v1232
      %1234 = vmatmul.bf16.gmra.mxu0 %v1209
      %v1235 = vpop.f32.mrf.mxu0
      %v1236 = vadd.f32 0.0, %v1235
      %v1237 = vpop.f32.mrf.mxu0
      %v1238 = vadd.f32 0.0, %v1237
      %1239 = vmatmul.bf16.gmra.mxu0 %v1212
      %v1240 = vpop.f32.mrf.mxu0
      %v1241 = vadd.f32 0.0, %v1240
      %v1242 = vpop.f32.mrf.mxu0
      %v1243 = vadd.f32 0.0, %v1242
      %1244 = vmatmul.bf16.gmra.mxu0 %v1215
      %v1245 = vpop.f32.mrf.mxu0
      %v1246 = vadd.f32 0.0, %v1245
      %v1247 = vpop.f32.mrf.mxu0
      %v1248 = vadd.f32 0.0, %v1247
      %1249 = vdwg.mxu0
      %v1250 = vpack.c.bf16 %v1189, %v1188
      %v1251 = vpack.c.bf16 %v1191, %v1190
      %v1252 = vpack.c.bf16 %v1193, %v1192
      %v1253 = vpack.c.bf16 %v1195, %v1194
      %v1254 = vpack.c.bf16 %v1233, %v1231
      %v1255 = vpack.c.bf16 %v1238, %v1236
      %v1256 = vpack.c.bf16 %v1243, %v1241
      %v1257 = vpack.c.bf16 %v1248, %v1246
      %1262 = vrot.lane.b32.xlu0 %v1033, 120
      %v1263 = vpop.permute.xlu0 %1262
      %1264 = vrot.lane.b32.xlu0 %v1034, 120
      %v1265 = vpop.permute.xlu0 %1264
      %1266 = vrot.lane.b32.xlu0 %v1035, 120
      %v1267 = vpop.permute.xlu0 %1266
      %1268 = vrot.lane.b32.xlu0 %v1036, 120
      %v1269 = vpop.permute.xlu0 %1268
      %1270 = vrot.lane.b32.xlu0 %v1037, 56
      %v1271 = vpop.permute.xlu0 %1270
      %1272 = vrot.lane.b32.xlu0 %v1038, 56
      %v1273 = vpop.permute.xlu0 %1272
      %1274 = vrot.lane.b32.xlu0 %v1039, 56
      %v1275 = vpop.permute.xlu0 %1274
      %1276 = vrot.lane.b32.xlu0 %v1040, 56
      %v1277 = vpop.permute.xlu0 %1276
      %v1279 = vsel %vm1053, %v1263, 0
      %v1282 = vsel %vm1053, %v1265, 0
      %v1285 = vsel %vm1053, %v1267, 0
      %v1288 = vsel %vm1053, %v1269, 0
      %v1291 = vsel %vm1053, %v1271, 0
      %v1294 = vsel %vm1053, %v1273, 0
      %v1297 = vsel %vm1053, %v1275, 0
      %v1300 = vsel %vm1053, %v1277, 0
      %1302 = vmatpush.bf16.xpose.msra.mxu0 0
      %1303 = vmatpush.bf16.xpose.msra.mxu0 0
      %1304 = vmatpush.bf16.xpose.msra.mxu0 0
      %1305 = vmatpush.bf16.xpose.msra.mxu0 0
      %1306 = vmatpush.bf16.xpose.msra.mxu0 %v1300
      %1307 = vmatpush.bf16.xpose.msra.mxu0 %v1297
      %1308 = vmatpush.bf16.xpose.msra.mxu0 %v1294
      %1309 = vmatpush.bf16.xpose.msra.mxu0 %v1291
      %1310 = vmatmul.bf16.gmra.mxu0 %v1279
      %v1311 = vpop.f32.mrf.mxu0
      %v1312 = vadd.f32 0.0, %v1311
      %v1313 = vpop.f32.mrf.mxu0
      %v1314 = vadd.f32 0.0, %v1313
      %1315 = vmatmul.bf16.gmra.mxu0 %v1282
      %v1316 = vpop.f32.mrf.mxu0
      %v1317 = vadd.f32 0.0, %v1316
      %v1318 = vpop.f32.mrf.mxu0
      %v1319 = vadd.f32 0.0, %v1318
      %1320 = vmatmul.bf16.gmra.mxu0 %v1285
      %v1321 = vpop.f32.mrf.mxu0
      %v1322 = vadd.f32 0.0, %v1321
      %v1323 = vpop.f32.mrf.mxu0
      %v1324 = vadd.f32 0.0, %v1323
      %1325 = vmatmul.bf16.gmra.mxu0 %v1288
      %v1326 = vpop.f32.mrf.mxu0
      %v1327 = vadd.f32 0.0, %v1326
      %v1328 = vpop.f32.mrf.mxu0
      %v1329 = vadd.f32 0.0, %v1328
      %1330 = vdwg.mxu0
      %v1331 = vsel %vm1107, %v1312, -inf
      %1332 = vmax.xlane.f32.xlu0 %v1331
      %v1333 = vpop.xlane.xlu0 %1332
      %v1334 = vsel %vm1107, %v1314, -inf
      %1335 = vmax.xlane.f32.xlu0 %v1334
      %v1336 = vpop.xlane.xlu0 %1335
      %v1337 = vsel %vm1107, %v1317, -inf
      %1338 = vmax.xlane.f32.xlu0 %v1337
      %v1339 = vpop.xlane.xlu0 %1338
      %v1340 = vsel %vm1107, %v1319, -inf
      %1341 = vmax.xlane.f32.xlu0 %v1340
      %v1342 = vpop.xlane.xlu0 %1341
      %v1343 = vsel %vm1107, %v1322, -inf
      %1344 = vmax.xlane.f32.xlu0 %v1343
      %v1345 = vpop.xlane.xlu0 %1344
      %v1346 = vsel %vm1107, %v1324, -inf
      %1347 = vmax.xlane.f32.xlu0 %v1346
      %v1348 = vpop.xlane.xlu0 %1347
      %v1349 = vsel %vm1107, %v1327, -inf
      %1350 = vmax.xlane.f32.xlu0 %v1349
      %v1351 = vpop.xlane.xlu0 %1350
      %v1352 = vsel %vm1107, %v1329, -inf
      %1353 = vmax.xlane.f32.xlu0 %v1352
      %v1354 = vpop.xlane.xlu0 %1353
      %v1355 = vsub.f32 %v1312, %v1333
      %v1356 = vsub.f32 %v1314, %v1336
      %v1357 = vsub.f32 %v1317, %v1339
      %v1358 = vsub.f32 %v1319, %v1342
      %v1359 = vsub.f32 %v1322, %v1345
      %v1360 = vsub.f32 %v1324, %v1348
      %v1361 = vsub.f32 %v1327, %v1351
      %v1362 = vsub.f32 %v1329, %v1354
      %v1363 = vmul.f32 %v1355, 1.442695
      %v1364 = vpow.pop %v1363
      %v1365 = vmul.f32 %v1356, 1.442695
      %v1366 = vpow.pop %v1365
      %v1367 = vmul.f32 %v1357, 1.442695
      %v1368 = vpow.pop %v1367
      %v1369 = vmul.f32 %v1358, 1.442695
      %v1370 = vpow.pop %v1369
      %v1371 = vmul.f32 %v1359, 1.442695
      %v1372 = vpow.pop %v1371
      %v1373 = vmul.f32 %v1360, 1.442695
      %v1374 = vpow.pop %v1373
      %v1375 = vmul.f32 %v1361, 1.442695
      %v1376 = vpow.pop %v1375
      %v1377 = vmul.f32 %v1362, 1.442695
      %v1378 = vpow.pop %v1377
      %v1379 = vsel %vm1107, %v1364, 0.0
      %1380 = vadd.xlane.f32.xlu0 %v1379
      %v1381 = vpop.xlane.xlu0 %1380
      %v1382 = vsel %vm1107, %v1366, 0.0
      %1383 = vadd.xlane.f32.xlu0 %v1382
      %v1384 = vpop.xlane.xlu0 %1383
      %v1385 = vsel %vm1107, %v1368, 0.0
      %1386 = vadd.xlane.f32.xlu0 %v1385
      %v1387 = vpop.xlane.xlu0 %1386
      %v1388 = vsel %vm1107, %v1370, 0.0
      %1389 = vadd.xlane.f32.xlu0 %v1388
      %v1390 = vpop.xlane.xlu0 %1389
      %v1391 = vsel %vm1107, %v1372, 0.0
      %1392 = vadd.xlane.f32.xlu0 %v1391
      %v1393 = vpop.xlane.xlu0 %1392
      %v1394 = vsel %vm1107, %v1374, 0.0
      %1395 = vadd.xlane.f32.xlu0 %v1394
      %v1396 = vpop.xlane.xlu0 %1395
      %v1397 = vsel %vm1107, %v1376, 0.0
      %1398 = vadd.xlane.f32.xlu0 %v1397
      %v1399 = vpop.xlane.xlu0 %1398
      %v1400 = vsel %vm1107, %v1378, 0.0
      %1401 = vadd.xlane.f32.xlu0 %v1400
      %v1402 = vpop.xlane.xlu0 %1401
      %v1403 = vrcp.pop %v1381
      %v1404 = vrcp.pop %v1384
      %v1405 = vrcp.pop %v1387
      %v1406 = vrcp.pop %v1390
      %v1407 = vrcp.pop %v1393
      %v1408 = vrcp.pop %v1396
      %v1409 = vrcp.pop %v1399
      %v1410 = vrcp.pop %v1402
      %v1411 = vmul.f32 %v1364, %v1403
      %v1412 = vmul.f32 %v1366, %v1404
      %v1413 = vmul.f32 %v1368, %v1405
      %v1414 = vmul.f32 %v1370, %v1406
      %v1415 = vmul.f32 %v1372, %v1407
      %v1416 = vmul.f32 %v1374, %v1408
      %v1417 = vmul.f32 %v1376, %v1409
      %v1418 = vmul.f32 %v1378, %v1410
      %v1419 = vpack.c.bf16 %v1030, %v1030
      %1420 = vrot.lane.b32.xlu0 %v1037, 24
      %v1421 = vpop.permute.xlu0 %1420
      %1422 = vrot.lane.b32.xlu0 %v1038, 24
      %v1423 = vpop.permute.xlu0 %1422
      %1424 = vrot.lane.b32.xlu0 %v1039, 24
      %v1425 = vpop.permute.xlu0 %1424
      %1426 = vrot.lane.b32.xlu0 %v1040, 24
      %v1427 = vpop.permute.xlu0 %1426
      %v1429 = vsel %vm1053, %v1421, 0
      %v1432 = vsel %vm1053, %v1423, 0
      %v1435 = vsel %vm1053, %v1425, 0
      %v1438 = vsel %vm1053, %v1427, 0
      %v1441 = vsel %vm1217, %v1419, 0
      %1443 = vmatpush.bf16.msra.mxu0 0
      %1444 = vmatpush.bf16.msra.mxu0 0
      %1445 = vmatpush.bf16.msra.mxu0 0
      %1446 = vmatpush.bf16.msra.mxu0 0
      %1447 = vmatpush.bf16.msra.mxu0 0
      %1448 = vmatpush.bf16.msra.mxu0 0
      %1449 = vmatpush.bf16.msra.mxu0 0
      %1450 = vmatpush.bf16.msra.mxu0 %v1441
      %1451 = vmatmul.bf16.gmra.mxu0 %v1429
      %v1452 = vpop.f32.mrf.mxu0
      %v1453 = vadd.f32 0.0, %v1452
      %v1454 = vpop.f32.mrf.mxu0
      %v1455 = vadd.f32 0.0, %v1454
      %1456 = vmatmul.bf16.gmra.mxu0 %v1432
      %v1457 = vpop.f32.mrf.mxu0
      %v1458 = vadd.f32 0.0, %v1457
      %v1459 = vpop.f32.mrf.mxu0
      %v1460 = vadd.f32 0.0, %v1459
      %1461 = vmatmul.bf16.gmra.mxu0 %v1435
      %v1462 = vpop.f32.mrf.mxu0
      %v1463 = vadd.f32 0.0, %v1462
      %v1464 = vpop.f32.mrf.mxu0
      %v1465 = vadd.f32 0.0, %v1464
      %1466 = vmatmul.bf16.gmra.mxu0 %v1438
      %v1467 = vpop.f32.mrf.mxu0
      %v1468 = vadd.f32 0.0, %v1467
      %v1469 = vpop.f32.mrf.mxu0
      %v1470 = vadd.f32 0.0, %v1469
      %1471 = vdwg.mxu0
      %v1472 = vpack.c.bf16 %v1412, %v1411
      %v1473 = vpack.c.bf16 %v1414, %v1413
      %v1474 = vpack.c.bf16 %v1416, %v1415
      %v1475 = vpack.c.bf16 %v1418, %v1417
      %v1476 = vpack.c.bf16 %v1455, %v1453
      %v1477 = vpack.c.bf16 %v1460, %v1458
      %v1478 = vpack.c.bf16 %v1465, %v1463
      %v1479 = vpack.c.bf16 %v1470, %v1468
      %v1481 = vsel %vm1107, %v1472, 0
      %v1484 = vsel %vm1107, %v1473, 0
      %v1487 = vsel %vm1107, %v1474, 0
      %v1490 = vsel %vm1107, %v1475, 0
      %1492 = vmatpush.bf16.msra.mxu0 0
      %1493 = vmatpush.bf16.msra.mxu0 0
      %1494 = vmatpush.bf16.msra.mxu0 0
      %1495 = vmatpush.bf16.msra.mxu0 0
      %1496 = vmatpush.bf16.msra.mxu0 %v1479
      %1497 = vmatpush.bf16.msra.mxu0 %v1478
      %1498 = vmatpush.bf16.msra.mxu0 %v1477
      %1499 = vmatpush.bf16.msra.mxu0 %v1476
      %1500 = vmatmul.bf16.gmra.mxu0 %v1481
      %v1501 = vpop.f32.mrf.mxu0
      %v1502 = vadd.f32 0.0, %v1501
      %v1503 = vpop.f32.mrf.mxu0
      %v1504 = vadd.f32 0.0, %v1503
      %1505 = vmatmul.bf16.gmra.mxu0 %v1484
      %v1506 = vpop.f32.mrf.mxu0
      %v1507 = vadd.f32 0.0, %v1506
      %v1508 = vpop.f32.mrf.mxu0
      %v1509 = vadd.f32 0.0, %v1508
      %1510 = vmatmul.bf16.gmra.mxu0 %v1487
      %v1511 = vpop.f32.mrf.mxu0
      %v1512 = vadd.f32 0.0, %v1511
      %v1513 = vpop.f32.mrf.mxu0
      %v1514 = vadd.f32 0.0, %v1513
      %1515 = vmatmul.bf16.gmra.mxu0 %v1490
      %v1516 = vpop.f32.mrf.mxu0
      %v1517 = vadd.f32 0.0, %v1516
      %v1518 = vpop.f32.mrf.mxu0
      %v1519 = vadd.f32 0.0, %v1518
      %1520 = vdwg.mxu0
      %v1522 = vsel %vm1107, %v1250, 0
      %v1525 = vsel %vm1107, %v1251, 0
      %v1528 = vsel %vm1107, %v1252, 0
      %v1531 = vsel %vm1107, %v1253, 0
      %1533 = vmatpush.bf16.msra.mxu0 0
      %1534 = vmatpush.bf16.msra.mxu0 0
      %1535 = vmatpush.bf16.msra.mxu0 0
      %1536 = vmatpush.bf16.msra.mxu0 0
      %1537 = vmatpush.bf16.msra.mxu0 %v1257
      %1538 = vmatpush.bf16.msra.mxu0 %v1256
      %1539 = vmatpush.bf16.msra.mxu0 %v1255
      %1540 = vmatpush.bf16.msra.mxu0 %v1254
      %1541 = vmatmul.bf16.gmra.mxu0 %v1522
      %v1542 = vpop.f32.mrf.mxu0
      %v1543 = vadd.f32 %v1502, %v1542
      %v1544 = vpop.f32.mrf.mxu0
      %v1545 = vadd.f32 %v1504, %v1544
      %1546 = vmatmul.bf16.gmra.mxu0 %v1525
      %v1547 = vpop.f32.mrf.mxu0
      %v1548 = vadd.f32 %v1507, %v1547
      %v1549 = vpop.f32.mrf.mxu0
      %v1550 = vadd.f32 %v1509, %v1549
      %1551 = vmatmul.bf16.gmra.mxu0 %v1528
      %v1552 = vpop.f32.mrf.mxu0
      %v1553 = vadd.f32 %v1512, %v1552
      %v1554 = vpop.f32.mrf.mxu0
      %v1555 = vadd.f32 %v1514, %v1554
      %1556 = vmatmul.bf16.gmra.mxu0 %v1531
      %v1557 = vpop.f32.mrf.mxu0
      %v1558 = vadd.f32 %v1517, %v1557
      %v1559 = vpop.f32.mrf.mxu0
      %v1560 = vadd.f32 %v1519, %v1559
      %1561 = vdwg.mxu0
      %1562 = vrot.lane.b32.xlu0 %v1033, 112
      %v1563 = vpop.permute.xlu0 %1562
      %1564 = vrot.lane.b32.xlu0 %v1034, 112
      %v1565 = vpop.permute.xlu0 %1564
      %1566 = vrot.lane.b32.xlu0 %v1035, 112
      %v1567 = vpop.permute.xlu0 %1566
      %1568 = vrot.lane.b32.xlu0 %v1036, 112
      %v1569 = vpop.permute.xlu0 %1568
      %1570 = vrot.lane.b32.xlu0 %v1037, 48
      %v1571 = vpop.permute.xlu0 %1570
      %1572 = vrot.lane.b32.xlu0 %v1038, 48
      %v1573 = vpop.permute.xlu0 %1572
      %1574 = vrot.lane.b32.xlu0 %v1039, 48
      %v1575 = vpop.permute.xlu0 %1574
      %1576 = vrot.lane.b32.xlu0 %v1040, 48
      %v1577 = vpop.permute.xlu0 %1576
      %v1579 = vsel %vm1053, %v1563, 0
      %v1582 = vsel %vm1053, %v1565, 0
      %v1585 = vsel %vm1053, %v1567, 0
      %v1588 = vsel %vm1053, %v1569, 0
      %v1591 = vsel %vm1053, %v1571, 0
      %v1594 = vsel %vm1053, %v1573, 0
      %v1597 = vsel %vm1053, %v1575, 0
      %v1600 = vsel %vm1053, %v1577, 0
      %1602 = vmatpush.bf16.xpose.msra.mxu0 0
      %1603 = vmatpush.bf16.xpose.msra.mxu0 0
      %1604 = vmatpush.bf16.xpose.msra.mxu0 0
      %1605 = vmatpush.bf16.xpose.msra.mxu0 0
      %1606 = vmatpush.bf16.xpose.msra.mxu0 %v1600
      %1607 = vmatpush.bf16.xpose.msra.mxu0 %v1597
      %1608 = vmatpush.bf16.xpose.msra.mxu0 %v1594
      %1609 = vmatpush.bf16.xpose.msra.mxu0 %v1591
      %1610 = vmatmul.bf16.gmra.mxu0 %v1579
      %v1611 = vpop.f32.mrf.mxu0
      %v1612 = vadd.f32 0.0, %v1611
      %v1613 = vpop.f32.mrf.mxu0
      %v1614 = vadd.f32 0.0, %v1613
      %1615 = vmatmul.bf16.gmra.mxu0 %v1582
      %v1616 = vpop.f32.mrf.mxu0
      %v1617 = vadd.f32 0.0, %v1616
      %v1618 = vpop.f32.mrf.mxu0
      %v1619 = vadd.f32 0.0, %v1618
      %1620 = vmatmul.bf16.gmra.mxu0 %v1585
      %v1621 = vpop.f32.mrf.mxu0
      %v1622 = vadd.f32 0.0, %v1621
      %v1623 = vpop.f32.mrf.mxu0
      %v1624 = vadd.f32 0.0, %v1623
      %1625 = vmatmul.bf16.gmra.mxu0 %v1588
      %v1626 = vpop.f32.mrf.mxu0
      %v1627 = vadd.f32 0.0, %v1626
      %v1628 = vpop.f32.mrf.mxu0
      %v1629 = vadd.f32 0.0, %v1628
      %1630 = vdwg.mxu0
      %v1631 = vsel %vm1107, %v1612, -inf
      %1632 = vmax.xlane.f32.xlu0 %v1631
      %v1633 = vpop.xlane.xlu0 %1632
      %v1634 = vsel %vm1107, %v1614, -inf
      %1635 = vmax.xlane.f32.xlu0 %v1634
      %v1636 = vpop.xlane.xlu0 %1635
      %v1637 = vsel %vm1107, %v1617, -inf
      %1638 = vmax.xlane.f32.xlu0 %v1637
      %v1639 = vpop.xlane.xlu0 %1638
      %v1640 = vsel %vm1107, %v1619, -inf
      %1641 = vmax.xlane.f32.xlu0 %v1640
      %v1642 = vpop.xlane.xlu0 %1641
      %v1643 = vsel %vm1107, %v1622, -inf
      %1644 = vmax.xlane.f32.xlu0 %v1643
      %v1645 = vpop.xlane.xlu0 %1644
      %v1646 = vsel %vm1107, %v1624, -inf
      %1647 = vmax.xlane.f32.xlu0 %v1646
      %v1648 = vpop.xlane.xlu0 %1647
      %v1649 = vsel %vm1107, %v1627, -inf
      %1650 = vmax.xlane.f32.xlu0 %v1649
      %v1651 = vpop.xlane.xlu0 %1650
      %v1652 = vsel %vm1107, %v1629, -inf
      %1653 = vmax.xlane.f32.xlu0 %v1652
      %v1654 = vpop.xlane.xlu0 %1653
      %v1655 = vsub.f32 %v1612, %v1633
      %v1656 = vsub.f32 %v1614, %v1636
      %v1657 = vsub.f32 %v1617, %v1639
      %v1658 = vsub.f32 %v1619, %v1642
      %v1659 = vsub.f32 %v1622, %v1645
      %v1660 = vsub.f32 %v1624, %v1648
      %v1661 = vsub.f32 %v1627, %v1651
      %v1662 = vsub.f32 %v1629, %v1654
      %v1663 = vmul.f32 %v1655, 1.442695
      %v1664 = vpow.pop %v1663
      %v1665 = vmul.f32 %v1656, 1.442695
      %v1666 = vpow.pop %v1665
      %v1667 = vmul.f32 %v1657, 1.442695
      %v1668 = vpow.pop %v1667
      %v1669 = vmul.f32 %v1658, 1.442695
      %v1670 = vpow.pop %v1669
      %v1671 = vmul.f32 %v1659, 1.442695
      %v1672 = vpow.pop %v1671
      %v1673 = vmul.f32 %v1660, 1.442695
      %v1674 = vpow.pop %v1673
      %v1675 = vmul.f32 %v1661, 1.442695
      %v1676 = vpow.pop %v1675
      %v1677 = vmul.f32 %v1662, 1.442695
      %v1678 = vpow.pop %v1677
      %v1679 = vsel %vm1107, %v1664, 0.0
      %1680 = vadd.xlane.f32.xlu0 %v1679
      %v1681 = vpop.xlane.xlu0 %1680
      %v1682 = vsel %vm1107, %v1666, 0.0
      %1683 = vadd.xlane.f32.xlu0 %v1682
      %v1684 = vpop.xlane.xlu0 %1683
      %v1685 = vsel %vm1107, %v1668, 0.0
      %1686 = vadd.xlane.f32.xlu0 %v1685
      %v1687 = vpop.xlane.xlu0 %1686
      %v1688 = vsel %vm1107, %v1670, 0.0
      %1689 = vadd.xlane.f32.xlu0 %v1688
      %v1690 = vpop.xlane.xlu0 %1689
      %v1691 = vsel %vm1107, %v1672, 0.0
      %1692 = vadd.xlane.f32.xlu0 %v1691
      %v1693 = vpop.xlane.xlu0 %1692
      %v1694 = vsel %vm1107, %v1674, 0.0
      %1695 = vadd.xlane.f32.xlu0 %v1694
      %v1696 = vpop.xlane.xlu0 %1695
      %v1697 = vsel %vm1107, %v1676, 0.0
      %1698 = vadd.xlane.f32.xlu0 %v1697
      %v1699 = vpop.xlane.xlu0 %1698
      %v1700 = vsel %vm1107, %v1678, 0.0
      %1701 = vadd.xlane.f32.xlu0 %v1700
      %v1702 = vpop.xlane.xlu0 %1701
      %v1703 = vrcp.pop %v1681
      %v1704 = vrcp.pop %v1684
      %v1705 = vrcp.pop %v1687
      %v1706 = vrcp.pop %v1690
      %v1707 = vrcp.pop %v1693
      %v1708 = vrcp.pop %v1696
      %v1709 = vrcp.pop %v1699
      %v1710 = vrcp.pop %v1702
      %v1711 = vmul.f32 %v1664, %v1703
      %v1712 = vmul.f32 %v1666, %v1704
      %v1713 = vmul.f32 %v1668, %v1705
      %v1714 = vmul.f32 %v1670, %v1706
      %v1715 = vmul.f32 %v1672, %v1707
      %v1716 = vmul.f32 %v1674, %v1708
      %v1717 = vmul.f32 %v1676, %v1709
      %v1718 = vmul.f32 %v1678, %v1710
      %v1719 = vpack.c.bf16 %v1031, %v1031
      %1720 = vrot.lane.b32.xlu0 %v1037, 16
      %v1721 = vpop.permute.xlu0 %1720
      %1722 = vrot.lane.b32.xlu0 %v1038, 16
      %v1723 = vpop.permute.xlu0 %1722
      %1724 = vrot.lane.b32.xlu0 %v1039, 16
      %v1725 = vpop.permute.xlu0 %1724
      %1726 = vrot.lane.b32.xlu0 %v1040, 16
      %v1727 = vpop.permute.xlu0 %1726
      %v1729 = vsel %vm1053, %v1721, 0
      %v1732 = vsel %vm1053, %v1723, 0
      %v1735 = vsel %vm1053, %v1725, 0
      %v1738 = vsel %vm1053, %v1727, 0
      %v1741 = vsel %vm1217, %v1719, 0
      %1743 = vmatpush.bf16.msra.mxu0 0
      %1744 = vmatpush.bf16.msra.mxu0 0
      %1745 = vmatpush.bf16.msra.mxu0 0
      %1746 = vmatpush.bf16.msra.mxu0 0
      %1747 = vmatpush.bf16.msra.mxu0 0
      %1748 = vmatpush.bf16.msra.mxu0 0
      %1749 = vmatpush.bf16.msra.mxu0 0
      %1750 = vmatpush.bf16.msra.mxu0 %v1741
      %1751 = vmatmul.bf16.gmra.mxu0 %v1729
      %v1752 = vpop.f32.mrf.mxu0
      %v1753 = vadd.f32 0.0, %v1752
      %v1754 = vpop.f32.mrf.mxu0
      %v1755 = vadd.f32 0.0, %v1754
      %1756 = vmatmul.bf16.gmra.mxu0 %v1732
      %v1757 = vpop.f32.mrf.mxu0
      %v1758 = vadd.f32 0.0, %v1757
      %v1759 = vpop.f32.mrf.mxu0
      %v1760 = vadd.f32 0.0, %v1759
      %1761 = vmatmul.bf16.gmra.mxu0 %v1735
      %v1762 = vpop.f32.mrf.mxu0
      %v1763 = vadd.f32 0.0, %v1762
      %v1764 = vpop.f32.mrf.mxu0
      %v1765 = vadd.f32 0.0, %v1764
      %1766 = vmatmul.bf16.gmra.mxu0 %v1738
      %v1767 = vpop.f32.mrf.mxu0
      %v1768 = vadd.f32 0.0, %v1767
      %v1769 = vpop.f32.mrf.mxu0
      %v1770 = vadd.f32 0.0, %v1769
      %1771 = vdwg.mxu0
      %v1772 = vpack.c.bf16 %v1712, %v1711
      %v1773 = vpack.c.bf16 %v1714, %v1713
      %v1774 = vpack.c.bf16 %v1716, %v1715
      %v1775 = vpack.c.bf16 %v1718, %v1717
      %v1776 = vpack.c.bf16 %v1755, %v1753
      %v1777 = vpack.c.bf16 %v1760, %v1758
      %v1778 = vpack.c.bf16 %v1765, %v1763
      %v1779 = vpack.c.bf16 %v1770, %v1768
      %v1781 = vsel %vm1107, %v1772, 0
      %v1784 = vsel %vm1107, %v1773, 0
      %v1787 = vsel %vm1107, %v1774, 0
      %v1790 = vsel %vm1107, %v1775, 0
      %1792 = vmatpush.bf16.msra.mxu0 0
      %1793 = vmatpush.bf16.msra.mxu0 0
      %1794 = vmatpush.bf16.msra.mxu0 0
      %1795 = vmatpush.bf16.msra.mxu0 0
      %1796 = vmatpush.bf16.msra.mxu0 %v1779
      %1797 = vmatpush.bf16.msra.mxu0 %v1778
      %1798 = vmatpush.bf16.msra.mxu0 %v1777
      %1799 = vmatpush.bf16.msra.mxu0 %v1776
      %1800 = vmatmul.bf16.gmra.mxu0 %v1781
      %v1801 = vpop.f32.mrf.mxu0
      %v1802 = vadd.f32 0.0, %v1801
      %v1803 = vpop.f32.mrf.mxu0
      %v1804 = vadd.f32 0.0, %v1803
      %1805 = vmatmul.bf16.gmra.mxu0 %v1784
      %v1806 = vpop.f32.mrf.mxu0
      %v1807 = vadd.f32 0.0, %v1806
      %v1808 = vpop.f32.mrf.mxu0
      %v1809 = vadd.f32 0.0, %v1808
      %1810 = vmatmul.bf16.gmra.mxu0 %v1787
      %v1811 = vpop.f32.mrf.mxu0
      %v1812 = vadd.f32 0.0, %v1811
      %v1813 = vpop.f32.mrf.mxu0
      %v1814 = vadd.f32 0.0, %v1813
      %1815 = vmatmul.bf16.gmra.mxu0 %v1790
      %v1816 = vpop.f32.mrf.mxu0
      %v1817 = vadd.f32 0.0, %v1816
      %v1818 = vpop.f32.mrf.mxu0
      %v1819 = vadd.f32 0.0, %v1818
      %1820 = vdwg.mxu0
      %v1821 = vadd.f32 %v1543, %v1802
      %v1822 = vadd.f32 %v1545, %v1804
      %v1823 = vadd.f32 %v1548, %v1807
      %v1824 = vadd.f32 %v1550, %v1809
      %v1825 = vadd.f32 %v1553, %v1812
      %v1826 = vadd.f32 %v1555, %v1814
      %v1827 = vadd.f32 %v1558, %v1817
      %v1828 = vadd.f32 %v1560, %v1819
      %1829 = vrot.lane.b32.xlu0 %v1033, 104
      %v1830 = vpop.permute.xlu0 %1829
      %1831 = vrot.lane.b32.xlu0 %v1034, 104
      %v1832 = vpop.permute.xlu0 %1831
      %1833 = vrot.lane.b32.xlu0 %v1035, 104
      %v1834 = vpop.permute.xlu0 %1833
      %1835 = vrot.lane.b32.xlu0 %v1036, 104
      %v1836 = vpop.permute.xlu0 %1835
      %1837 = vrot.lane.b32.xlu0 %v1037, 40
      %v1838 = vpop.permute.xlu0 %1837
      %1839 = vrot.lane.b32.xlu0 %v1038, 40
      %v1840 = vpop.permute.xlu0 %1839
      %1841 = vrot.lane.b32.xlu0 %v1039, 40
      %v1842 = vpop.permute.xlu0 %1841
      %1843 = vrot.lane.b32.xlu0 %v1040, 40
      %v1844 = vpop.permute.xlu0 %1843
      %v1846 = vsel %vm1053, %v1830, 0
      %v1849 = vsel %vm1053, %v1832, 0
      %v1852 = vsel %vm1053, %v1834, 0
      %v1855 = vsel %vm1053, %v1836, 0
      %v1858 = vsel %vm1053, %v1838, 0
      %v1861 = vsel %vm1053, %v1840, 0
      %v1864 = vsel %vm1053, %v1842, 0
      %v1867 = vsel %vm1053, %v1844, 0
      %1869 = vmatpush.bf16.xpose.msra.mxu0 0
      %1870 = vmatpush.bf16.xpose.msra.mxu0 0
      %1871 = vmatpush.bf16.xpose.msra.mxu0 0
      %1872 = vmatpush.bf16.xpose.msra.mxu0 0
      %1873 = vmatpush.bf16.xpose.msra.mxu0 %v1867
      %1874 = vmatpush.bf16.xpose.msra.mxu0 %v1864
      %1875 = vmatpush.bf16.xpose.msra.mxu0 %v1861
      %1876 = vmatpush.bf16.xpose.msra.mxu0 %v1858
      %1877 = vmatmul.bf16.gmra.mxu0 %v1846
      %v1878 = vpop.f32.mrf.mxu0
      %v1879 = vadd.f32 0.0, %v1878
      %v1880 = vpop.f32.mrf.mxu0
      %v1881 = vadd.f32 0.0, %v1880
      %1882 = vmatmul.bf16.gmra.mxu0 %v1849
      %v1883 = vpop.f32.mrf.mxu0
      %v1884 = vadd.f32 0.0, %v1883
      %v1885 = vpop.f32.mrf.mxu0
      %v1886 = vadd.f32 0.0, %v1885
      %1887 = vmatmul.bf16.gmra.mxu0 %v1852
      %v1888 = vpop.f32.mrf.mxu0
      %v1889 = vadd.f32 0.0, %v1888
      %v1890 = vpop.f32.mrf.mxu0
      %v1891 = vadd.f32 0.0, %v1890
      %1892 = vmatmul.bf16.gmra.mxu0 %v1855
      %v1893 = vpop.f32.mrf.mxu0
      %v1894 = vadd.f32 0.0, %v1893
      %v1895 = vpop.f32.mrf.mxu0
      %v1896 = vadd.f32 0.0, %v1895
      %1897 = vdwg.mxu0
      %v1898 = vsel %vm1107, %v1879, -inf
      %1899 = vmax.xlane.f32.xlu0 %v1898
      %v1900 = vpop.xlane.xlu0 %1899
      %v1901 = vsel %vm1107, %v1881, -inf
      %1902 = vmax.xlane.f32.xlu0 %v1901
      %v1903 = vpop.xlane.xlu0 %1902
      %v1904 = vsel %vm1107, %v1884, -inf
      %1905 = vmax.xlane.f32.xlu0 %v1904
      %v1906 = vpop.xlane.xlu0 %1905
      %v1907 = vsel %vm1107, %v1886, -inf
      %1908 = vmax.xlane.f32.xlu0 %v1907
      %v1909 = vpop.xlane.xlu0 %1908
      %v1910 = vsel %vm1107, %v1889, -inf
      %1911 = vmax.xlane.f32.xlu0 %v1910
      %v1912 = vpop.xlane.xlu0 %1911
      %v1913 = vsel %vm1107, %v1891, -inf
      %1914 = vmax.xlane.f32.xlu0 %v1913
      %v1915 = vpop.xlane.xlu0 %1914
      %v1916 = vsel %vm1107, %v1894, -inf
      %1917 = vmax.xlane.f32.xlu0 %v1916
      %v1918 = vpop.xlane.xlu0 %1917
      %v1919 = vsel %vm1107, %v1896, -inf
      %1920 = vmax.xlane.f32.xlu0 %v1919
      %v1921 = vpop.xlane.xlu0 %1920
      %v1922 = vsub.f32 %v1879, %v1900
      %v1923 = vsub.f32 %v1881, %v1903
      %v1924 = vsub.f32 %v1884, %v1906
      %v1925 = vsub.f32 %v1886, %v1909
      %v1926 = vsub.f32 %v1889, %v1912
      %v1927 = vsub.f32 %v1891, %v1915
      %v1928 = vsub.f32 %v1894, %v1918
      %v1929 = vsub.f32 %v1896, %v1921
      %v1930 = vmul.f32 %v1922, 1.442695
      %v1931 = vpow.pop %v1930
      %v1932 = vmul.f32 %v1923, 1.442695
      %v1933 = vpow.pop %v1932
      %v1934 = vmul.f32 %v1924, 1.442695
      %v1935 = vpow.pop %v1934
      %v1936 = vmul.f32 %v1925, 1.442695
      %v1937 = vpow.pop %v1936
      %v1938 = vmul.f32 %v1926, 1.442695
      %v1939 = vpow.pop %v1938
      %v1940 = vmul.f32 %v1927, 1.442695
      %v1941 = vpow.pop %v1940
      %v1942 = vmul.f32 %v1928, 1.442695
      %v1943 = vpow.pop %v1942
      %v1944 = vmul.f32 %v1929, 1.442695
      %v1945 = vpow.pop %v1944
      %v1946 = vsel %vm1107, %v1931, 0.0
      %1947 = vadd.xlane.f32.xlu0 %v1946
      %v1948 = vpop.xlane.xlu0 %1947
      %v1949 = vsel %vm1107, %v1933, 0.0
      %1950 = vadd.xlane.f32.xlu0 %v1949
      %v1951 = vpop.xlane.xlu0 %1950
      %v1952 = vsel %vm1107, %v1935, 0.0
      %1953 = vadd.xlane.f32.xlu0 %v1952
      %v1954 = vpop.xlane.xlu0 %1953
      %v1955 = vsel %vm1107, %v1937, 0.0
      %1956 = vadd.xlane.f32.xlu0 %v1955
      %v1957 = vpop.xlane.xlu0 %1956
      %v1958 = vsel %vm1107, %v1939, 0.0
      %1959 = vadd.xlane.f32.xlu0 %v1958
      %v1960 = vpop.xlane.xlu0 %1959
      %v1961 = vsel %vm1107, %v1941, 0.0
      %1962 = vadd.xlane.f32.xlu0 %v1961
      %v1963 = vpop.xlane.xlu0 %1962
      %v1964 = vsel %vm1107, %v1943, 0.0
      %1965 = vadd.xlane.f32.xlu0 %v1964
      %v1966 = vpop.xlane.xlu0 %1965
      %v1967 = vsel %vm1107, %v1945, 0.0
      %1968 = vadd.xlane.f32.xlu0 %v1967
      %v1969 = vpop.xlane.xlu0 %1968
      %v1970 = vrcp.pop %v1948
      %v1971 = vrcp.pop %v1951
      %v1972 = vrcp.pop %v1954
      %v1973 = vrcp.pop %v1957
      %v1974 = vrcp.pop %v1960
      %v1975 = vrcp.pop %v1963
      %v1976 = vrcp.pop %v1966
      %v1977 = vrcp.pop %v1969
      %v1978 = vmul.f32 %v1931, %v1970
      %v1979 = vmul.f32 %v1933, %v1971
      %v1980 = vmul.f32 %v1935, %v1972
      %v1981 = vmul.f32 %v1937, %v1973
      %v1982 = vmul.f32 %v1939, %v1974
      %v1983 = vmul.f32 %v1941, %v1975
      %v1984 = vmul.f32 %v1943, %v1976
      %v1985 = vmul.f32 %v1945, %v1977
      %v1986 = vpack.c.bf16 %v1032, %v1032
      %1987 = vrot.lane.b32.xlu0 %v1037, 8
      %v1988 = vpop.permute.xlu0 %1987
      %1989 = vrot.lane.b32.xlu0 %v1038, 8
      %v1990 = vpop.permute.xlu0 %1989
      %1991 = vrot.lane.b32.xlu0 %v1039, 8
      %v1992 = vpop.permute.xlu0 %1991
      %1993 = vrot.lane.b32.xlu0 %v1040, 8
      %v1994 = vpop.permute.xlu0 %1993
      %v1996 = vsel %vm1053, %v1988, 0
      %v1999 = vsel %vm1053, %v1990, 0
      %v2002 = vsel %vm1053, %v1992, 0
      %v2005 = vsel %vm1053, %v1994, 0
      %v2008 = vsel %vm1217, %v1986, 0
      %2010 = vmatpush.bf16.msra.mxu0 0
      %2011 = vmatpush.bf16.msra.mxu0 0
      %2012 = vmatpush.bf16.msra.mxu0 0
      %2013 = vmatpush.bf16.msra.mxu0 0
      %2014 = vmatpush.bf16.msra.mxu0 0
      %2015 = vmatpush.bf16.msra.mxu0 0
      %2016 = vmatpush.bf16.msra.mxu0 0
      %2017 = vmatpush.bf16.msra.mxu0 %v2008
      %2018 = vmatmul.bf16.gmra.mxu0 %v1996
      %v2019 = vpop.f32.mrf.mxu0
      %v2020 = vadd.f32 0.0, %v2019
      %v2021 = vpop.f32.mrf.mxu0
      %v2022 = vadd.f32 0.0, %v2021
      %2023 = vmatmul.bf16.gmra.mxu0 %v1999
      %v2024 = vpop.f32.mrf.mxu0
      %v2025 = vadd.f32 0.0, %v2024
      %v2026 = vpop.f32.mrf.mxu0
      %v2027 = vadd.f32 0.0, %v2026
      %2028 = vmatmul.bf16.gmra.mxu0 %v2002
      %v2029 = vpop.f32.mrf.mxu0
      %v2030 = vadd.f32 0.0, %v2029
      %v2031 = vpop.f32.mrf.mxu0
      %v2032 = vadd.f32 0.0, %v2031
      %2033 = vmatmul.bf16.gmra.mxu0 %v2005
      %v2034 = vpop.f32.mrf.mxu0
      %v2035 = vadd.f32 0.0, %v2034
      %v2036 = vpop.f32.mrf.mxu0
      %v2037 = vadd.f32 0.0, %v2036
      %2038 = vdwg.mxu0
      %v2039 = vpack.c.bf16 %v1979, %v1978
      %v2040 = vpack.c.bf16 %v1981, %v1980
      %v2041 = vpack.c.bf16 %v1983, %v1982
      %v2042 = vpack.c.bf16 %v1985, %v1984
      %v2043 = vpack.c.bf16 %v2022, %v2020
      %v2044 = vpack.c.bf16 %v2027, %v2025
      %v2045 = vpack.c.bf16 %v2032, %v2030
      %v2046 = vpack.c.bf16 %v2037, %v2035
      %v2048 = vsel %vm1107, %v2039, 0
      %v2051 = vsel %vm1107, %v2040, 0
      %v2054 = vsel %vm1107, %v2041, 0
      %v2057 = vsel %vm1107, %v2042, 0
      %2059 = vmatpush.bf16.msra.mxu0 0
      %2060 = vmatpush.bf16.msra.mxu0 0
      %2061 = vmatpush.bf16.msra.mxu0 0
      %2062 = vmatpush.bf16.msra.mxu0 0
      %2063 = vmatpush.bf16.msra.mxu0 %v2046
      %2064 = vmatpush.bf16.msra.mxu0 %v2045
      %2065 = vmatpush.bf16.msra.mxu0 %v2044
      %2066 = vmatpush.bf16.msra.mxu0 %v2043
      %2067 = vmatmul.bf16.gmra.mxu0 %v2048
      %v2068 = vpop.f32.mrf.mxu0
      %v2069 = vadd.f32 0.0, %v2068
      %v2070 = vpop.f32.mrf.mxu0
      %v2071 = vadd.f32 0.0, %v2070
      %2072 = vmatmul.bf16.gmra.mxu0 %v2051
      %v2073 = vpop.f32.mrf.mxu0
      %v2074 = vadd.f32 0.0, %v2073
      %v2075 = vpop.f32.mrf.mxu0
      %v2076 = vadd.f32 0.0, %v2075
      %2077 = vmatmul.bf16.gmra.mxu0 %v2054
      %v2078 = vpop.f32.mrf.mxu0
      %v2079 = vadd.f32 0.0, %v2078
      %v2080 = vpop.f32.mrf.mxu0
      %v2081 = vadd.f32 0.0, %v2080
      %2082 = vmatmul.bf16.gmra.mxu0 %v2057
      %v2083 = vpop.f32.mrf.mxu0
      %v2084 = vadd.f32 0.0, %v2083
      %v2085 = vpop.f32.mrf.mxu0
      %v2086 = vadd.f32 0.0, %v2085
      %2087 = vdwg.mxu0
      %v2088 = vadd.f32 %v1821, %v2069
      %v2089 = vadd.f32 %v1822, %v2071
      %v2090 = vadd.f32 %v1823, %v2074
      %v2091 = vadd.f32 %v1824, %v2076
      %v2092 = vadd.f32 %v1825, %v2079
      %v2093 = vadd.f32 %v1826, %v2081
      %v2094 = vadd.f32 %v1827, %v2084
      %v2095 = vadd.f32 %v1828, %v2086
      %v2096 = vpack.c.bf16 %v1022, %v1021
      %v2097 = vpack.c.bf16 %v1024, %v1023
      %v2098 = vpack.c.bf16 %v1026, %v1025
      %v2099 = vpack.c.bf16 %v1028, %v1027
      %v2100 = vpack.c.bf16 %v804, %v802
      %v2101 = vpack.c.bf16 %v809, %v807
      %v2102 = vpack.c.bf16 %v814, %v812
      %v2103 = vpack.c.bf16 %v819, %v817
      %2108 = vrot.lane.b32.xlu0 %v2100, 64
      %v2109 = vpop.permute.xlu0 %2108
      %2110 = vrot.lane.b32.xlu0 %v2101, 64
      %v2111 = vpop.permute.xlu0 %2110
      %2112 = vrot.lane.b32.xlu0 %v2102, 64
      %v2113 = vpop.permute.xlu0 %2112
      %2114 = vrot.lane.b32.xlu0 %v2103, 64
      %v2115 = vpop.permute.xlu0 %2114
      %v2117 = vsel %vm1053, %v2096, 0
      %v2120 = vsel %vm1053, %v2097, 0
      %v2123 = vsel %vm1053, %v2098, 0
      %v2126 = vsel %vm1053, %v2099, 0
      %v2129 = vsel %vm1053, %v2109, 0
      %v2132 = vsel %vm1053, %v2111, 0
      %v2135 = vsel %vm1053, %v2113, 0
      %v2138 = vsel %vm1053, %v2115, 0
      %2140 = vmatpush.bf16.xpose.msra.mxu0 0
      %2141 = vmatpush.bf16.xpose.msra.mxu0 0
      %2142 = vmatpush.bf16.xpose.msra.mxu0 0
      %2143 = vmatpush.bf16.xpose.msra.mxu0 0
      %2144 = vmatpush.bf16.xpose.msra.mxu0 %v2138
      %2145 = vmatpush.bf16.xpose.msra.mxu0 %v2135
      %2146 = vmatpush.bf16.xpose.msra.mxu0 %v2132
      %2147 = vmatpush.bf16.xpose.msra.mxu0 %v2129
      %2148 = vmatmul.bf16.gmra.mxu0 %v2117
      %v2149 = vpop.f32.mrf.mxu0
      %v2150 = vadd.f32 0.0, %v2149
      %v2151 = vpop.f32.mrf.mxu0
      %v2152 = vadd.f32 0.0, %v2151
      %2153 = vmatmul.bf16.gmra.mxu0 %v2120
      %v2154 = vpop.f32.mrf.mxu0
      %v2155 = vadd.f32 0.0, %v2154
      %v2156 = vpop.f32.mrf.mxu0
      %v2157 = vadd.f32 0.0, %v2156
      %2158 = vmatmul.bf16.gmra.mxu0 %v2123
      %v2159 = vpop.f32.mrf.mxu0
      %v2160 = vadd.f32 0.0, %v2159
      %v2161 = vpop.f32.mrf.mxu0
      %v2162 = vadd.f32 0.0, %v2161
      %2163 = vmatmul.bf16.gmra.mxu0 %v2126
      %v2164 = vpop.f32.mrf.mxu0
      %v2165 = vadd.f32 0.0, %v2164
      %v2166 = vpop.f32.mrf.mxu0
      %v2167 = vadd.f32 0.0, %v2166
      %2168 = vdwg.mxu0
      %v2169 = vsel %vm1107, %v2150, -inf
      %2170 = vmax.xlane.f32.xlu0 %v2169
      %v2171 = vpop.xlane.xlu0 %2170
      %v2172 = vsel %vm1107, %v2152, -inf
      %2173 = vmax.xlane.f32.xlu0 %v2172
      %v2174 = vpop.xlane.xlu0 %2173
      %v2175 = vsel %vm1107, %v2155, -inf
      %2176 = vmax.xlane.f32.xlu0 %v2175
      %v2177 = vpop.xlane.xlu0 %2176
      %v2178 = vsel %vm1107, %v2157, -inf
      %2179 = vmax.xlane.f32.xlu0 %v2178
      %v2180 = vpop.xlane.xlu0 %2179
      %v2181 = vsel %vm1107, %v2160, -inf
      %2182 = vmax.xlane.f32.xlu0 %v2181
      %v2183 = vpop.xlane.xlu0 %2182
      %v2184 = vsel %vm1107, %v2162, -inf
      %2185 = vmax.xlane.f32.xlu0 %v2184
      %v2186 = vpop.xlane.xlu0 %2185
      %v2187 = vsel %vm1107, %v2165, -inf
      %2188 = vmax.xlane.f32.xlu0 %v2187
      %v2189 = vpop.xlane.xlu0 %2188
      %v2190 = vsel %vm1107, %v2167, -inf
      %2191 = vmax.xlane.f32.xlu0 %v2190
      %v2192 = vpop.xlane.xlu0 %2191
      %v2193 = vsub.f32 %v2150, %v2171
      %v2194 = vsub.f32 %v2152, %v2174
      %v2195 = vsub.f32 %v2155, %v2177
      %v2196 = vsub.f32 %v2157, %v2180
      %v2197 = vsub.f32 %v2160, %v2183
      %v2198 = vsub.f32 %v2162, %v2186
      %v2199 = vsub.f32 %v2165, %v2189
      %v2200 = vsub.f32 %v2167, %v2192
      %v2201 = vmul.f32 %v2193, 1.442695
      %v2202 = vpow.pop %v2201
      %v2203 = vmul.f32 %v2194, 1.442695
      %v2204 = vpow.pop %v2203
      %v2205 = vmul.f32 %v2195, 1.442695
      %v2206 = vpow.pop %v2205
      %v2207 = vmul.f32 %v2196, 1.442695
      %v2208 = vpow.pop %v2207
      %v2209 = vmul.f32 %v2197, 1.442695
      %v2210 = vpow.pop %v2209
      %v2211 = vmul.f32 %v2198, 1.442695
      %v2212 = vpow.pop %v2211
      %v2213 = vmul.f32 %v2199, 1.442695
      %v2214 = vpow.pop %v2213
      %v2215 = vmul.f32 %v2200, 1.442695
      %v2216 = vpow.pop %v2215
      %v2217 = vsel %vm1107, %v2202, 0.0
      %2218 = vadd.xlane.f32.xlu0 %v2217
      %v2219 = vpop.xlane.xlu0 %2218
      %v2220 = vsel %vm1107, %v2204, 0.0
      %2221 = vadd.xlane.f32.xlu0 %v2220
      %v2222 = vpop.xlane.xlu0 %2221
      %v2223 = vsel %vm1107, %v2206, 0.0
      %2224 = vadd.xlane.f32.xlu0 %v2223
      %v2225 = vpop.xlane.xlu0 %2224
      %v2226 = vsel %vm1107, %v2208, 0.0
      %2227 = vadd.xlane.f32.xlu0 %v2226
      %v2228 = vpop.xlane.xlu0 %2227
      %v2229 = vsel %vm1107, %v2210, 0.0
      %2230 = vadd.xlane.f32.xlu0 %v2229
      %v2231 = vpop.xlane.xlu0 %2230
      %v2232 = vsel %vm1107, %v2212, 0.0
      %2233 = vadd.xlane.f32.xlu0 %v2232
      %v2234 = vpop.xlane.xlu0 %2233
      %v2235 = vsel %vm1107, %v2214, 0.0
      %2236 = vadd.xlane.f32.xlu0 %v2235
      %v2237 = vpop.xlane.xlu0 %2236
      %v2238 = vsel %vm1107, %v2216, 0.0
      %2239 = vadd.xlane.f32.xlu0 %v2238
      %v2240 = vpop.xlane.xlu0 %2239
      %v2241 = vrcp.pop %v2219
      %v2242 = vrcp.pop %v2222
      %v2243 = vrcp.pop %v2225
      %v2244 = vrcp.pop %v2228
      %v2245 = vrcp.pop %v2231
      %v2246 = vrcp.pop %v2234
      %v2247 = vrcp.pop %v2237
      %v2248 = vrcp.pop %v2240
      %v2249 = vmul.f32 %v2202, %v2241
      %v2250 = vmul.f32 %v2204, %v2242
      %v2251 = vmul.f32 %v2206, %v2243
      %v2252 = vmul.f32 %v2208, %v2244
      %v2253 = vmul.f32 %v2210, %v2245
      %v2254 = vmul.f32 %v2212, %v2246
      %v2255 = vmul.f32 %v2214, %v2247
      %v2256 = vmul.f32 %v2216, %v2248
      %2257 = vrot.lane.b32.xlu0 %v2100, 32
      %v2258 = vpop.permute.xlu0 %2257
      %2259 = vrot.lane.b32.xlu0 %v2101, 32
      %v2260 = vpop.permute.xlu0 %2259
      %2261 = vrot.lane.b32.xlu0 %v2102, 32
      %v2262 = vpop.permute.xlu0 %2261
      %2263 = vrot.lane.b32.xlu0 %v2103, 32
      %v2264 = vpop.permute.xlu0 %2263
      %v2266 = vsel %vm1053, %v2258, 0
      %v2269 = vsel %vm1053, %v2260, 0
      %v2272 = vsel %vm1053, %v2262, 0
      %v2275 = vsel %vm1053, %v2264, 0
      %2277 = vmatpush.bf16.msra.mxu0 0
      %2278 = vmatpush.bf16.msra.mxu0 0
      %2279 = vmatpush.bf16.msra.mxu0 0
      %2280 = vmatpush.bf16.msra.mxu0 0
      %2281 = vmatpush.bf16.msra.mxu0 0
      %2282 = vmatpush.bf16.msra.mxu0 0
      %2283 = vmatpush.bf16.msra.mxu0 0
      %2284 = vmatpush.bf16.msra.mxu0 %v1219
      %2285 = vmatmul.bf16.gmra.mxu0 %v2266
      %v2286 = vpop.f32.mrf.mxu0
      %v2287 = vadd.f32 0.0, %v2286
      %v2288 = vpop.f32.mrf.mxu0
      %v2289 = vadd.f32 0.0, %v2288
      %2290 = vmatmul.bf16.gmra.mxu0 %v2269
      %v2291 = vpop.f32.mrf.mxu0
      %v2292 = vadd.f32 0.0, %v2291
      %v2293 = vpop.f32.mrf.mxu0
      %v2294 = vadd.f32 0.0, %v2293
      %2295 = vmatmul.bf16.gmra.mxu0 %v2272
      %v2296 = vpop.f32.mrf.mxu0
      %v2297 = vadd.f32 0.0, %v2296
      %v2298 = vpop.f32.mrf.mxu0
      %v2299 = vadd.f32 0.0, %v2298
      %2300 = vmatmul.bf16.gmra.mxu0 %v2275
      %v2301 = vpop.f32.mrf.mxu0
      %v2302 = vadd.f32 0.0, %v2301
      %v2303 = vpop.f32.mrf.mxu0
      %v2304 = vadd.f32 0.0, %v2303
      %2305 = vdwg.mxu0
      %v2306 = vpack.c.bf16 %v2250, %v2249
      %v2307 = vpack.c.bf16 %v2252, %v2251
      %v2308 = vpack.c.bf16 %v2254, %v2253
      %v2309 = vpack.c.bf16 %v2256, %v2255
      %v2310 = vpack.c.bf16 %v2289, %v2287
      %v2311 = vpack.c.bf16 %v2294, %v2292
      %v2312 = vpack.c.bf16 %v2299, %v2297
      %v2313 = vpack.c.bf16 %v2304, %v2302
      %2318 = vrot.lane.b32.xlu0 %v2096, 120
      %v2319 = vpop.permute.xlu0 %2318
      %2320 = vrot.lane.b32.xlu0 %v2097, 120
      %v2321 = vpop.permute.xlu0 %2320
      %2322 = vrot.lane.b32.xlu0 %v2098, 120
      %v2323 = vpop.permute.xlu0 %2322
      %2324 = vrot.lane.b32.xlu0 %v2099, 120
      %v2325 = vpop.permute.xlu0 %2324
      %2326 = vrot.lane.b32.xlu0 %v2100, 56
      %v2327 = vpop.permute.xlu0 %2326
      %2328 = vrot.lane.b32.xlu0 %v2101, 56
      %v2329 = vpop.permute.xlu0 %2328
      %2330 = vrot.lane.b32.xlu0 %v2102, 56
      %v2331 = vpop.permute.xlu0 %2330
      %2332 = vrot.lane.b32.xlu0 %v2103, 56
      %v2333 = vpop.permute.xlu0 %2332
      %v2335 = vsel %vm1053, %v2319, 0
      %v2338 = vsel %vm1053, %v2321, 0
      %v2341 = vsel %vm1053, %v2323, 0
      %v2344 = vsel %vm1053, %v2325, 0
      %v2347 = vsel %vm1053, %v2327, 0
      %v2350 = vsel %vm1053, %v2329, 0
      %v2353 = vsel %vm1053, %v2331, 0
      %v2356 = vsel %vm1053, %v2333, 0
      %2358 = vmatpush.bf16.xpose.msra.mxu0 0
      %2359 = vmatpush.bf16.xpose.msra.mxu0 0
      %2360 = vmatpush.bf16.xpose.msra.mxu0 0
      %2361 = vmatpush.bf16.xpose.msra.mxu0 0
      %2362 = vmatpush.bf16.xpose.msra.mxu0 %v2356
      %2363 = vmatpush.bf16.xpose.msra.mxu0 %v2353
      %2364 = vmatpush.bf16.xpose.msra.mxu0 %v2350
      %2365 = vmatpush.bf16.xpose.msra.mxu0 %v2347
      %2366 = vmatmul.bf16.gmra.mxu0 %v2335
      %v2367 = vpop.f32.mrf.mxu0
      %v2368 = vadd.f32 0.0, %v2367
      %v2369 = vpop.f32.mrf.mxu0
      %v2370 = vadd.f32 0.0, %v2369
      %2371 = vmatmul.bf16.gmra.mxu0 %v2338
      %v2372 = vpop.f32.mrf.mxu0
      %v2373 = vadd.f32 0.0, %v2372
      %v2374 = vpop.f32.mrf.mxu0
      %v2375 = vadd.f32 0.0, %v2374
      %2376 = vmatmul.bf16.gmra.mxu0 %v2341
      %v2377 = vpop.f32.mrf.mxu0
      %v2378 = vadd.f32 0.0, %v2377
      %v2379 = vpop.f32.mrf.mxu0
      %v2380 = vadd.f32 0.0, %v2379
      %2381 = vmatmul.bf16.gmra.mxu0 %v2344
      %v2382 = vpop.f32.mrf.mxu0
      %v2383 = vadd.f32 0.0, %v2382
      %v2384 = vpop.f32.mrf.mxu0
      %v2385 = vadd.f32 0.0, %v2384
      %2386 = vdwg.mxu0
      %v2387 = vsel %vm1107, %v2368, -inf
      %2388 = vmax.xlane.f32.xlu0 %v2387
      %v2389 = vpop.xlane.xlu0 %2388
      %v2390 = vsel %vm1107, %v2370, -inf
      %2391 = vmax.xlane.f32.xlu0 %v2390
      %v2392 = vpop.xlane.xlu0 %2391
      %v2393 = vsel %vm1107, %v2373, -inf
      %2394 = vmax.xlane.f32.xlu0 %v2393
      %v2395 = vpop.xlane.xlu0 %2394
      %v2396 = vsel %vm1107, %v2375, -inf
      %2397 = vmax.xlane.f32.xlu0 %v2396
      %v2398 = vpop.xlane.xlu0 %2397
      %v2399 = vsel %vm1107, %v2378, -inf
      %2400 = vmax.xlane.f32.xlu0 %v2399
      %v2401 = vpop.xlane.xlu0 %2400
      %v2402 = vsel %vm1107, %v2380, -inf
      %2403 = vmax.xlane.f32.xlu0 %v2402
      %v2404 = vpop.xlane.xlu0 %2403
      %v2405 = vsel %vm1107, %v2383, -inf
      %2406 = vmax.xlane.f32.xlu0 %v2405
      %v2407 = vpop.xlane.xlu0 %2406
      %v2408 = vsel %vm1107, %v2385, -inf
      %2409 = vmax.xlane.f32.xlu0 %v2408
      %v2410 = vpop.xlane.xlu0 %2409
      %v2411 = vsub.f32 %v2368, %v2389
      %v2412 = vsub.f32 %v2370, %v2392
      %v2413 = vsub.f32 %v2373, %v2395
      %v2414 = vsub.f32 %v2375, %v2398
      %v2415 = vsub.f32 %v2378, %v2401
      %v2416 = vsub.f32 %v2380, %v2404
      %v2417 = vsub.f32 %v2383, %v2407
      %v2418 = vsub.f32 %v2385, %v2410
      %v2419 = vmul.f32 %v2411, 1.442695
      %v2420 = vpow.pop %v2419
      %v2421 = vmul.f32 %v2412, 1.442695
      %v2422 = vpow.pop %v2421
      %v2423 = vmul.f32 %v2413, 1.442695
      %v2424 = vpow.pop %v2423
      %v2425 = vmul.f32 %v2414, 1.442695
      %v2426 = vpow.pop %v2425
      %v2427 = vmul.f32 %v2415, 1.442695
      %v2428 = vpow.pop %v2427
      %v2429 = vmul.f32 %v2416, 1.442695
      %v2430 = vpow.pop %v2429
      %v2431 = vmul.f32 %v2417, 1.442695
      %v2432 = vpow.pop %v2431
      %v2433 = vmul.f32 %v2418, 1.442695
      %v2434 = vpow.pop %v2433
      %v2435 = vsel %vm1107, %v2420, 0.0
      %2436 = vadd.xlane.f32.xlu0 %v2435
      %v2437 = vpop.xlane.xlu0 %2436
      %v2438 = vsel %vm1107, %v2422, 0.0
      %2439 = vadd.xlane.f32.xlu0 %v2438
      %v2440 = vpop.xlane.xlu0 %2439
      %v2441 = vsel %vm1107, %v2424, 0.0
      %2442 = vadd.xlane.f32.xlu0 %v2441
      %v2443 = vpop.xlane.xlu0 %2442
      %v2444 = vsel %vm1107, %v2426, 0.0
      %2445 = vadd.xlane.f32.xlu0 %v2444
      %v2446 = vpop.xlane.xlu0 %2445
      %v2447 = vsel %vm1107, %v2428, 0.0
      %2448 = vadd.xlane.f32.xlu0 %v2447
      %v2449 = vpop.xlane.xlu0 %2448
      %v2450 = vsel %vm1107, %v2430, 0.0
      %2451 = vadd.xlane.f32.xlu0 %v2450
      %v2452 = vpop.xlane.xlu0 %2451
      %v2453 = vsel %vm1107, %v2432, 0.0
      %2454 = vadd.xlane.f32.xlu0 %v2453
      %v2455 = vpop.xlane.xlu0 %2454
      %v2456 = vsel %vm1107, %v2434, 0.0
      %2457 = vadd.xlane.f32.xlu0 %v2456
      %v2458 = vpop.xlane.xlu0 %2457
      %v2459 = vrcp.pop %v2437
      %v2460 = vrcp.pop %v2440
      %v2461 = vrcp.pop %v2443
      %v2462 = vrcp.pop %v2446
      %v2463 = vrcp.pop %v2449
      %v2464 = vrcp.pop %v2452
      %v2465 = vrcp.pop %v2455
      %v2466 = vrcp.pop %v2458
      %v2467 = vmul.f32 %v2420, %v2459
      %v2468 = vmul.f32 %v2422, %v2460
      %v2469 = vmul.f32 %v2424, %v2461
      %v2470 = vmul.f32 %v2426, %v2462
      %v2471 = vmul.f32 %v2428, %v2463
      %v2472 = vmul.f32 %v2430, %v2464
      %v2473 = vmul.f32 %v2432, %v2465
      %v2474 = vmul.f32 %v2434, %v2466
      %2475 = vrot.lane.b32.xlu0 %v2100, 24
      %v2476 = vpop.permute.xlu0 %2475
      %2477 = vrot.lane.b32.xlu0 %v2101, 24
      %v2478 = vpop.permute.xlu0 %2477
      %2479 = vrot.lane.b32.xlu0 %v2102, 24
      %v2480 = vpop.permute.xlu0 %2479
      %2481 = vrot.lane.b32.xlu0 %v2103, 24
      %v2482 = vpop.permute.xlu0 %2481
      %v2484 = vsel %vm1053, %v2476, 0
      %v2487 = vsel %vm1053, %v2478, 0
      %v2490 = vsel %vm1053, %v2480, 0
      %v2493 = vsel %vm1053, %v2482, 0
      %2495 = vmatpush.bf16.msra.mxu0 0
      %2496 = vmatpush.bf16.msra.mxu0 0
      %2497 = vmatpush.bf16.msra.mxu0 0
      %2498 = vmatpush.bf16.msra.mxu0 0
      %2499 = vmatpush.bf16.msra.mxu0 0
      %2500 = vmatpush.bf16.msra.mxu0 0
      %2501 = vmatpush.bf16.msra.mxu0 0
      %2502 = vmatpush.bf16.msra.mxu0 %v1441
      %2503 = vmatmul.bf16.gmra.mxu0 %v2484
      %v2504 = vpop.f32.mrf.mxu0
      %v2505 = vadd.f32 0.0, %v2504
      %v2506 = vpop.f32.mrf.mxu0
      %v2507 = vadd.f32 0.0, %v2506
      %2508 = vmatmul.bf16.gmra.mxu0 %v2487
      %v2509 = vpop.f32.mrf.mxu0
      %v2510 = vadd.f32 0.0, %v2509
      %v2511 = vpop.f32.mrf.mxu0
      %v2512 = vadd.f32 0.0, %v2511
      %2513 = vmatmul.bf16.gmra.mxu0 %v2490
      %v2514 = vpop.f32.mrf.mxu0
      %v2515 = vadd.f32 0.0, %v2514
      %v2516 = vpop.f32.mrf.mxu0
      %v2517 = vadd.f32 0.0, %v2516
      %2518 = vmatmul.bf16.gmra.mxu0 %v2493
      %v2519 = vpop.f32.mrf.mxu0
      %v2520 = vadd.f32 0.0, %v2519
      %v2521 = vpop.f32.mrf.mxu0
      %v2522 = vadd.f32 0.0, %v2521
      %2523 = vdwg.mxu0
      %v2524 = vpack.c.bf16 %v2468, %v2467
      %v2525 = vpack.c.bf16 %v2470, %v2469
      %v2526 = vpack.c.bf16 %v2472, %v2471
      %v2527 = vpack.c.bf16 %v2474, %v2473
      %v2528 = vpack.c.bf16 %v2507, %v2505
      %v2529 = vpack.c.bf16 %v2512, %v2510
      %v2530 = vpack.c.bf16 %v2517, %v2515
      %v2531 = vpack.c.bf16 %v2522, %v2520
      %v2533 = vsel %vm1107, %v2524, 0
      %v2536 = vsel %vm1107, %v2525, 0
      %v2539 = vsel %vm1107, %v2526, 0
      %v2542 = vsel %vm1107, %v2527, 0
      %2544 = vmatpush.bf16.msra.mxu0 0
      %2545 = vmatpush.bf16.msra.mxu0 0
      %2546 = vmatpush.bf16.msra.mxu0 0
      %2547 = vmatpush.bf16.msra.mxu0 0
      %2548 = vmatpush.bf16.msra.mxu0 %v2531
      %2549 = vmatpush.bf16.msra.mxu0 %v2530
      %2550 = vmatpush.bf16.msra.mxu0 %v2529
      %2551 = vmatpush.bf16.msra.mxu0 %v2528
      %2552 = vmatmul.bf16.gmra.mxu0 %v2533
      %v2553 = vpop.f32.mrf.mxu0
      %v2554 = vadd.f32 0.0, %v2553
      %v2555 = vpop.f32.mrf.mxu0
      %v2556 = vadd.f32 0.0, %v2555
      %2557 = vmatmul.bf16.gmra.mxu0 %v2536
      %v2558 = vpop.f32.mrf.mxu0
      %v2559 = vadd.f32 0.0, %v2558
      %v2560 = vpop.f32.mrf.mxu0
      %v2561 = vadd.f32 0.0, %v2560
      %2562 = vmatmul.bf16.gmra.mxu0 %v2539
      %v2563 = vpop.f32.mrf.mxu0
      %v2564 = vadd.f32 0.0, %v2563
      %v2565 = vpop.f32.mrf.mxu0
      %v2566 = vadd.f32 0.0, %v2565
      %2567 = vmatmul.bf16.gmra.mxu0 %v2542
      %v2568 = vpop.f32.mrf.mxu0
      %v2569 = vadd.f32 0.0, %v2568
      %v2570 = vpop.f32.mrf.mxu0
      %v2571 = vadd.f32 0.0, %v2570
      %2572 = vdwg.mxu0
      %v2574 = vsel %vm1107, %v2306, 0
      %v2577 = vsel %vm1107, %v2307, 0
      %v2580 = vsel %vm1107, %v2308, 0
      %v2583 = vsel %vm1107, %v2309, 0
      %2585 = vmatpush.bf16.msra.mxu0 0
      %2586 = vmatpush.bf16.msra.mxu0 0
      %2587 = vmatpush.bf16.msra.mxu0 0
      %2588 = vmatpush.bf16.msra.mxu0 0
      %2589 = vmatpush.bf16.msra.mxu0 %v2313
      %2590 = vmatpush.bf16.msra.mxu0 %v2312
      %2591 = vmatpush.bf16.msra.mxu0 %v2311
      %2592 = vmatpush.bf16.msra.mxu0 %v2310
      %2593 = vmatmul.bf16.gmra.mxu0 %v2574
      %v2594 = vpop.f32.mrf.mxu0
      %v2595 = vadd.f32 %v2554, %v2594
      %v2596 = vpop.f32.mrf.mxu0
      %v2597 = vadd.f32 %v2556, %v2596
      %2598 = vmatmul.bf16.gmra.mxu0 %v2577
      %v2599 = vpop.f32.mrf.mxu0
      %v2600 = vadd.f32 %v2559, %v2599
      %v2601 = vpop.f32.mrf.mxu0
      %v2602 = vadd.f32 %v2561, %v2601
      %2603 = vmatmul.bf16.gmra.mxu0 %v2580
      %v2604 = vpop.f32.mrf.mxu0
      %v2605 = vadd.f32 %v2564, %v2604
      %v2606 = vpop.f32.mrf.mxu0
      %v2607 = vadd.f32 %v2566, %v2606
      %2608 = vmatmul.bf16.gmra.mxu0 %v2583
      %v2609 = vpop.f32.mrf.mxu0
      %v2610 = vadd.f32 %v2569, %v2609
      %v2611 = vpop.f32.mrf.mxu0
      %v2612 = vadd.f32 %v2571, %v2611
      %2613 = vdwg.mxu0
      %2614 = vrot.lane.b32.xlu0 %v2096, 112
      %v2615 = vpop.permute.xlu0 %2614
      %2616 = vrot.lane.b32.xlu0 %v2097, 112
      %v2617 = vpop.permute.xlu0 %2616
      %2618 = vrot.lane.b32.xlu0 %v2098, 112
      %v2619 = vpop.permute.xlu0 %2618
      %2620 = vrot.lane.b32.xlu0 %v2099, 112
      %v2621 = vpop.permute.xlu0 %2620
      %2622 = vrot.lane.b32.xlu0 %v2100, 48
      %v2623 = vpop.permute.xlu0 %2622
      %2624 = vrot.lane.b32.xlu0 %v2101, 48
      %v2625 = vpop.permute.xlu0 %2624
      %2626 = vrot.lane.b32.xlu0 %v2102, 48
      %v2627 = vpop.permute.xlu0 %2626
      %2628 = vrot.lane.b32.xlu0 %v2103, 48
      %v2629 = vpop.permute.xlu0 %2628
      %v2631 = vsel %vm1053, %v2615, 0
      %v2634 = vsel %vm1053, %v2617, 0
      %v2637 = vsel %vm1053, %v2619, 0
      %v2640 = vsel %vm1053, %v2621, 0
      %v2643 = vsel %vm1053, %v2623, 0
      %v2646 = vsel %vm1053, %v2625, 0
      %v2649 = vsel %vm1053, %v2627, 0
      %v2652 = vsel %vm1053, %v2629, 0
      %2654 = vmatpush.bf16.xpose.msra.mxu0 0
      %2655 = vmatpush.bf16.xpose.msra.mxu0 0
      %2656 = vmatpush.bf16.xpose.msra.mxu0 0
      %2657 = vmatpush.bf16.xpose.msra.mxu0 0
      %2658 = vmatpush.bf16.xpose.msra.mxu0 %v2652
      %2659 = vmatpush.bf16.xpose.msra.mxu0 %v2649
      %2660 = vmatpush.bf16.xpose.msra.mxu0 %v2646
      %2661 = vmatpush.bf16.xpose.msra.mxu0 %v2643
      %2662 = vmatmul.bf16.gmra.mxu0 %v2631
      %v2663 = vpop.f32.mrf.mxu0
      %v2664 = vadd.f32 0.0, %v2663
      %v2665 = vpop.f32.mrf.mxu0
      %v2666 = vadd.f32 0.0, %v2665
      %2667 = vmatmul.bf16.gmra.mxu0 %v2634
      %v2668 = vpop.f32.mrf.mxu0
      %v2669 = vadd.f32 0.0, %v2668
      %v2670 = vpop.f32.mrf.mxu0
      %v2671 = vadd.f32 0.0, %v2670
      %2672 = vmatmul.bf16.gmra.mxu0 %v2637
      %v2673 = vpop.f32.mrf.mxu0
      %v2674 = vadd.f32 0.0, %v2673
      %v2675 = vpop.f32.mrf.mxu0
      %v2676 = vadd.f32 0.0, %v2675
      %2677 = vmatmul.bf16.gmra.mxu0 %v2640
      %v2678 = vpop.f32.mrf.mxu0
      %v2679 = vadd.f32 0.0, %v2678
      %v2680 = vpop.f32.mrf.mxu0
      %v2681 = vadd.f32 0.0, %v2680
      %2682 = vdwg.mxu0
      %v2683 = vsel %vm1107, %v2664, -inf
      %2684 = vmax.xlane.f32.xlu0 %v2683
      %v2685 = vpop.xlane.xlu0 %2684
      %v2686 = vsel %vm1107, %v2666, -inf
      %2687 = vmax.xlane.f32.xlu0 %v2686
      %v2688 = vpop.xlane.xlu0 %2687
      %v2689 = vsel %vm1107, %v2669, -inf
      %2690 = vmax.xlane.f32.xlu0 %v2689
      %v2691 = vpop.xlane.xlu0 %2690
      %v2692 = vsel %vm1107, %v2671, -inf
      %2693 = vmax.xlane.f32.xlu0 %v2692
      %v2694 = vpop.xlane.xlu0 %2693
      %v2695 = vsel %vm1107, %v2674, -inf
      %2696 = vmax.xlane.f32.xlu0 %v2695
      %v2697 = vpop.xlane.xlu0 %2696
      %v2698 = vsel %vm1107, %v2676, -inf
      %2699 = vmax.xlane.f32.xlu0 %v2698
      %v2700 = vpop.xlane.xlu0 %2699
      %v2701 = vsel %vm1107, %v2679, -inf
      %2702 = vmax.xlane.f32.xlu0 %v2701
      %v2703 = vpop.xlane.xlu0 %2702
      %v2704 = vsel %vm1107, %v2681, -inf
      %2705 = vmax.xlane.f32.xlu0 %v2704
      %v2706 = vpop.xlane.xlu0 %2705
      %v2707 = vsub.f32 %v2664, %v2685
      %v2708 = vsub.f32 %v2666, %v2688
      %v2709 = vsub.f32 %v2669, %v2691
      %v2710 = vsub.f32 %v2671, %v2694
      %v2711 = vsub.f32 %v2674, %v2697
      %v2712 = vsub.f32 %v2676, %v2700
      %v2713 = vsub.f32 %v2679, %v2703
      %v2714 = vsub.f32 %v2681, %v2706
      %v2715 = vmul.f32 %v2707, 1.442695
      %v2716 = vpow.pop %v2715
      %v2717 = vmul.f32 %v2708, 1.442695
      %v2718 = vpow.pop %v2717
      %v2719 = vmul.f32 %v2709, 1.442695
      %v2720 = vpow.pop %v2719
      %v2721 = vmul.f32 %v2710, 1.442695
      %v2722 = vpow.pop %v2721
      %v2723 = vmul.f32 %v2711, 1.442695
      %v2724 = vpow.pop %v2723
      %v2725 = vmul.f32 %v2712, 1.442695
      %v2726 = vpow.pop %v2725
      %v2727 = vmul.f32 %v2713, 1.442695
      %v2728 = vpow.pop %v2727
      %v2729 = vmul.f32 %v2714, 1.442695
      %v2730 = vpow.pop %v2729
      %v2731 = vsel %vm1107, %v2716, 0.0
      %2732 = vadd.xlane.f32.xlu0 %v2731
      %v2733 = vpop.xlane.xlu0 %2732
      %v2734 = vsel %vm1107, %v2718, 0.0
      %2735 = vadd.xlane.f32.xlu0 %v2734
      %v2736 = vpop.xlane.xlu0 %2735
      %v2737 = vsel %vm1107, %v2720, 0.0
      %2738 = vadd.xlane.f32.xlu0 %v2737
      %v2739 = vpop.xlane.xlu0 %2738
      %v2740 = vsel %vm1107, %v2722, 0.0
      %2741 = vadd.xlane.f32.xlu0 %v2740
      %v2742 = vpop.xlane.xlu0 %2741
      %v2743 = vsel %vm1107, %v2724, 0.0
      %2744 = vadd.xlane.f32.xlu0 %v2743
      %v2745 = vpop.xlane.xlu0 %2744
      %v2746 = vsel %vm1107, %v2726, 0.0
      %2747 = vadd.xlane.f32.xlu0 %v2746
      %v2748 = vpop.xlane.xlu0 %2747
      %v2749 = vsel %vm1107, %v2728, 0.0
      %2750 = vadd.xlane.f32.xlu0 %v2749
      %v2751 = vpop.xlane.xlu0 %2750
      %v2752 = vsel %vm1107, %v2730, 0.0
      %2753 = vadd.xlane.f32.xlu0 %v2752
      %v2754 = vpop.xlane.xlu0 %2753
      %v2755 = vrcp.pop %v2733
      %v2756 = vrcp.pop %v2736
      %v2757 = vrcp.pop %v2739
      %v2758 = vrcp.pop %v2742
      %v2759 = vrcp.pop %v2745
      %v2760 = vrcp.pop %v2748
      %v2761 = vrcp.pop %v2751
      %v2762 = vrcp.pop %v2754
      %v2763 = vmul.f32 %v2716, %v2755
      %v2764 = vmul.f32 %v2718, %v2756
      %v2765 = vmul.f32 %v2720, %v2757
      %v2766 = vmul.f32 %v2722, %v2758
      %v2767 = vmul.f32 %v2724, %v2759
      %v2768 = vmul.f32 %v2726, %v2760
      %v2769 = vmul.f32 %v2728, %v2761
      %v2770 = vmul.f32 %v2730, %v2762
      %2771 = vrot.lane.b32.xlu0 %v2100, 16
      %v2772 = vpop.permute.xlu0 %2771
      %2773 = vrot.lane.b32.xlu0 %v2101, 16
      %v2774 = vpop.permute.xlu0 %2773
      %2775 = vrot.lane.b32.xlu0 %v2102, 16
      %v2776 = vpop.permute.xlu0 %2775
      %2777 = vrot.lane.b32.xlu0 %v2103, 16
      %v2778 = vpop.permute.xlu0 %2777
      %v2780 = vsel %vm1053, %v2772, 0
      %v2783 = vsel %vm1053, %v2774, 0
      %v2786 = vsel %vm1053, %v2776, 0
      %v2789 = vsel %vm1053, %v2778, 0
      %2791 = vmatpush.bf16.msra.mxu0 0
      %2792 = vmatpush.bf16.msra.mxu0 0
      %2793 = vmatpush.bf16.msra.mxu0 0
      %2794 = vmatpush.bf16.msra.mxu0 0
      %2795 = vmatpush.bf16.msra.mxu0 0
      %2796 = vmatpush.bf16.msra.mxu0 0
      %2797 = vmatpush.bf16.msra.mxu0 0
      %2798 = vmatpush.bf16.msra.mxu0 %v1741
      %2799 = vmatmul.bf16.gmra.mxu0 %v2780
      %v2800 = vpop.f32.mrf.mxu0
      %v2801 = vadd.f32 0.0, %v2800
      %v2802 = vpop.f32.mrf.mxu0
      %v2803 = vadd.f32 0.0, %v2802
      %2804 = vmatmul.bf16.gmra.mxu0 %v2783
      %v2805 = vpop.f32.mrf.mxu0
      %v2806 = vadd.f32 0.0, %v2805
      %v2807 = vpop.f32.mrf.mxu0
      %v2808 = vadd.f32 0.0, %v2807
      %2809 = vmatmul.bf16.gmra.mxu0 %v2786
      %v2810 = vpop.f32.mrf.mxu0
      %v2811 = vadd.f32 0.0, %v2810
      %v2812 = vpop.f32.mrf.mxu0
      %v2813 = vadd.f32 0.0, %v2812
      %2814 = vmatmul.bf16.gmra.mxu0 %v2789
      %v2815 = vpop.f32.mrf.mxu0
      %v2816 = vadd.f32 0.0, %v2815
      %v2817 = vpop.f32.mrf.mxu0
      %v2818 = vadd.f32 0.0, %v2817
      %2819 = vdwg.mxu0
      %v2820 = vpack.c.bf16 %v2764, %v2763
      %v2821 = vpack.c.bf16 %v2766, %v2765
      %v2822 = vpack.c.bf16 %v2768, %v2767
      %v2823 = vpack.c.bf16 %v2770, %v2769
      %v2824 = vpack.c.bf16 %v2803, %v2801
      %v2825 = vpack.c.bf16 %v2808, %v2806
      %v2826 = vpack.c.bf16 %v2813, %v2811
      %v2827 = vpack.c.bf16 %v2818, %v2816
      %v2829 = vsel %vm1107, %v2820, 0
      %v2832 = vsel %vm1107, %v2821, 0
      %v2835 = vsel %vm1107, %v2822, 0
      %v2838 = vsel %vm1107, %v2823, 0
      %2840 = vmatpush.bf16.msra.mxu0 0
      %2841 = vmatpush.bf16.msra.mxu0 0
      %2842 = vmatpush.bf16.msra.mxu0 0
      %2843 = vmatpush.bf16.msra.mxu0 0
      %2844 = vmatpush.bf16.msra.mxu0 %v2827
      %2845 = vmatpush.bf16.msra.mxu0 %v2826
      %2846 = vmatpush.bf16.msra.mxu0 %v2825
      %2847 = vmatpush.bf16.msra.mxu0 %v2824
      %2848 = vmatmul.bf16.gmra.mxu0 %v2829
      %v2849 = vpop.f32.mrf.mxu0
      %v2850 = vadd.f32 0.0, %v2849
      %v2851 = vpop.f32.mrf.mxu0
      %v2852 = vadd.f32 0.0, %v2851
      %2853 = vmatmul.bf16.gmra.mxu0 %v2832
      %v2854 = vpop.f32.mrf.mxu0
      %v2855 = vadd.f32 0.0, %v2854
      %v2856 = vpop.f32.mrf.mxu0
      %v2857 = vadd.f32 0.0, %v2856
      %2858 = vmatmul.bf16.gmra.mxu0 %v2835
      %v2859 = vpop.f32.mrf.mxu0
      %v2860 = vadd.f32 0.0, %v2859
      %v2861 = vpop.f32.mrf.mxu0
      %v2862 = vadd.f32 0.0, %v2861
      %2863 = vmatmul.bf16.gmra.mxu0 %v2838
      %v2864 = vpop.f32.mrf.mxu0
      %v2865 = vadd.f32 0.0, %v2864
      %v2866 = vpop.f32.mrf.mxu0
      %v2867 = vadd.f32 0.0, %v2866
      %2868 = vdwg.mxu0
      %v2869 = vadd.f32 %v2595, %v2850
      %v2870 = vadd.f32 %v2597, %v2852
      %v2871 = vadd.f32 %v2600, %v2855
      %v2872 = vadd.f32 %v2602, %v2857
      %v2873 = vadd.f32 %v2605, %v2860
      %v2874 = vadd.f32 %v2607, %v2862
      %v2875 = vadd.f32 %v2610, %v2865
      %v2876 = vadd.f32 %v2612, %v2867
      %2877 = vrot.lane.b32.xlu0 %v2096, 104
      %v2878 = vpop.permute.xlu0 %2877
      %2879 = vrot.lane.b32.xlu0 %v2097, 104
      %v2880 = vpop.permute.xlu0 %2879
      %2881 = vrot.lane.b32.xlu0 %v2098, 104
      %v2882 = vpop.permute.xlu0 %2881
      %2883 = vrot.lane.b32.xlu0 %v2099, 104
      %v2884 = vpop.permute.xlu0 %2883
      %2885 = vrot.lane.b32.xlu0 %v2100, 40
      %v2886 = vpop.permute.xlu0 %2885
      %2887 = vrot.lane.b32.xlu0 %v2101, 40
      %v2888 = vpop.permute.xlu0 %2887
      %2889 = vrot.lane.b32.xlu0 %v2102, 40
      %v2890 = vpop.permute.xlu0 %2889
      %2891 = vrot.lane.b32.xlu0 %v2103, 40
      %v2892 = vpop.permute.xlu0 %2891
      %v2894 = vsel %vm1053, %v2878, 0
      %v2897 = vsel %vm1053, %v2880, 0
      %v2900 = vsel %vm1053, %v2882, 0
      %v2903 = vsel %vm1053, %v2884, 0
      %v2906 = vsel %vm1053, %v2886, 0
      %v2909 = vsel %vm1053, %v2888, 0
      %v2912 = vsel %vm1053, %v2890, 0
      %v2915 = vsel %vm1053, %v2892, 0
      %2917 = vmatpush.bf16.xpose.msra.mxu0 0
      %2918 = vmatpush.bf16.xpose.msra.mxu0 0
      %2919 = vmatpush.bf16.xpose.msra.mxu0 0
      %2920 = vmatpush.bf16.xpose.msra.mxu0 0
      %2921 = vmatpush.bf16.xpose.msra.mxu0 %v2915
      %2922 = vmatpush.bf16.xpose.msra.mxu0 %v2912
      %2923 = vmatpush.bf16.xpose.msra.mxu0 %v2909
      %2924 = vmatpush.bf16.xpose.msra.mxu0 %v2906
      %2925 = vmatmul.bf16.gmra.mxu0 %v2894
      %v2926 = vpop.f32.mrf.mxu0
      %v2927 = vadd.f32 0.0, %v2926
      %v2928 = vpop.f32.mrf.mxu0
      %v2929 = vadd.f32 0.0, %v2928
      %2930 = vmatmul.bf16.gmra.mxu0 %v2897
      %v2931 = vpop.f32.mrf.mxu0
      %v2932 = vadd.f32 0.0, %v2931
      %v2933 = vpop.f32.mrf.mxu0
      %v2934 = vadd.f32 0.0, %v2933
      %2935 = vmatmul.bf16.gmra.mxu0 %v2900
      %v2936 = vpop.f32.mrf.mxu0
      %v2937 = vadd.f32 0.0, %v2936
      %v2938 = vpop.f32.mrf.mxu0
      %v2939 = vadd.f32 0.0, %v2938
      %2940 = vmatmul.bf16.gmra.mxu0 %v2903
      %v2941 = vpop.f32.mrf.mxu0
      %v2942 = vadd.f32 0.0, %v2941
      %v2943 = vpop.f32.mrf.mxu0
      %v2944 = vadd.f32 0.0, %v2943
      %2945 = vdwg.mxu0
      %v2946 = vsel %vm1107, %v2927, -inf
      %2947 = vmax.xlane.f32.xlu0 %v2946
      %v2948 = vpop.xlane.xlu0 %2947
      %v2949 = vsel %vm1107, %v2929, -inf
      %2950 = vmax.xlane.f32.xlu0 %v2949
      %v2951 = vpop.xlane.xlu0 %2950
      %v2952 = vsel %vm1107, %v2932, -inf
      %2953 = vmax.xlane.f32.xlu0 %v2952
      %v2954 = vpop.xlane.xlu0 %2953
      %v2955 = vsel %vm1107, %v2934, -inf
      %2956 = vmax.xlane.f32.xlu0 %v2955
      %v2957 = vpop.xlane.xlu0 %2956
      %v2958 = vsel %vm1107, %v2937, -inf
      %2959 = vmax.xlane.f32.xlu0 %v2958
      %v2960 = vpop.xlane.xlu0 %2959
      %v2961 = vsel %vm1107, %v2939, -inf
      %2962 = vmax.xlane.f32.xlu0 %v2961
      %v2963 = vpop.xlane.xlu0 %2962
      %v2964 = vsel %vm1107, %v2942, -inf
      %2965 = vmax.xlane.f32.xlu0 %v2964
      %v2966 = vpop.xlane.xlu0 %2965
      %v2967 = vsel %vm1107, %v2944, -inf
      %2968 = vmax.xlane.f32.xlu0 %v2967
      %v2969 = vpop.xlane.xlu0 %2968
      %v2970 = vsub.f32 %v2927, %v2948
      %v2971 = vsub.f32 %v2929, %v2951
      %v2972 = vsub.f32 %v2932, %v2954
      %v2973 = vsub.f32 %v2934, %v2957
      %v2974 = vsub.f32 %v2937, %v2960
      %v2975 = vsub.f32 %v2939, %v2963
      %v2976 = vsub.f32 %v2942, %v2966
      %v2977 = vsub.f32 %v2944, %v2969
      %v2978 = vmul.f32 %v2970, 1.442695
      %v2979 = vpow.pop %v2978
      %v2980 = vmul.f32 %v2971, 1.442695
      %v2981 = vpow.pop %v2980
      %v2982 = vmul.f32 %v2972, 1.442695
      %v2983 = vpow.pop %v2982
      %v2984 = vmul.f32 %v2973, 1.442695
      %v2985 = vpow.pop %v2984
      %v2986 = vmul.f32 %v2974, 1.442695
      %v2987 = vpow.pop %v2986
      %v2988 = vmul.f32 %v2975, 1.442695
      %v2989 = vpow.pop %v2988
      %v2990 = vmul.f32 %v2976, 1.442695
      %v2991 = vpow.pop %v2990
      %v2992 = vmul.f32 %v2977, 1.442695
      %v2993 = vpow.pop %v2992
      %v2994 = vsel %vm1107, %v2979, 0.0
      %2995 = vadd.xlane.f32.xlu0 %v2994
      %v2996 = vpop.xlane.xlu0 %2995
      %v2997 = vsel %vm1107, %v2981, 0.0
      %2998 = vadd.xlane.f32.xlu0 %v2997
      %v2999 = vpop.xlane.xlu0 %2998
      %v3000 = vsel %vm1107, %v2983, 0.0
      %3001 = vadd.xlane.f32.xlu0 %v3000
      %v3002 = vpop.xlane.xlu0 %3001
      %v3003 = vsel %vm1107, %v2985, 0.0
      %3004 = vadd.xlane.f32.xlu0 %v3003
      %v3005 = vpop.xlane.xlu0 %3004
      %v3006 = vsel %vm1107, %v2987, 0.0
      %3007 = vadd.xlane.f32.xlu0 %v3006
      %v3008 = vpop.xlane.xlu0 %3007
      %v3009 = vsel %vm1107, %v2989, 0.0
      %3010 = vadd.xlane.f32.xlu0 %v3009
      %v3011 = vpop.xlane.xlu0 %3010
      %v3012 = vsel %vm1107, %v2991, 0.0
      %3013 = vadd.xlane.f32.xlu0 %v3012
      %v3014 = vpop.xlane.xlu0 %3013
      %v3015 = vsel %vm1107, %v2993, 0.0
      %3016 = vadd.xlane.f32.xlu0 %v3015
      %v3017 = vpop.xlane.xlu0 %3016
      %v3018 = vrcp.pop %v2996
      %v3019 = vrcp.pop %v2999
      %v3020 = vrcp.pop %v3002
      %v3021 = vrcp.pop %v3005
      %v3022 = vrcp.pop %v3008
      %v3023 = vrcp.pop %v3011
      %v3024 = vrcp.pop %v3014
      %v3025 = vrcp.pop %v3017
      %v3026 = vmul.f32 %v2979, %v3018
      %v3027 = vmul.f32 %v2981, %v3019
      %v3028 = vmul.f32 %v2983, %v3020
      %v3029 = vmul.f32 %v2985, %v3021
      %v3030 = vmul.f32 %v2987, %v3022
      %v3031 = vmul.f32 %v2989, %v3023
      %v3032 = vmul.f32 %v2991, %v3024
      %v3033 = vmul.f32 %v2993, %v3025
      %3034 = vrot.lane.b32.xlu0 %v2100, 8
      %v3035 = vpop.permute.xlu0 %3034
      %3036 = vrot.lane.b32.xlu0 %v2101, 8
      %v3037 = vpop.permute.xlu0 %3036
      %3038 = vrot.lane.b32.xlu0 %v2102, 8
      %v3039 = vpop.permute.xlu0 %3038
      %3040 = vrot.lane.b32.xlu0 %v2103, 8
      %v3041 = vpop.permute.xlu0 %3040
      %v3043 = vsel %vm1053, %v3035, 0
      %v3046 = vsel %vm1053, %v3037, 0
      %v3049 = vsel %vm1053, %v3039, 0
      %v3052 = vsel %vm1053, %v3041, 0
      %3054 = vmatpush.bf16.msra.mxu0 0
      %3055 = vmatpush.bf16.msra.mxu0 0
      %3056 = vmatpush.bf16.msra.mxu0 0
      %3057 = vmatpush.bf16.msra.mxu0 0
      %3058 = vmatpush.bf16.msra.mxu0 0
      %3059 = vmatpush.bf16.msra.mxu0 0
      %3060 = vmatpush.bf16.msra.mxu0 0
      %3061 = vmatpush.bf16.msra.mxu0 %v2008
      %3062 = vmatmul.bf16.gmra.mxu0 %v3043
      %v3063 = vpop.f32.mrf.mxu0
      %v3064 = vadd.f32 0.0, %v3063
      %v3065 = vpop.f32.mrf.mxu0
      %v3066 = vadd.f32 0.0, %v3065
      %3067 = vmatmul.bf16.gmra.mxu0 %v3046
      %v3068 = vpop.f32.mrf.mxu0
      %v3069 = vadd.f32 0.0, %v3068
      %v3070 = vpop.f32.mrf.mxu0
      %v3071 = vadd.f32 0.0, %v3070
      %3072 = vmatmul.bf16.gmra.mxu0 %v3049
      %v3073 = vpop.f32.mrf.mxu0
      %v3074 = vadd.f32 0.0, %v3073
      %v3075 = vpop.f32.mrf.mxu0
      %v3076 = vadd.f32 0.0, %v3075
      %3077 = vmatmul.bf16.gmra.mxu0 %v3052
      %v3078 = vpop.f32.mrf.mxu0
      %v3079 = vadd.f32 0.0, %v3078
      %v3080 = vpop.f32.mrf.mxu0
      %v3081 = vadd.f32 0.0, %v3080
      %3082 = vdwg.mxu0
      %v3083 = vpack.c.bf16 %v3027, %v3026
      %v3084 = vpack.c.bf16 %v3029, %v3028
      %v3085 = vpack.c.bf16 %v3031, %v3030
      %v3086 = vpack.c.bf16 %v3033, %v3032
      %v3087 = vpack.c.bf16 %v3066, %v3064
      %v3088 = vpack.c.bf16 %v3071, %v3069
      %v3089 = vpack.c.bf16 %v3076, %v3074
      %v3090 = vpack.c.bf16 %v3081, %v3079
      %v3092 = vsel %vm1107, %v3083, 0
      %v3095 = vsel %vm1107, %v3084, 0
      %v3098 = vsel %vm1107, %v3085, 0
      %v3101 = vsel %vm1107, %v3086, 0
      %3103 = vmatpush.bf16.msra.mxu0 0
      %3104 = vmatpush.bf16.msra.mxu0 0
      %3105 = vmatpush.bf16.msra.mxu0 0
      %3106 = vmatpush.bf16.msra.mxu0 0
      %3107 = vmatpush.bf16.msra.mxu0 %v3090
      %3108 = vmatpush.bf16.msra.mxu0 %v3089
      %3109 = vmatpush.bf16.msra.mxu0 %v3088
      %3110 = vmatpush.bf16.msra.mxu0 %v3087
      %3111 = vmatmul.bf16.gmra.mxu0 %v3092
      %v3112 = vpop.f32.mrf.mxu0
      %v3113 = vadd.f32 0.0, %v3112
      %v3114 = vpop.f32.mrf.mxu0
      %v3115 = vadd.f32 0.0, %v3114
      %3116 = vmatmul.bf16.gmra.mxu0 %v3095
      %v3117 = vpop.f32.mrf.mxu0
      %v3118 = vadd.f32 0.0, %v3117
      %v3119 = vpop.f32.mrf.mxu0
      %v3120 = vadd.f32 0.0, %v3119
      %3121 = vmatmul.bf16.gmra.mxu0 %v3098
      %v3122 = vpop.f32.mrf.mxu0
      %v3123 = vadd.f32 0.0, %v3122
      %v3124 = vpop.f32.mrf.mxu0
      %v3125 = vadd.f32 0.0, %v3124
      %3126 = vmatmul.bf16.gmra.mxu0 %v3101
      %v3127 = vpop.f32.mrf.mxu0
      %v3128 = vadd.f32 0.0, %v3127
      %v3129 = vpop.f32.mrf.mxu0
      %v3130 = vadd.f32 0.0, %v3129
      %3131 = vdwg.mxu0
      %v3132 = vadd.f32 %v2869, %v3113
      %v3133 = vadd.f32 %v2870, %v3115
      %v3134 = vadd.f32 %v2871, %v3118
      %v3135 = vadd.f32 %v2872, %v3120
      %v3136 = vadd.f32 %v2873, %v3123
      %v3137 = vadd.f32 %v2874, %v3125
      %v3138 = vadd.f32 %v2875, %v3128
      %v3139 = vadd.f32 %v2876, %v3130
      %v3140 = vadd.f32 %v310, %v2088
      %v3141 = vadd.f32 %v311, %v2089
      %v3142 = vadd.f32 %v312, %v2090
      %v3143 = vadd.f32 %v313, %v2091
      %v3144 = vadd.f32 %v314, %v2092
      %v3145 = vadd.f32 %v315, %v2093
      %v3146 = vadd.f32 %v316, %v2094
      %v3147 = vadd.f32 %v317, %v2095
      %v3148 = vadd.f32 %v318, %v3132
      %v3149 = vadd.f32 %v319, %v3133
      %v3150 = vadd.f32 %v320, %v3134
      %v3151 = vadd.f32 %v321, %v3135
      %v3152 = vadd.f32 %v322, %v3136
      %v3153 = vadd.f32 %v323, %v3137
      %v3154 = vadd.f32 %v324, %v3138
      %v3155 = vadd.f32 %v325, %v3139
      %v3156 = vperm.slane %v326, 5
      %v3157 = vadd.f32 %v3140, %v3156
      %v3158 = vadd.f32 %v3141, %v3156
      %v3159 = vadd.f32 %v3142, %v3156
      %v3160 = vadd.f32 %v3143, %v3156
      %v3161 = vadd.f32 %v3144, %v3156
      %v3162 = vadd.f32 %v3145, %v3156
      %v3163 = vadd.f32 %v3146, %v3156
      %v3164 = vadd.f32 %v3147, %v3156
      %v3165 = vadd.f32 %v3148, %v3156
      %v3166 = vadd.f32 %v3149, %v3156
      %v3167 = vadd.f32 %v3150, %v3156
      %v3168 = vadd.f32 %v3151, %v3156
      %v3169 = vadd.f32 %v3152, %v3156
      %v3170 = vadd.f32 %v3153, %v3156
      %v3171 = vadd.f32 %v3154, %v3156
      %v3172 = vadd.f32 %v3155, %v3156
      %v3173 = vsel %vm329, %v3157, 0.0
      %3174 = vadd.xlane.f32.xlu0 %v3173
      %v3175 = vpop.xlane.xlu0 %3174
      %v3176 = vsel %vm329, %v3158, 0.0
      %3177 = vadd.xlane.f32.xlu0 %v3176
      %v3178 = vpop.xlane.xlu0 %3177
      %v3179 = vsel %vm329, %v3159, 0.0
      %3180 = vadd.xlane.f32.xlu0 %v3179
      %v3181 = vpop.xlane.xlu0 %3180
      %v3182 = vsel %vm329, %v3160, 0.0
      %3183 = vadd.xlane.f32.xlu0 %v3182
      %v3184 = vpop.xlane.xlu0 %3183
      %v3185 = vsel %vm329, %v3161, 0.0
      %3186 = vadd.xlane.f32.xlu0 %v3185
      %v3187 = vpop.xlane.xlu0 %3186
      %v3188 = vsel %vm329, %v3162, 0.0
      %3189 = vadd.xlane.f32.xlu0 %v3188
      %v3190 = vpop.xlane.xlu0 %3189
      %v3191 = vsel %vm329, %v3163, 0.0
      %3192 = vadd.xlane.f32.xlu0 %v3191
      %v3193 = vpop.xlane.xlu0 %3192
      %v3194 = vsel %vm329, %v3164, 0.0
      %3195 = vadd.xlane.f32.xlu0 %v3194
      %v3196 = vpop.xlane.xlu0 %3195
      %v3197 = vsel %vm329, %v3165, 0.0
      %3198 = vadd.xlane.f32.xlu0 %v3197
      %v3199 = vpop.xlane.xlu0 %3198
      %v3200 = vsel %vm329, %v3166, 0.0
      %3201 = vadd.xlane.f32.xlu0 %v3200
      %v3202 = vpop.xlane.xlu0 %3201
      %v3203 = vsel %vm329, %v3167, 0.0
      %3204 = vadd.xlane.f32.xlu0 %v3203
      %v3205 = vpop.xlane.xlu0 %3204
      %v3206 = vsel %vm329, %v3168, 0.0
      %3207 = vadd.xlane.f32.xlu0 %v3206
      %v3208 = vpop.xlane.xlu0 %3207
      %v3209 = vsel %vm329, %v3169, 0.0
      %3210 = vadd.xlane.f32.xlu0 %v3209
      %v3211 = vpop.xlane.xlu0 %3210
      %v3212 = vsel %vm329, %v3170, 0.0
      %3213 = vadd.xlane.f32.xlu0 %v3212
      %v3214 = vpop.xlane.xlu0 %3213
      %v3215 = vsel %vm329, %v3171, 0.0
      %3216 = vadd.xlane.f32.xlu0 %v3215
      %v3217 = vpop.xlane.xlu0 %3216
      %v3218 = vsel %vm329, %v3172, 0.0
      %3219 = vadd.xlane.f32.xlu0 %v3218
      %v3220 = vpop.xlane.xlu0 %3219
      %v3221 = vmul.f32 %v3175, %v384
      %v3222 = vmul.f32 %v3178, %v384
      %v3223 = vmul.f32 %v3181, %v384
      %v3224 = vmul.f32 %v3184, %v384
      %v3225 = vmul.f32 %v3187, %v384
      %v3226 = vmul.f32 %v3190, %v384
      %v3227 = vmul.f32 %v3193, %v384
      %v3228 = vmul.f32 %v3196, %v384
      %v3229 = vmul.f32 %v3199, %v384
      %v3230 = vmul.f32 %v3202, %v384
      %v3231 = vmul.f32 %v3205, %v384
      %v3232 = vmul.f32 %v3208, %v384
      %v3233 = vmul.f32 %v3211, %v384
      %v3234 = vmul.f32 %v3214, %v384
      %v3235 = vmul.f32 %v3217, %v384
      %v3236 = vmul.f32 %v3220, %v384
      %v3237 = vsub.f32 %v3157, %v3221
      %v3238 = vsub.f32 %v3158, %v3222
      %v3239 = vsub.f32 %v3159, %v3223
      %v3240 = vsub.f32 %v3160, %v3224
      %v3241 = vsub.f32 %v3161, %v3225
      %v3242 = vsub.f32 %v3162, %v3226
      %v3243 = vsub.f32 %v3163, %v3227
      %v3244 = vsub.f32 %v3164, %v3228
      %v3245 = vsub.f32 %v3165, %v3229
      %v3246 = vsub.f32 %v3166, %v3230
      %v3247 = vsub.f32 %v3167, %v3231
      %v3248 = vsub.f32 %v3168, %v3232
      %v3249 = vsub.f32 %v3169, %v3233
      %v3250 = vsub.f32 %v3170, %v3234
      %v3251 = vsub.f32 %v3171, %v3235
      %v3252 = vsub.f32 %v3172, %v3236
      %v3253 = vmul.f32 %v3237, %v3237
      %v3254 = vmul.f32 %v3238, %v3238
      %v3255 = vmul.f32 %v3239, %v3239
      %v3256 = vmul.f32 %v3240, %v3240
      %v3257 = vmul.f32 %v3241, %v3241
      %v3258 = vmul.f32 %v3242, %v3242
      %v3259 = vmul.f32 %v3243, %v3243
      %v3260 = vmul.f32 %v3244, %v3244
      %v3261 = vmul.f32 %v3245, %v3245
      %v3262 = vmul.f32 %v3246, %v3246
      %v3263 = vmul.f32 %v3247, %v3247
      %v3264 = vmul.f32 %v3248, %v3248
      %v3265 = vmul.f32 %v3249, %v3249
      %v3266 = vmul.f32 %v3250, %v3250
      %v3267 = vmul.f32 %v3251, %v3251
      %v3268 = vmul.f32 %v3252, %v3252
      %v3269 = vsel %vm329, %v3253, 0.0
      %3270 = vadd.xlane.f32.xlu0 %v3269
      %v3271 = vpop.xlane.xlu0 %3270
      %v3272 = vsel %vm329, %v3254, 0.0
      %3273 = vadd.xlane.f32.xlu0 %v3272
      %v3274 = vpop.xlane.xlu0 %3273
      %v3275 = vsel %vm329, %v3255, 0.0
      %3276 = vadd.xlane.f32.xlu0 %v3275
      %v3277 = vpop.xlane.xlu0 %3276
      %v3278 = vsel %vm329, %v3256, 0.0
      %3279 = vadd.xlane.f32.xlu0 %v3278
      %v3280 = vpop.xlane.xlu0 %3279
      %v3281 = vsel %vm329, %v3257, 0.0
      %3282 = vadd.xlane.f32.xlu0 %v3281
      %v3283 = vpop.xlane.xlu0 %3282
      %v3284 = vsel %vm329, %v3258, 0.0
      %3285 = vadd.xlane.f32.xlu0 %v3284
      %v3286 = vpop.xlane.xlu0 %3285
      %v3287 = vsel %vm329, %v3259, 0.0
      %3288 = vadd.xlane.f32.xlu0 %v3287
      %v3289 = vpop.xlane.xlu0 %3288
      %v3290 = vsel %vm329, %v3260, 0.0
      %3291 = vadd.xlane.f32.xlu0 %v3290
      %v3292 = vpop.xlane.xlu0 %3291
      %v3293 = vsel %vm329, %v3261, 0.0
      %3294 = vadd.xlane.f32.xlu0 %v3293
      %v3295 = vpop.xlane.xlu0 %3294
      %v3296 = vsel %vm329, %v3262, 0.0
      %3297 = vadd.xlane.f32.xlu0 %v3296
      %v3298 = vpop.xlane.xlu0 %3297
      %v3299 = vsel %vm329, %v3263, 0.0
      %3300 = vadd.xlane.f32.xlu0 %v3299
      %v3301 = vpop.xlane.xlu0 %3300
      %v3302 = vsel %vm329, %v3264, 0.0
      %3303 = vadd.xlane.f32.xlu0 %v3302
      %v3304 = vpop.xlane.xlu0 %3303
      %v3305 = vsel %vm329, %v3265, 0.0
      %3306 = vadd.xlane.f32.xlu0 %v3305
      %v3307 = vpop.xlane.xlu0 %3306
      %v3308 = vsel %vm329, %v3266, 0.0
      %3309 = vadd.xlane.f32.xlu0 %v3308
      %v3310 = vpop.xlane.xlu0 %3309
      %v3311 = vsel %vm329, %v3267, 0.0
      %3312 = vadd.xlane.f32.xlu0 %v3311
      %v3313 = vpop.xlane.xlu0 %3312
      %v3314 = vsel %vm329, %v3268, 0.0
      %3315 = vadd.xlane.f32.xlu0 %v3314
      %v3316 = vpop.xlane.xlu0 %3315
      %v3317 = vmul.f32 %v3271, %v384
      %v3318 = vmul.f32 %v3274, %v384
      %v3319 = vmul.f32 %v3277, %v384
      %v3320 = vmul.f32 %v3280, %v384
      %v3321 = vmul.f32 %v3283, %v384
      %v3322 = vmul.f32 %v3286, %v384
      %v3323 = vmul.f32 %v3289, %v384
      %v3324 = vmul.f32 %v3292, %v384
      %v3325 = vmul.f32 %v3295, %v384
      %v3326 = vmul.f32 %v3298, %v384
      %v3327 = vmul.f32 %v3301, %v384
      %v3328 = vmul.f32 %v3304, %v384
      %v3329 = vmul.f32 %v3307, %v384
      %v3330 = vmul.f32 %v3310, %v384
      %v3331 = vmul.f32 %v3313, %v384
      %v3332 = vmul.f32 %v3316, %v384
      %v3333 = vadd.f32 %v3317, 1e-05
      %v3334 = vadd.f32 %v3318, 1e-05
      %v3335 = vadd.f32 %v3319, 1e-05
      %v3336 = vadd.f32 %v3320, 1e-05
      %v3337 = vadd.f32 %v3321, 1e-05
      %v3338 = vadd.f32 %v3322, 1e-05
      %v3339 = vadd.f32 %v3323, 1e-05
      %v3340 = vadd.f32 %v3324, 1e-05
      %v3341 = vadd.f32 %v3325, 1e-05
      %v3342 = vadd.f32 %v3326, 1e-05
      %v3343 = vadd.f32 %v3327, 1e-05
      %v3344 = vadd.f32 %v3328, 1e-05
      %v3345 = vadd.f32 %v3329, 1e-05
      %v3346 = vadd.f32 %v3330, 1e-05
      %v3347 = vadd.f32 %v3331, 1e-05
      %v3348 = vadd.f32 %v3332, 1e-05
      %v3349 = vrsqrt.pop %v3333
      %v3350 = vmul.f32 %v3349, %v3333
      %v3351 = vmul.f32 %v3350, %v3349
      %v3352 = vmul.f32 0.5, %v3351
      %v3353 = vsub.f32 1.5, %v3352
      %v3354 = vmul.f32 %v3349, %v3353
      %vm3355 = vweird.f32 %v3333
      %vm3356 = vweird.f32 %v3349
      %vm3357 = vmor %vm3355, %vm3356
      %v3358 = vsel %vm3357, %v3349, %v3354
      %v3359 = vrsqrt.pop %v3334
      %v3360 = vmul.f32 %v3359, %v3334
      %v3361 = vmul.f32 %v3360, %v3359
      %v3362 = vmul.f32 0.5, %v3361
      %v3363 = vsub.f32 1.5, %v3362
      %v3364 = vmul.f32 %v3359, %v3363
      %vm3365 = vweird.f32 %v3334
      %vm3366 = vweird.f32 %v3359
      %vm3367 = vmor %vm3365, %vm3366
      %v3368 = vsel %vm3367, %v3359, %v3364
      %v3369 = vrsqrt.pop %v3335
      %v3370 = vmul.f32 %v3369, %v3335
      %v3371 = vmul.f32 %v3370, %v3369
      %v3372 = vmul.f32 0.5, %v3371
      %v3373 = vsub.f32 1.5, %v3372
      %v3374 = vmul.f32 %v3369, %v3373
      %vm3375 = vweird.f32 %v3335
      %vm3376 = vweird.f32 %v3369
      %vm3377 = vmor %vm3375, %vm3376
      %v3378 = vsel %vm3377, %v3369, %v3374
      %v3379 = vrsqrt.pop %v3336
      %v3380 = vmul.f32 %v3379, %v3336
      %v3381 = vmul.f32 %v3380, %v3379
      %v3382 = vmul.f32 0.5, %v3381
      %v3383 = vsub.f32 1.5, %v3382
      %v3384 = vmul.f32 %v3379, %v3383
      %vm3385 = vweird.f32 %v3336
      %vm3386 = vweird.f32 %v3379
      %vm3387 = vmor %vm3385, %vm3386
      %v3388 = vsel %vm3387, %v3379, %v3384
      %v3389 = vrsqrt.pop %v3337
      %v3390 = vmul.f32 %v3389, %v3337
      %v3391 = vmul.f32 %v3390, %v3389
      %v3392 = vmul.f32 0.5, %v3391
      %v3393 = vsub.f32 1.5, %v3392
      %v3394 = vmul.f32 %v3389, %v3393
      %vm3395 = vweird.f32 %v3337
      %vm3396 = vweird.f32 %v3389
      %vm3397 = vmor %vm3395, %vm3396
      %v3398 = vsel %vm3397, %v3389, %v3394
      %v3399 = vrsqrt.pop %v3338
      %v3400 = vmul.f32 %v3399, %v3338
      %v3401 = vmul.f32 %v3400, %v3399
      %v3402 = vmul.f32 0.5, %v3401
      %v3403 = vsub.f32 1.5, %v3402
      %v3404 = vmul.f32 %v3399, %v3403
      %vm3405 = vweird.f32 %v3338
      %vm3406 = vweird.f32 %v3399
      %vm3407 = vmor %vm3405, %vm3406
      %v3408 = vsel %vm3407, %v3399, %v3404
      %v3409 = vrsqrt.pop %v3339
      %v3410 = vmul.f32 %v3409, %v3339
      %v3411 = vmul.f32 %v3410, %v3409
      %v3412 = vmul.f32 0.5, %v3411
      %v3413 = vsub.f32 1.5, %v3412
      %v3414 = vmul.f32 %v3409, %v3413
      %vm3415 = vweird.f32 %v3339
      %vm3416 = vweird.f32 %v3409
      %vm3417 = vmor %vm3415, %vm3416
      %v3418 = vsel %vm3417, %v3409, %v3414
      %v3419 = vrsqrt.pop %v3340
      %v3420 = vmul.f32 %v3419, %v3340
      %v3421 = vmul.f32 %v3420, %v3419
      %v3422 = vmul.f32 0.5, %v3421
      %v3423 = vsub.f32 1.5, %v3422
      %v3424 = vmul.f32 %v3419, %v3423
      %vm3425 = vweird.f32 %v3340
      %vm3426 = vweird.f32 %v3419
      %vm3427 = vmor %vm3425, %vm3426
      %v3428 = vsel %vm3427, %v3419, %v3424
      %v3429 = vrsqrt.pop %v3341
      %v3430 = vmul.f32 %v3429, %v3341
      %v3431 = vmul.f32 %v3430, %v3429
      %v3432 = vmul.f32 0.5, %v3431
      %v3433 = vsub.f32 1.5, %v3432
      %v3434 = vmul.f32 %v3429, %v3433
      %vm3435 = vweird.f32 %v3341
      %vm3436 = vweird.f32 %v3429
      %vm3437 = vmor %vm3435, %vm3436
      %v3438 = vsel %vm3437, %v3429, %v3434
      %v3439 = vrsqrt.pop %v3342
      %v3440 = vmul.f32 %v3439, %v3342
      %v3441 = vmul.f32 %v3440, %v3439
      %v3442 = vmul.f32 0.5, %v3441
      %v3443 = vsub.f32 1.5, %v3442
      %v3444 = vmul.f32 %v3439, %v3443
      %vm3445 = vweird.f32 %v3342
      %vm3446 = vweird.f32 %v3439
      %vm3447 = vmor %vm3445, %vm3446
      %v3448 = vsel %vm3447, %v3439, %v3444
      %v3449 = vrsqrt.pop %v3343
      %v3450 = vmul.f32 %v3449, %v3343
      %v3451 = vmul.f32 %v3450, %v3449
      %v3452 = vmul.f32 0.5, %v3451
      %v3453 = vsub.f32 1.5, %v3452
      %v3454 = vmul.f32 %v3449, %v3453
      %vm3455 = vweird.f32 %v3343
      %vm3456 = vweird.f32 %v3449
      %vm3457 = vmor %vm3455, %vm3456
      %v3458 = vsel %vm3457, %v3449, %v3454
      %v3459 = vrsqrt.pop %v3344
      %v3460 = vmul.f32 %v3459, %v3344
      %v3461 = vmul.f32 %v3460, %v3459
      %v3462 = vmul.f32 0.5, %v3461
      %v3463 = vsub.f32 1.5, %v3462
      %v3464 = vmul.f32 %v3459, %v3463
      %vm3465 = vweird.f32 %v3344
      %vm3466 = vweird.f32 %v3459
      %vm3467 = vmor %vm3465, %vm3466
      %v3468 = vsel %vm3467, %v3459, %v3464
      %v3469 = vrsqrt.pop %v3345
      %v3470 = vmul.f32 %v3469, %v3345
      %v3471 = vmul.f32 %v3470, %v3469
      %v3472 = vmul.f32 0.5, %v3471
      %v3473 = vsub.f32 1.5, %v3472
      %v3474 = vmul.f32 %v3469, %v3473
      %vm3475 = vweird.f32 %v3345
      %vm3476 = vweird.f32 %v3469
      %vm3477 = vmor %vm3475, %vm3476
      %v3478 = vsel %vm3477, %v3469, %v3474
      %v3479 = vrsqrt.pop %v3346
      %v3480 = vmul.f32 %v3479, %v3346
      %v3481 = vmul.f32 %v3480, %v3479
      %v3482 = vmul.f32 0.5, %v3481
      %v3483 = vsub.f32 1.5, %v3482
      %v3484 = vmul.f32 %v3479, %v3483
      %vm3485 = vweird.f32 %v3346
      %vm3486 = vweird.f32 %v3479
      %vm3487 = vmor %vm3485, %vm3486
      %v3488 = vsel %vm3487, %v3479, %v3484
      %v3489 = vrsqrt.pop %v3347
      %v3490 = vmul.f32 %v3489, %v3347
      %v3491 = vmul.f32 %v3490, %v3489
      %v3492 = vmul.f32 0.5, %v3491
      %v3493 = vsub.f32 1.5, %v3492
      %v3494 = vmul.f32 %v3489, %v3493
      %vm3495 = vweird.f32 %v3347
      %vm3496 = vweird.f32 %v3489
      %vm3497 = vmor %vm3495, %vm3496
      %v3498 = vsel %vm3497, %v3489, %v3494
      %v3499 = vrsqrt.pop %v3348
      %v3500 = vmul.f32 %v3499, %v3348
      %v3501 = vmul.f32 %v3500, %v3499
      %v3502 = vmul.f32 0.5, %v3501
      %v3503 = vsub.f32 1.5, %v3502
      %v3504 = vmul.f32 %v3499, %v3503
      %vm3505 = vweird.f32 %v3348
      %vm3506 = vweird.f32 %v3499
      %vm3507 = vmor %vm3505, %vm3506
      %v3508 = vsel %vm3507, %v3499, %v3504
      %v3509 = vmul.f32 %v3237, %v3358
      %v3510 = vmul.f32 %v3238, %v3368
      %v3511 = vmul.f32 %v3239, %v3378
      %v3512 = vmul.f32 %v3240, %v3388
      %v3513 = vmul.f32 %v3241, %v3398
      %v3514 = vmul.f32 %v3242, %v3408
      %v3515 = vmul.f32 %v3243, %v3418
      %v3516 = vmul.f32 %v3244, %v3428
      %v3517 = vmul.f32 %v3245, %v3438
      %v3518 = vmul.f32 %v3246, %v3448
      %v3519 = vmul.f32 %v3247, %v3458
      %v3520 = vmul.f32 %v3248, %v3468
      %v3521 = vmul.f32 %v3249, %v3478
      %v3522 = vmul.f32 %v3250, %v3488
      %v3523 = vmul.f32 %v3251, %v3498
      %v3524 = vmul.f32 %v3252, %v3508
      %v3525 = vperm.slane %v326, 2
      %v3526 = vmul.f32 %v3509, %v3525
      %v3527 = vmul.f32 %v3510, %v3525
      %v3528 = vmul.f32 %v3511, %v3525
      %v3529 = vmul.f32 %v3512, %v3525
      %v3530 = vmul.f32 %v3513, %v3525
      %v3531 = vmul.f32 %v3514, %v3525
      %v3532 = vmul.f32 %v3515, %v3525
      %v3533 = vmul.f32 %v3516, %v3525
      %v3534 = vmul.f32 %v3517, %v3525
      %v3535 = vmul.f32 %v3518, %v3525
      %v3536 = vmul.f32 %v3519, %v3525
      %v3537 = vmul.f32 %v3520, %v3525
      %v3538 = vmul.f32 %v3521, %v3525
      %v3539 = vmul.f32 %v3522, %v3525
      %v3540 = vmul.f32 %v3523, %v3525
      %v3541 = vmul.f32 %v3524, %v3525
      %v3542 = vperm.slane %v326, 3
      %v3543 = vadd.f32 %v3526, %v3542
      %v3544 = vadd.f32 %v3527, %v3542
      %v3545 = vadd.f32 %v3528, %v3542
      %v3546 = vadd.f32 %v3529, %v3542
      %v3547 = vadd.f32 %v3530, %v3542
      %v3548 = vadd.f32 %v3531, %v3542
      %v3549 = vadd.f32 %v3532, %v3542
      %v3550 = vadd.f32 %v3533, %v3542
      %v3551 = vadd.f32 %v3534, %v3542
      %v3552 = vadd.f32 %v3535, %v3542
      %v3553 = vadd.f32 %v3536, %v3542
      %v3554 = vadd.f32 %v3537, %v3542
      %v3555 = vadd.f32 %v3538, %v3542
      %v3556 = vadd.f32 %v3539, %v3542
      %v3557 = vadd.f32 %v3540, %v3542
      %v3558 = vadd.f32 %v3541, %v3542
      %v3559 = vpack.c.bf16 %v3544, %v3543
      %v3560 = vpack.c.bf16 %v3546, %v3545
      %v3561 = vpack.c.bf16 %v3548, %v3547
      %v3562 = vpack.c.bf16 %v3550, %v3549
      %v3563 = vpack.c.bf16 %v3552, %v3551
      %v3564 = vpack.c.bf16 %v3554, %v3553
      %v3565 = vpack.c.bf16 %v3556, %v3555
      %v3566 = vpack.c.bf16 %v3558, %v3557
      %v3567 = vld [vmem:[%s5] sm:$0xf]
      %v3568 = vld [vmem:[%s5 + $0x4] sm:$0xf]
      %v3569 = vld [vmem:[%s5 + $0x8] sm:$0xf]
      %v3570 = vld [vmem:[%s5 + $0xc] sm:$0xf]
      %v3571 = vperm.slane %v326, 6
      %v3576 = vunpack.c.l.b16 %v3567
      %v3577 = vunpack.c.l.b16 %v3568
      %v3578 = vunpack.c.l.b16 %v3569
      %v3579 = vunpack.c.l.b16 %v3570
      %v3580 = vpack.c.b16 %v3577, %v3576
      %v3581 = vpack.c.b16 %v3579, %v3578
      %v3585 = vsel %vm329, %v3559, 0
      %v3588 = vsel %vm329, %v3560, 0
      %v3591 = vsel %vm329, %v3561, 0
      %v3594 = vsel %vm329, %v3562, 0
      %v3597 = vsel %vm329, %v3563, 0
      %v3600 = vsel %vm329, %v3564, 0
      %v3603 = vsel %vm329, %v3565, 0
      %v3606 = vsel %vm329, %v3566, 0
      %3608 = vmatpush.bf16.msra.mxu0 0
      %3609 = vmatpush.bf16.msra.mxu0 0
      %3610 = vmatpush.bf16.msra.mxu0 0
      %3611 = vmatpush.bf16.msra.mxu0 0
      %3612 = vmatpush.bf16.msra.mxu0 0
      %3613 = vmatpush.bf16.msra.mxu0 0
      %3614 = vmatpush.bf16.msra.mxu0 %v3581
      %3615 = vmatpush.bf16.msra.mxu0 %v3580
      %3616 = vmatmul.bf16.gmra.mxu0 %v3585
      %v3617 = vpop.f32.mrf.mxu0
      %v3618 = vadd.f32 %v3571, %v3617
      %v3619 = vpop.f32.mrf.mxu0
      %v3620 = vadd.f32 %v3571, %v3619
      %3621 = vmatmul.bf16.gmra.mxu0 %v3588
      %v3622 = vpop.f32.mrf.mxu0
      %v3623 = vadd.f32 %v3571, %v3622
      %v3624 = vpop.f32.mrf.mxu0
      %v3625 = vadd.f32 %v3571, %v3624
      %3626 = vmatmul.bf16.gmra.mxu0 %v3591
      %v3627 = vpop.f32.mrf.mxu0
      %v3628 = vadd.f32 %v3571, %v3627
      %v3629 = vpop.f32.mrf.mxu0
      %v3630 = vadd.f32 %v3571, %v3629
      %3631 = vmatmul.bf16.gmra.mxu0 %v3594
      %v3632 = vpop.f32.mrf.mxu0
      %v3633 = vadd.f32 %v3571, %v3632
      %v3634 = vpop.f32.mrf.mxu0
      %v3635 = vadd.f32 %v3571, %v3634
      %3636 = vmatmul.bf16.gmra.mxu0 %v3597
      %v3637 = vpop.f32.mrf.mxu0
      %v3638 = vadd.f32 %v3571, %v3637
      %v3639 = vpop.f32.mrf.mxu0
      %v3640 = vadd.f32 %v3571, %v3639
      %3641 = vmatmul.bf16.gmra.mxu0 %v3600
      %v3642 = vpop.f32.mrf.mxu0
      %v3643 = vadd.f32 %v3571, %v3642
      %v3644 = vpop.f32.mrf.mxu0
      %v3645 = vadd.f32 %v3571, %v3644
      %3646 = vmatmul.bf16.gmra.mxu0 %v3603
      %v3647 = vpop.f32.mrf.mxu0
      %v3648 = vadd.f32 %v3571, %v3647
      %v3649 = vpop.f32.mrf.mxu0
      %v3650 = vadd.f32 %v3571, %v3649
      %3651 = vmatmul.bf16.gmra.mxu0 %v3606
      %v3652 = vpop.f32.mrf.mxu0
      %v3653 = vadd.f32 %v3571, %v3652
      %v3654 = vpop.f32.mrf.mxu0
      %v3655 = vadd.f32 %v3571, %v3654
      %3656 = vdwg.mxu0
      %v3657 = vlaneseq
      %v3658 = vshrl.u32 %v3657, 7
      %v3659 = vadd.s32 %v3658, 8
      %v3660 = vadd.s32 %v3658, 16
      %v3661 = vadd.s32 %v3658, 24
      %v3662 = vadd.s32 %v3658, 32
      %v3663 = vadd.s32 %v3658, 40
      %v3664 = vadd.s32 %v3658, 48
      %v3665 = vadd.s32 %v3658, 56
      %v3666 = vadd.s32 %v3658, 64
      %v3667 = vadd.s32 %v3658, 72
      %v3668 = vadd.s32 %v3658, 80
      %v3669 = vadd.s32 %v3658, 88
      %v3670 = vadd.s32 %v3658, 96
      %v3671 = vadd.s32 %v3658, 104
      %v3672 = vadd.s32 %v3658, 112
      %v3673 = vadd.s32 %v3658, 120
      %vm3674 = vcmp.lt.s32.totalorder %v3658, 0
      %v3675 = vsub.s32 0, %v3658
      %v3676 = vsel %vm3674, %v3675, %v3658
      %v3677 = vshrl.u32 %v3676, 6
      %v3678 = vand.u32 %v3676, 63
      %v3679 = vsub.s32 0, %v3678
      %v3680 = vsel %vm3674, %v3679, %v3678
      %vm3681 = vcmp.lt.s32.totalorder %v3659, 0
      %v3682 = vsub.s32 0, %v3659
      %v3683 = vsel %vm3681, %v3682, %v3659
      %v3684 = vshrl.u32 %v3683, 6
      %v3685 = vand.u32 %v3683, 63
      %v3686 = vsub.s32 0, %v3685
      %v3687 = vsel %vm3681, %v3686, %v3685
      %vm3688 = vcmp.lt.s32.totalorder %v3660, 0
      %v3689 = vsub.s32 0, %v3660
      %v3690 = vsel %vm3688, %v3689, %v3660
      %v3691 = vshrl.u32 %v3690, 6
      %v3692 = vand.u32 %v3690, 63
      %v3693 = vsub.s32 0, %v3692
      %v3694 = vsel %vm3688, %v3693, %v3692
      %vm3695 = vcmp.lt.s32.totalorder %v3661, 0
      %v3696 = vsub.s32 0, %v3661
      %v3697 = vsel %vm3695, %v3696, %v3661
      %v3698 = vshrl.u32 %v3697, 6
      %v3699 = vand.u32 %v3697, 63
      %v3700 = vsub.s32 0, %v3699
      %v3701 = vsel %vm3695, %v3700, %v3699
      %vm3702 = vcmp.lt.s32.totalorder %v3662, 0
      %v3703 = vsub.s32 0, %v3662
      %v3704 = vsel %vm3702, %v3703, %v3662
      %v3705 = vshrl.u32 %v3704, 6
      %v3706 = vand.u32 %v3704, 63
      %v3707 = vsub.s32 0, %v3706
      %v3708 = vsel %vm3702, %v3707, %v3706
      %vm3709 = vcmp.lt.s32.totalorder %v3663, 0
      %v3710 = vsub.s32 0, %v3663
      %v3711 = vsel %vm3709, %v3710, %v3663
      %v3712 = vshrl.u32 %v3711, 6
      %v3713 = vand.u32 %v3711, 63
      %v3714 = vsub.s32 0, %v3713
      %v3715 = vsel %vm3709, %v3714, %v3713
      %vm3716 = vcmp.lt.s32.totalorder %v3664, 0
      %v3717 = vsub.s32 0, %v3664
      %v3718 = vsel %vm3716, %v3717, %v3664
      %v3719 = vshrl.u32 %v3718, 6
      %v3720 = vand.u32 %v3718, 63
      %v3721 = vsub.s32 0, %v3720
      %v3722 = vsel %vm3716, %v3721, %v3720
      %vm3723 = vcmp.lt.s32.totalorder %v3665, 0
      %v3724 = vsub.s32 0, %v3665
      %v3725 = vsel %vm3723, %v3724, %v3665
      %v3726 = vshrl.u32 %v3725, 6
      %v3727 = vand.u32 %v3725, 63
      %v3728 = vsub.s32 0, %v3727
      %v3729 = vsel %vm3723, %v3728, %v3727
      %vm3730 = vcmp.lt.s32.totalorder %v3666, 0
      %v3731 = vsub.s32 0, %v3666
      %v3732 = vsel %vm3730, %v3731, %v3666
      %v3733 = vshrl.u32 %v3732, 6
      %v3734 = vand.u32 %v3732, 63
      %v3735 = vsub.s32 0, %v3734
      %v3736 = vsel %vm3730, %v3735, %v3734
      %vm3737 = vcmp.lt.s32.totalorder %v3667, 0
      %v3738 = vsub.s32 0, %v3667
      %v3739 = vsel %vm3737, %v3738, %v3667
      %v3740 = vshrl.u32 %v3739, 6
      %v3741 = vand.u32 %v3739, 63
      %v3742 = vsub.s32 0, %v3741
      %v3743 = vsel %vm3737, %v3742, %v3741
      %vm3744 = vcmp.lt.s32.totalorder %v3668, 0
      %v3745 = vsub.s32 0, %v3668
      %v3746 = vsel %vm3744, %v3745, %v3668
      %v3747 = vshrl.u32 %v3746, 6
      %v3748 = vand.u32 %v3746, 63
      %v3749 = vsub.s32 0, %v3748
      %v3750 = vsel %vm3744, %v3749, %v3748
      %vm3751 = vcmp.lt.s32.totalorder %v3669, 0
      %v3752 = vsub.s32 0, %v3669
      %v3753 = vsel %vm3751, %v3752, %v3669
      %v3754 = vshrl.u32 %v3753, 6
      %v3755 = vand.u32 %v3753, 63
      %v3756 = vsub.s32 0, %v3755
      %v3757 = vsel %vm3751, %v3756, %v3755
      %vm3758 = vcmp.lt.s32.totalorder %v3670, 0
      %v3759 = vsub.s32 0, %v3670
      %v3760 = vsel %vm3758, %v3759, %v3670
      %v3761 = vshrl.u32 %v3760, 6
      %v3762 = vand.u32 %v3760, 63
      %v3763 = vsub.s32 0, %v3762
      %v3764 = vsel %vm3758, %v3763, %v3762
      %vm3765 = vcmp.lt.s32.totalorder %v3671, 0
      %v3766 = vsub.s32 0, %v3671
      %v3767 = vsel %vm3765, %v3766, %v3671
      %v3768 = vshrl.u32 %v3767, 6
      %v3769 = vand.u32 %v3767, 63
      %v3770 = vsub.s32 0, %v3769
      %v3771 = vsel %vm3765, %v3770, %v3769
      %vm3772 = vcmp.lt.s32.totalorder %v3672, 0
      %v3773 = vsub.s32 0, %v3672
      %v3774 = vsel %vm3772, %v3773, %v3672
      %v3775 = vshrl.u32 %v3774, 6
      %v3776 = vand.u32 %v3774, 63
      %v3777 = vsub.s32 0, %v3776
      %v3778 = vsel %vm3772, %v3777, %v3776
      %vm3779 = vcmp.lt.s32.totalorder %v3673, 0
      %v3780 = vsub.s32 0, %v3673
      %v3781 = vsel %vm3779, %v3780, %v3673
      %v3782 = vshrl.u32 %v3781, 6
      %v3783 = vand.u32 %v3781, 63
      %v3784 = vsub.s32 0, %v3783
      %v3785 = vsel %vm3779, %v3784, %v3783
      %vm3786 = vcmp.ne.s32.totalorder %v3680, 0
      %vm3787 = vcmp.ne.s32.totalorder %v3687, 0
      %vm3788 = vcmp.ne.s32.totalorder %v3694, 0
      %vm3789 = vcmp.ne.s32.totalorder %v3701, 0
      %vm3790 = vcmp.ne.s32.totalorder %v3708, 0
      %vm3791 = vcmp.ne.s32.totalorder %v3715, 0
      %vm3792 = vcmp.ne.s32.totalorder %v3722, 0
      %vm3793 = vcmp.ne.s32.totalorder %v3729, 0
      %vm3794 = vcmp.ne.s32.totalorder %v3736, 0
      %vm3795 = vcmp.ne.s32.totalorder %v3743, 0
      %vm3796 = vcmp.ne.s32.totalorder %v3750, 0
      %vm3797 = vcmp.ne.s32.totalorder %v3757, 0
      %vm3798 = vcmp.ne.s32.totalorder %v3764, 0
      %vm3799 = vcmp.ne.s32.totalorder %v3771, 0
      %vm3800 = vcmp.ne.s32.totalorder %v3778, 0
      %vm3801 = vcmp.ne.s32.totalorder %v3785, 0
      %vm3802 = vcmp.lt.s32.totalorder %v3680, 0
      %vm3803 = vcmp.lt.s32.totalorder %v3687, 0
      %vm3804 = vcmp.lt.s32.totalorder %v3694, 0
      %vm3805 = vcmp.lt.s32.totalorder %v3701, 0
      %vm3806 = vcmp.lt.s32.totalorder %v3708, 0
      %vm3807 = vcmp.lt.s32.totalorder %v3715, 0
      %vm3808 = vcmp.lt.s32.totalorder %v3722, 0
      %vm3809 = vcmp.lt.s32.totalorder %v3729, 0
      %vm3810 = vcmp.lt.s32.totalorder %v3736, 0
      %vm3811 = vcmp.lt.s32.totalorder %v3743, 0
      %vm3812 = vcmp.lt.s32.totalorder %v3750, 0
      %vm3813 = vcmp.lt.s32.totalorder %v3757, 0
      %vm3814 = vcmp.lt.s32.totalorder %v3764, 0
      %vm3815 = vcmp.lt.s32.totalorder %v3771, 0
      %vm3816 = vcmp.lt.s32.totalorder %v3778, 0
      %vm3817 = vcmp.lt.s32.totalorder %v3785, 0
      %vm3818 = vmand %vm3802, %vm3786
      %vm3819 = vmand %vm3803, %vm3787
      %vm3820 = vmand %vm3804, %vm3788
      %vm3821 = vmand %vm3805, %vm3789
      %vm3822 = vmand %vm3806, %vm3790
      %vm3823 = vmand %vm3807, %vm3791
      %vm3824 = vmand %vm3808, %vm3792
      %vm3825 = vmand %vm3809, %vm3793
      %vm3826 = vmand %vm3810, %vm3794
      %vm3827 = vmand %vm3811, %vm3795
      %vm3828 = vmand %vm3812, %vm3796
      %vm3829 = vmand %vm3813, %vm3797
      %vm3830 = vmand %vm3814, %vm3798
      %vm3831 = vmand %vm3815, %vm3799
      %vm3832 = vmand %vm3816, %vm3800
      %vm3833 = vmand %vm3817, %vm3801
      %v3834 = vadd.s32 %v3680, 64
      %v3835 = vadd.s32 %v3687, 64
      %v3836 = vadd.s32 %v3694, 64
      %v3837 = vadd.s32 %v3701, 64
      %v3838 = vadd.s32 %v3708, 64
      %v3839 = vadd.s32 %v3715, 64
      %v3840 = vadd.s32 %v3722, 64
      %v3841 = vadd.s32 %v3729, 64
      %v3842 = vadd.s32 %v3736, 64
      %v3843 = vadd.s32 %v3743, 64
      %v3844 = vadd.s32 %v3750, 64
      %v3845 = vadd.s32 %v3757, 64
      %v3846 = vadd.s32 %v3764, 64
      %v3847 = vadd.s32 %v3771, 64
      %v3848 = vadd.s32 %v3778, 64
      %v3849 = vadd.s32 %v3785, 64
      %v3850 = vsel %vm3818, %v3834, %v3680
      %v3851 = vsel %vm3819, %v3835, %v3687
      %v3852 = vsel %vm3820, %v3836, %v3694
      %v3853 = vsel %vm3821, %v3837, %v3701
      %v3854 = vsel %vm3822, %v3838, %v3708
      %v3855 = vsel %vm3823, %v3839, %v3715
      %v3856 = vsel %vm3824, %v3840, %v3722
      %v3857 = vsel %vm3825, %v3841, %v3729
      %v3858 = vsel %vm3826, %v3842, %v3736
      %v3859 = vsel %vm3827, %v3843, %v3743
      %v3860 = vsel %vm3828, %v3844, %v3750
      %v3861 = vsel %vm3829, %v3845, %v3757
      %v3862 = vsel %vm3830, %v3846, %v3764
      %v3863 = vsel %vm3831, %v3847, %v3771
      %v3864 = vsel %vm3832, %v3848, %v3778
      %v3865 = vsel %vm3833, %v3849, %v3785
      %vm3866 = vcmp.lt.s32.totalorder %v3850, 0
      %v3867 = vsub.s32 0, %v3850
      %v3868 = vsel %vm3866, %v3867, %v3850
      %v3869 = vshrl.u32 %v3868, 3
      %v3870 = vand.u32 %v3868, 7
      %v3871 = vsub.s32 0, %v3870
      %v3872 = vsel %vm3866, %v3871, %v3870
      %vm3873 = vcmp.lt.s32.totalorder %v3851, 0
      %v3874 = vsub.s32 0, %v3851
      %v3875 = vsel %vm3873, %v3874, %v3851
      %v3876 = vshrl.u32 %v3875, 3
      %v3877 = vand.u32 %v3875, 7
      %v3878 = vsub.s32 0, %v3877
      %v3879 = vsel %vm3873, %v3878, %v3877
      %vm3880 = vcmp.lt.s32.totalorder %v3852, 0
      %v3881 = vsub.s32 0, %v3852
      %v3882 = vsel %vm3880, %v3881, %v3852
      %v3883 = vshrl.u32 %v3882, 3
      %v3884 = vand.u32 %v3882, 7
      %v3885 = vsub.s32 0, %v3884
      %v3886 = vsel %vm3880, %v3885, %v3884
      %vm3887 = vcmp.lt.s32.totalorder %v3853, 0
      %v3888 = vsub.s32 0, %v3853
      %v3889 = vsel %vm3887, %v3888, %v3853
      %v3890 = vshrl.u32 %v3889, 3
      %v3891 = vand.u32 %v3889, 7
      %v3892 = vsub.s32 0, %v3891
      %v3893 = vsel %vm3887, %v3892, %v3891
      %vm3894 = vcmp.lt.s32.totalorder %v3854, 0
      %v3895 = vsub.s32 0, %v3854
      %v3896 = vsel %vm3894, %v3895, %v3854
      %v3897 = vshrl.u32 %v3896, 3
      %v3898 = vand.u32 %v3896, 7
      %v3899 = vsub.s32 0, %v3898
      %v3900 = vsel %vm3894, %v3899, %v3898
      %vm3901 = vcmp.lt.s32.totalorder %v3855, 0
      %v3902 = vsub.s32 0, %v3855
      %v3903 = vsel %vm3901, %v3902, %v3855
      %v3904 = vshrl.u32 %v3903, 3
      %v3905 = vand.u32 %v3903, 7
      %v3906 = vsub.s32 0, %v3905
      %v3907 = vsel %vm3901, %v3906, %v3905
      %vm3908 = vcmp.lt.s32.totalorder %v3856, 0
      %v3909 = vsub.s32 0, %v3856
      %v3910 = vsel %vm3908, %v3909, %v3856
      %v3911 = vshrl.u32 %v3910, 3
      %v3912 = vand.u32 %v3910, 7
      %v3913 = vsub.s32 0, %v3912
      %v3914 = vsel %vm3908, %v3913, %v3912
      %vm3915 = vcmp.lt.s32.totalorder %v3857, 0
      %v3916 = vsub.s32 0, %v3857
      %v3917 = vsel %vm3915, %v3916, %v3857
      %v3918 = vshrl.u32 %v3917, 3
      %v3919 = vand.u32 %v3917, 7
      %v3920 = vsub.s32 0, %v3919
      %v3921 = vsel %vm3915, %v3920, %v3919
      %vm3922 = vcmp.lt.s32.totalorder %v3858, 0
      %v3923 = vsub.s32 0, %v3858
      %v3924 = vsel %vm3922, %v3923, %v3858
      %v3925 = vshrl.u32 %v3924, 3
      %v3926 = vand.u32 %v3924, 7
      %v3927 = vsub.s32 0, %v3926
      %v3928 = vsel %vm3922, %v3927, %v3926
      %vm3929 = vcmp.lt.s32.totalorder %v3859, 0
      %v3930 = vsub.s32 0, %v3859
      %v3931 = vsel %vm3929, %v3930, %v3859
      %v3932 = vshrl.u32 %v3931, 3
      %v3933 = vand.u32 %v3931, 7
      %v3934 = vsub.s32 0, %v3933
      %v3935 = vsel %vm3929, %v3934, %v3933
      %vm3936 = vcmp.lt.s32.totalorder %v3860, 0
      %v3937 = vsub.s32 0, %v3860
      %v3938 = vsel %vm3936, %v3937, %v3860
      %v3939 = vshrl.u32 %v3938, 3
      %v3940 = vand.u32 %v3938, 7
      %v3941 = vsub.s32 0, %v3940
      %v3942 = vsel %vm3936, %v3941, %v3940
      %vm3943 = vcmp.lt.s32.totalorder %v3861, 0
      %v3944 = vsub.s32 0, %v3861
      %v3945 = vsel %vm3943, %v3944, %v3861
      %v3946 = vshrl.u32 %v3945, 3
      %v3947 = vand.u32 %v3945, 7
      %v3948 = vsub.s32 0, %v3947
      %v3949 = vsel %vm3943, %v3948, %v3947
      %vm3950 = vcmp.lt.s32.totalorder %v3862, 0
      %v3951 = vsub.s32 0, %v3862
      %v3952 = vsel %vm3950, %v3951, %v3862
      %v3953 = vshrl.u32 %v3952, 3
      %v3954 = vand.u32 %v3952, 7
      %v3955 = vsub.s32 0, %v3954
      %v3956 = vsel %vm3950, %v3955, %v3954
      %vm3957 = vcmp.lt.s32.totalorder %v3863, 0
      %v3958 = vsub.s32 0, %v3863
      %v3959 = vsel %vm3957, %v3958, %v3863
      %v3960 = vshrl.u32 %v3959, 3
      %v3961 = vand.u32 %v3959, 7
      %v3962 = vsub.s32 0, %v3961
      %v3963 = vsel %vm3957, %v3962, %v3961
      %vm3964 = vcmp.lt.s32.totalorder %v3864, 0
      %v3965 = vsub.s32 0, %v3864
      %v3966 = vsel %vm3964, %v3965, %v3864
      %v3967 = vshrl.u32 %v3966, 3
      %v3968 = vand.u32 %v3966, 7
      %v3969 = vsub.s32 0, %v3968
      %v3970 = vsel %vm3964, %v3969, %v3968
      %vm3971 = vcmp.lt.s32.totalorder %v3865, 0
      %v3972 = vsub.s32 0, %v3865
      %v3973 = vsel %vm3971, %v3972, %v3865
      %v3974 = vshrl.u32 %v3973, 3
      %v3975 = vand.u32 %v3973, 7
      %v3976 = vsub.s32 0, %v3975
      %v3977 = vsel %vm3971, %v3976, %v3975
      %vm3978 = vcmp.ne.s32.totalorder %v3872, 0
      %vm3979 = vcmp.ne.s32.totalorder %v3879, 0
      %vm3980 = vcmp.ne.s32.totalorder %v3886, 0
      %vm3981 = vcmp.ne.s32.totalorder %v3893, 0
      %vm3982 = vcmp.ne.s32.totalorder %v3900, 0
      %vm3983 = vcmp.ne.s32.totalorder %v3907, 0
      %vm3984 = vcmp.ne.s32.totalorder %v3914, 0
      %vm3985 = vcmp.ne.s32.totalorder %v3921, 0
      %vm3986 = vcmp.ne.s32.totalorder %v3928, 0
      %vm3987 = vcmp.ne.s32.totalorder %v3935, 0
      %vm3988 = vcmp.ne.s32.totalorder %v3942, 0
      %vm3989 = vcmp.ne.s32.totalorder %v3949, 0
      %vm3990 = vcmp.ne.s32.totalorder %v3956, 0
      %vm3991 = vcmp.ne.s32.totalorder %v3963, 0
      %vm3992 = vcmp.ne.s32.totalorder %v3970, 0
      %vm3993 = vcmp.ne.s32.totalorder %v3977, 0
      %vm3994 = vcmp.lt.s32.totalorder %v3872, 0
      %vm3995 = vcmp.lt.s32.totalorder %v3879, 0
      %vm3996 = vcmp.lt.s32.totalorder %v3886, 0
      %vm3997 = vcmp.lt.s32.totalorder %v3893, 0
      %vm3998 = vcmp.lt.s32.totalorder %v3900, 0
      %vm3999 = vcmp.lt.s32.totalorder %v3907, 0
      %vm4000 = vcmp.lt.s32.totalorder %v3914, 0
      %vm4001 = vcmp.lt.s32.totalorder %v3921, 0
      %vm4002 = vcmp.lt.s32.totalorder %v3928, 0
      %vm4003 = vcmp.lt.s32.totalorder %v3935, 0
      %vm4004 = vcmp.lt.s32.totalorder %v3942, 0
      %vm4005 = vcmp.lt.s32.totalorder %v3949, 0
      %vm4006 = vcmp.lt.s32.totalorder %v3956, 0
      %vm4007 = vcmp.lt.s32.totalorder %v3963, 0
      %vm4008 = vcmp.lt.s32.totalorder %v3970, 0
      %vm4009 = vcmp.lt.s32.totalorder %v3977, 0
      %vm4010 = vmand %vm3994, %vm3978
      %vm4011 = vmand %vm3995, %vm3979
      %vm4012 = vmand %vm3996, %vm3980
      %vm4013 = vmand %vm3997, %vm3981
      %vm4014 = vmand %vm3998, %vm3982
      %vm4015 = vmand %vm3999, %vm3983
      %vm4016 = vmand %vm4000, %vm3984
      %vm4017 = vmand %vm4001, %vm3985
      %vm4018 = vmand %vm4002, %vm3986
      %vm4019 = vmand %vm4003, %vm3987
      %vm4020 = vmand %vm4004, %vm3988
      %vm4021 = vmand %vm4005, %vm3989
      %vm4022 = vmand %vm4006, %vm3990
      %vm4023 = vmand %vm4007, %vm3991
      %vm4024 = vmand %vm4008, %vm3992
      %vm4025 = vmand %vm4009, %vm3993
      %v4026 = vadd.s32 %v3872, 8
      %v4027 = vadd.s32 %v3879, 8
      %v4028 = vadd.s32 %v3886, 8
      %v4029 = vadd.s32 %v3893, 8
      %v4030 = vadd.s32 %v3900, 8
      %v4031 = vadd.s32 %v3907, 8
      %v4032 = vadd.s32 %v3914, 8
      %v4033 = vadd.s32 %v3921, 8
      %v4034 = vadd.s32 %v3928, 8
      %v4035 = vadd.s32 %v3935, 8
      %v4036 = vadd.s32 %v3942, 8
      %v4037 = vadd.s32 %v3949, 8
      %v4038 = vadd.s32 %v3956, 8
      %v4039 = vadd.s32 %v3963, 8
      %v4040 = vadd.s32 %v3970, 8
      %v4041 = vadd.s32 %v3977, 8
      %v4042 = vsel %vm4010, %v4026, %v3872
      %v4043 = vsel %vm4011, %v4027, %v3879
      %v4044 = vsel %vm4012, %v4028, %v3886
      %v4045 = vsel %vm4013, %v4029, %v3893
      %v4046 = vsel %vm4014, %v4030, %v3900
      %v4047 = vsel %vm4015, %v4031, %v3907
      %v4048 = vsel %vm4016, %v4032, %v3914
      %v4049 = vsel %vm4017, %v4033, %v3921
      %v4050 = vsel %vm4018, %v4034, %v3928
      %v4051 = vsel %vm4019, %v4035, %v3935
      %v4052 = vsel %vm4020, %v4036, %v3942
      %v4053 = vsel %vm4021, %v4037, %v3949
      %v4054 = vsel %vm4022, %v4038, %v3956
      %v4055 = vsel %vm4023, %v4039, %v3963
      %v4056 = vsel %vm4024, %v4040, %v3970
      %v4057 = vsel %vm4025, %v4041, %v3977
      %vm4058 = vcmp.ge.s32.totalorder %v3850, 8
      %vm4059 = vcmp.ge.s32.totalorder %v3851, 8
      %vm4060 = vcmp.ge.s32.totalorder %v3852, 8
      %vm4061 = vcmp.ge.s32.totalorder %v3853, 8
      %vm4062 = vcmp.ge.s32.totalorder %v3854, 8
      %vm4063 = vcmp.ge.s32.totalorder %v3855, 8
      %vm4064 = vcmp.ge.s32.totalorder %v3856, 8
      %vm4065 = vcmp.ge.s32.totalorder %v3857, 8
      %vm4066 = vcmp.ge.s32.totalorder %v3858, 8
      %vm4067 = vcmp.ge.s32.totalorder %v3859, 8
      %vm4068 = vcmp.ge.s32.totalorder %v3860, 8
      %vm4069 = vcmp.ge.s32.totalorder %v3861, 8
      %vm4070 = vcmp.ge.s32.totalorder %v3862, 8
      %vm4071 = vcmp.ge.s32.totalorder %v3863, 8
      %vm4072 = vcmp.ge.s32.totalorder %v3864, 8
      %vm4073 = vcmp.ge.s32.totalorder %v3865, 8
      %v4074 = vsel %vm4058, 1, 0
      %v4075 = vsel %vm4059, 1, 0
      %v4076 = vsel %vm4060, 1, 0
      %v4077 = vsel %vm4061, 1, 0
      %v4078 = vsel %vm4062, 1, 0
      %v4079 = vsel %vm4063, 1, 0
      %v4080 = vsel %vm4064, 1, 0
      %v4081 = vsel %vm4065, 1, 0
      %v4082 = vsel %vm4066, 1, 0
      %v4083 = vsel %vm4067, 1, 0
      %v4084 = vsel %vm4068, 1, 0
      %v4085 = vsel %vm4069, 1, 0
      %v4086 = vsel %vm4070, 1, 0
      %v4087 = vsel %vm4071, 1, 0
      %v4088 = vsel %vm4072, 1, 0
      %v4089 = vsel %vm4073, 1, 0
      %v4090 = vcvt.s32.f32 %v4074
      %v4091 = vcvt.s32.f32 %v4075
      %v4092 = vcvt.s32.f32 %v4076
      %v4093 = vcvt.s32.f32 %v4077
      %v4094 = vcvt.s32.f32 %v4078
      %v4095 = vcvt.s32.f32 %v4079
      %v4096 = vcvt.s32.f32 %v4080
      %v4097 = vcvt.s32.f32 %v4081
      %v4098 = vcvt.s32.f32 %v4082
      %v4099 = vcvt.s32.f32 %v4083
      %v4100 = vcvt.s32.f32 %v4084
      %v4101 = vcvt.s32.f32 %v4085
      %v4102 = vcvt.s32.f32 %v4086
      %v4103 = vcvt.s32.f32 %v4087
      %v4104 = vcvt.s32.f32 %v4088
      %v4105 = vcvt.s32.f32 %v4089
      %vm4106 = vcmp.lt.s32.totalorder %v3850, 56
      %vm4107 = vcmp.lt.s32.totalorder %v3851, 56
      %vm4108 = vcmp.lt.s32.totalorder %v3852, 56
      %vm4109 = vcmp.lt.s32.totalorder %v3853, 56
      %vm4110 = vcmp.lt.s32.totalorder %v3854, 56
      %vm4111 = vcmp.lt.s32.totalorder %v3855, 56
      %vm4112 = vcmp.lt.s32.totalorder %v3856, 56
      %vm4113 = vcmp.lt.s32.totalorder %v3857, 56
      %vm4114 = vcmp.lt.s32.totalorder %v3858, 56
      %vm4115 = vcmp.lt.s32.totalorder %v3859, 56
      %vm4116 = vcmp.lt.s32.totalorder %v3860, 56
      %vm4117 = vcmp.lt.s32.totalorder %v3861, 56
      %vm4118 = vcmp.lt.s32.totalorder %v3862, 56
      %vm4119 = vcmp.lt.s32.totalorder %v3863, 56
      %vm4120 = vcmp.lt.s32.totalorder %v3864, 56
      %vm4121 = vcmp.lt.s32.totalorder %v3865, 56
      %v4122 = vsel %vm4106, 1, 0
      %v4123 = vsel %vm4107, 1, 0
      %v4124 = vsel %vm4108, 1, 0
      %v4125 = vsel %vm4109, 1, 0
      %v4126 = vsel %vm4110, 1, 0
      %v4127 = vsel %vm4111, 1, 0
      %v4128 = vsel %vm4112, 1, 0
      %v4129 = vsel %vm4113, 1, 0
      %v4130 = vsel %vm4114, 1, 0
      %v4131 = vsel %vm4115, 1, 0
      %v4132 = vsel %vm4116, 1, 0
      %v4133 = vsel %vm4117, 1, 0
      %v4134 = vsel %vm4118, 1, 0
      %v4135 = vsel %vm4119, 1, 0
      %v4136 = vsel %vm4120, 1, 0
      %v4137 = vsel %vm4121, 1, 0
      %v4138 = vcvt.s32.f32 %v4122
      %v4139 = vcvt.s32.f32 %v4123
      %v4140 = vcvt.s32.f32 %v4124
      %v4141 = vcvt.s32.f32 %v4125
      %v4142 = vcvt.s32.f32 %v4126
      %v4143 = vcvt.s32.f32 %v4127
      %v4144 = vcvt.s32.f32 %v4128
      %v4145 = vcvt.s32.f32 %v4129
      %v4146 = vcvt.s32.f32 %v4130
      %v4147 = vcvt.s32.f32 %v4131
      %v4148 = vcvt.s32.f32 %v4132
      %v4149 = vcvt.s32.f32 %v4133
      %v4150 = vcvt.s32.f32 %v4134
      %v4151 = vcvt.s32.f32 %v4135
      %v4152 = vcvt.s32.f32 %v4136
      %v4153 = vcvt.s32.f32 %v4137
      %vm4154 = vcmp.ge.s32.totalorder %v4042, 1
      %vm4155 = vcmp.ge.s32.totalorder %v4043, 1
      %vm4156 = vcmp.ge.s32.totalorder %v4044, 1
      %vm4157 = vcmp.ge.s32.totalorder %v4045, 1
      %vm4158 = vcmp.ge.s32.totalorder %v4046, 1
      %vm4159 = vcmp.ge.s32.totalorder %v4047, 1
      %vm4160 = vcmp.ge.s32.totalorder %v4048, 1
      %vm4161 = vcmp.ge.s32.totalorder %v4049, 1
      %vm4162 = vcmp.ge.s32.totalorder %v4050, 1
      %vm4163 = vcmp.ge.s32.totalorder %v4051, 1
      %vm4164 = vcmp.ge.s32.totalorder %v4052, 1
      %vm4165 = vcmp.ge.s32.totalorder %v4053, 1
      %vm4166 = vcmp.ge.s32.totalorder %v4054, 1
      %vm4167 = vcmp.ge.s32.totalorder %v4055, 1
      %vm4168 = vcmp.ge.s32.totalorder %v4056, 1
      %vm4169 = vcmp.ge.s32.totalorder %v4057, 1
      %v4170 = vsel %vm4154, 1, 0
      %v4171 = vsel %vm4155, 1, 0
      %v4172 = vsel %vm4156, 1, 0
      %v4173 = vsel %vm4157, 1, 0
      %v4174 = vsel %vm4158, 1, 0
      %v4175 = vsel %vm4159, 1, 0
      %v4176 = vsel %vm4160, 1, 0
      %v4177 = vsel %vm4161, 1, 0
      %v4178 = vsel %vm4162, 1, 0
      %v4179 = vsel %vm4163, 1, 0
      %v4180 = vsel %vm4164, 1, 0
      %v4181 = vsel %vm4165, 1, 0
      %v4182 = vsel %vm4166, 1, 0
      %v4183 = vsel %vm4167, 1, 0
      %v4184 = vsel %vm4168, 1, 0
      %v4185 = vsel %vm4169, 1, 0
      %v4186 = vcvt.s32.f32 %v4170
      %v4187 = vcvt.s32.f32 %v4171
      %v4188 = vcvt.s32.f32 %v4172
      %v4189 = vcvt.s32.f32 %v4173
      %v4190 = vcvt.s32.f32 %v4174
      %v4191 = vcvt.s32.f32 %v4175
      %v4192 = vcvt.s32.f32 %v4176
      %v4193 = vcvt.s32.f32 %v4177
      %v4194 = vcvt.s32.f32 %v4178
      %v4195 = vcvt.s32.f32 %v4179
      %v4196 = vcvt.s32.f32 %v4180
      %v4197 = vcvt.s32.f32 %v4181
      %v4198 = vcvt.s32.f32 %v4182
      %v4199 = vcvt.s32.f32 %v4183
      %v4200 = vcvt.s32.f32 %v4184
      %v4201 = vcvt.s32.f32 %v4185
      %vm4202 = vcmp.lt.s32.totalorder %v4042, 7
      %vm4203 = vcmp.lt.s32.totalorder %v4043, 7
      %vm4204 = vcmp.lt.s32.totalorder %v4044, 7
      %vm4205 = vcmp.lt.s32.totalorder %v4045, 7
      %vm4206 = vcmp.lt.s32.totalorder %v4046, 7
      %vm4207 = vcmp.lt.s32.totalorder %v4047, 7
      %vm4208 = vcmp.lt.s32.totalorder %v4048, 7
      %vm4209 = vcmp.lt.s32.totalorder %v4049, 7
      %vm4210 = vcmp.lt.s32.totalorder %v4050, 7
      %vm4211 = vcmp.lt.s32.totalorder %v4051, 7
      %vm4212 = vcmp.lt.s32.totalorder %v4052, 7
      %vm4213 = vcmp.lt.s32.totalorder %v4053, 7
      %vm4214 = vcmp.lt.s32.totalorder %v4054, 7
      %vm4215 = vcmp.lt.s32.totalorder %v4055, 7
      %vm4216 = vcmp.lt.s32.totalorder %v4056, 7
      %vm4217 = vcmp.lt.s32.totalorder %v4057, 7
      %v4218 = vsel %vm4202, 1, 0
      %v4219 = vsel %vm4203, 1, 0
      %v4220 = vsel %vm4204, 1, 0
      %v4221 = vsel %vm4205, 1, 0
      %v4222 = vsel %vm4206, 1, 0
      %v4223 = vsel %vm4207, 1, 0
      %v4224 = vsel %vm4208, 1, 0
      %v4225 = vsel %vm4209, 1, 0
      %v4226 = vsel %vm4210, 1, 0
      %v4227 = vsel %vm4211, 1, 0
      %v4228 = vsel %vm4212, 1, 0
      %v4229 = vsel %vm4213, 1, 0
      %v4230 = vsel %vm4214, 1, 0
      %v4231 = vsel %vm4215, 1, 0
      %v4232 = vsel %vm4216, 1, 0
      %v4233 = vsel %vm4217, 1, 0
      %v4234 = vcvt.s32.f32 %v4218
      %v4235 = vcvt.s32.f32 %v4219
      %v4236 = vcvt.s32.f32 %v4220
      %v4237 = vcvt.s32.f32 %v4221
      %v4238 = vcvt.s32.f32 %v4222
      %v4239 = vcvt.s32.f32 %v4223
      %v4240 = vcvt.s32.f32 %v4224
      %v4241 = vcvt.s32.f32 %v4225
      %v4242 = vcvt.s32.f32 %v4226
      %v4243 = vcvt.s32.f32 %v4227
      %v4244 = vcvt.s32.f32 %v4228
      %v4245 = vcvt.s32.f32 %v4229
      %v4246 = vcvt.s32.f32 %v4230
      %v4247 = vcvt.s32.f32 %v4231
      %v4248 = vcvt.s32.f32 %v4232
      %v4249 = vcvt.s32.f32 %v4233
      %v4250 = vrot.slane %v3618, 7
      %v4251 = vrot.slane %v3620, 7
      %v4252 = vrot.slane %v3623, 7
      %v4253 = vrot.slane %v3625, 7
      %v4254 = vrot.slane %v3628, 7
      %v4255 = vrot.slane %v3630, 7
      %v4256 = vrot.slane %v3633, 7
      %v4257 = vrot.slane %v3635, 7
      %v4258 = vrot.slane %v3638, 7
      %v4259 = vrot.slane %v3640, 7
      %v4260 = vrot.slane %v3643, 7
      %v4261 = vrot.slane %v3645, 7
      %v4262 = vrot.slane %v3648, 7
      %v4263 = vrot.slane %v3650, 7
      %v4264 = vrot.slane %v3653, 7
      %v4265 = vrot.slane %v3655, 7
      %vm4266 = vcmp.lt.s32.totalorder %v3658, 1
      %v4267 = vsel %vm4266, %v4264, %v4265
      %v4268 = vsel %vm4266, %v4263, %v4264
      %v4269 = vsel %vm4266, %v4262, %v4263
      %v4270 = vsel %vm4266, %v4261, %v4262
      %v4271 = vsel %vm4266, %v4260, %v4261
      %v4272 = vsel %vm4266, %v4259, %v4260
      %v4273 = vsel %vm4266, %v4258, %v4259
      %v4274 = vsel %vm4266, %v4257, %v4258
      %v4275 = vsel %vm4266, %v4256, %v4257
      %v4276 = vsel %vm4266, %v4255, %v4256
      %v4277 = vsel %vm4266, %v4254, %v4255
      %v4278 = vsel %vm4266, %v4253, %v4254
      %v4279 = vsel %vm4266, %v4252, %v4253
      %v4280 = vsel %vm4266, %v4251, %v4252
      %v4281 = vsel %vm4266, %v4250, %v4251
      %v4282 = vsel %vm4266, %v4265, %v4250
      %v4283 = vmul.f32 %v4090, %v4186
      %v4284 = vmul.f32 %v4091, %v4187
      %v4285 = vmul.f32 %v4092, %v4188
      %v4286 = vmul.f32 %v4093, %v4189
      %v4287 = vmul.f32 %v4094, %v4190
      %v4288 = vmul.f32 %v4095, %v4191
      %v4289 = vmul.f32 %v4096, %v4192
      %v4290 = vmul.f32 %v4097, %v4193
      %v4291 = vmul.f32 %v4098, %v4194
      %v4292 = vmul.f32 %v4099, %v4195
      %v4293 = vmul.f32 %v4100, %v4196
      %v4294 = vmul.f32 %v4101, %v4197
      %v4295 = vmul.f32 %v4102, %v4198
      %v4296 = vmul.f32 %v4103, %v4199
      %v4297 = vmul.f32 %v4104, %v4200
      %v4298 = vmul.f32 %v4105, %v4201
      %v4299 = vmul.f32 %v4267, %v4283
      %v4300 = vmul.f32 %v4282, %v4284
      %v4301 = vmul.f32 %v4281, %v4285
      %v4302 = vmul.f32 %v4280, %v4286
      %v4303 = vmul.f32 %v4279, %v4287
      %v4304 = vmul.f32 %v4278, %v4288
      %v4305 = vmul.f32 %v4277, %v4289
      %v4306 = vmul.f32 %v4276, %v4290
      %v4307 = vmul.f32 %v4275, %v4291
      %v4308 = vmul.f32 %v4274, %v4292
      %v4309 = vmul.f32 %v4273, %v4293
      %v4310 = vmul.f32 %v4272, %v4294
      %v4311 = vmul.f32 %v4271, %v4295
      %v4312 = vmul.f32 %v4270, %v4296
      %v4313 = vmul.f32 %v4269, %v4297
      %v4314 = vmul.f32 %v4268, %v4298
      %v4315 = vperm.slane %v327, 0
      %v4316 = vmul.f32 %v4299, %v4315
      %v4317 = vmul.f32 %v4300, %v4315
      %v4318 = vmul.f32 %v4301, %v4315
      %v4319 = vmul.f32 %v4302, %v4315
      %v4320 = vmul.f32 %v4303, %v4315
      %v4321 = vmul.f32 %v4304, %v4315
      %v4322 = vmul.f32 %v4305, %v4315
      %v4323 = vmul.f32 %v4306, %v4315
      %v4324 = vmul.f32 %v4307, %v4315
      %v4325 = vmul.f32 %v4308, %v4315
      %v4326 = vmul.f32 %v4309, %v4315
      %v4327 = vmul.f32 %v4310, %v4315
      %v4328 = vmul.f32 %v4311, %v4315
      %v4329 = vmul.f32 %v4312, %v4315
      %v4330 = vmul.f32 %v4313, %v4315
      %v4331 = vmul.f32 %v4314, %v4315
      %v4332 = vadd.f32 %v4316, 0.0
      %v4333 = vadd.f32 %v4317, 0.0
      %v4334 = vadd.f32 %v4318, 0.0
      %v4335 = vadd.f32 %v4319, 0.0
      %v4336 = vadd.f32 %v4320, 0.0
      %v4337 = vadd.f32 %v4321, 0.0
      %v4338 = vadd.f32 %v4322, 0.0
      %v4339 = vadd.f32 %v4323, 0.0
      %v4340 = vadd.f32 %v4324, 0.0
      %v4341 = vadd.f32 %v4325, 0.0
      %v4342 = vadd.f32 %v4326, 0.0
      %v4343 = vadd.f32 %v4327, 0.0
      %v4344 = vadd.f32 %v4328, 0.0
      %v4345 = vadd.f32 %v4329, 0.0
      %v4346 = vadd.f32 %v4330, 0.0
      %v4347 = vadd.f32 %v4331, 0.0
      %v4348 = vmul.f32 %v3655, %v4090
      %v4349 = vmul.f32 %v3618, %v4091
      %v4350 = vmul.f32 %v3620, %v4092
      %v4351 = vmul.f32 %v3623, %v4093
      %v4352 = vmul.f32 %v3625, %v4094
      %v4353 = vmul.f32 %v3628, %v4095
      %v4354 = vmul.f32 %v3630, %v4096
      %v4355 = vmul.f32 %v3633, %v4097
      %v4356 = vmul.f32 %v3635, %v4098
      %v4357 = vmul.f32 %v3638, %v4099
      %v4358 = vmul.f32 %v3640, %v4100
      %v4359 = vmul.f32 %v3643, %v4101
      %v4360 = vmul.f32 %v3645, %v4102
      %v4361 = vmul.f32 %v3648, %v4103
      %v4362 = vmul.f32 %v3650, %v4104
      %v4363 = vmul.f32 %v3653, %v4105
      %v4364 = vperm.slane %v327, 1
      %v4365 = vmul.f32 %v4348, %v4364
      %v4366 = vmul.f32 %v4349, %v4364
      %v4367 = vmul.f32 %v4350, %v4364
      %v4368 = vmul.f32 %v4351, %v4364
      %v4369 = vmul.f32 %v4352, %v4364
      %v4370 = vmul.f32 %v4353, %v4364
      %v4371 = vmul.f32 %v4354, %v4364
      %v4372 = vmul.f32 %v4355, %v4364
      %v4373 = vmul.f32 %v4356, %v4364
      %v4374 = vmul.f32 %v4357, %v4364
      %v4375 = vmul.f32 %v4358, %v4364
      %v4376 = vmul.f32 %v4359, %v4364
      %v4377 = vmul.f32 %v4360, %v4364
      %v4378 = vmul.f32 %v4361, %v4364
      %v4379 = vmul.f32 %v4362, %v4364
      %v4380 = vmul.f32 %v4363, %v4364
      %v4381 = vadd.f32 %v4332, %v4365
      %v4382 = vadd.f32 %v4333, %v4366
      %v4383 = vadd.f32 %v4334, %v4367
      %v4384 = vadd.f32 %v4335, %v4368
      %v4385 = vadd.f32 %v4336, %v4369
      %v4386 = vadd.f32 %v4337, %v4370
      %v4387 = vadd.f32 %v4338, %v4371
      %v4388 = vadd.f32 %v4339, %v4372
      %v4389 = vadd.f32 %v4340, %v4373
      %v4390 = vadd.f32 %v4341, %v4374
      %v4391 = vadd.f32 %v4342, %v4375
      %v4392 = vadd.f32 %v4343, %v4376
      %v4393 = vadd.f32 %v4344, %v4377
      %v4394 = vadd.f32 %v4345, %v4378
      %v4395 = vadd.f32 %v4346, %v4379
      %v4396 = vadd.f32 %v4347, %v4380
      %v4397 = vrot.slane %v3618, 1
      %v4398 = vrot.slane %v3620, 1
      %v4399 = vrot.slane %v3623, 1
      %v4400 = vrot.slane %v3625, 1
      %v4401 = vrot.slane %v3628, 1
      %v4402 = vrot.slane %v3630, 1
      %v4403 = vrot.slane %v3633, 1
      %v4404 = vrot.slane %v3635, 1
      %v4405 = vrot.slane %v3638, 1
      %v4406 = vrot.slane %v3640, 1
      %v4407 = vrot.slane %v3643, 1
      %v4408 = vrot.slane %v3645, 1
      %v4409 = vrot.slane %v3648, 1
      %v4410 = vrot.slane %v3650, 1
      %v4411 = vrot.slane %v3653, 1
      %v4412 = vrot.slane %v3655, 1
      %vm4413 = vcmp.lt.s32.totalorder %v3658, 7
      %v4414 = vsel %vm4413, %v4411, %v4412
      %v4415 = vsel %vm4413, %v4410, %v4411
      %v4416 = vsel %vm4413, %v4409, %v4410
      %v4417 = vsel %vm4413, %v4408, %v4409
      %v4418 = vsel %vm4413, %v4407, %v4408
      %v4419 = vsel %vm4413, %v4406, %v4407
      %v4420 = vsel %vm4413, %v4405, %v4406
      %v4421 = vsel %vm4413, %v4404, %v4405
      %v4422 = vsel %vm4413, %v4403, %v4404
      %v4423 = vsel %vm4413, %v4402, %v4403
      %v4424 = vsel %vm4413, %v4401, %v4402
      %v4425 = vsel %vm4413, %v4400, %v4401
      %v4426 = vsel %vm4413, %v4399, %v4400
      %v4427 = vsel %vm4413, %v4398, %v4399
      %v4428 = vsel %vm4413, %v4397, %v4398
      %v4429 = vsel %vm4413, %v4412, %v4397
      %v4430 = vmul.f32 %v4090, %v4234
      %v4431 = vmul.f32 %v4091, %v4235
      %v4432 = vmul.f32 %v4092, %v4236
      %v4433 = vmul.f32 %v4093, %v4237
      %v4434 = vmul.f32 %v4094, %v4238
      %v4435 = vmul.f32 %v4095, %v4239
      %v4436 = vmul.f32 %v4096, %v4240
      %v4437 = vmul.f32 %v4097, %v4241
      %v4438 = vmul.f32 %v4098, %v4242
      %v4439 = vmul.f32 %v4099, %v4243
      %v4440 = vmul.f32 %v4100, %v4244
      %v4441 = vmul.f32 %v4101, %v4245
      %v4442 = vmul.f32 %v4102, %v4246
      %v4443 = vmul.f32 %v4103, %v4247
      %v4444 = vmul.f32 %v4104, %v4248
      %v4445 = vmul.f32 %v4105, %v4249
      %v4446 = vmul.f32 %v4429, %v4430
      %v4447 = vmul.f32 %v4428, %v4431
      %v4448 = vmul.f32 %v4427, %v4432
      %v4449 = vmul.f32 %v4426, %v4433
      %v4450 = vmul.f32 %v4425, %v4434
      %v4451 = vmul.f32 %v4424, %v4435
      %v4452 = vmul.f32 %v4423, %v4436
      %v4453 = vmul.f32 %v4422, %v4437
      %v4454 = vmul.f32 %v4421, %v4438
      %v4455 = vmul.f32 %v4420, %v4439
      %v4456 = vmul.f32 %v4419, %v4440
      %v4457 = vmul.f32 %v4418, %v4441
      %v4458 = vmul.f32 %v4417, %v4442
      %v4459 = vmul.f32 %v4416, %v4443
      %v4460 = vmul.f32 %v4415, %v4444
      %v4461 = vmul.f32 %v4414, %v4445
      %v4462 = vperm.slane %v327, 2
      %v4463 = vmul.f32 %v4446, %v4462
      %v4464 = vmul.f32 %v4447, %v4462
      %v4465 = vmul.f32 %v4448, %v4462
      %v4466 = vmul.f32 %v4449, %v4462
      %v4467 = vmul.f32 %v4450, %v4462
      %v4468 = vmul.f32 %v4451, %v4462
      %v4469 = vmul.f32 %v4452, %v4462
      %v4470 = vmul.f32 %v4453, %v4462
      %v4471 = vmul.f32 %v4454, %v4462
      %v4472 = vmul.f32 %v4455, %v4462
      %v4473 = vmul.f32 %v4456, %v4462
      %v4474 = vmul.f32 %v4457, %v4462
      %v4475 = vmul.f32 %v4458, %v4462
      %v4476 = vmul.f32 %v4459, %v4462
      %v4477 = vmul.f32 %v4460, %v4462
      %v4478 = vmul.f32 %v4461, %v4462
      %v4479 = vadd.f32 %v4381, %v4463
      %v4480 = vadd.f32 %v4382, %v4464
      %v4481 = vadd.f32 %v4383, %v4465
      %v4482 = vadd.f32 %v4384, %v4466
      %v4483 = vadd.f32 %v4385, %v4467
      %v4484 = vadd.f32 %v4386, %v4468
      %v4485 = vadd.f32 %v4387, %v4469
      %v4486 = vadd.f32 %v4388, %v4470
      %v4487 = vadd.f32 %v4389, %v4471
      %v4488 = vadd.f32 %v4390, %v4472
      %v4489 = vadd.f32 %v4391, %v4473
      %v4490 = vadd.f32 %v4392, %v4474
      %v4491 = vadd.f32 %v4393, %v4475
      %v4492 = vadd.f32 %v4394, %v4476
      %v4493 = vadd.f32 %v4395, %v4477
      %v4494 = vadd.f32 %v4396, %v4478
      %v4495 = vmul.f32 %v4282, %v4186
      %v4496 = vmul.f32 %v4281, %v4187
      %v4497 = vmul.f32 %v4280, %v4188
      %v4498 = vmul.f32 %v4279, %v4189
      %v4499 = vmul.f32 %v4278, %v4190
      %v4500 = vmul.f32 %v4277, %v4191
      %v4501 = vmul.f32 %v4276, %v4192
      %v4502 = vmul.f32 %v4275, %v4193
      %v4503 = vmul.f32 %v4274, %v4194
      %v4504 = vmul.f32 %v4273, %v4195
      %v4505 = vmul.f32 %v4272, %v4196
      %v4506 = vmul.f32 %v4271, %v4197
      %v4507 = vmul.f32 %v4270, %v4198
      %v4508 = vmul.f32 %v4269, %v4199
      %v4509 = vmul.f32 %v4268, %v4200
      %v4510 = vmul.f32 %v4267, %v4201
      %v4511 = vperm.slane %v327, 3
      %v4512 = vmul.f32 %v4495, %v4511
      %v4513 = vmul.f32 %v4496, %v4511
      %v4514 = vmul.f32 %v4497, %v4511
      %v4515 = vmul.f32 %v4498, %v4511
      %v4516 = vmul.f32 %v4499, %v4511
      %v4517 = vmul.f32 %v4500, %v4511
      %v4518 = vmul.f32 %v4501, %v4511
      %v4519 = vmul.f32 %v4502, %v4511
      %v4520 = vmul.f32 %v4503, %v4511
      %v4521 = vmul.f32 %v4504, %v4511
      %v4522 = vmul.f32 %v4505, %v4511
      %v4523 = vmul.f32 %v4506, %v4511
      %v4524 = vmul.f32 %v4507, %v4511
      %v4525 = vmul.f32 %v4508, %v4511
      %v4526 = vmul.f32 %v4509, %v4511
      %v4527 = vmul.f32 %v4510, %v4511
      %v4528 = vadd.f32 %v4479, %v4512
      %v4529 = vadd.f32 %v4480, %v4513
      %v4530 = vadd.f32 %v4481, %v4514
      %v4531 = vadd.f32 %v4482, %v4515
      %v4532 = vadd.f32 %v4483, %v4516
      %v4533 = vadd.f32 %v4484, %v4517
      %v4534 = vadd.f32 %v4485, %v4518
      %v4535 = vadd.f32 %v4486, %v4519
      %v4536 = vadd.f32 %v4487, %v4520
      %v4537 = vadd.f32 %v4488, %v4521
      %v4538 = vadd.f32 %v4489, %v4522
      %v4539 = vadd.f32 %v4490, %v4523
      %v4540 = vadd.f32 %v4491, %v4524
      %v4541 = vadd.f32 %v4492, %v4525
      %v4542 = vadd.f32 %v4493, %v4526
      %v4543 = vadd.f32 %v4494, %v4527
      %v4544 = vperm.slane %v327, 4
      %v4545 = vmul.f32 %v3618, %v4544
      %v4546 = vmul.f32 %v3620, %v4544
      %v4547 = vmul.f32 %v3623, %v4544
      %v4548 = vmul.f32 %v3625, %v4544
      %v4549 = vmul.f32 %v3628, %v4544
      %v4550 = vmul.f32 %v3630, %v4544
      %v4551 = vmul.f32 %v3633, %v4544
      %v4552 = vmul.f32 %v3635, %v4544
      %v4553 = vmul.f32 %v3638, %v4544
      %v4554 = vmul.f32 %v3640, %v4544
      %v4555 = vmul.f32 %v3643, %v4544
      %v4556 = vmul.f32 %v3645, %v4544
      %v4557 = vmul.f32 %v3648, %v4544
      %v4558 = vmul.f32 %v3650, %v4544
      %v4559 = vmul.f32 %v3653, %v4544
      %v4560 = vmul.f32 %v3655, %v4544
      %v4561 = vadd.f32 %v4528, %v4545
      %v4562 = vadd.f32 %v4529, %v4546
      %v4563 = vadd.f32 %v4530, %v4547
      %v4564 = vadd.f32 %v4531, %v4548
      %v4565 = vadd.f32 %v4532, %v4549
      %v4566 = vadd.f32 %v4533, %v4550
      %v4567 = vadd.f32 %v4534, %v4551
      %v4568 = vadd.f32 %v4535, %v4552
      %v4569 = vadd.f32 %v4536, %v4553
      %v4570 = vadd.f32 %v4537, %v4554
      %v4571 = vadd.f32 %v4538, %v4555
      %v4572 = vadd.f32 %v4539, %v4556
      %v4573 = vadd.f32 %v4540, %v4557
      %v4574 = vadd.f32 %v4541, %v4558
      %v4575 = vadd.f32 %v4542, %v4559
      %v4576 = vadd.f32 %v4543, %v4560
      %v4577 = vmul.f32 %v4428, %v4234
      %v4578 = vmul.f32 %v4427, %v4235
      %v4579 = vmul.f32 %v4426, %v4236
      %v4580 = vmul.f32 %v4425, %v4237
      %v4581 = vmul.f32 %v4424, %v4238
      %v4582 = vmul.f32 %v4423, %v4239
      %v4583 = vmul.f32 %v4422, %v4240
      %v4584 = vmul.f32 %v4421, %v4241
      %v4585 = vmul.f32 %v4420, %v4242
      %v4586 = vmul.f32 %v4419, %v4243
      %v4587 = vmul.f32 %v4418, %v4244
      %v4588 = vmul.f32 %v4417, %v4245
      %v4589 = vmul.f32 %v4416, %v4246
      %v4590 = vmul.f32 %v4415, %v4247
      %v4591 = vmul.f32 %v4414, %v4248
      %v4592 = vmul.f32 %v4429, %v4249
      %v4593 = vperm.slane %v327, 5
      %v4594 = vmul.f32 %v4577, %v4593
      %v4595 = vmul.f32 %v4578, %v4593
      %v4596 = vmul.f32 %v4579, %v4593
      %v4597 = vmul.f32 %v4580, %v4593
      %v4598 = vmul.f32 %v4581, %v4593
      %v4599 = vmul.f32 %v4582, %v4593
      %v4600 = vmul.f32 %v4583, %v4593
      %v4601 = vmul.f32 %v4584, %v4593
      %v4602 = vmul.f32 %v4585, %v4593
      %v4603 = vmul.f32 %v4586, %v4593
      %v4604 = vmul.f32 %v4587, %v4593
      %v4605 = vmul.f32 %v4588, %v4593
      %v4606 = vmul.f32 %v4589, %v4593
      %v4607 = vmul.f32 %v4590, %v4593
      %v4608 = vmul.f32 %v4591, %v4593
      %v4609 = vmul.f32 %v4592, %v4593
      %v4610 = vadd.f32 %v4561, %v4594
      %v4611 = vadd.f32 %v4562, %v4595
      %v4612 = vadd.f32 %v4563, %v4596
      %v4613 = vadd.f32 %v4564, %v4597
      %v4614 = vadd.f32 %v4565, %v4598
      %v4615 = vadd.f32 %v4566, %v4599
      %v4616 = vadd.f32 %v4567, %v4600
      %v4617 = vadd.f32 %v4568, %v4601
      %v4618 = vadd.f32 %v4569, %v4602
      %v4619 = vadd.f32 %v4570, %v4603
      %v4620 = vadd.f32 %v4571, %v4604
      %v4621 = vadd.f32 %v4572, %v4605
      %v4622 = vadd.f32 %v4573, %v4606
      %v4623 = vadd.f32 %v4574, %v4607
      %v4624 = vadd.f32 %v4575, %v4608
      %v4625 = vadd.f32 %v4576, %v4609
      %v4626 = vmul.f32 %v4138, %v4186
      %v4627 = vmul.f32 %v4139, %v4187
      %v4628 = vmul.f32 %v4140, %v4188
      %v4629 = vmul.f32 %v4141, %v4189
      %v4630 = vmul.f32 %v4142, %v4190
      %v4631 = vmul.f32 %v4143, %v4191
      %v4632 = vmul.f32 %v4144, %v4192
      %v4633 = vmul.f32 %v4145, %v4193
      %v4634 = vmul.f32 %v4146, %v4194
      %v4635 = vmul.f32 %v4147, %v4195
      %v4636 = vmul.f32 %v4148, %v4196
      %v4637 = vmul.f32 %v4149, %v4197
      %v4638 = vmul.f32 %v4150, %v4198
      %v4639 = vmul.f32 %v4151, %v4199
      %v4640 = vmul.f32 %v4152, %v4200
      %v4641 = vmul.f32 %v4153, %v4201
      %v4642 = vmul.f32 %v4281, %v4626
      %v4643 = vmul.f32 %v4280, %v4627
      %v4644 = vmul.f32 %v4279, %v4628
      %v4645 = vmul.f32 %v4278, %v4629
      %v4646 = vmul.f32 %v4277, %v4630
      %v4647 = vmul.f32 %v4276, %v4631
      %v4648 = vmul.f32 %v4275, %v4632
      %v4649 = vmul.f32 %v4274, %v4633
      %v4650 = vmul.f32 %v4273, %v4634
      %v4651 = vmul.f32 %v4272, %v4635
      %v4652 = vmul.f32 %v4271, %v4636
      %v4653 = vmul.f32 %v4270, %v4637
      %v4654 = vmul.f32 %v4269, %v4638
      %v4655 = vmul.f32 %v4268, %v4639
      %v4656 = vmul.f32 %v4267, %v4640
      %v4657 = vmul.f32 %v4282, %v4641
      %v4658 = vperm.slane %v327, 6
      %v4659 = vmul.f32 %v4642, %v4658
      %v4660 = vmul.f32 %v4643, %v4658
      %v4661 = vmul.f32 %v4644, %v4658
      %v4662 = vmul.f32 %v4645, %v4658
      %v4663 = vmul.f32 %v4646, %v4658
      %v4664 = vmul.f32 %v4647, %v4658
      %v4665 = vmul.f32 %v4648, %v4658
      %v4666 = vmul.f32 %v4649, %v4658
      %v4667 = vmul.f32 %v4650, %v4658
      %v4668 = vmul.f32 %v4651, %v4658
      %v4669 = vmul.f32 %v4652, %v4658
      %v4670 = vmul.f32 %v4653, %v4658
      %v4671 = vmul.f32 %v4654, %v4658
      %v4672 = vmul.f32 %v4655, %v4658
      %v4673 = vmul.f32 %v4656, %v4658
      %v4674 = vmul.f32 %v4657, %v4658
      %v4675 = vadd.f32 %v4610, %v4659
      %v4676 = vadd.f32 %v4611, %v4660
      %v4677 = vadd.f32 %v4612, %v4661
      %v4678 = vadd.f32 %v4613, %v4662
      %v4679 = vadd.f32 %v4614, %v4663
      %v4680 = vadd.f32 %v4615, %v4664
      %v4681 = vadd.f32 %v4616, %v4665
      %v4682 = vadd.f32 %v4617, %v4666
      %v4683 = vadd.f32 %v4618, %v4667
      %v4684 = vadd.f32 %v4619, %v4668
      %v4685 = vadd.f32 %v4620, %v4669
      %v4686 = vadd.f32 %v4621, %v4670
      %v4687 = vadd.f32 %v4622, %v4671
      %v4688 = vadd.f32 %v4623, %v4672
      %v4689 = vadd.f32 %v4624, %v4673
      %v4690 = vadd.f32 %v4625, %v4674
      %v4691 = vmul.f32 %v3620, %v4138
      %v4692 = vmul.f32 %v3623, %v4139
      %v4693 = vmul.f32 %v3625, %v4140
      %v4694 = vmul.f32 %v3628, %v4141
      %v4695 = vmul.f32 %v3630, %v4142
      %v4696 = vmul.f32 %v3633, %v4143
      %v4697 = vmul.f32 %v3635, %v4144
      %v4698 = vmul.f32 %v3638, %v4145
      %v4699 = vmul.f32 %v3640, %v4146
      %v4700 = vmul.f32 %v3643, %v4147
      %v4701 = vmul.f32 %v3645, %v4148
      %v4702 = vmul.f32 %v3648, %v4149
      %v4703 = vmul.f32 %v3650, %v4150
      %v4704 = vmul.f32 %v3653, %v4151
      %v4705 = vmul.f32 %v3655, %v4152
      %v4706 = vmul.f32 %v3618, %v4153
      %v4707 = vperm.slane %v327, 7
      %v4708 = vmul.f32 %v4691, %v4707
      %v4709 = vmul.f32 %v4692, %v4707
      %v4710 = vmul.f32 %v4693, %v4707
      %v4711 = vmul.f32 %v4694, %v4707
      %v4712 = vmul.f32 %v4695, %v4707
      %v4713 = vmul.f32 %v4696, %v4707
      %v4714 = vmul.f32 %v4697, %v4707
      %v4715 = vmul.f32 %v4698, %v4707
      %v4716 = vmul.f32 %v4699, %v4707
      %v4717 = vmul.f32 %v4700, %v4707
      %v4718 = vmul.f32 %v4701, %v4707
      %v4719 = vmul.f32 %v4702, %v4707
      %v4720 = vmul.f32 %v4703, %v4707
      %v4721 = vmul.f32 %v4704, %v4707
      %v4722 = vmul.f32 %v4705, %v4707
      %v4723 = vmul.f32 %v4706, %v4707
      %v4724 = vadd.f32 %v4675, %v4708
      %v4725 = vadd.f32 %v4676, %v4709
      %v4726 = vadd.f32 %v4677, %v4710
      %v4727 = vadd.f32 %v4678, %v4711
      %v4728 = vadd.f32 %v4679, %v4712
      %v4729 = vadd.f32 %v4680, %v4713
      %v4730 = vadd.f32 %v4681, %v4714
      %v4731 = vadd.f32 %v4682, %v4715
      %v4732 = vadd.f32 %v4683, %v4716
      %v4733 = vadd.f32 %v4684, %v4717
      %v4734 = vadd.f32 %v4685, %v4718
      %v4735 = vadd.f32 %v4686, %v4719
      %v4736 = vadd.f32 %v4687, %v4720
      %v4737 = vadd.f32 %v4688, %v4721
      %v4738 = vadd.f32 %v4689, %v4722
      %v4739 = vadd.f32 %v4690, %v4723
      %v4740 = vmul.f32 %v4138, %v4234
      %v4741 = vmul.f32 %v4139, %v4235
      %v4742 = vmul.f32 %v4140, %v4236
      %v4743 = vmul.f32 %v4141, %v4237
      %v4744 = vmul.f32 %v4142, %v4238
      %v4745 = vmul.f32 %v4143, %v4239
      %v4746 = vmul.f32 %v4144, %v4240
      %v4747 = vmul.f32 %v4145, %v4241
      %v4748 = vmul.f32 %v4146, %v4242
      %v4749 = vmul.f32 %v4147, %v4243
      %v4750 = vmul.f32 %v4148, %v4244
      %v4751 = vmul.f32 %v4149, %v4245
      %v4752 = vmul.f32 %v4150, %v4246
      %v4753 = vmul.f32 %v4151, %v4247
      %v4754 = vmul.f32 %v4152, %v4248
      %v4755 = vmul.f32 %v4153, %v4249
      %v4756 = vmul.f32 %v4427, %v4740
      %v4757 = vmul.f32 %v4426, %v4741
      %v4758 = vmul.f32 %v4425, %v4742
      %v4759 = vmul.f32 %v4424, %v4743
      %v4760 = vmul.f32 %v4423, %v4744
      %v4761 = vmul.f32 %v4422, %v4745
      %v4762 = vmul.f32 %v4421, %v4746
      %v4763 = vmul.f32 %v4420, %v4747
      %v4764 = vmul.f32 %v4419, %v4748
      %v4765 = vmul.f32 %v4418, %v4749
      %v4766 = vmul.f32 %v4417, %v4750
      %v4767 = vmul.f32 %v4416, %v4751
      %v4768 = vmul.f32 %v4415, %v4752
      %v4769 = vmul.f32 %v4414, %v4753
      %v4770 = vmul.f32 %v4429, %v4754
      %v4771 = vmul.f32 %v4428, %v4755
      %v4772 = vperm.slane %v328, 0
      %v4773 = vmul.f32 %v4756, %v4772
      %v4774 = vmul.f32 %v4757, %v4772
      %v4775 = vmul.f32 %v4758, %v4772
      %v4776 = vmul.f32 %v4759, %v4772
      %v4777 = vmul.f32 %v4760, %v4772
      %v4778 = vmul.f32 %v4761, %v4772
      %v4779 = vmul.f32 %v4762, %v4772
      %v4780 = vmul.f32 %v4763, %v4772
      %v4781 = vmul.f32 %v4764, %v4772
      %v4782 = vmul.f32 %v4765, %v4772
      %v4783 = vmul.f32 %v4766, %v4772
      %v4784 = vmul.f32 %v4767, %v4772
      %v4785 = vmul.f32 %v4768, %v4772
      %v4786 = vmul.f32 %v4769, %v4772
      %v4787 = vmul.f32 %v4770, %v4772
      %v4788 = vmul.f32 %v4771, %v4772
      %v4789 = vadd.f32 %v4724, %v4773
      %v4790 = vadd.f32 %v4725, %v4774
      %v4791 = vadd.f32 %v4726, %v4775
      %v4792 = vadd.f32 %v4727, %v4776
      %v4793 = vadd.f32 %v4728, %v4777
      %v4794 = vadd.f32 %v4729, %v4778
      %v4795 = vadd.f32 %v4730, %v4779
      %v4796 = vadd.f32 %v4731, %v4780
      %v4797 = vadd.f32 %v4732, %v4781
      %v4798 = vadd.f32 %v4733, %v4782
      %v4799 = vadd.f32 %v4734, %v4783
      %v4800 = vadd.f32 %v4735, %v4784
      %v4801 = vadd.f32 %v4736, %v4785
      %v4802 = vadd.f32 %v4737, %v4786
      %v4803 = vadd.f32 %v4738, %v4787
      %v4804 = vadd.f32 %v4739, %v4788
      %v4805 = vperm.slane %v326, 7
      %v4806 = vadd.f32 %v4789, %v4805
      %v4807 = vadd.f32 %v4790, %v4805
      %v4808 = vadd.f32 %v4791, %v4805
      %v4809 = vadd.f32 %v4792, %v4805
      %v4810 = vadd.f32 %v4793, %v4805
      %v4811 = vadd.f32 %v4794, %v4805
      %v4812 = vadd.f32 %v4795, %v4805
      %v4813 = vadd.f32 %v4796, %v4805
      %v4814 = vadd.f32 %v4797, %v4805
      %v4815 = vadd.f32 %v4798, %v4805
      %v4816 = vadd.f32 %v4799, %v4805
      %v4817 = vadd.f32 %v4800, %v4805
      %v4818 = vadd.f32 %v4801, %v4805
      %v4819 = vadd.f32 %v4802, %v4805
      %v4820 = vadd.f32 %v4803, %v4805
      %v4821 = vadd.f32 %v4804, %v4805
      %v4822 = vadd.f32 %v4806, %v3618
      %v4823 = vadd.f32 %v4807, %v3620
      %v4824 = vadd.f32 %v4808, %v3623
      %v4825 = vadd.f32 %v4809, %v3625
      %v4826 = vadd.f32 %v4810, %v3628
      %v4827 = vadd.f32 %v4811, %v3630
      %v4828 = vadd.f32 %v4812, %v3633
      %v4829 = vadd.f32 %v4813, %v3635
      %v4830 = vadd.f32 %v4814, %v3638
      %v4831 = vadd.f32 %v4815, %v3640
      %v4832 = vadd.f32 %v4816, %v3643
      %v4833 = vadd.f32 %v4817, %v3645
      %v4834 = vadd.f32 %v4818, %v3648
      %v4835 = vadd.f32 %v4819, %v3650
      %v4836 = vadd.f32 %v4820, %v3653
      %v4837 = vadd.f32 %v4821, %v3655
      %4838 = vadd.xlane.f32.xlu0 %v4822
      %v4839 = vpop.xlane.xlu0 %4838
      %4840 = vadd.xlane.f32.xlu0 %v4823
      %v4841 = vpop.xlane.xlu0 %4840
      %4842 = vadd.xlane.f32.xlu0 %v4824
      %v4843 = vpop.xlane.xlu0 %4842
      %4844 = vadd.xlane.f32.xlu0 %v4825
      %v4845 = vpop.xlane.xlu0 %4844
      %4846 = vadd.xlane.f32.xlu0 %v4826
      %v4847 = vpop.xlane.xlu0 %4846
      %4848 = vadd.xlane.f32.xlu0 %v4827
      %v4849 = vpop.xlane.xlu0 %4848
      %4850 = vadd.xlane.f32.xlu0 %v4828
      %v4851 = vpop.xlane.xlu0 %4850
      %4852 = vadd.xlane.f32.xlu0 %v4829
      %v4853 = vpop.xlane.xlu0 %4852
      %4854 = vadd.xlane.f32.xlu0 %v4830
      %v4855 = vpop.xlane.xlu0 %4854
      %4856 = vadd.xlane.f32.xlu0 %v4831
      %v4857 = vpop.xlane.xlu0 %4856
      %4858 = vadd.xlane.f32.xlu0 %v4832
      %v4859 = vpop.xlane.xlu0 %4858
      %4860 = vadd.xlane.f32.xlu0 %v4833
      %v4861 = vpop.xlane.xlu0 %4860
      %4862 = vadd.xlane.f32.xlu0 %v4834
      %v4863 = vpop.xlane.xlu0 %4862
      %4864 = vadd.xlane.f32.xlu0 %v4835
      %v4865 = vpop.xlane.xlu0 %4864
      %4866 = vadd.xlane.f32.xlu0 %v4836
      %v4867 = vpop.xlane.xlu0 %4866
      %4868 = vadd.xlane.f32.xlu0 %v4837
      %v4869 = vpop.xlane.xlu0 %4868
      %v4870 = vrcp.pop 128.0
      %v4871 = vmul.f32 128.0, %v4870
      %v4872 = vsub.f32 1.0, %v4871
      %v4873 = vmul.f32 %v4870, %v4872
      %v4874 = vadd.f32 %v4870, %v4873
      %vm4875 = vweird.f32 %v4870
      %v4876 = vsel %vm4875, %v4870, %v4874
      %v4877 = vmul.f32 %v4839, %v4876
      %v4878 = vmul.f32 %v4841, %v4876
      %v4879 = vmul.f32 %v4843, %v4876
      %v4880 = vmul.f32 %v4845, %v4876
      %v4881 = vmul.f32 %v4847, %v4876
      %v4882 = vmul.f32 %v4849, %v4876
      %v4883 = vmul.f32 %v4851, %v4876
      %v4884 = vmul.f32 %v4853, %v4876
      %v4885 = vmul.f32 %v4855, %v4876
      %v4886 = vmul.f32 %v4857, %v4876
      %v4887 = vmul.f32 %v4859, %v4876
      %v4888 = vmul.f32 %v4861, %v4876
      %v4889 = vmul.f32 %v4863, %v4876
      %v4890 = vmul.f32 %v4865, %v4876
      %v4891 = vmul.f32 %v4867, %v4876
      %v4892 = vmul.f32 %v4869, %v4876
      %v4893 = vsub.f32 %v4822, %v4877
      %v4894 = vsub.f32 %v4823, %v4878
      %v4895 = vsub.f32 %v4824, %v4879
      %v4896 = vsub.f32 %v4825, %v4880
      %v4897 = vsub.f32 %v4826, %v4881
      %v4898 = vsub.f32 %v4827, %v4882
      %v4899 = vsub.f32 %v4828, %v4883
      %v4900 = vsub.f32 %v4829, %v4884
      %v4901 = vsub.f32 %v4830, %v4885
      %v4902 = vsub.f32 %v4831, %v4886
      %v4903 = vsub.f32 %v4832, %v4887
      %v4904 = vsub.f32 %v4833, %v4888
      %v4905 = vsub.f32 %v4834, %v4889
      %v4906 = vsub.f32 %v4835, %v4890
      %v4907 = vsub.f32 %v4836, %v4891
      %v4908 = vsub.f32 %v4837, %v4892
      %v4909 = vmul.f32 %v4893, %v4893
      %v4910 = vmul.f32 %v4894, %v4894
      %v4911 = vmul.f32 %v4895, %v4895
      %v4912 = vmul.f32 %v4896, %v4896
      %v4913 = vmul.f32 %v4897, %v4897
      %v4914 = vmul.f32 %v4898, %v4898
      %v4915 = vmul.f32 %v4899, %v4899
      %v4916 = vmul.f32 %v4900, %v4900
      %v4917 = vmul.f32 %v4901, %v4901
      %v4918 = vmul.f32 %v4902, %v4902
      %v4919 = vmul.f32 %v4903, %v4903
      %v4920 = vmul.f32 %v4904, %v4904
      %v4921 = vmul.f32 %v4905, %v4905
      %v4922 = vmul.f32 %v4906, %v4906
      %v4923 = vmul.f32 %v4907, %v4907
      %v4924 = vmul.f32 %v4908, %v4908
      %4925 = vadd.xlane.f32.xlu0 %v4909
      %v4926 = vpop.xlane.xlu0 %4925
      %4927 = vadd.xlane.f32.xlu0 %v4910
      %v4928 = vpop.xlane.xlu0 %4927
      %4929 = vadd.xlane.f32.xlu0 %v4911
      %v4930 = vpop.xlane.xlu0 %4929
      %4931 = vadd.xlane.f32.xlu0 %v4912
      %v4932 = vpop.xlane.xlu0 %4931
      %4933 = vadd.xlane.f32.xlu0 %v4913
      %v4934 = vpop.xlane.xlu0 %4933
      %4935 = vadd.xlane.f32.xlu0 %v4914
      %v4936 = vpop.xlane.xlu0 %4935
      %4937 = vadd.xlane.f32.xlu0 %v4915
      %v4938 = vpop.xlane.xlu0 %4937
      %4939 = vadd.xlane.f32.xlu0 %v4916
      %v4940 = vpop.xlane.xlu0 %4939
      %4941 = vadd.xlane.f32.xlu0 %v4917
      %v4942 = vpop.xlane.xlu0 %4941
      %4943 = vadd.xlane.f32.xlu0 %v4918
      %v4944 = vpop.xlane.xlu0 %4943
      %4945 = vadd.xlane.f32.xlu0 %v4919
      %v4946 = vpop.xlane.xlu0 %4945
      %4947 = vadd.xlane.f32.xlu0 %v4920
      %v4948 = vpop.xlane.xlu0 %4947
      %4949 = vadd.xlane.f32.xlu0 %v4921
      %v4950 = vpop.xlane.xlu0 %4949
      %4951 = vadd.xlane.f32.xlu0 %v4922
      %v4952 = vpop.xlane.xlu0 %4951
      %4953 = vadd.xlane.f32.xlu0 %v4923
      %v4954 = vpop.xlane.xlu0 %4953
      %4955 = vadd.xlane.f32.xlu0 %v4924
      %v4956 = vpop.xlane.xlu0 %4955
      %v4957 = vmul.f32 %v4926, %v4876
      %v4958 = vmul.f32 %v4928, %v4876
      %v4959 = vmul.f32 %v4930, %v4876
      %v4960 = vmul.f32 %v4932, %v4876
      %v4961 = vmul.f32 %v4934, %v4876
      %v4962 = vmul.f32 %v4936, %v4876
      %v4963 = vmul.f32 %v4938, %v4876
      %v4964 = vmul.f32 %v4940, %v4876
      %v4965 = vmul.f32 %v4942, %v4876
      %v4966 = vmul.f32 %v4944, %v4876
      %v4967 = vmul.f32 %v4946, %v4876
      %v4968 = vmul.f32 %v4948, %v4876
      %v4969 = vmul.f32 %v4950, %v4876
      %v4970 = vmul.f32 %v4952, %v4876
      %v4971 = vmul.f32 %v4954, %v4876
      %v4972 = vmul.f32 %v4956, %v4876
      %v4973 = vadd.f32 %v4957, 1e-05
      %v4974 = vadd.f32 %v4958, 1e-05
      %v4975 = vadd.f32 %v4959, 1e-05
      %v4976 = vadd.f32 %v4960, 1e-05
      %v4977 = vadd.f32 %v4961, 1e-05
      %v4978 = vadd.f32 %v4962, 1e-05
      %v4979 = vadd.f32 %v4963, 1e-05
      %v4980 = vadd.f32 %v4964, 1e-05
      %v4981 = vadd.f32 %v4965, 1e-05
      %v4982 = vadd.f32 %v4966, 1e-05
      %v4983 = vadd.f32 %v4967, 1e-05
      %v4984 = vadd.f32 %v4968, 1e-05
      %v4985 = vadd.f32 %v4969, 1e-05
      %v4986 = vadd.f32 %v4970, 1e-05
      %v4987 = vadd.f32 %v4971, 1e-05
      %v4988 = vadd.f32 %v4972, 1e-05
      %v4989 = vrsqrt.pop %v4973
      %v4990 = vmul.f32 %v4989, %v4973
      %v4991 = vmul.f32 %v4990, %v4989
      %v4992 = vmul.f32 0.5, %v4991
      %v4993 = vsub.f32 1.5, %v4992
      %v4994 = vmul.f32 %v4989, %v4993
      %vm4995 = vweird.f32 %v4973
      %vm4996 = vweird.f32 %v4989
      %vm4997 = vmor %vm4995, %vm4996
      %v4998 = vsel %vm4997, %v4989, %v4994
      %v4999 = vrsqrt.pop %v4974
      %v5000 = vmul.f32 %v4999, %v4974
      %v5001 = vmul.f32 %v5000, %v4999
      %v5002 = vmul.f32 0.5, %v5001
      %v5003 = vsub.f32 1.5, %v5002
      %v5004 = vmul.f32 %v4999, %v5003
      %vm5005 = vweird.f32 %v4974
      %vm5006 = vweird.f32 %v4999
      %vm5007 = vmor %vm5005, %vm5006
      %v5008 = vsel %vm5007, %v4999, %v5004
      %v5009 = vrsqrt.pop %v4975
      %v5010 = vmul.f32 %v5009, %v4975
      %v5011 = vmul.f32 %v5010, %v5009
      %v5012 = vmul.f32 0.5, %v5011
      %v5013 = vsub.f32 1.5, %v5012
      %v5014 = vmul.f32 %v5009, %v5013
      %vm5015 = vweird.f32 %v4975
      %vm5016 = vweird.f32 %v5009
      %vm5017 = vmor %vm5015, %vm5016
      %v5018 = vsel %vm5017, %v5009, %v5014
      %v5019 = vrsqrt.pop %v4976
      %v5020 = vmul.f32 %v5019, %v4976
      %v5021 = vmul.f32 %v5020, %v5019
      %v5022 = vmul.f32 0.5, %v5021
      %v5023 = vsub.f32 1.5, %v5022
      %v5024 = vmul.f32 %v5019, %v5023
      %vm5025 = vweird.f32 %v4976
      %vm5026 = vweird.f32 %v5019
      %vm5027 = vmor %vm5025, %vm5026
      %v5028 = vsel %vm5027, %v5019, %v5024
      %v5029 = vrsqrt.pop %v4977
      %v5030 = vmul.f32 %v5029, %v4977
      %v5031 = vmul.f32 %v5030, %v5029
      %v5032 = vmul.f32 0.5, %v5031
      %v5033 = vsub.f32 1.5, %v5032
      %v5034 = vmul.f32 %v5029, %v5033
      %vm5035 = vweird.f32 %v4977
      %vm5036 = vweird.f32 %v5029
      %vm5037 = vmor %vm5035, %vm5036
      %v5038 = vsel %vm5037, %v5029, %v5034
      %v5039 = vrsqrt.pop %v4978
      %v5040 = vmul.f32 %v5039, %v4978
      %v5041 = vmul.f32 %v5040, %v5039
      %v5042 = vmul.f32 0.5, %v5041
      %v5043 = vsub.f32 1.5, %v5042
      %v5044 = vmul.f32 %v5039, %v5043
      %vm5045 = vweird.f32 %v4978
      %vm5046 = vweird.f32 %v5039
      %vm5047 = vmor %vm5045, %vm5046
      %v5048 = vsel %vm5047, %v5039, %v5044
      %v5049 = vrsqrt.pop %v4979
      %v5050 = vmul.f32 %v5049, %v4979
      %v5051 = vmul.f32 %v5050, %v5049
      %v5052 = vmul.f32 0.5, %v5051
      %v5053 = vsub.f32 1.5, %v5052
      %v5054 = vmul.f32 %v5049, %v5053
      %vm5055 = vweird.f32 %v4979
      %vm5056 = vweird.f32 %v5049
      %vm5057 = vmor %vm5055, %vm5056
      %v5058 = vsel %vm5057, %v5049, %v5054
      %v5059 = vrsqrt.pop %v4980
      %v5060 = vmul.f32 %v5059, %v4980
      %v5061 = vmul.f32 %v5060, %v5059
      %v5062 = vmul.f32 0.5, %v5061
      %v5063 = vsub.f32 1.5, %v5062
      %v5064 = vmul.f32 %v5059, %v5063
      %vm5065 = vweird.f32 %v4980
      %vm5066 = vweird.f32 %v5059
      %vm5067 = vmor %vm5065, %vm5066
      %v5068 = vsel %vm5067, %v5059, %v5064
      %v5069 = vrsqrt.pop %v4981
      %v5070 = vmul.f32 %v5069, %v4981
      %v5071 = vmul.f32 %v5070, %v5069
      %v5072 = vmul.f32 0.5, %v5071
      %v5073 = vsub.f32 1.5, %v5072
      %v5074 = vmul.f32 %v5069, %v5073
      %vm5075 = vweird.f32 %v4981
      %vm5076 = vweird.f32 %v5069
      %vm5077 = vmor %vm5075, %vm5076
      %v5078 = vsel %vm5077, %v5069, %v5074
      %v5079 = vrsqrt.pop %v4982
      %v5080 = vmul.f32 %v5079, %v4982
      %v5081 = vmul.f32 %v5080, %v5079
      %v5082 = vmul.f32 0.5, %v5081
      %v5083 = vsub.f32 1.5, %v5082
      %v5084 = vmul.f32 %v5079, %v5083
      %vm5085 = vweird.f32 %v4982
      %vm5086 = vweird.f32 %v5079
      %vm5087 = vmor %vm5085, %vm5086
      %v5088 = vsel %vm5087, %v5079, %v5084
      %v5089 = vrsqrt.pop %v4983
      %v5090 = vmul.f32 %v5089, %v4983
      %v5091 = vmul.f32 %v5090, %v5089
      %v5092 = vmul.f32 0.5, %v5091
      %v5093 = vsub.f32 1.5, %v5092
      %v5094 = vmul.f32 %v5089, %v5093
      %vm5095 = vweird.f32 %v4983
      %vm5096 = vweird.f32 %v5089
      %vm5097 = vmor %vm5095, %vm5096
      %v5098 = vsel %vm5097, %v5089, %v5094
      %v5099 = vrsqrt.pop %v4984
      %v5100 = vmul.f32 %v5099, %v4984
      %v5101 = vmul.f32 %v5100, %v5099
      %v5102 = vmul.f32 0.5, %v5101
      %v5103 = vsub.f32 1.5, %v5102
      %v5104 = vmul.f32 %v5099, %v5103
      %vm5105 = vweird.f32 %v4984
      %vm5106 = vweird.f32 %v5099
      %vm5107 = vmor %vm5105, %vm5106
      %v5108 = vsel %vm5107, %v5099, %v5104
      %v5109 = vrsqrt.pop %v4985
      %v5110 = vmul.f32 %v5109, %v4985
      %v5111 = vmul.f32 %v5110, %v5109
      %v5112 = vmul.f32 0.5, %v5111
      %v5113 = vsub.f32 1.5, %v5112
      %v5114 = vmul.f32 %v5109, %v5113
      %vm5115 = vweird.f32 %v4985
      %vm5116 = vweird.f32 %v5109
      %vm5117 = vmor %vm5115, %vm5116
      %v5118 = vsel %vm5117, %v5109, %v5114
      %v5119 = vrsqrt.pop %v4986
      %v5120 = vmul.f32 %v5119, %v4986
      %v5121 = vmul.f32 %v5120, %v5119
      %v5122 = vmul.f32 0.5, %v5121
      %v5123 = vsub.f32 1.5, %v5122
      %v5124 = vmul.f32 %v5119, %v5123
      %vm5125 = vweird.f32 %v4986
      %vm5126 = vweird.f32 %v5119
      %vm5127 = vmor %vm5125, %vm5126
      %v5128 = vsel %vm5127, %v5119, %v5124
      %v5129 = vrsqrt.pop %v4987
      %v5130 = vmul.f32 %v5129, %v4987
      %v5131 = vmul.f32 %v5130, %v5129
      %v5132 = vmul.f32 0.5, %v5131
      %v5133 = vsub.f32 1.5, %v5132
      %v5134 = vmul.f32 %v5129, %v5133
      %vm5135 = vweird.f32 %v4987
      %vm5136 = vweird.f32 %v5129
      %vm5137 = vmor %vm5135, %vm5136
      %v5138 = vsel %vm5137, %v5129, %v5134
      %v5139 = vrsqrt.pop %v4988
      %v5140 = vmul.f32 %v5139, %v4988
      %v5141 = vmul.f32 %v5140, %v5139
      %v5142 = vmul.f32 0.5, %v5141
      %v5143 = vsub.f32 1.5, %v5142
      %v5144 = vmul.f32 %v5139, %v5143
      %vm5145 = vweird.f32 %v4988
      %vm5146 = vweird.f32 %v5139
      %vm5147 = vmor %vm5145, %vm5146
      %v5148 = vsel %vm5147, %v5139, %v5144
      %v5149 = vmul.f32 %v4893, %v4998
      %v5150 = vmul.f32 %v4894, %v5008
      %v5151 = vmul.f32 %v4895, %v5018
      %v5152 = vmul.f32 %v4896, %v5028
      %v5153 = vmul.f32 %v4897, %v5038
      %v5154 = vmul.f32 %v4898, %v5048
      %v5155 = vmul.f32 %v4899, %v5058
      %v5156 = vmul.f32 %v4900, %v5068
      %v5157 = vmul.f32 %v4901, %v5078
      %v5158 = vmul.f32 %v4902, %v5088
      %v5159 = vmul.f32 %v4903, %v5098
      %v5160 = vmul.f32 %v4904, %v5108
      %v5161 = vmul.f32 %v4905, %v5118
      %v5162 = vmul.f32 %v4906, %v5128
      %v5163 = vmul.f32 %v4907, %v5138
      %v5164 = vmul.f32 %v4908, %v5148
      %v5165 = vperm.slane %v328, 1
      %v5166 = vmul.f32 %v5149, %v5165
      %v5167 = vmul.f32 %v5150, %v5165
      %v5168 = vmul.f32 %v5151, %v5165
      %v5169 = vmul.f32 %v5152, %v5165
      %v5170 = vmul.f32 %v5153, %v5165
      %v5171 = vmul.f32 %v5154, %v5165
      %v5172 = vmul.f32 %v5155, %v5165
      %v5173 = vmul.f32 %v5156, %v5165
      %v5174 = vmul.f32 %v5157, %v5165
      %v5175 = vmul.f32 %v5158, %v5165
      %v5176 = vmul.f32 %v5159, %v5165
      %v5177 = vmul.f32 %v5160, %v5165
      %v5178 = vmul.f32 %v5161, %v5165
      %v5179 = vmul.f32 %v5162, %v5165
      %v5180 = vmul.f32 %v5163, %v5165
      %v5181 = vmul.f32 %v5164, %v5165
      %v5182 = vperm.slane %v328, 2
      %v5183 = vadd.f32 %v5166, %v5182
      %v5184 = vadd.f32 %v5167, %v5182
      %v5185 = vadd.f32 %v5168, %v5182
      %v5186 = vadd.f32 %v5169, %v5182
      %v5187 = vadd.f32 %v5170, %v5182
      %v5188 = vadd.f32 %v5171, %v5182
      %v5189 = vadd.f32 %v5172, %v5182
      %v5190 = vadd.f32 %v5173, %v5182
      %v5191 = vadd.f32 %v5174, %v5182
      %v5192 = vadd.f32 %v5175, %v5182
      %v5193 = vadd.f32 %v5176, %v5182
      %v5194 = vadd.f32 %v5177, %v5182
      %v5195 = vadd.f32 %v5178, %v5182
      %v5196 = vadd.f32 %v5179, %v5182
      %v5197 = vadd.f32 %v5180, %v5182
      %v5198 = vadd.f32 %v5181, %v5182
      %v5199 = vadd.f32 %v5183, %v3618
      %v5200 = vadd.f32 %v5184, %v3620
      %v5201 = vadd.f32 %v5185, %v3623
      %v5202 = vadd.f32 %v5186, %v3625
      %v5203 = vadd.f32 %v5187, %v3628
      %v5204 = vadd.f32 %v5188, %v3630
      %v5205 = vadd.f32 %v5189, %v3633
      %v5206 = vadd.f32 %v5190, %v3635
      %v5207 = vadd.f32 %v5191, %v3638
      %v5208 = vadd.f32 %v5192, %v3640
      %v5209 = vadd.f32 %v5193, %v3643
      %v5210 = vadd.f32 %v5194, %v3645
      %v5211 = vadd.f32 %v5195, %v3648
      %v5212 = vadd.f32 %v5196, %v3650
      %v5213 = vadd.f32 %v5197, %v3653
      %v5214 = vadd.f32 %v5198, %v3655
      %5215 = vadd.xlane.f32.xlu0 %v5199
      %v5216 = vpop.xlane.xlu0 %5215
      %5217 = vadd.xlane.f32.xlu0 %v5200
      %v5218 = vpop.xlane.xlu0 %5217
      %5219 = vadd.xlane.f32.xlu0 %v5201
      %v5220 = vpop.xlane.xlu0 %5219
      %5221 = vadd.xlane.f32.xlu0 %v5202
      %v5222 = vpop.xlane.xlu0 %5221
      %5223 = vadd.xlane.f32.xlu0 %v5203
      %v5224 = vpop.xlane.xlu0 %5223
      %5225 = vadd.xlane.f32.xlu0 %v5204
      %v5226 = vpop.xlane.xlu0 %5225
      %5227 = vadd.xlane.f32.xlu0 %v5205
      %v5228 = vpop.xlane.xlu0 %5227
      %5229 = vadd.xlane.f32.xlu0 %v5206
      %v5230 = vpop.xlane.xlu0 %5229
      %5231 = vadd.xlane.f32.xlu0 %v5207
      %v5232 = vpop.xlane.xlu0 %5231
      %5233 = vadd.xlane.f32.xlu0 %v5208
      %v5234 = vpop.xlane.xlu0 %5233
      %5235 = vadd.xlane.f32.xlu0 %v5209
      %v5236 = vpop.xlane.xlu0 %5235
      %5237 = vadd.xlane.f32.xlu0 %v5210
      %v5238 = vpop.xlane.xlu0 %5237
      %5239 = vadd.xlane.f32.xlu0 %v5211
      %v5240 = vpop.xlane.xlu0 %5239
      %5241 = vadd.xlane.f32.xlu0 %v5212
      %v5242 = vpop.xlane.xlu0 %5241
      %5243 = vadd.xlane.f32.xlu0 %v5213
      %v5244 = vpop.xlane.xlu0 %5243
      %5245 = vadd.xlane.f32.xlu0 %v5214
      %v5246 = vpop.xlane.xlu0 %5245
      %v5247 = vmul.f32 %v5216, %v4876
      %v5248 = vmul.f32 %v5218, %v4876
      %v5249 = vmul.f32 %v5220, %v4876
      %v5250 = vmul.f32 %v5222, %v4876
      %v5251 = vmul.f32 %v5224, %v4876
      %v5252 = vmul.f32 %v5226, %v4876
      %v5253 = vmul.f32 %v5228, %v4876
      %v5254 = vmul.f32 %v5230, %v4876
      %v5255 = vmul.f32 %v5232, %v4876
      %v5256 = vmul.f32 %v5234, %v4876
      %v5257 = vmul.f32 %v5236, %v4876
      %v5258 = vmul.f32 %v5238, %v4876
      %v5259 = vmul.f32 %v5240, %v4876
      %v5260 = vmul.f32 %v5242, %v4876
      %v5261 = vmul.f32 %v5244, %v4876
      %v5262 = vmul.f32 %v5246, %v4876
      %v5263 = vsub.f32 %v5199, %v5247
      %v5264 = vsub.f32 %v5200, %v5248
      %v5265 = vsub.f32 %v5201, %v5249
      %v5266 = vsub.f32 %v5202, %v5250
      %v5267 = vsub.f32 %v5203, %v5251
      %v5268 = vsub.f32 %v5204, %v5252
      %v5269 = vsub.f32 %v5205, %v5253
      %v5270 = vsub.f32 %v5206, %v5254
      %v5271 = vsub.f32 %v5207, %v5255
      %v5272 = vsub.f32 %v5208, %v5256
      %v5273 = vsub.f32 %v5209, %v5257
      %v5274 = vsub.f32 %v5210, %v5258
      %v5275 = vsub.f32 %v5211, %v5259
      %v5276 = vsub.f32 %v5212, %v5260
      %v5277 = vsub.f32 %v5213, %v5261
      %v5278 = vsub.f32 %v5214, %v5262
      %v5279 = vmul.f32 %v5263, %v5263
      %v5280 = vmul.f32 %v5264, %v5264
      %v5281 = vmul.f32 %v5265, %v5265
      %v5282 = vmul.f32 %v5266, %v5266
      %v5283 = vmul.f32 %v5267, %v5267
      %v5284 = vmul.f32 %v5268, %v5268
      %v5285 = vmul.f32 %v5269, %v5269
      %v5286 = vmul.f32 %v5270, %v5270
      %v5287 = vmul.f32 %v5271, %v5271
      %v5288 = vmul.f32 %v5272, %v5272
      %v5289 = vmul.f32 %v5273, %v5273
      %v5290 = vmul.f32 %v5274, %v5274
      %v5291 = vmul.f32 %v5275, %v5275
      %v5292 = vmul.f32 %v5276, %v5276
      %v5293 = vmul.f32 %v5277, %v5277
      %v5294 = vmul.f32 %v5278, %v5278
      %5295 = vadd.xlane.f32.xlu0 %v5279
      %v5296 = vpop.xlane.xlu0 %5295
      %5297 = vadd.xlane.f32.xlu0 %v5280
      %v5298 = vpop.xlane.xlu0 %5297
      %5299 = vadd.xlane.f32.xlu0 %v5281
      %v5300 = vpop.xlane.xlu0 %5299
      %5301 = vadd.xlane.f32.xlu0 %v5282
      %v5302 = vpop.xlane.xlu0 %5301
      %5303 = vadd.xlane.f32.xlu0 %v5283
      %v5304 = vpop.xlane.xlu0 %5303
      %5305 = vadd.xlane.f32.xlu0 %v5284
      %v5306 = vpop.xlane.xlu0 %5305
      %5307 = vadd.xlane.f32.xlu0 %v5285
      %v5308 = vpop.xlane.xlu0 %5307
      %5309 = vadd.xlane.f32.xlu0 %v5286
      %v5310 = vpop.xlane.xlu0 %5309
      %5311 = vadd.xlane.f32.xlu0 %v5287
      %v5312 = vpop.xlane.xlu0 %5311
      %5313 = vadd.xlane.f32.xlu0 %v5288
      %v5314 = vpop.xlane.xlu0 %5313
      %5315 = vadd.xlane.f32.xlu0 %v5289
      %v5316 = vpop.xlane.xlu0 %5315
      %5317 = vadd.xlane.f32.xlu0 %v5290
      %v5318 = vpop.xlane.xlu0 %5317
      %5319 = vadd.xlane.f32.xlu0 %v5291
      %v5320 = vpop.xlane.xlu0 %5319
      %5321 = vadd.xlane.f32.xlu0 %v5292
      %v5322 = vpop.xlane.xlu0 %5321
      %5323 = vadd.xlane.f32.xlu0 %v5293
      %v5324 = vpop.xlane.xlu0 %5323
      %5325 = vadd.xlane.f32.xlu0 %v5294
      %v5326 = vpop.xlane.xlu0 %5325
      %v5327 = vmul.f32 %v5296, %v4876
      %v5328 = vmul.f32 %v5298, %v4876
      %v5329 = vmul.f32 %v5300, %v4876
      %v5330 = vmul.f32 %v5302, %v4876
      %v5331 = vmul.f32 %v5304, %v4876
      %v5332 = vmul.f32 %v5306, %v4876
      %v5333 = vmul.f32 %v5308, %v4876
      %v5334 = vmul.f32 %v5310, %v4876
      %v5335 = vmul.f32 %v5312, %v4876
      %v5336 = vmul.f32 %v5314, %v4876
      %v5337 = vmul.f32 %v5316, %v4876
      %v5338 = vmul.f32 %v5318, %v4876
      %v5339 = vmul.f32 %v5320, %v4876
      %v5340 = vmul.f32 %v5322, %v4876
      %v5341 = vmul.f32 %v5324, %v4876
      %v5342 = vmul.f32 %v5326, %v4876
      %v5343 = vadd.f32 %v5327, 1e-05
      %v5344 = vadd.f32 %v5328, 1e-05
      %v5345 = vadd.f32 %v5329, 1e-05
      %v5346 = vadd.f32 %v5330, 1e-05
      %v5347 = vadd.f32 %v5331, 1e-05
      %v5348 = vadd.f32 %v5332, 1e-05
      %v5349 = vadd.f32 %v5333, 1e-05
      %v5350 = vadd.f32 %v5334, 1e-05
      %v5351 = vadd.f32 %v5335, 1e-05
      %v5352 = vadd.f32 %v5336, 1e-05
      %v5353 = vadd.f32 %v5337, 1e-05
      %v5354 = vadd.f32 %v5338, 1e-05
      %v5355 = vadd.f32 %v5339, 1e-05
      %v5356 = vadd.f32 %v5340, 1e-05
      %v5357 = vadd.f32 %v5341, 1e-05
      %v5358 = vadd.f32 %v5342, 1e-05
      %v5359 = vrsqrt.pop %v5343
      %v5360 = vmul.f32 %v5359, %v5343
      %v5361 = vmul.f32 %v5360, %v5359
      %v5362 = vmul.f32 0.5, %v5361
      %v5363 = vsub.f32 1.5, %v5362
      %v5364 = vmul.f32 %v5359, %v5363
      %vm5365 = vweird.f32 %v5343
      %vm5366 = vweird.f32 %v5359
      %vm5367 = vmor %vm5365, %vm5366
      %v5368 = vsel %vm5367, %v5359, %v5364
      %v5369 = vrsqrt.pop %v5344
      %v5370 = vmul.f32 %v5369, %v5344
      %v5371 = vmul.f32 %v5370, %v5369
      %v5372 = vmul.f32 0.5, %v5371
      %v5373 = vsub.f32 1.5, %v5372
      %v5374 = vmul.f32 %v5369, %v5373
      %vm5375 = vweird.f32 %v5344
      %vm5376 = vweird.f32 %v5369
      %vm5377 = vmor %vm5375, %vm5376
      %v5378 = vsel %vm5377, %v5369, %v5374
      %v5379 = vrsqrt.pop %v5345
      %v5380 = vmul.f32 %v5379, %v5345
      %v5381 = vmul.f32 %v5380, %v5379
      %v5382 = vmul.f32 0.5, %v5381
      %v5383 = vsub.f32 1.5, %v5382
      %v5384 = vmul.f32 %v5379, %v5383
      %vm5385 = vweird.f32 %v5345
      %vm5386 = vweird.f32 %v5379
      %vm5387 = vmor %vm5385, %vm5386
      %v5388 = vsel %vm5387, %v5379, %v5384
      %v5389 = vrsqrt.pop %v5346
      %v5390 = vmul.f32 %v5389, %v5346
      %v5391 = vmul.f32 %v5390, %v5389
      %v5392 = vmul.f32 0.5, %v5391
      %v5393 = vsub.f32 1.5, %v5392
      %v5394 = vmul.f32 %v5389, %v5393
      %vm5395 = vweird.f32 %v5346
      %vm5396 = vweird.f32 %v5389
      %vm5397 = vmor %vm5395, %vm5396
      %v5398 = vsel %vm5397, %v5389, %v5394
      %v5399 = vrsqrt.pop %v5347
      %v5400 = vmul.f32 %v5399, %v5347
      %v5401 = vmul.f32 %v5400, %v5399
      %v5402 = vmul.f32 0.5, %v5401
      %v5403 = vsub.f32 1.5, %v5402
      %v5404 = vmul.f32 %v5399, %v5403
      %vm5405 = vweird.f32 %v5347
      %vm5406 = vweird.f32 %v5399
      %vm5407 = vmor %vm5405, %vm5406
      %v5408 = vsel %vm5407, %v5399, %v5404
      %v5409 = vrsqrt.pop %v5348
      %v5410 = vmul.f32 %v5409, %v5348
      %v5411 = vmul.f32 %v5410, %v5409
      %v5412 = vmul.f32 0.5, %v5411
      %v5413 = vsub.f32 1.5, %v5412
      %v5414 = vmul.f32 %v5409, %v5413
      %vm5415 = vweird.f32 %v5348
      %vm5416 = vweird.f32 %v5409
      %vm5417 = vmor %vm5415, %vm5416
      %v5418 = vsel %vm5417, %v5409, %v5414
      %v5419 = vrsqrt.pop %v5349
      %v5420 = vmul.f32 %v5419, %v5349
      %v5421 = vmul.f32 %v5420, %v5419
      %v5422 = vmul.f32 0.5, %v5421
      %v5423 = vsub.f32 1.5, %v5422
      %v5424 = vmul.f32 %v5419, %v5423
      %vm5425 = vweird.f32 %v5349
      %vm5426 = vweird.f32 %v5419
      %vm5427 = vmor %vm5425, %vm5426
      %v5428 = vsel %vm5427, %v5419, %v5424
      %v5429 = vrsqrt.pop %v5350
      %v5430 = vmul.f32 %v5429, %v5350
      %v5431 = vmul.f32 %v5430, %v5429
      %v5432 = vmul.f32 0.5, %v5431
      %v5433 = vsub.f32 1.5, %v5432
      %v5434 = vmul.f32 %v5429, %v5433
      %vm5435 = vweird.f32 %v5350
      %vm5436 = vweird.f32 %v5429
      %vm5437 = vmor %vm5435, %vm5436
      %v5438 = vsel %vm5437, %v5429, %v5434
      %v5439 = vrsqrt.pop %v5351
      %v5440 = vmul.f32 %v5439, %v5351
      %v5441 = vmul.f32 %v5440, %v5439
      %v5442 = vmul.f32 0.5, %v5441
      %v5443 = vsub.f32 1.5, %v5442
      %v5444 = vmul.f32 %v5439, %v5443
      %vm5445 = vweird.f32 %v5351
      %vm5446 = vweird.f32 %v5439
      %vm5447 = vmor %vm5445, %vm5446
      %v5448 = vsel %vm5447, %v5439, %v5444
      %v5449 = vrsqrt.pop %v5352
      %v5450 = vmul.f32 %v5449, %v5352
      %v5451 = vmul.f32 %v5450, %v5449
      %v5452 = vmul.f32 0.5, %v5451
      %v5453 = vsub.f32 1.5, %v5452
      %v5454 = vmul.f32 %v5449, %v5453
      %vm5455 = vweird.f32 %v5352
      %vm5456 = vweird.f32 %v5449
      %vm5457 = vmor %vm5455, %vm5456
      %v5458 = vsel %vm5457, %v5449, %v5454
      %v5459 = vrsqrt.pop %v5353
      %v5460 = vmul.f32 %v5459, %v5353
      %v5461 = vmul.f32 %v5460, %v5459
      %v5462 = vmul.f32 0.5, %v5461
      %v5463 = vsub.f32 1.5, %v5462
      %v5464 = vmul.f32 %v5459, %v5463
      %vm5465 = vweird.f32 %v5353
      %vm5466 = vweird.f32 %v5459
      %vm5467 = vmor %vm5465, %vm5466
      %v5468 = vsel %vm5467, %v5459, %v5464
      %v5469 = vrsqrt.pop %v5354
      %v5470 = vmul.f32 %v5469, %v5354
      %v5471 = vmul.f32 %v5470, %v5469
      %v5472 = vmul.f32 0.5, %v5471
      %v5473 = vsub.f32 1.5, %v5472
      %v5474 = vmul.f32 %v5469, %v5473
      %vm5475 = vweird.f32 %v5354
      %vm5476 = vweird.f32 %v5469
      %vm5477 = vmor %vm5475, %vm5476
      %v5478 = vsel %vm5477, %v5469, %v5474
      %v5479 = vrsqrt.pop %v5355
      %v5480 = vmul.f32 %v5479, %v5355
      %v5481 = vmul.f32 %v5480, %v5479
      %v5482 = vmul.f32 0.5, %v5481
      %v5483 = vsub.f32 1.5, %v5482
      %v5484 = vmul.f32 %v5479, %v5483
      %vm5485 = vweird.f32 %v5355
      %vm5486 = vweird.f32 %v5479
      %vm5487 = vmor %vm5485, %vm5486
      %v5488 = vsel %vm5487, %v5479, %v5484
      %v5489 = vrsqrt.pop %v5356
      %v5490 = vmul.f32 %v5489, %v5356
      %v5491 = vmul.f32 %v5490, %v5489
      %v5492 = vmul.f32 0.5, %v5491
      %v5493 = vsub.f32 1.5, %v5492
      %v5494 = vmul.f32 %v5489, %v5493
      %vm5495 = vweird.f32 %v5356
      %vm5496 = vweird.f32 %v5489
      %vm5497 = vmor %vm5495, %vm5496
      %v5498 = vsel %vm5497, %v5489, %v5494
      %v5499 = vrsqrt.pop %v5357
      %v5500 = vmul.f32 %v5499, %v5357
      %v5501 = vmul.f32 %v5500, %v5499
      %v5502 = vmul.f32 0.5, %v5501
      %v5503 = vsub.f32 1.5, %v5502
      %v5504 = vmul.f32 %v5499, %v5503
      %vm5505 = vweird.f32 %v5357
      %vm5506 = vweird.f32 %v5499
      %vm5507 = vmor %vm5505, %vm5506
      %v5508 = vsel %vm5507, %v5499, %v5504
      %v5509 = vrsqrt.pop %v5358
      %v5510 = vmul.f32 %v5509, %v5358
      %v5511 = vmul.f32 %v5510, %v5509
      %v5512 = vmul.f32 0.5, %v5511
      %v5513 = vsub.f32 1.5, %v5512
      %v5514 = vmul.f32 %v5509, %v5513
      %vm5515 = vweird.f32 %v5358
      %vm5516 = vweird.f32 %v5509
      %vm5517 = vmor %vm5515, %vm5516
      %v5518 = vsel %vm5517, %v5509, %v5514
      %v5519 = vmul.f32 %v5263, %v5368
      %v5520 = vmul.f32 %v5264, %v5378
      %v5521 = vmul.f32 %v5265, %v5388
      %v5522 = vmul.f32 %v5266, %v5398
      %v5523 = vmul.f32 %v5267, %v5408
      %v5524 = vmul.f32 %v5268, %v5418
      %v5525 = vmul.f32 %v5269, %v5428
      %v5526 = vmul.f32 %v5270, %v5438
      %v5527 = vmul.f32 %v5271, %v5448
      %v5528 = vmul.f32 %v5272, %v5458
      %v5529 = vmul.f32 %v5273, %v5468
      %v5530 = vmul.f32 %v5274, %v5478
      %v5531 = vmul.f32 %v5275, %v5488
      %v5532 = vmul.f32 %v5276, %v5498
      %v5533 = vmul.f32 %v5277, %v5508
      %v5534 = vmul.f32 %v5278, %v5518
      %v5535 = vperm.slane %v328, 3
      %v5536 = vmul.f32 %v5519, %v5535
      %v5537 = vmul.f32 %v5520, %v5535
      %v5538 = vmul.f32 %v5521, %v5535
      %v5539 = vmul.f32 %v5522, %v5535
      %v5540 = vmul.f32 %v5523, %v5535
      %v5541 = vmul.f32 %v5524, %v5535
      %v5542 = vmul.f32 %v5525, %v5535
      %v5543 = vmul.f32 %v5526, %v5535
      %v5544 = vmul.f32 %v5527, %v5535
      %v5545 = vmul.f32 %v5528, %v5535
      %v5546 = vmul.f32 %v5529, %v5535
      %v5547 = vmul.f32 %v5530, %v5535
      %v5548 = vmul.f32 %v5531, %v5535
      %v5549 = vmul.f32 %v5532, %v5535
      %v5550 = vmul.f32 %v5533, %v5535
      %v5551 = vmul.f32 %v5534, %v5535
      %v5552 = vperm.slane %v328, 4
      %v5553 = vadd.f32 %v5536, %v5552
      %v5554 = vadd.f32 %v5537, %v5552
      %v5555 = vadd.f32 %v5538, %v5552
      %v5556 = vadd.f32 %v5539, %v5552
      %v5557 = vadd.f32 %v5540, %v5552
      %v5558 = vadd.f32 %v5541, %v5552
      %v5559 = vadd.f32 %v5542, %v5552
      %v5560 = vadd.f32 %v5543, %v5552
      %v5561 = vadd.f32 %v5544, %v5552
      %v5562 = vadd.f32 %v5545, %v5552
      %v5563 = vadd.f32 %v5546, %v5552
      %v5564 = vadd.f32 %v5547, %v5552
      %v5565 = vadd.f32 %v5548, %v5552
      %v5566 = vadd.f32 %v5549, %v5552
      %v5567 = vadd.f32 %v5550, %v5552
      %v5568 = vadd.f32 %v5551, %v5552
      %v5569 = vadd.f32 %v5553, %v3618
      %v5570 = vadd.f32 %v5554, %v3620
      %v5571 = vadd.f32 %v5555, %v3623
      %v5572 = vadd.f32 %v5556, %v3625
      %v5573 = vadd.f32 %v5557, %v3628
      %v5574 = vadd.f32 %v5558, %v3630
      %v5575 = vadd.f32 %v5559, %v3633
      %v5576 = vadd.f32 %v5560, %v3635
      %v5577 = vadd.f32 %v5561, %v3638
      %v5578 = vadd.f32 %v5562, %v3640
      %v5579 = vadd.f32 %v5563, %v3643
      %v5580 = vadd.f32 %v5564, %v3645
      %v5581 = vadd.f32 %v5565, %v3648
      %v5582 = vadd.f32 %v5566, %v3650
      %v5583 = vadd.f32 %v5567, %v3653
      %v5584 = vadd.f32 %v5568, %v3655
      %5585 = vadd.xlane.f32.xlu0 %v5569
      %v5586 = vpop.xlane.xlu0 %5585
      %5587 = vadd.xlane.f32.xlu0 %v5570
      %v5588 = vpop.xlane.xlu0 %5587
      %5589 = vadd.xlane.f32.xlu0 %v5571
      %v5590 = vpop.xlane.xlu0 %5589
      %5591 = vadd.xlane.f32.xlu0 %v5572
      %v5592 = vpop.xlane.xlu0 %5591
      %5593 = vadd.xlane.f32.xlu0 %v5573
      %v5594 = vpop.xlane.xlu0 %5593
      %5595 = vadd.xlane.f32.xlu0 %v5574
      %v5596 = vpop.xlane.xlu0 %5595
      %5597 = vadd.xlane.f32.xlu0 %v5575
      %v5598 = vpop.xlane.xlu0 %5597
      %5599 = vadd.xlane.f32.xlu0 %v5576
      %v5600 = vpop.xlane.xlu0 %5599
      %5601 = vadd.xlane.f32.xlu0 %v5577
      %v5602 = vpop.xlane.xlu0 %5601
      %5603 = vadd.xlane.f32.xlu0 %v5578
      %v5604 = vpop.xlane.xlu0 %5603
      %5605 = vadd.xlane.f32.xlu0 %v5579
      %v5606 = vpop.xlane.xlu0 %5605
      %5607 = vadd.xlane.f32.xlu0 %v5580
      %v5608 = vpop.xlane.xlu0 %5607
      %5609 = vadd.xlane.f32.xlu0 %v5581
      %v5610 = vpop.xlane.xlu0 %5609
      %5611 = vadd.xlane.f32.xlu0 %v5582
      %v5612 = vpop.xlane.xlu0 %5611
      %5613 = vadd.xlane.f32.xlu0 %v5583
      %v5614 = vpop.xlane.xlu0 %5613
      %5615 = vadd.xlane.f32.xlu0 %v5584
      %v5616 = vpop.xlane.xlu0 %5615
      %v5617 = vmul.f32 %v5586, %v4876
      %v5618 = vmul.f32 %v5588, %v4876
      %v5619 = vmul.f32 %v5590, %v4876
      %v5620 = vmul.f32 %v5592, %v4876
      %v5621 = vmul.f32 %v5594, %v4876
      %v5622 = vmul.f32 %v5596, %v4876
      %v5623 = vmul.f32 %v5598, %v4876
      %v5624 = vmul.f32 %v5600, %v4876
      %v5625 = vmul.f32 %v5602, %v4876
      %v5626 = vmul.f32 %v5604, %v4876
      %v5627 = vmul.f32 %v5606, %v4876
      %v5628 = vmul.f32 %v5608, %v4876
      %v5629 = vmul.f32 %v5610, %v4876
      %v5630 = vmul.f32 %v5612, %v4876
      %v5631 = vmul.f32 %v5614, %v4876
      %v5632 = vmul.f32 %v5616, %v4876
      %v5633 = vsub.f32 %v5569, %v5617
      %v5634 = vsub.f32 %v5570, %v5618
      %v5635 = vsub.f32 %v5571, %v5619
      %v5636 = vsub.f32 %v5572, %v5620
      %v5637 = vsub.f32 %v5573, %v5621
      %v5638 = vsub.f32 %v5574, %v5622
      %v5639 = vsub.f32 %v5575, %v5623
      %v5640 = vsub.f32 %v5576, %v5624
      %v5641 = vsub.f32 %v5577, %v5625
      %v5642 = vsub.f32 %v5578, %v5626
      %v5643 = vsub.f32 %v5579, %v5627
      %v5644 = vsub.f32 %v5580, %v5628
      %v5645 = vsub.f32 %v5581, %v5629
      %v5646 = vsub.f32 %v5582, %v5630
      %v5647 = vsub.f32 %v5583, %v5631
      %v5648 = vsub.f32 %v5584, %v5632
      %v5649 = vmul.f32 %v5633, %v5633
      %v5650 = vmul.f32 %v5634, %v5634
      %v5651 = vmul.f32 %v5635, %v5635
      %v5652 = vmul.f32 %v5636, %v5636
      %v5653 = vmul.f32 %v5637, %v5637
      %v5654 = vmul.f32 %v5638, %v5638
      %v5655 = vmul.f32 %v5639, %v5639
      %v5656 = vmul.f32 %v5640, %v5640
      %v5657 = vmul.f32 %v5641, %v5641
      %v5658 = vmul.f32 %v5642, %v5642
      %v5659 = vmul.f32 %v5643, %v5643
      %v5660 = vmul.f32 %v5644, %v5644
      %v5661 = vmul.f32 %v5645, %v5645
      %v5662 = vmul.f32 %v5646, %v5646
      %v5663 = vmul.f32 %v5647, %v5647
      %v5664 = vmul.f32 %v5648, %v5648
      %5665 = vadd.xlane.f32.xlu0 %v5649
      %v5666 = vpop.xlane.xlu0 %5665
      %5667 = vadd.xlane.f32.xlu0 %v5650
      %v5668 = vpop.xlane.xlu0 %5667
      %5669 = vadd.xlane.f32.xlu0 %v5651
      %v5670 = vpop.xlane.xlu0 %5669
      %5671 = vadd.xlane.f32.xlu0 %v5652
      %v5672 = vpop.xlane.xlu0 %5671
      %5673 = vadd.xlane.f32.xlu0 %v5653
      %v5674 = vpop.xlane.xlu0 %5673
      %5675 = vadd.xlane.f32.xlu0 %v5654
      %v5676 = vpop.xlane.xlu0 %5675
      %5677 = vadd.xlane.f32.xlu0 %v5655
      %v5678 = vpop.xlane.xlu0 %5677
      %5679 = vadd.xlane.f32.xlu0 %v5656
      %v5680 = vpop.xlane.xlu0 %5679
      %5681 = vadd.xlane.f32.xlu0 %v5657
      %v5682 = vpop.xlane.xlu0 %5681
      %5683 = vadd.xlane.f32.xlu0 %v5658
      %v5684 = vpop.xlane.xlu0 %5683
      %5685 = vadd.xlane.f32.xlu0 %v5659
      %v5686 = vpop.xlane.xlu0 %5685
      %5687 = vadd.xlane.f32.xlu0 %v5660
      %v5688 = vpop.xlane.xlu0 %5687
      %5689 = vadd.xlane.f32.xlu0 %v5661
      %v5690 = vpop.xlane.xlu0 %5689
      %5691 = vadd.xlane.f32.xlu0 %v5662
      %v5692 = vpop.xlane.xlu0 %5691
      %5693 = vadd.xlane.f32.xlu0 %v5663
      %v5694 = vpop.xlane.xlu0 %5693
      %5695 = vadd.xlane.f32.xlu0 %v5664
      %v5696 = vpop.xlane.xlu0 %5695
      %v5697 = vmul.f32 %v5666, %v4876
      %v5698 = vmul.f32 %v5668, %v4876
      %v5699 = vmul.f32 %v5670, %v4876
      %v5700 = vmul.f32 %v5672, %v4876
      %v5701 = vmul.f32 %v5674, %v4876
      %v5702 = vmul.f32 %v5676, %v4876
      %v5703 = vmul.f32 %v5678, %v4876
      %v5704 = vmul.f32 %v5680, %v4876
      %v5705 = vmul.f32 %v5682, %v4876
      %v5706 = vmul.f32 %v5684, %v4876
      %v5707 = vmul.f32 %v5686, %v4876
      %v5708 = vmul.f32 %v5688, %v4876
      %v5709 = vmul.f32 %v5690, %v4876
      %v5710 = vmul.f32 %v5692, %v4876
      %v5711 = vmul.f32 %v5694, %v4876
      %v5712 = vmul.f32 %v5696, %v4876
      %v5713 = vadd.f32 %v5697, 1e-05
      %v5714 = vadd.f32 %v5698, 1e-05
      %v5715 = vadd.f32 %v5699, 1e-05
      %v5716 = vadd.f32 %v5700, 1e-05
      %v5717 = vadd.f32 %v5701, 1e-05
      %v5718 = vadd.f32 %v5702, 1e-05
      %v5719 = vadd.f32 %v5703, 1e-05
      %v5720 = vadd.f32 %v5704, 1e-05
      %v5721 = vadd.f32 %v5705, 1e-05
      %v5722 = vadd.f32 %v5706, 1e-05
      %v5723 = vadd.f32 %v5707, 1e-05
      %v5724 = vadd.f32 %v5708, 1e-05
      %v5725 = vadd.f32 %v5709, 1e-05
      %v5726 = vadd.f32 %v5710, 1e-05
      %v5727 = vadd.f32 %v5711, 1e-05
      %v5728 = vadd.f32 %v5712, 1e-05
      %v5729 = vrsqrt.pop %v5713
      %v5730 = vmul.f32 %v5729, %v5713
      %v5731 = vmul.f32 %v5730, %v5729
      %v5732 = vmul.f32 0.5, %v5731
      %v5733 = vsub.f32 1.5, %v5732
      %v5734 = vmul.f32 %v5729, %v5733
      %vm5735 = vweird.f32 %v5713
      %vm5736 = vweird.f32 %v5729
      %vm5737 = vmor %vm5735, %vm5736
      %v5738 = vsel %vm5737, %v5729, %v5734
      %v5739 = vrsqrt.pop %v5714
      %v5740 = vmul.f32 %v5739, %v5714
      %v5741 = vmul.f32 %v5740, %v5739
      %v5742 = vmul.f32 0.5, %v5741
      %v5743 = vsub.f32 1.5, %v5742
      %v5744 = vmul.f32 %v5739, %v5743
      %vm5745 = vweird.f32 %v5714
      %vm5746 = vweird.f32 %v5739
      %vm5747 = vmor %vm5745, %vm5746
      %v5748 = vsel %vm5747, %v5739, %v5744
      %v5749 = vrsqrt.pop %v5715
      %v5750 = vmul.f32 %v5749, %v5715
      %v5751 = vmul.f32 %v5750, %v5749
      %v5752 = vmul.f32 0.5, %v5751
      %v5753 = vsub.f32 1.5, %v5752
      %v5754 = vmul.f32 %v5749, %v5753
      %vm5755 = vweird.f32 %v5715
      %vm5756 = vweird.f32 %v5749
      %vm5757 = vmor %vm5755, %vm5756
      %v5758 = vsel %vm5757, %v5749, %v5754
      %v5759 = vrsqrt.pop %v5716
      %v5760 = vmul.f32 %v5759, %v5716
      %v5761 = vmul.f32 %v5760, %v5759
      %v5762 = vmul.f32 0.5, %v5761
      %v5763 = vsub.f32 1.5, %v5762
      %v5764 = vmul.f32 %v5759, %v5763
      %vm5765 = vweird.f32 %v5716
      %vm5766 = vweird.f32 %v5759
      %vm5767 = vmor %vm5765, %vm5766
      %v5768 = vsel %vm5767, %v5759, %v5764
      %v5769 = vrsqrt.pop %v5717
      %v5770 = vmul.f32 %v5769, %v5717
      %v5771 = vmul.f32 %v5770, %v5769
      %v5772 = vmul.f32 0.5, %v5771
      %v5773 = vsub.f32 1.5, %v5772
      %v5774 = vmul.f32 %v5769, %v5773
      %vm5775 = vweird.f32 %v5717
      %vm5776 = vweird.f32 %v5769
      %vm5777 = vmor %vm5775, %vm5776
      %v5778 = vsel %vm5777, %v5769, %v5774
      %v5779 = vrsqrt.pop %v5718
      %v5780 = vmul.f32 %v5779, %v5718
      %v5781 = vmul.f32 %v5780, %v5779
      %v5782 = vmul.f32 0.5, %v5781
      %v5783 = vsub.f32 1.5, %v5782
      %v5784 = vmul.f32 %v5779, %v5783
      %vm5785 = vweird.f32 %v5718
      %vm5786 = vweird.f32 %v5779
      %vm5787 = vmor %vm5785, %vm5786
      %v5788 = vsel %vm5787, %v5779, %v5784
      %v5789 = vrsqrt.pop %v5719
      %v5790 = vmul.f32 %v5789, %v5719
      %v5791 = vmul.f32 %v5790, %v5789
      %v5792 = vmul.f32 0.5, %v5791
      %v5793 = vsub.f32 1.5, %v5792
      %v5794 = vmul.f32 %v5789, %v5793
      %vm5795 = vweird.f32 %v5719
      %vm5796 = vweird.f32 %v5789
      %vm5797 = vmor %vm5795, %vm5796
      %v5798 = vsel %vm5797, %v5789, %v5794
      %v5799 = vrsqrt.pop %v5720
      %v5800 = vmul.f32 %v5799, %v5720
      %v5801 = vmul.f32 %v5800, %v5799
      %v5802 = vmul.f32 0.5, %v5801
      %v5803 = vsub.f32 1.5, %v5802
      %v5804 = vmul.f32 %v5799, %v5803
      %vm5805 = vweird.f32 %v5720
      %vm5806 = vweird.f32 %v5799
      %vm5807 = vmor %vm5805, %vm5806
      %v5808 = vsel %vm5807, %v5799, %v5804
      %v5809 = vrsqrt.pop %v5721
      %v5810 = vmul.f32 %v5809, %v5721
      %v5811 = vmul.f32 %v5810, %v5809
      %v5812 = vmul.f32 0.5, %v5811
      %v5813 = vsub.f32 1.5, %v5812
      %v5814 = vmul.f32 %v5809, %v5813
      %vm5815 = vweird.f32 %v5721
      %vm5816 = vweird.f32 %v5809
      %vm5817 = vmor %vm5815, %vm5816
      %v5818 = vsel %vm5817, %v5809, %v5814
      %v5819 = vrsqrt.pop %v5722
      %v5820 = vmul.f32 %v5819, %v5722
      %v5821 = vmul.f32 %v5820, %v5819
      %v5822 = vmul.f32 0.5, %v5821
      %v5823 = vsub.f32 1.5, %v5822
      %v5824 = vmul.f32 %v5819, %v5823
      %vm5825 = vweird.f32 %v5722
      %vm5826 = vweird.f32 %v5819
      %vm5827 = vmor %vm5825, %vm5826
      %v5828 = vsel %vm5827, %v5819, %v5824
      %v5829 = vrsqrt.pop %v5723
      %v5830 = vmul.f32 %v5829, %v5723
      %v5831 = vmul.f32 %v5830, %v5829
      %v5832 = vmul.f32 0.5, %v5831
      %v5833 = vsub.f32 1.5, %v5832
      %v5834 = vmul.f32 %v5829, %v5833
      %vm5835 = vweird.f32 %v5723
      %vm5836 = vweird.f32 %v5829
      %vm5837 = vmor %vm5835, %vm5836
      %v5838 = vsel %vm5837, %v5829, %v5834
      %v5839 = vrsqrt.pop %v5724
      %v5840 = vmul.f32 %v5839, %v5724
      %v5841 = vmul.f32 %v5840, %v5839
      %v5842 = vmul.f32 0.5, %v5841
      %v5843 = vsub.f32 1.5, %v5842
      %v5844 = vmul.f32 %v5839, %v5843
      %vm5845 = vweird.f32 %v5724
      %vm5846 = vweird.f32 %v5839
      %vm5847 = vmor %vm5845, %vm5846
      %v5848 = vsel %vm5847, %v5839, %v5844
      %v5849 = vrsqrt.pop %v5725
      %v5850 = vmul.f32 %v5849, %v5725
      %v5851 = vmul.f32 %v5850, %v5849
      %v5852 = vmul.f32 0.5, %v5851
      %v5853 = vsub.f32 1.5, %v5852
      %v5854 = vmul.f32 %v5849, %v5853
      %vm5855 = vweird.f32 %v5725
      %vm5856 = vweird.f32 %v5849
      %vm5857 = vmor %vm5855, %vm5856
      %v5858 = vsel %vm5857, %v5849, %v5854
      %v5859 = vrsqrt.pop %v5726
      %v5860 = vmul.f32 %v5859, %v5726
      %v5861 = vmul.f32 %v5860, %v5859
      %v5862 = vmul.f32 0.5, %v5861
      %v5863 = vsub.f32 1.5, %v5862
      %v5864 = vmul.f32 %v5859, %v5863
      %vm5865 = vweird.f32 %v5726
      %vm5866 = vweird.f32 %v5859
      %vm5867 = vmor %vm5865, %vm5866
      %v5868 = vsel %vm5867, %v5859, %v5864
      %v5869 = vrsqrt.pop %v5727
      %v5870 = vmul.f32 %v5869, %v5727
      %v5871 = vmul.f32 %v5870, %v5869
      %v5872 = vmul.f32 0.5, %v5871
      %v5873 = vsub.f32 1.5, %v5872
      %v5874 = vmul.f32 %v5869, %v5873
      %vm5875 = vweird.f32 %v5727
      %vm5876 = vweird.f32 %v5869
      %vm5877 = vmor %vm5875, %vm5876
      %v5878 = vsel %vm5877, %v5869, %v5874
      %v5879 = vrsqrt.pop %v5728
      %v5880 = vmul.f32 %v5879, %v5728
      %v5881 = vmul.f32 %v5880, %v5879
      %v5882 = vmul.f32 0.5, %v5881
      %v5883 = vsub.f32 1.5, %v5882
      %v5884 = vmul.f32 %v5879, %v5883
      %vm5885 = vweird.f32 %v5728
      %vm5886 = vweird.f32 %v5879
      %vm5887 = vmor %vm5885, %vm5886
      %v5888 = vsel %vm5887, %v5879, %v5884
      %v5889 = vmul.f32 %v5633, %v5738
      %v5890 = vmul.f32 %v5634, %v5748
      %v5891 = vmul.f32 %v5635, %v5758
      %v5892 = vmul.f32 %v5636, %v5768
      %v5893 = vmul.f32 %v5637, %v5778
      %v5894 = vmul.f32 %v5638, %v5788
      %v5895 = vmul.f32 %v5639, %v5798
      %v5896 = vmul.f32 %v5640, %v5808
      %v5897 = vmul.f32 %v5641, %v5818
      %v5898 = vmul.f32 %v5642, %v5828
      %v5899 = vmul.f32 %v5643, %v5838
      %v5900 = vmul.f32 %v5644, %v5848
      %v5901 = vmul.f32 %v5645, %v5858
      %v5902 = vmul.f32 %v5646, %v5868
      %v5903 = vmul.f32 %v5647, %v5878
      %v5904 = vmul.f32 %v5648, %v5888
      %v5905 = vperm.slane %v328, 5
      %v5906 = vmul.f32 %v5889, %v5905
      %v5907 = vmul.f32 %v5890, %v5905
      %v5908 = vmul.f32 %v5891, %v5905
      %v5909 = vmul.f32 %v5892, %v5905
      %v5910 = vmul.f32 %v5893, %v5905
      %v5911 = vmul.f32 %v5894, %v5905
      %v5912 = vmul.f32 %v5895, %v5905
      %v5913 = vmul.f32 %v5896, %v5905
      %v5914 = vmul.f32 %v5897, %v5905
      %v5915 = vmul.f32 %v5898, %v5905
      %v5916 = vmul.f32 %v5899, %v5905
      %v5917 = vmul.f32 %v5900, %v5905
      %v5918 = vmul.f32 %v5901, %v5905
      %v5919 = vmul.f32 %v5902, %v5905
      %v5920 = vmul.f32 %v5903, %v5905
      %v5921 = vmul.f32 %v5904, %v5905
      %v5922 = vperm.slane %v328, 6
      %v5923 = vadd.f32 %v5906, %v5922
      %v5924 = vadd.f32 %v5907, %v5922
      %v5925 = vadd.f32 %v5908, %v5922
      %v5926 = vadd.f32 %v5909, %v5922
      %v5927 = vadd.f32 %v5910, %v5922
      %v5928 = vadd.f32 %v5911, %v5922
      %v5929 = vadd.f32 %v5912, %v5922
      %v5930 = vadd.f32 %v5913, %v5922
      %v5931 = vadd.f32 %v5914, %v5922
      %v5932 = vadd.f32 %v5915, %v5922
      %v5933 = vadd.f32 %v5916, %v5922
      %v5934 = vadd.f32 %v5917, %v5922
      %v5935 = vadd.f32 %v5918, %v5922
      %v5936 = vadd.f32 %v5919, %v5922
      %v5937 = vadd.f32 %v5920, %v5922
      %v5938 = vadd.f32 %v5921, %v5922
      %v5939 = vmul.f32 %v5923, 0.5
      %v5940 = vmul.f32 %v5924, 0.5
      %v5941 = vmul.f32 %v5925, 0.5
      %v5942 = vmul.f32 %v5926, 0.5
      %v5943 = vmul.f32 %v5927, 0.5
      %v5944 = vmul.f32 %v5928, 0.5
      %v5945 = vmul.f32 %v5929, 0.5
      %v5946 = vmul.f32 %v5930, 0.5
      %v5947 = vmul.f32 %v5931, 0.5
      %v5948 = vmul.f32 %v5932, 0.5
      %v5949 = vmul.f32 %v5933, 0.5
      %v5950 = vmul.f32 %v5934, 0.5
      %v5951 = vmul.f32 %v5935, 0.5
      %v5952 = vmul.f32 %v5936, 0.5
      %v5953 = vmul.f32 %v5937, 0.5
      %v5954 = vmul.f32 %v5938, 0.5
      %v5955 = vmul.f32 %v5923, 0.044715
      %v5956 = vmul.f32 %v5924, 0.044715
      %v5957 = vmul.f32 %v5925, 0.044715
      %v5958 = vmul.f32 %v5926, 0.044715
      %v5959 = vmul.f32 %v5927, 0.044715
      %v5960 = vmul.f32 %v5928, 0.044715
      %v5961 = vmul.f32 %v5929, 0.044715
      %v5962 = vmul.f32 %v5930, 0.044715
      %v5963 = vmul.f32 %v5931, 0.044715
      %v5964 = vmul.f32 %v5932, 0.044715
      %v5965 = vmul.f32 %v5933, 0.044715
      %v5966 = vmul.f32 %v5934, 0.044715
      %v5967 = vmul.f32 %v5935, 0.044715
      %v5968 = vmul.f32 %v5936, 0.044715
      %v5969 = vmul.f32 %v5937, 0.044715
      %v5970 = vmul.f32 %v5938, 0.044715
      %v5971 = vmul.f32 %v5955, %v5923
      %v5972 = vmul.f32 %v5956, %v5924
      %v5973 = vmul.f32 %v5957, %v5925
      %v5974 = vmul.f32 %v5958, %v5926
      %v5975 = vmul.f32 %v5959, %v5927
      %v5976 = vmul.f32 %v5960, %v5928
      %v5977 = vmul.f32 %v5961, %v5929
      %v5978 = vmul.f32 %v5962, %v5930
      %v5979 = vmul.f32 %v5963, %v5931
      %v5980 = vmul.f32 %v5964, %v5932
      %v5981 = vmul.f32 %v5965, %v5933
      %v5982 = vmul.f32 %v5966, %v5934
      %v5983 = vmul.f32 %v5967, %v5935
      %v5984 = vmul.f32 %v5968, %v5936
      %v5985 = vmul.f32 %v5969, %v5937
      %v5986 = vmul.f32 %v5970, %v5938
      %v5987 = vmul.f32 %v5971, %v5923
      %v5988 = vmul.f32 %v5972, %v5924
      %v5989 = vmul.f32 %v5973, %v5925
      %v5990 = vmul.f32 %v5974, %v5926
      %v5991 = vmul.f32 %v5975, %v5927
      %v5992 = vmul.f32 %v5976, %v5928
      %v5993 = vmul.f32 %v5977, %v5929
      %v5994 = vmul.f32 %v5978, %v5930
      %v5995 = vmul.f32 %v5979, %v5931
      %v5996 = vmul.f32 %v5980, %v5932
      %v5997 = vmul.f32 %v5981, %v5933
      %v5998 = vmul.f32 %v5982, %v5934
      %v5999 = vmul.f32 %v5983, %v5935
      %v6000 = vmul.f32 %v5984, %v5936
      %v6001 = vmul.f32 %v5985, %v5937
      %v6002 = vmul.f32 %v5986, %v5938
      %v6003 = vadd.f32 %v5923, %v5987
      %v6004 = vadd.f32 %v5924, %v5988
      %v6005 = vadd.f32 %v5925, %v5989
      %v6006 = vadd.f32 %v5926, %v5990
      %v6007 = vadd.f32 %v5927, %v5991
      %v6008 = vadd.f32 %v5928, %v5992
      %v6009 = vadd.f32 %v5929, %v5993
      %v6010 = vadd.f32 %v5930, %v5994
      %v6011 = vadd.f32 %v5931, %v5995
      %v6012 = vadd.f32 %v5932, %v5996
      %v6013 = vadd.f32 %v5933, %v5997
      %v6014 = vadd.f32 %v5934, %v5998
      %v6015 = vadd.f32 %v5935, %v5999
      %v6016 = vadd.f32 %v5936, %v6000
      %v6017 = vadd.f32 %v5937, %v6001
      %v6018 = vadd.f32 %v5938, %v6002
      %v6019 = vmul.f32 %v6003, 0.7978846
      %v6020 = vmul.f32 %v6004, 0.7978846
      %v6021 = vmul.f32 %v6005, 0.7978846
      %v6022 = vmul.f32 %v6006, 0.7978846
      %v6023 = vmul.f32 %v6007, 0.7978846
      %v6024 = vmul.f32 %v6008, 0.7978846
      %v6025 = vmul.f32 %v6009, 0.7978846
      %v6026 = vmul.f32 %v6010, 0.7978846
      %v6027 = vmul.f32 %v6011, 0.7978846
      %v6028 = vmul.f32 %v6012, 0.7978846
      %v6029 = vmul.f32 %v6013, 0.7978846
      %v6030 = vmul.f32 %v6014, 0.7978846
      %v6031 = vmul.f32 %v6015, 0.7978846
      %v6032 = vmul.f32 %v6016, 0.7978846
      %v6033 = vmul.f32 %v6017, 0.7978846
      %v6034 = vmul.f32 %v6018, 0.7978846
      %v6035 = vtanh.pop %v6019
      %v6036 = vtanh.pop %v6020
      %v6037 = vtanh.pop %v6021
      %v6038 = vtanh.pop %v6022
      %v6039 = vtanh.pop %v6023
      %v6040 = vtanh.pop %v6024
      %v6041 = vtanh.pop %v6025
      %v6042 = vtanh.pop %v6026
      %v6043 = vtanh.pop %v6027
      %v6044 = vtanh.pop %v6028
      %v6045 = vtanh.pop %v6029
      %v6046 = vtanh.pop %v6030
      %v6047 = vtanh.pop %v6031
      %v6048 = vtanh.pop %v6032
      %v6049 = vtanh.pop %v6033
      %v6050 = vtanh.pop %v6034
      %v6051 = vadd.f32 %v6035, 1.0
      %v6052 = vadd.f32 %v6036, 1.0
      %v6053 = vadd.f32 %v6037, 1.0
      %v6054 = vadd.f32 %v6038, 1.0
      %v6055 = vadd.f32 %v6039, 1.0
      %v6056 = vadd.f32 %v6040, 1.0
      %v6057 = vadd.f32 %v6041, 1.0
      %v6058 = vadd.f32 %v6042, 1.0
      %v6059 = vadd.f32 %v6043, 1.0
      %v6060 = vadd.f32 %v6044, 1.0
      %v6061 = vadd.f32 %v6045, 1.0
      %v6062 = vadd.f32 %v6046, 1.0
      %v6063 = vadd.f32 %v6047, 1.0
      %v6064 = vadd.f32 %v6048, 1.0
      %v6065 = vadd.f32 %v6049, 1.0
      %v6066 = vadd.f32 %v6050, 1.0
      %v6067 = vmul.f32 %v5939, %v6051
      %v6068 = vmul.f32 %v5940, %v6052
      %v6069 = vmul.f32 %v5941, %v6053
      %v6070 = vmul.f32 %v5942, %v6054
      %v6071 = vmul.f32 %v5943, %v6055
      %v6072 = vmul.f32 %v5944, %v6056
      %v6073 = vmul.f32 %v5945, %v6057
      %v6074 = vmul.f32 %v5946, %v6058
      %v6075 = vmul.f32 %v5947, %v6059
      %v6076 = vmul.f32 %v5948, %v6060
      %v6077 = vmul.f32 %v5949, %v6061
      %v6078 = vmul.f32 %v5950, %v6062
      %v6079 = vmul.f32 %v5951, %v6063
      %v6080 = vmul.f32 %v5952, %v6064
      %v6081 = vmul.f32 %v5953, %v6065
      %v6082 = vmul.f32 %v5954, %v6066
      %v6083 = vpack.c.bf16 %v6068, %v6067
      %v6084 = vpack.c.bf16 %v6070, %v6069
      %v6085 = vpack.c.bf16 %v6072, %v6071
      %v6086 = vpack.c.bf16 %v6074, %v6073
      %v6087 = vpack.c.bf16 %v6076, %v6075
      %v6088 = vpack.c.bf16 %v6078, %v6077
      %v6089 = vpack.c.bf16 %v6080, %v6079
      %v6090 = vpack.c.bf16 %v6082, %v6081
      %v6091 = vld [vmem:[%s6] sm:$0xf]
      %v6092 = vld [vmem:[%s6 + $0x4] sm:$0xf]
      %v6093 = vld [vmem:[%s6 + $0x8] sm:$0xf]
      %v6094 = vld [vmem:[%s6 + $0xc] sm:$0xf]
      %v6095 = vld [vmem:[%s6 + $0x10] sm:$0xf]
      %v6096 = vld [vmem:[%s6 + $0x14] sm:$0xf]
      %v6097 = vld [vmem:[%s6 + $0x18] sm:$0xf]
      %v6098 = vld [vmem:[%s6 + $0x1c] sm:$0xf]
      %v6099 = vld [vmem:[%s6 + $0x20] sm:$0xf]
      %v6100 = vld [vmem:[%s6 + $0x24] sm:$0xf]
      %v6101 = vld [vmem:[%s6 + $0x28] sm:$0xf]
      %v6102 = vld [vmem:[%s6 + $0x2c] sm:$0xf]
      %v6103 = vld [vmem:[%s6 + $0x30] sm:$0xf]
      %v6104 = vld [vmem:[%s6 + $0x34] sm:$0xf]
      %v6105 = vld [vmem:[%s6 + $0x38] sm:$0xf]
      %v6106 = vld [vmem:[%s6 + $0x3c] sm:$0xf]
      %v6107 = vperm.slane %v328, 7
      %v6124 = vunpack.c.l.b16 %v6091
      %v6125 = vunpack.c.l.b16 %v6092
      %v6126 = vunpack.c.l.b16 %v6093
      %v6127 = vunpack.c.l.b16 %v6094
      %v6128 = vunpack.c.l.b16 %v6095
      %v6129 = vunpack.c.l.b16 %v6096
      %v6130 = vunpack.c.l.b16 %v6097
      %v6131 = vunpack.c.l.b16 %v6098
      %v6132 = vunpack.c.l.b16 %v6099
      %v6133 = vunpack.c.l.b16 %v6100
      %v6134 = vunpack.c.l.b16 %v6101
      %v6135 = vunpack.c.l.b16 %v6102
      %v6136 = vunpack.c.l.b16 %v6103
      %v6137 = vunpack.c.l.b16 %v6104
      %v6138 = vunpack.c.l.b16 %v6105
      %v6139 = vunpack.c.l.b16 %v6106
      %v6140 = vpack.c.b16 %v6125, %v6124
      %v6141 = vpack.c.b16 %v6127, %v6126
      %v6142 = vpack.c.b16 %v6129, %v6128
      %v6143 = vpack.c.b16 %v6131, %v6130
      %v6144 = vpack.c.b16 %v6133, %v6132
      %v6145 = vpack.c.b16 %v6135, %v6134
      %v6146 = vpack.c.b16 %v6137, %v6136
      %v6147 = vpack.c.b16 %v6139, %v6138
      %6156 = vmatpush.bf16.msra.mxu0 %v6147
      %6157 = vmatpush.bf16.msra.mxu0 %v6146
      %6158 = vmatpush.bf16.msra.mxu0 %v6145
      %6159 = vmatpush.bf16.msra.mxu0 %v6144
      %6160 = vmatpush.bf16.msra.mxu0 %v6143
      %6161 = vmatpush.bf16.msra.mxu0 %v6142
      %6162 = vmatpush.bf16.msra.mxu0 %v6141
      %6163 = vmatpush.bf16.msra.mxu0 %v6140
      %6164 = vmatmul.bf16.gmra.mxu0 %v6083
      %v6165 = vpop.f32.mrf.mxu0
      %v6166 = vadd.f32 %v6107, %v6165
      %v6167 = vpop.f32.mrf.mxu0
      %v6168 = vadd.f32 %v6107, %v6167
      %6169 = vmatmul.bf16.gmra.mxu0 %v6084
      %v6170 = vpop.f32.mrf.mxu0
      %v6171 = vadd.f32 %v6107, %v6170
      %v6172 = vpop.f32.mrf.mxu0
      %v6173 = vadd.f32 %v6107, %v6172
      %6174 = vmatmul.bf16.gmra.mxu0 %v6085
      %v6175 = vpop.f32.mrf.mxu0
      %v6176 = vadd.f32 %v6107, %v6175
      %v6177 = vpop.f32.mrf.mxu0
      %v6178 = vadd.f32 %v6107, %v6177
      %6179 = vmatmul.bf16.gmra.mxu0 %v6086
      %v6180 = vpop.f32.mrf.mxu0
      %v6181 = vadd.f32 %v6107, %v6180
      %v6182 = vpop.f32.mrf.mxu0
      %v6183 = vadd.f32 %v6107, %v6182
      %6184 = vmatmul.bf16.gmra.mxu0 %v6087
      %v6185 = vpop.f32.mrf.mxu0
      %v6186 = vadd.f32 %v6107, %v6185
      %v6187 = vpop.f32.mrf.mxu0
      %v6188 = vadd.f32 %v6107, %v6187
      %6189 = vmatmul.bf16.gmra.mxu0 %v6088
      %v6190 = vpop.f32.mrf.mxu0
      %v6191 = vadd.f32 %v6107, %v6190
      %v6192 = vpop.f32.mrf.mxu0
      %v6193 = vadd.f32 %v6107, %v6192
      %6194 = vmatmul.bf16.gmra.mxu0 %v6089
      %v6195 = vpop.f32.mrf.mxu0
      %v6196 = vadd.f32 %v6107, %v6195
      %v6197 = vpop.f32.mrf.mxu0
      %v6198 = vadd.f32 %v6107, %v6197
      %6199 = vmatmul.bf16.gmra.mxu0 %v6090
      %v6200 = vpop.f32.mrf.mxu0
      %v6201 = vadd.f32 %v6107, %v6200
      %v6202 = vpop.f32.mrf.mxu0
      %v6203 = vadd.f32 %v6107, %v6202
      %6204 = vdwg.mxu0
      %v6205 = vadd.f32 %v3157, %v6166
      %v6206 = vadd.f32 %v3158, %v6168
      %v6207 = vadd.f32 %v3159, %v6171
      %v6208 = vadd.f32 %v3160, %v6173
      %v6209 = vadd.f32 %v3161, %v6176
      %v6210 = vadd.f32 %v3162, %v6178
      %v6211 = vadd.f32 %v3163, %v6181
      %v6212 = vadd.f32 %v3164, %v6183
      %v6213 = vadd.f32 %v3165, %v6186
      %v6214 = vadd.f32 %v3166, %v6188
      %v6215 = vadd.f32 %v3167, %v6191
      %v6216 = vadd.f32 %v3168, %v6193
      %v6217 = vadd.f32 %v3169, %v6196
      %v6218 = vadd.f32 %v3170, %v6198
      %v6219 = vadd.f32 %v3171, %v6201
      %v6220 = vadd.f32 %v3172, %v6203
      %6221 = vst.msk [vmem:[%s307] sm:$0xff] %vm329, %v6205
      %6222 = vst.msk [vmem:[%s307 + $0x8] sm:$0xff] %vm329, %v6206
      %6223 = vst.msk [vmem:[%s307 + $0x10] sm:$0xff] %vm329, %v6207
      %6224 = vst.msk [vmem:[%s307 + $0x18] sm:$0xff] %vm329, %v6208
      %6225 = vst.msk [vmem:[%s307 + $0x20] sm:$0xff] %vm329, %v6209
      %6226 = vst.msk [vmem:[%s307 + $0x28] sm:$0xff] %vm329, %v6210
      %6227 = vst.msk [vmem:[%s307 + $0x30] sm:$0xff] %vm329, %v6211
      %6228 = vst.msk [vmem:[%s307 + $0x38] sm:$0xff] %vm329, %v6212
      %6229 = vst.msk [vmem:[%s307 + $0x40] sm:$0xff] %vm329, %v6213
      %6230 = vst.msk [vmem:[%s307 + $0x48] sm:$0xff] %vm329, %v6214
      %6231 = vst.msk [vmem:[%s307 + $0x50] sm:$0xff] %vm329, %v6215
      %6232 = vst.msk [vmem:[%s307 + $0x58] sm:$0xff] %vm329, %v6216
      %6233 = vst.msk [vmem:[%s307 + $0x60] sm:$0xff] %vm329, %v6217
      %6234 = vst.msk [vmem:[%s307 + $0x68] sm:$0xff] %vm329, %v6218
      %6235 = vst.msk [vmem:[%s307 + $0x70] sm:$0xff] %vm329, %v6219
      %6236 = vst.msk [vmem:[%s307 + $0x78] sm:$0xff] %vm329, %v6220
      %s6237 = smul.u32 16, %s19
      %p6238 = scmp.lt.s32.totalorder %s6237, 31
      %s6239 = scalar_select %p6238, %s6237, 31
      %s6240 = smul.addr %s6239, 8
      %s6241 = scalar_lea.vmem %s8, %s6240
      // Predicated region
      $region53: #{transformer_block_forward.1} parent=51 // pred_check
        %p6242 = pneg %p210
      $region54: #{transformer_block_forward.1} parent=51 // pred_check_branch
        %6244 = sbr.rel (%p6242) target = $region56
      $region55: #{transformer_block_forward.1} parent=51 // pred_region
        %s6245 = smul.u32 16, %s19
      $region56: #{transformer_block_forward.1} parent=51 // pred_fallthru
        _
    $region52: #{transformer_block_forward.1} parent=5 // pred_fallthru
      _
    %p6246 = scmp.le.s32.totalorder 2, %s14
    // Predicated region
    $region57: #{transformer_block_forward.1} parent=5 // pred_check
      %p6247 = pneg %p6246
    $region58: #{transformer_block_forward.1} parent=5 // pred_check_branch
      %6249 = sbr.rel (%p6247) target = $region60
    $region59: #{transformer_block_forward.1} parent=5 // pred_region
      %s6250 = ssub.s32 %s14, 2
      // Predicated region
      $region61: #{transformer_block_forward.1} parent=59 // pred_check
        %p6251 = pneg %p216
      $region62: #{transformer_block_forward.1} parent=59 // pred_check_branch
        %6253 = sbr.rel (%p6251) target = $region64
      $region63: #{transformer_block_forward.1} parent=59 // pred_region
        %s6254 = smul.u32 16, %s20
        %p6255 = scmp.lt.s32.totalorder %s6254, 31
        %s6256 = scalar_select %p6255, %s6254, 31
        %s6257 = smul.addr %s6256, 8
        %s6258 = scalar_lea.vmem %s8, %s6257
      $region64: #{transformer_block_forward.1} parent=59 // pred_fallthru
        _
    $region60: #{transformer_block_forward.1} parent=5 // pred_fallthru
      _
  $region6: #{transformer_block_forward.1} parent=0 // loop_footer
    %s18 = sadd.s32 1, %s14
  $region7: #{transformer_block_forward.1} parent=0 // loop_footer_branch
    %13 = sbr.rel target = $region3
  $region8: #{transformer_block_forward.1} parent=0 // loop_exit
    _

</llo_original>
